<compile_context>
chip_gen: v6e
topology: v6e:2x2x1
jax: 0.10.0
libtpu: 0.0.40
codegen_flags: <defaults>
</compile_context>

<pallas_src>
import functools

import jax
import jax.numpy as jnp
from jax.experimental import pallas as pl
from jax.experimental.pallas import tpu as pltpu


def _transformer_block_kernel(
    x_ref,        # (Bb, N, D)  f32
    ln1_g_ref,    # (1, D)      f32
    ln1_b_ref,    # (1, D)      f32
    wqkv_ref,     # (D, 3D)     bf16  (pre-transposed, Q columns pre-scaled)
    wo_ref,       # (D, D)      bf16  (pre-transposed)
    bo_ref,       # (1, D)      f32
    ln2_g_ref,    # (1, D)      f32
    ln2_b_ref,    # (1, D)      f32
    w1_ref,       # (D, M)      bf16  (pre-transposed)
    b1_ref,       # (1, M)      f32
    w2_ref,       # (M, D)      bf16  (pre-transposed)
    b2_ref,       # (1, D)      f32
    o_ref,        # (Bb, N, D)  f32
    attn_ref,     # VMEM scratch (Bb*N, D) f32 — assembled multi-head output
    *,
    num_heads: int,
):
    eps = 1e-5
    Bb, N, D = x_ref.shape
    R = Bb * N
    hd = D // num_heads
    bf16 = jnp.bfloat16

    # Flatten the batch block so every projection/MLP matmul sees R = Bb*N rows.
    x = x_ref[...].reshape(R, D)                               # f32

    # ---- LayerNorm 1 (f32) ----
    mu = jnp.mean(x, axis=-1, keepdims=True)
    var = jnp.mean((x - mu) ** 2, axis=-1, keepdims=True)
    xn = (x - mu) * jax.lax.rsqrt(var + eps)
    xn = xn * ln1_g_ref[...] + ln1_b_ref[...]

    # ---- QKV projection (bf16 MXU, f32 accumulate) ----
    qkv = jnp.dot(xn.astype(bf16), wqkv_ref[...],
                  preferred_element_type=jnp.float32)          # (R, 3D) f32
    q = qkv[:, 0:D].reshape(Bb, N, D)
    k = qkv[:, D:2 * D].reshape(Bb, N, D)
    v = qkv[:, 2 * D:3 * D].reshape(Bb, N, D)

    # ---- Multi-head self-attention ----
    # Each head: batched (over Bb) einsum; softmax in f32; scale already folded
    # into the Q weights.  Head outputs land in a lane-dense VMEM scratch.
    for h in range(num_heads):
        sl = slice(h * hd, (h + 1) * hd)
        qh = q[:, :, sl].astype(bf16)                          # (Bb, N, hd)
        kh = k[:, :, sl].astype(bf16)
        vh = v[:, :, sl].astype(bf16)
        s = jnp.einsum("bqd,bkd->bqk", qh, kh,
                       preferred_element_type=jnp.float32)     # (Bb, N, N) f32
        s = s - jnp.max(s, axis=-1, keepdims=True)
        p = jnp.exp(s)
        p = p * pl.reciprocal(jnp.sum(p, axis=-1, keepdims=True), approx=True)
        oh = jnp.einsum("bqk,bkd->bqd", p.astype(bf16), vh,
                        preferred_element_type=jnp.float32)    # (Bb, N, hd) f32
        attn_ref[:, sl] = oh.reshape(R, hd)

    attn = jnp.dot(attn_ref[...].astype(bf16), wo_ref[...],
                   preferred_element_type=jnp.float32) + bo_ref[...]

    # residual (dropout == identity at inference)
    x1 = x + attn

    # ---- LayerNorm 2 (f32) ----
    mu2 = jnp.mean(x1, axis=-1, keepdims=True)
    var2 = jnp.mean((x1 - mu2) ** 2, axis=-1, keepdims=True)
    xn2 = (x1 - mu2) * jax.lax.rsqrt(var2 + eps)
    xn2 = xn2 * ln2_g_ref[...] + ln2_b_ref[...]

    # ---- MLP: Linear -> GELU(exact erf) -> Linear ----
    h1 = jnp.dot(xn2.astype(bf16), w1_ref[...],
                 preferred_element_type=jnp.float32) + b1_ref[...]
    h1 = 0.5 * h1 * (1.0 + jax.lax.erf(h1 * 0.7071067811865476))
    h2 = jnp.dot(h1.astype(bf16), w2_ref[...],
                 preferred_element_type=jnp.float32) + b2_ref[...]

    o_ref[...] = (x1 + h2).reshape(Bb, N, D).astype(o_ref.dtype)


def _prepare_operands(params, num_heads):
    """Torch-layout f32 params -> kernel operands (pre-transposed, bf16 weights,
    f32 biases/LN params, 1/sqrt(head_dim) folded into the Q weight columns)."""
    D = params["wo"].shape[0]
    M = params["w1"].shape[0]
    hd = D // num_heads
    scale = float(hd) ** -0.5
    f32, bf16 = jnp.float32, jnp.bfloat16

    wqkv_t = params["wqkv"].T.astype(f32)                      # (D, 3D)
    wqkv_t = jnp.concatenate([wqkv_t[:, :D] * scale, wqkv_t[:, D:]], axis=1)

    return [
        params["ln1_g"].reshape(1, D).astype(f32),
        params["ln1_b"].reshape(1, D).astype(f32),
        wqkv_t.astype(bf16),                                   # (D, 3D)
        params["wo"].T.astype(bf16),                           # (D, D)
        params["bo"].reshape(1, D).astype(f32),
        params["ln2_g"].reshape(1, D).astype(f32),
        params["ln2_b"].reshape(1, D).astype(f32),
        params["w1"].T.astype(bf16),                           # (D, M)
        params["b1"].reshape(1, M).astype(f32),
        params["w2"].T.astype(bf16),                           # (M, D)
        params["b2"].reshape(1, D).astype(f32),
    ]


def transformer_block(x, params, *, num_heads, block_b=None):
    """x: (B, N, D) float32. params: torch-layout dict from init_params."""
    B, N, D = x.shape
    assert D % num_heads == 0

    if block_b is None:          # fill ~256 MXU rows per grid step if possible
        block_b = 1
        for cand in range(min(B, max(1, 256 // max(N, 1))), 0, -1):
            if B % cand == 0:
                block_b = cand
                break
    assert B % block_b == 0

    operands = _prepare_operands(params, num_heads)
    kernel = functools.partial(_transformer_block_kernel, num_heads=num_heads)

    def build(weight_pipeline_mode):
        in_specs = [pl.BlockSpec((block_b, N, D), lambda b: (b, 0, 0))]
        for op in operands:
            kwargs = {}
            if weight_pipeline_mode is not None:
                kwargs["pipeline_mode"] = weight_pipeline_mode
            in_specs.append(
                pl.BlockSpec(op.shape, lambda b, _nd=op.ndim: (0,) * _nd, **kwargs)
            )
        return pl.pallas_call(
            kernel,
            out_shape=jax.ShapeDtypeStruct((B, N, D), x.dtype),
            grid_spec=pltpu.PrefetchScalarGridSpec(
                num_scalar_prefetch=0,
                grid=(B // block_b,),
                in_specs=in_specs,
                out_specs=pl.BlockSpec((block_b, N, D), lambda b: (b, 0, 0)),
                scratch_shapes=[pltpu.VMEM((block_b * N, D), jnp.float32)],
            ),
            compiler_params=pltpu.CompilerParams(
                dimension_semantics=("parallel",),
                vmem_limit_bytes=48 * 1024 * 1024,
            ),
        )

    try:
        # Weights/biases have a constant index_map -> single-buffer them.
        return build(pl.Buffered(1))(x, *operands)
    except Exception:
        # Older JAX/Mosaic builds may not accept pipeline_mode; default
        # double-buffering is still correct (just uses more VMEM).
        return build(None)(x, *operands)


def init_params(key, embed_dim, num_heads, mlp_dim):
    """Deterministic synthetic parameters in PyTorch layout: Linear weight is
    (out_features, in_features); forward is x @ W.T + b."""
    D, M = embed_dim, mlp_dim
    ks = jax.random.split(key, 6)
    s = 0.05
    return {
        "ln1_g": jnp.ones((D,), jnp.float32),
        "ln1_b": jnp.zeros((D,), jnp.float32),
        "wqkv": jax.random.normal(ks[0], (3 * D, D), jnp.float32) * s,
        "wo":   jax.random.normal(ks[1], (D, D), jnp.float32) * s,
        "bo":   jax.random.normal(ks[2], (D,), jnp.float32) * s,
        "ln2_g": jnp.ones((D,), jnp.float32),
        "ln2_b": jnp.zeros((D,), jnp.float32),
        "w1":   jax.random.normal(ks[3], (M, D), jnp.float32) * s,
        "b1":   jax.random.normal(ks[4], (M,), jnp.float32) * s,
        "w2":   jax.random.normal(ks[5], (D, M), jnp.float32) * s,
        "b2":   jnp.zeros((D,), jnp.float32),
    }


def reference_block(x, params, *, num_heads):
    """Pure-JAX f32 reference of the PyTorch forward (dropout = identity)."""
    B, N, D = x.shape
    hd = D // num_heads
    eps = 1e-5

    def ln(v, g, b):
        mu = jnp.mean(v, axis=-1, keepdims=True)
        var = jnp.mean((v - mu) ** 2, axis=-1, keepdims=True)
        return (v - mu) / jnp.sqrt(var + eps) * g + b

    xn = ln(x, params["ln1_g"], params["ln1_b"])
    qkv = xn @ params["wqkv"].T                                 # (B, N, 3D)
    qkv = qkv.reshape(B, N, 3, num_heads, hd).transpose(2, 0, 3, 1, 4)
    q, k, v = qkv[0], qkv[1], qkv[2]                            # (B, H, N, hd)
    att = jax.nn.softmax((q @ jnp.swapaxes(k, -2, -1)) * (hd ** -0.5), axis=-1)
    out = (att @ v).transpose(0, 2, 1, 3).reshape(B, N, D)
    out = out @ params["wo"].T + params["bo"]
    x1 = x + out
    xn2 = ln(x1, params["ln2_g"], params["ln2_b"])
    h1 = jax.nn.gelu(xn2 @ params["w1"].T + params["b1"], approximate=False)
    h2 = h1 @ params["w2"].T + params["b2"]
    return x1 + h2


if __name__ == "__main__":
    # Small but lane/sublane aligned: D multiple of 128, N multiple of 8.
    B, N, D = 8, 16, 128
    num_heads, mlp_dim = 4, 256

    key = jax.random.PRNGKey(0)
    kx, kp = jax.random.split(key)
    x = jax.random.normal(kx, (B, N, D), jnp.float32)
    params = init_params(kp, D, num_heads, mlp_dim)

    out = transformer_block(x, params, num_heads=num_heads, block_b=4)
    out = jax.block_until_ready(out)

    ref = reference_block(x, params, num_heads=num_heads)
    assert out.shape == (B, N, D)
    max_err = float(jnp.max(jnp.abs(out - ref)))
    # bf16 matmul operands (f32 accumulation) + approx reciprocal -> relax the
    # pure-f32 tolerance; real bugs show up as O(0.1+) errors.
    assert jnp.allclose(out, ref, atol=3e-2, rtol=3e-2), (
        f"mismatch vs JAX reference, max|err|={max_err}")
    print("KERNEL_OK")
</pallas_src>

<mosaic_0001>
module attributes {stable_mosaic.version = 11 : i64} {
  func.func @_transformer_block_kernel(%arg0: i32, %arg1: memref<4x16x128xf32, #tpu.memory_space<vmem>>, %arg2: memref<1x128xf32, #tpu.memory_space<vmem>>, %arg3: memref<1x128xf32, #tpu.memory_space<vmem>>, %arg4: memref<128x384xbf16, #tpu.memory_space<vmem>>, %arg5: memref<128x128xbf16, #tpu.memory_space<vmem>>, %arg6: memref<1x128xf32, #tpu.memory_space<vmem>>, %arg7: memref<1x128xf32, #tpu.memory_space<vmem>>, %arg8: memref<1x128xf32, #tpu.memory_space<vmem>>, %arg9: memref<128x256xbf16, #tpu.memory_space<vmem>>, %arg10: memref<1x256xf32, #tpu.memory_space<vmem>>, %arg11: memref<256x128xbf16, #tpu.memory_space<vmem>>, %arg12: memref<1x128xf32, #tpu.memory_space<vmem>>, %arg13: memref<4x16x128xf32, #tpu.memory_space<vmem>>, %arg14: memref<64x128xf32, #tpu.memory_space<vmem>>) attributes {dimension_semantics = [#tpu.dimension_semantics<parallel>], iteration_bounds = array<i64: 2>, scalar_prefetch = 0 : i64, scratch_operands = 1 : i64, tpu.core_type = #tpu.core_type<tc>, window_params = [{transform_indices = @transform_0, window_bounds = array<i64: 4, 16, 128>}, {pipeline_mode = #tpu.pipeline_mode<synchronous>, transform_indices = @transform_1, window_bounds = array<i64: 1, 128>}, {pipeline_mode = #tpu.pipeline_mode<synchronous>, transform_indices = @transform_2, window_bounds = array<i64: 1, 128>}, {pipeline_mode = #tpu.pipeline_mode<synchronous>, transform_indices = @transform_3, window_bounds = array<i64: 128, 384>}, {pipeline_mode = #tpu.pipeline_mode<synchronous>, transform_indices = @transform_4, window_bounds = array<i64: 128, 128>}, {pipeline_mode = #tpu.pipeline_mode<synchronous>, transform_indices = @transform_5, window_bounds = array<i64: 1, 128>}, {pipeline_mode = #tpu.pipeline_mode<synchronous>, transform_indices = @transform_6, window_bounds = array<i64: 1, 128>}, {pipeline_mode = #tpu.pipeline_mode<synchronous>, transform_indices = @transform_7, window_bounds = array<i64: 1, 128>}, {pipeline_mode = #tpu.pipeline_mode<synchronous>, transform_indices = @transform_8, window_bounds = array<i64: 128, 256>}, {pipeline_mode = #tpu.pipeline_mode<synchronous>, transform_indices = @transform_9, window_bounds = array<i64: 1, 256>}, {pipeline_mode = #tpu.pipeline_mode<synchronous>, transform_indices = @transform_10, window_bounds = array<i64: 256, 128>}, {pipeline_mode = #tpu.pipeline_mode<synchronous>, transform_indices = @transform_11, window_bounds = array<i64: 1, 128>}, {transform_indices = @transform_12, window_bounds = array<i64: 4, 16, 128>}]} {
    %c0 = arith.constant 0 : index
    %c0_0 = arith.constant 0 : index
    %c0_1 = arith.constant 0 : index
    %0 = vector.load %arg1[%c0, %c0_0, %c0_1] : memref<4x16x128xf32, #tpu.memory_space<vmem>>, vector<4x16x128xf32>
    %1 = vector.shape_cast %0 : vector<4x16x128xf32> to vector<64x128xf32>
    %cst = arith.constant dense<0.000000e+00> : vector<64xf32>
    %2 = vector.multi_reduction <add>, %1, %cst [1] : vector<64x128xf32> to vector<64xf32>
    %3 = vector.shape_cast %2 : vector<64xf32> to vector<64x1xf32>
    %cst_2 = arith.constant 1.280000e+02 : f32
    %4 = vector.broadcast %cst_2 : f32 to vector<64x1xf32>
    %5 = arith.divf %3, %4 : vector<64x1xf32>
    %6 = vector.broadcast %5 : vector<64x1xf32> to vector<64x128xf32>
    %7 = arith.subf %1, %6 : vector<64x128xf32>
    %8 = arith.mulf %7, %7 : vector<64x128xf32>
    %cst_3 = arith.constant dense<0.000000e+00> : vector<64xf32>
    %9 = vector.multi_reduction <add>, %8, %cst_3 [1] : vector<64x128xf32> to vector<64xf32>
    %10 = vector.shape_cast %9 : vector<64xf32> to vector<64x1xf32>
    %cst_4 = arith.constant 1.280000e+02 : f32
    %11 = vector.broadcast %cst_4 : f32 to vector<64x1xf32>
    %12 = arith.divf %10, %11 : vector<64x1xf32>
    %13 = vector.broadcast %5 : vector<64x1xf32> to vector<64x128xf32>
    %14 = arith.subf %1, %13 : vector<64x128xf32>
    %cst_5 = arith.constant 9.99999974E-6 : f32
    %15 = vector.broadcast %cst_5 : f32 to vector<64x1xf32>
    %16 = arith.addf %12, %15 : vector<64x1xf32>
    %17 = math.rsqrt %16 : vector<64x1xf32>
    %18 = vector.broadcast %17 : vector<64x1xf32> to vector<64x128xf32>
    %19 = arith.mulf %14, %18 : vector<64x128xf32>
    %c0_6 = arith.constant 0 : index
    %c0_7 = arith.constant 0 : index
    %20 = vector.load %arg2[%c0_6, %c0_7] : memref<1x128xf32, #tpu.memory_space<vmem>>, vector<1x128xf32>
    %21 = vector.broadcast %20 : vector<1x128xf32> to vector<64x128xf32>
    %22 = arith.mulf %19, %21 : vector<64x128xf32>
    %c0_8 = arith.constant 0 : index
    %c0_9 = arith.constant 0 : index
    %23 = vector.load %arg3[%c0_8, %c0_9] : memref<1x128xf32, #tpu.memory_space<vmem>>, vector<1x128xf32>
    %24 = vector.broadcast %23 : vector<1x128xf32> to vector<64x128xf32>
    %25 = arith.addf %22, %24 : vector<64x128xf32>
    %26 = arith.truncf %25 : vector<64x128xf32> to vector<64x128xbf16>
    %c0_10 = arith.constant 0 : index
    %c0_11 = arith.constant 0 : index
    %27 = vector.load %arg4[%c0_10, %c0_11] : memref<128x384xbf16, #tpu.memory_space<vmem>>, vector<128x384xbf16>
    %cst_12 = arith.constant dense<0.000000e+00> : vector<64x384xf32>
    %28 = tpu.matmul %26, %27, %cst_12 {dimension_numbers = #tpu.dot_dimension_numbers<[1], [0], [0], [1], [0, 0, 1, 1], [], []>} : vector<64x128xbf16>, vector<128x384xbf16>, vector<64x384xf32> -> vector<64x384xf32>
    %29 = vector.extract_strided_slice %28 {offsets = [0, 0], sizes = [64, 128], strides = [1, 1]} : vector<64x384xf32> to vector<64x128xf32>
    %30 = vector.shape_cast %29 : vector<64x128xf32> to vector<4x16x128xf32>
    %31 = vector.extract_strided_slice %28 {offsets = [0, 128], sizes = [64, 128], strides = [1, 1]} : vector<64x384xf32> to vector<64x128xf32>
    %32 = vector.shape_cast %31 : vector<64x128xf32> to vector<4x16x128xf32>
    %33 = vector.extract_strided_slice %28 {offsets = [0, 256], sizes = [64, 128], strides = [1, 1]} : vector<64x384xf32> to vector<64x128xf32>
    %34 = vector.shape_cast %33 : vector<64x128xf32> to vector<4x16x128xf32>
    %35 = vector.extract_strided_slice %30 {offsets = [0, 0, 0], sizes = [4, 16, 32], strides = [1, 1, 1]} : vector<4x16x128xf32> to vector<4x16x32xf32>
    %36 = arith.truncf %35 : vector<4x16x32xf32> to vector<4x16x32xbf16>
    %37 = vector.extract_strided_slice %32 {offsets = [0, 0, 0], sizes = [4, 16, 32], strides = [1, 1, 1]} : vector<4x16x128xf32> to vector<4x16x32xf32>
    %38 = arith.truncf %37 : vector<4x16x32xf32> to vector<4x16x32xbf16>
    %39 = vector.extract_strided_slice %34 {offsets = [0, 0, 0], sizes = [4, 16, 32], strides = [1, 1, 1]} : vector<4x16x128xf32> to vector<4x16x32xf32>
    %40 = arith.truncf %39 : vector<4x16x32xf32> to vector<4x16x32xbf16>
    "tpu.trace_start"() <{level = 10 : i32, message = "bqd,bkd->bqk"}> : () -> ()
    %cst_13 = arith.constant dense<0.000000e+00> : vector<4x16x16xf32>
    %41 = tpu.matmul %36, %38, %cst_13 {dimension_numbers = #tpu.dot_dimension_numbers<[2], [2], [1], [1], [0, 0, 0, 1, 1, 1], [0], [0]>} : vector<4x16x32xbf16>, vector<4x16x32xbf16>, vector<4x16x16xf32> -> vector<4x16x16xf32>
    "tpu.trace_stop"() : () -> ()
    %cst_14 = arith.constant dense<0xFF800000> : vector<4x16xf32>
    %42 = vector.multi_reduction <maximumf>, %41, %cst_14 [2] : vector<4x16x16xf32> to vector<4x16xf32>
    %43 = vector.shape_cast %42 : vector<4x16xf32> to vector<4x16x1xf32>
    %44 = vector.broadcast %43 : vector<4x16x1xf32> to vector<4x16x16xf32>
    %45 = arith.subf %41, %44 : vector<4x16x16xf32>
    %46 = math.exp %45 : vector<4x16x16xf32>
    %cst_15 = arith.constant dense<0.000000e+00> : vector<4x16xf32>
    %47 = vector.multi_reduction <add>, %46, %cst_15 [2] : vector<4x16x16xf32> to vector<4x16xf32>
    %48 = vector.shape_cast %47 : vector<4x16xf32> to vector<4x16x1xf32>
    %49 = tpu.reciprocal %48 {approx = true} : vector<4x16x1xf32> -> vector<4x16x1xf32>
    %50 = vector.broadcast %49 : vector<4x16x1xf32> to vector<4x16x16xf32>
    %51 = arith.mulf %46, %50 : vector<4x16x16xf32>
    %52 = arith.truncf %51 : vector<4x16x16xf32> to vector<4x16x16xbf16>
    "tpu.trace_start"() <{level = 10 : i32, message = "bqk,bkd->bqd"}> : () -> ()
    %cst_16 = arith.constant dense<0.000000e+00> : vector<4x16x32xf32>
    %53 = tpu.matmul %52, %40, %cst_16 {dimension_numbers = #tpu.dot_dimension_numbers<[2], [1], [1], [2], [0, 0, 0, 1, 1, 2], [0], [0]>} : vector<4x16x16xbf16>, vector<4x16x32xbf16>, vector<4x16x32xf32> -> vector<4x16x32xf32>
    "tpu.trace_stop"() : () -> ()
    %54 = vector.shape_cast %53 : vector<4x16x32xf32> to vector<64x32xf32>
    %c0_17 = arith.constant 0 : index
    %c0_18 = arith.constant 0 : index
    %55 = vector.load %arg14[%c0_17, %c0_18] : memref<64x128xf32, #tpu.memory_space<vmem>>, vector<64x32xf32>
    tpu.vector_store %arg14[%c0_17, %c0_18], %54 {strides = array<i32>} : memref<64x128xf32, #tpu.memory_space<vmem>>, vector<64x32xf32>,
    %56 = vector.extract_strided_slice %30 {offsets = [0, 0, 32], sizes = [4, 16, 32], strides = [1, 1, 1]} : vector<4x16x128xf32> to vector<4x16x32xf32>
    %57 = arith.truncf %56 : vector<4x16x32xf32> to vector<4x16x32xbf16>
    %58 = vector.extract_strided_slice %32 {offsets = [0, 0, 32], sizes = [4, 16, 32], strides = [1, 1, 1]} : vector<4x16x128xf32> to vector<4x16x32xf32>
    %59 = arith.truncf %58 : vector<4x16x32xf32> to vector<4x16x32xbf16>
    %60 = vector.extract_strided_slice %34 {offsets = [0, 0, 32], sizes = [4, 16, 32], strides = [1, 1, 1]} : vector<4x16x128xf32> to vector<4x16x32xf32>
    %61 = arith.truncf %60 : vector<4x16x32xf32> to vector<4x16x32xbf16>
    "tpu.trace_start"() <{level = 10 : i32, message = "bqd,bkd->bqk"}> : () -> ()
    %cst_19 = arith.constant dense<0.000000e+00> : vector<4x16x16xf32>
    %62 = tpu.matmul %57, %59, %cst_19 {dimension_numbers = #tpu.dot_dimension_numbers<[2], [2], [1], [1], [0, 0, 0, 1, 1, 1], [0], [0]>} : vector<4x16x32xbf16>, vector<4x16x32xbf16>, vector<4x16x16xf32> -> vector<4x16x16xf32>
    "tpu.trace_stop"() : () -> ()
    %cst_20 = arith.constant dense<0xFF800000> : vector<4x16xf32>
    %63 = vector.multi_reduction <maximumf>, %62, %cst_20 [2] : vector<4x16x16xf32> to vector<4x16xf32>
    %64 = vector.shape_cast %63 : vector<4x16xf32> to vector<4x16x1xf32>
    %65 = vector.broadcast %64 : vector<4x16x1xf32> to vector<4x16x16xf32>
    %66 = arith.subf %62, %65 : vector<4x16x16xf32>
    %67 = math.exp %66 : vector<4x16x16xf32>
    %cst_21 = arith.constant dense<0.000000e+00> : vector<4x16xf32>
    %68 = vector.multi_reduction <add>, %67, %cst_21 [2] : vector<4x16x16xf32> to vector<4x16xf32>
    %69 = vector.shape_cast %68 : vector<4x16xf32> to vector<4x16x1xf32>
    %70 = tpu.reciprocal %69 {approx = true} : vector<4x16x1xf32> -> vector<4x16x1xf32>
    %71 = vector.broadcast %70 : vector<4x16x1xf32> to vector<4x16x16xf32>
    %72 = arith.mulf %67, %71 : vector<4x16x16xf32>
    %73 = arith.truncf %72 : vector<4x16x16xf32> to vector<4x16x16xbf16>
    "tpu.trace_start"() <{level = 10 : i32, message = "bqk,bkd->bqd"}> : () -> ()
    %cst_22 = arith.constant dense<0.000000e+00> : vector<4x16x32xf32>
    %74 = tpu.matmul %73, %61, %cst_22 {dimension_numbers = #tpu.dot_dimension_numbers<[2], [1], [1], [2], [0, 0, 0, 1, 1, 2], [0], [0]>} : vector<4x16x16xbf16>, vector<4x16x32xbf16>, vector<4x16x32xf32> -> vector<4x16x32xf32>
    "tpu.trace_stop"() : () -> ()
    %75 = vector.shape_cast %74 : vector<4x16x32xf32> to vector<64x32xf32>
    %c0_23 = arith.constant 0 : index
    %c32 = arith.constant 32 : index
    %76 = vector.load %arg14[%c0_23, %c32] : memref<64x128xf32, #tpu.memory_space<vmem>>, vector<64x32xf32>
    tpu.vector_store %arg14[%c0_23, %c32], %75 {strides = array<i32>} : memref<64x128xf32, #tpu.memory_space<vmem>>, vector<64x32xf32>,
    %77 = vector.extract_strided_slice %30 {offsets = [0, 0, 64], sizes = [4, 16, 32], strides = [1, 1, 1]} : vector<4x16x128xf32> to vector<4x16x32xf32>
    %78 = arith.truncf %77 : vector<4x16x32xf32> to vector<4x16x32xbf16>
    %79 = vector.extract_strided_slice %32 {offsets = [0, 0, 64], sizes = [4, 16, 32], strides = [1, 1, 1]} : vector<4x16x128xf32> to vector<4x16x32xf32>
    %80 = arith.truncf %79 : vector<4x16x32xf32> to vector<4x16x32xbf16>
    %81 = vector.extract_strided_slice %34 {offsets = [0, 0, 64], sizes = [4, 16, 32], strides = [1, 1, 1]} : vector<4x16x128xf32> to vector<4x16x32xf32>
    %82 = arith.truncf %81 : vector<4x16x32xf32> to vector<4x16x32xbf16>
    "tpu.trace_start"() <{level = 10 : i32, message = "bqd,bkd->bqk"}> : () -> ()
    %cst_24 = arith.constant dense<0.000000e+00> : vector<4x16x16xf32>
    %83 = tpu.matmul %78, %80, %cst_24 {dimension_numbers = #tpu.dot_dimension_numbers<[2], [2], [1], [1], [0, 0, 0, 1, 1, 1], [0], [0]>} : vector<4x16x32xbf16>, vector<4x16x32xbf16>, vector<4x16x16xf32> -> vector<4x16x16xf32>
    "tpu.trace_stop"() : () -> ()
    %cst_25 = arith.constant dense<0xFF800000> : vector<4x16xf32>
    %84 = vector.multi_reduction <maximumf>, %83, %cst_25 [2] : vector<4x16x16xf32> to vector<4x16xf32>
    %85 = vector.shape_cast %84 : vector<4x16xf32> to vector<4x16x1xf32>
    %86 = vector.broadcast %85 : vector<4x16x1xf32> to vector<4x16x16xf32>
    %87 = arith.subf %83, %86 : vector<4x16x16xf32>
    %88 = math.exp %87 : vector<4x16x16xf32>
    %cst_26 = arith.constant dense<0.000000e+00> : vector<4x16xf32>
    %89 = vector.multi_reduction <add>, %88, %cst_26 [2] : vector<4x16x16xf32> to vector<4x16xf32>
    %90 = vector.shape_cast %89 : vector<4x16xf32> to vector<4x16x1xf32>
    %91 = tpu.reciprocal %90 {approx = true} : vector<4x16x1xf32> -> vector<4x16x1xf32>
    %92 = vector.broadcast %91 : vector<4x16x1xf32> to vector<4x16x16xf32>
    %93 = arith.mulf %88, %92 : vector<4x16x16xf32>
    %94 = arith.truncf %93 : vector<4x16x16xf32> to vector<4x16x16xbf16>
    "tpu.trace_start"() <{level = 10 : i32, message = "bqk,bkd->bqd"}> : () -> ()
    %cst_27 = arith.constant dense<0.000000e+00> : vector<4x16x32xf32>
    %95 = tpu.matmul %94, %82, %cst_27 {dimension_numbers = #tpu.dot_dimension_numbers<[2], [1], [1], [2], [0, 0, 0, 1, 1, 2], [0], [0]>} : vector<4x16x16xbf16>, vector<4x16x32xbf16>, vector<4x16x32xf32> -> vector<4x16x32xf32>
    "tpu.trace_stop"() : () -> ()
    %96 = vector.shape_cast %95 : vector<4x16x32xf32> to vector<64x32xf32>
    %c0_28 = arith.constant 0 : index
    %c64 = arith.constant 64 : index
    %97 = vector.load %arg14[%c0_28, %c64] : memref<64x128xf32, #tpu.memory_space<vmem>>, vector<64x32xf32>
    tpu.vector_store %arg14[%c0_28, %c64], %96 {strides = array<i32>} : memref<64x128xf32, #tpu.memory_space<vmem>>, vector<64x32xf32>,
    %98 = vector.extract_strided_slice %30 {offsets = [0, 0, 96], sizes = [4, 16, 32], strides = [1, 1, 1]} : vector<4x16x128xf32> to vector<4x16x32xf32>
    %99 = arith.truncf %98 : vector<4x16x32xf32> to vector<4x16x32xbf16>
    %100 = vector.extract_strided_slice %32 {offsets = [0, 0, 96], sizes = [4, 16, 32], strides = [1, 1, 1]} : vector<4x16x128xf32> to vector<4x16x32xf32>
    %101 = arith.truncf %100 : vector<4x16x32xf32> to vector<4x16x32xbf16>
    %102 = vector.extract_strided_slice %34 {offsets = [0, 0, 96], sizes = [4, 16, 32], strides = [1, 1, 1]} : vector<4x16x128xf32> to vector<4x16x32xf32>
    %103 = arith.truncf %102 : vector<4x16x32xf32> to vector<4x16x32xbf16>
    "tpu.trace_start"() <{level = 10 : i32, message = "bqd,bkd->bqk"}> : () -> ()
    %cst_29 = arith.constant dense<0.000000e+00> : vector<4x16x16xf32>
    %104 = tpu.matmul %99, %101, %cst_29 {dimension_numbers = #tpu.dot_dimension_numbers<[2], [2], [1], [1], [0, 0, 0, 1, 1, 1], [0], [0]>} : vector<4x16x32xbf16>, vector<4x16x32xbf16>, vector<4x16x16xf32> -> vector<4x16x16xf32>
    "tpu.trace_stop"() : () -> ()
    %cst_30 = arith.constant dense<0xFF800000> : vector<4x16xf32>
    %105 = vector.multi_reduction <maximumf>, %104, %cst_30 [2] : vector<4x16x16xf32> to vector<4x16xf32>
    %106 = vector.shape_cast %105 : vector<4x16xf32> to vector<4x16x1xf32>
    %107 = vector.broadcast %106 : vector<4x16x1xf32> to vector<4x16x16xf32>
    %108 = arith.subf %104, %107 : vector<4x16x16xf32>
    %109 = math.exp %108 : vector<4x16x16xf32>
    %cst_31 = arith.constant dense<0.000000e+00> : vector<4x16xf32>
    %110 = vector.multi_reduction <add>, %109, %cst_31 [2] : vector<4x16x16xf32> to vector<4x16xf32>
    %111 = vector.shape_cast %110 : vector<4x16xf32> to vector<4x16x1xf32>
    %112 = tpu.reciprocal %111 {approx = true} : vector<4x16x1xf32> -> vector<4x16x1xf32>
    %113 = vector.broadcast %112 : vector<4x16x1xf32> to vector<4x16x16xf32>
    %114 = arith.mulf %109, %113 : vector<4x16x16xf32>
    %115 = arith.truncf %114 : vector<4x16x16xf32> to vector<4x16x16xbf16>
    "tpu.trace_start"() <{level = 10 : i32, message = "bqk,bkd->bqd"}> : () -> ()
    %cst_32 = arith.constant dense<0.000000e+00> : vector<4x16x32xf32>
    %116 = tpu.matmul %115, %103, %cst_32 {dimension_numbers = #tpu.dot_dimension_numbers<[2], [1], [1], [2], [0, 0, 0, 1, 1, 2], [0], [0]>} : vector<4x16x16xbf16>, vector<4x16x32xbf16>, vector<4x16x32xf32> -> vector<4x16x32xf32>
    "tpu.trace_stop"() : () -> ()
    %117 = vector.shape_cast %116 : vector<4x16x32xf32> to vector<64x32xf32>
    %c0_33 = arith.constant 0 : index
    %c96 = arith.constant 96 : index
    %118 = vector.load %arg14[%c0_33, %c96] : memref<64x128xf32, #tpu.memory_space<vmem>>, vector<64x32xf32>
    tpu.vector_store %arg14[%c0_33, %c96], %117 {strides = array<i32>} : memref<64x128xf32, #tpu.memory_space<vmem>>, vector<64x32xf32>,
    %c0_34 = arith.constant 0 : index
    %c0_35 = arith.constant 0 : index
    %119 = vector.load %arg14[%c0_34, %c0_35] : memref<64x128xf32, #tpu.memory_space<vmem>>, vector<64x128xf32>
    %120 = arith.truncf %119 : vector<64x128xf32> to vector<64x128xbf16>
    %c0_36 = arith.constant 0 : index
    %c0_37 = arith.constant 0 : index
    %121 = vector.load %arg5[%c0_36, %c0_37] : memref<128x128xbf16, #tpu.memory_space<vmem>>, vector<128x128xbf16>
    %cst_38 = arith.constant dense<0.000000e+00> : vector<64x128xf32>
    %122 = tpu.matmul %120, %121, %cst_38 {dimension_numbers = #tpu.dot_dimension_numbers<[1], [0], [0], [1], [0, 0, 1, 1], [], []>} : vector<64x128xbf16>, vector<128x128xbf16>, vector<64x128xf32> -> vector<64x128xf32>
    %c0_39 = arith.constant 0 : index
    %c0_40 = arith.constant 0 : index
    %123 = vector.load %arg6[%c0_39, %c0_40] : memref<1x128xf32, #tpu.memory_space<vmem>>, vector<1x128xf32>
    %124 = vector.broadcast %123 : vector<1x128xf32> to vector<64x128xf32>
    %125 = arith.addf %122, %124 : vector<64x128xf32>
    %126 = arith.addf %1, %125 : vector<64x128xf32>
    %cst_41 = arith.constant dense<0.000000e+00> : vector<64xf32>
    %127 = vector.multi_reduction <add>, %126, %cst_41 [1] : vector<64x128xf32> to vector<64xf32>
    %128 = vector.shape_cast %127 : vector<64xf32> to vector<64x1xf32>
    %cst_42 = arith.constant 1.280000e+02 : f32
    %129 = vector.broadcast %cst_42 : f32 to vector<64x1xf32>
    %130 = arith.divf %128, %129 : vector<64x1xf32>
    %131 = vector.broadcast %130 : vector<64x1xf32> to vector<64x128xf32>
    %132 = arith.subf %126, %131 : vector<64x128xf32>
    %133 = arith.mulf %132, %132 : vector<64x128xf32>
    %cst_43 = arith.constant dense<0.000000e+00> : vector<64xf32>
    %134 = vector.multi_reduction <add>, %133, %cst_43 [1] : vector<64x128xf32> to vector<64xf32>
    %135 = vector.shape_cast %134 : vector<64xf32> to vector<64x1xf32>
    %cst_44 = arith.constant 1.280000e+02 : f32
    %136 = vector.broadcast %cst_44 : f32 to vector<64x1xf32>
    %137 = arith.divf %135, %136 : vector<64x1xf32>
    %138 = vector.broadcast %130 : vector<64x1xf32> to vector<64x128xf32>
    %139 = arith.subf %126, %138 : vector<64x128xf32>
    %cst_45 = arith.constant 9.99999974E-6 : f32
    %140 = vector.broadcast %cst_45 : f32 to vector<64x1xf32>
    %141 = arith.addf %137, %140 : vector<64x1xf32>
    %142 = math.rsqrt %141 : vector<64x1xf32>
    %143 = vector.broadcast %142 : vector<64x1xf32> to vector<64x128xf32>
    %144 = arith.mulf %139, %143 : vector<64x128xf32>
    %c0_46 = arith.constant 0 : index
    %c0_47 = arith.constant 0 : index
    %145 = vector.load %arg7[%c0_46, %c0_47] : memref<1x128xf32, #tpu.memory_space<vmem>>, vector<1x128xf32>
    %146 = vector.broadcast %145 : vector<1x128xf32> to vector<64x128xf32>
    %147 = arith.mulf %144, %146 : vector<64x128xf32>
    %c0_48 = arith.constant 0 : index
    %c0_49 = arith.constant 0 : index
    %148 = vector.load %arg8[%c0_48, %c0_49] : memref<1x128xf32, #tpu.memory_space<vmem>>, vector<1x128xf32>
    %149 = vector.broadcast %148 : vector<1x128xf32> to vector<64x128xf32>
    %150 = arith.addf %147, %149 : vector<64x128xf32>
    %151 = arith.truncf %150 : vector<64x128xf32> to vector<64x128xbf16>
    %c0_50 = arith.constant 0 : index
    %c0_51 = arith.constant 0 : index
    %152 = vector.load %arg9[%c0_50, %c0_51] : memref<128x256xbf16, #tpu.memory_space<vmem>>, vector<128x256xbf16>
    %cst_52 = arith.constant dense<0.000000e+00> : vector<64x256xf32>
    %153 = tpu.matmul %151, %152, %cst_52 {dimension_numbers = #tpu.dot_dimension_numbers<[1], [0], [0], [1], [0, 0, 1, 1], [], []>} : vector<64x128xbf16>, vector<128x256xbf16>, vector<64x256xf32> -> vector<64x256xf32>
    %c0_53 = arith.constant 0 : index
    %c0_54 = arith.constant 0 : index
    %154 = vector.load %arg10[%c0_53, %c0_54] : memref<1x256xf32, #tpu.memory_space<vmem>>, vector<1x256xf32>
    %155 = vector.broadcast %154 : vector<1x256xf32> to vector<64x256xf32>
    %156 = arith.addf %153, %155 : vector<64x256xf32>
    %cst_55 = arith.constant 5.000000e-01 : f32
    %157 = vector.broadcast %cst_55 : f32 to vector<64x256xf32>
    %158 = arith.mulf %157, %156 : vector<64x256xf32>
    %cst_56 = arith.constant 0.707106769 : f32
    %159 = vector.broadcast %cst_56 : f32 to vector<64x256xf32>
    %160 = arith.mulf %156, %159 : vector<64x256xf32>
    %161 = math.erf %160 : vector<64x256xf32>
    %cst_57 = arith.constant 1.000000e+00 : f32
    %162 = vector.broadcast %cst_57 : f32 to vector<64x256xf32>
    %163 = arith.addf %162, %161 : vector<64x256xf32>
    %164 = arith.mulf %158, %163 : vector<64x256xf32>
    %165 = arith.truncf %164 : vector<64x256xf32> to vector<64x256xbf16>
    %c0_58 = arith.constant 0 : index
    %c0_59 = arith.constant 0 : index
    %166 = vector.load %arg11[%c0_58, %c0_59] : memref<256x128xbf16, #tpu.memory_space<vmem>>, vector<256x128xbf16>
    %cst_60 = arith.constant dense<0.000000e+00> : vector<64x128xf32>
    %167 = tpu.matmul %165, %166, %cst_60 {dimension_numbers = #tpu.dot_dimension_numbers<[1], [0], [0], [1], [0, 0, 1, 1], [], []>} : vector<64x256xbf16>, vector<256x128xbf16>, vector<64x128xf32> -> vector<64x128xf32>
    %c0_61 = arith.constant 0 : index
    %c0_62 = arith.constant 0 : index
    %168 = vector.load %arg12[%c0_61, %c0_62] : memref<1x128xf32, #tpu.memory_space<vmem>>, vector<1x128xf32>
    %169 = vector.broadcast %168 : vector<1x128xf32> to vector<64x128xf32>
    %170 = arith.addf %167, %169 : vector<64x128xf32>
    %171 = arith.addf %126, %170 : vector<64x128xf32>
    %172 = vector.shape_cast %171 : vector<64x128xf32> to vector<4x16x128xf32>
    %c0_63 = arith.constant 0 : index
    %c0_64 = arith.constant 0 : index
    %c0_65 = arith.constant 0 : index
    %173 = vector.load %arg13[%c0_63, %c0_64, %c0_65] : memref<4x16x128xf32, #tpu.memory_space<vmem>>, vector<4x16x128xf32>
    tpu.vector_store %arg13[%c0_63, %c0_64, %c0_65], %172 {strides = array<i32>} : memref<4x16x128xf32, #tpu.memory_space<vmem>>, vector<4x16x128xf32>,
    return
  }
  func.func @transform_0(%arg0: i32) -> (i32, i32, i32) {
    %c0_i32 = arith.constant 0 : i32
    %c0_i32_0 = arith.constant 0 : i32
    %c0_i32_1 = arith.constant 0 : i32
    return %arg0, %c0_i32, %c0_i32_0 : i32, i32, i32
  }
  func.func @transform_1(%arg0: i32) -> (i32, i32) {
    %c0_i32 = arith.constant 0 : i32
    %c0_i32_0 = arith.constant 0 : i32
    %c0_i32_1 = arith.constant 0 : i32
    return %c0_i32, %c0_i32_0 : i32, i32
  }
  func.func @transform_2(%arg0: i32) -> (i32, i32) {
    %c0_i32 = arith.constant 0 : i32
    %c0_i32_0 = arith.constant 0 : i32
    %c0_i32_1 = arith.constant 0 : i32
    return %c0_i32, %c0_i32_0 : i32, i32
  }
  func.func @transform_3(%arg0: i32) -> (i32, i32) {
    %c0_i32 = arith.constant 0 : i32
    %c0_i32_0 = arith.constant 0 : i32
    %c0_i32_1 = arith.constant 0 : i32
    return %c0_i32, %c0_i32_0 : i32, i32
  }
  func.func @transform_4(%arg0: i32) -> (i32, i32) {
    %c0_i32 = arith.constant 0 : i32
    %c0_i32_0 = arith.constant 0 : i32
    %c0_i32_1 = arith.constant 0 : i32
    return %c0_i32, %c0_i32_0 : i32, i32
  }
  func.func @transform_5(%arg0: i32) -> (i32, i32) {
    %c0_i32 = arith.constant 0 : i32
    %c0_i32_0 = arith.constant 0 : i32
    %c0_i32_1 = arith.constant 0 : i32
    return %c0_i32, %c0_i32_0 : i32, i32
  }
  func.func @transform_6(%arg0: i32) -> (i32, i32) {
    %c0_i32 = arith.constant 0 : i32
    %c0_i32_0 = arith.constant 0 : i32
    %c0_i32_1 = arith.constant 0 : i32
    return %c0_i32, %c0_i32_0 : i32, i32
  }
  func.func @transform_7(%arg0: i32) -> (i32, i32) {
    %c0_i32 = arith.constant 0 : i32
    %c0_i32_0 = arith.constant 0 : i32
    %c0_i32_1 = arith.constant 0 : i32
    return %c0_i32, %c0_i32_0 : i32, i32
  }
  func.func @transform_8(%arg0: i32) -> (i32, i32) {
    %c0_i32 = arith.constant 0 : i32
    %c0_i32_0 = arith.constant 0 : i32
    %c0_i32_1 = arith.constant 0 : i32
    return %c0_i32, %c0_i32_0 : i32, i32
  }
  func.func @transform_9(%arg0: i32) -> (i32, i32) {
    %c0_i32 = arith.constant 0 : i32
    %c0_i32_0 = arith.constant 0 : i32
    %c0_i32_1 = arith.constant 0 : i32
    return %c0_i32, %c0_i32_0 : i32, i32
  }
  func.func @transform_10(%arg0: i32) -> (i32, i32) {
    %c0_i32 = arith.constant 0 : i32
    %c0_i32_0 = arith.constant 0 : i32
    %c0_i32_1 = arith.constant 0 : i32
    return %c0_i32, %c0_i32_0 : i32, i32
  }
  func.func @transform_11(%arg0: i32) -> (i32, i32) {
    %c0_i32 = arith.constant 0 : i32
    %c0_i32_0 = arith.constant 0 : i32
    %c0_i32_1 = arith.constant 0 : i32
    return %c0_i32, %c0_i32_0 : i32, i32
  }
  func.func @transform_12(%arg0: i32) -> (i32, i32, i32) {
    %c0_i32 = arith.constant 0 : i32
    %c0_i32_0 = arith.constant 0 : i32
    %c0_i32_1 = arith.constant 0 : i32
    return %arg0, %c0_i32, %c0_i32_0 : i32, i32, i32
  }
}

module attributes {stable_mosaic.version = 11 : i64} {
  func.func @_transformer_block_kernel(%arg0: i32, %arg1: memref<4x16x128xf32, #tpu.memory_space<vmem>>, %arg2: memref<1x128xf32, #tpu.memory_space<vmem>>, %arg3: memref<1x128xf32, #tpu.memory_space<vmem>>, %arg4: memref<128x384xbf16, #tpu.memory_space<vmem>>, %arg5: memref<128x128xbf16, #tpu.memory_space<vmem>>, %arg6: memref<1x128xf32, #tpu.memory_space<vmem>>, %arg7: memref<1x128xf32, #tpu.memory_space<vmem>>, %arg8: memref<1x128xf32, #tpu.memory_space<vmem>>, %arg9: memref<128x256xbf16, #tpu.memory_space<vmem>>, %arg10: memref<1x256xf32, #tpu.memory_space<vmem>>, %arg11: memref<256x128xbf16, #tpu.memory_space<vmem>>, %arg12: memref<1x128xf32, #tpu.memory_space<vmem>>, %arg13: memref<4x16x128xf32, #tpu.memory_space<vmem>>, %arg14: memref<64x128xf32, #tpu.memory_space<vmem>>) attributes {dimension_semantics = [#tpu.dimension_semantics<parallel>], iteration_bounds = array<i64: 2>, scalar_prefetch = 0 : i64, scratch_operands = 1 : i64, tpu.core_type = #tpu.core_type<tc>, window_params = [{transform_indices = @transform_0, window_bounds = array<i64: 4, 16, 128>}, {pipeline_mode = #tpu.pipeline_mode<synchronous>, transform_indices = @transform_1, window_bounds = array<i64: 1, 128>}, {pipeline_mode = #tpu.pipeline_mode<synchronous>, transform_indices = @transform_2, window_bounds = array<i64: 1, 128>}, {pipeline_mode = #tpu.pipeline_mode<synchronous>, transform_indices = @transform_3, window_bounds = array<i64: 128, 384>}, {pipeline_mode = #tpu.pipeline_mode<synchronous>, transform_indices = @transform_4, window_bounds = array<i64: 128, 128>}, {pipeline_mode = #tpu.pipeline_mode<synchronous>, transform_indices = @transform_5, window_bounds = array<i64: 1, 128>}, {pipeline_mode = #tpu.pipeline_mode<synchronous>, transform_indices = @transform_6, window_bounds = array<i64: 1, 128>}, {pipeline_mode = #tpu.pipeline_mode<synchronous>, transform_indices = @transform_7, window_bounds = array<i64: 1, 128>}, {pipeline_mode = #tpu.pipeline_mode<synchronous>, transform_indices = @transform_8, window_bounds = array<i64: 128, 256>}, {pipeline_mode = #tpu.pipeline_mode<synchronous>, transform_indices = @transform_9, window_bounds = array<i64: 1, 256>}, {pipeline_mode = #tpu.pipeline_mode<synchronous>, transform_indices = @transform_10, window_bounds = array<i64: 256, 128>}, {pipeline_mode = #tpu.pipeline_mode<synchronous>, transform_indices = @transform_11, window_bounds = array<i64: 1, 128>}, {transform_indices = @transform_12, window_bounds = array<i64: 4, 16, 128>}]} {
    %c0 = arith.constant 0 : index
    %c0_0 = arith.constant 0 : index
    %c0_1 = arith.constant 0 : index
    %0 = vector.load %arg1[%c0, %c0_0, %c0_1] : memref<4x16x128xf32, #tpu.memory_space<vmem>>, vector<4x16x128xf32>
    %1 = vector.shape_cast %0 : vector<4x16x128xf32> to vector<64x128xf32>
    %cst = arith.constant dense<0.000000e+00> : vector<64xf32>
    %2 = vector.multi_reduction <add>, %1, %cst [1] : vector<64x128xf32> to vector<64xf32>
    %3 = vector.shape_cast %2 : vector<64xf32> to vector<64x1xf32>
    %cst_2 = arith.constant 1.280000e+02 : f32
    %4 = vector.broadcast %cst_2 : f32 to vector<64x1xf32>
    %5 = arith.divf %3, %4 : vector<64x1xf32>
    %6 = vector.broadcast %5 : vector<64x1xf32> to vector<64x128xf32>
    %7 = arith.subf %1, %6 : vector<64x128xf32>
    %8 = arith.mulf %7, %7 : vector<64x128xf32>
    %cst_3 = arith.constant dense<0.000000e+00> : vector<64xf32>
    %9 = vector.multi_reduction <add>, %8, %cst_3 [1] : vector<64x128xf32> to vector<64xf32>
    %10 = vector.shape_cast %9 : vector<64xf32> to vector<64x1xf32>
    %cst_4 = arith.constant 1.280000e+02 : f32
    %11 = vector.broadcast %cst_4 : f32 to vector<64x1xf32>
    %12 = arith.divf %10, %11 : vector<64x1xf32>
    %13 = vector.broadcast %5 : vector<64x1xf32> to vector<64x128xf32>
    %14 = arith.subf %1, %13 : vector<64x128xf32>
    %cst_5 = arith.constant 9.99999974E-6 : f32
    %15 = vector.broadcast %cst_5 : f32 to vector<64x1xf32>
    %16 = arith.addf %12, %15 : vector<64x1xf32>
    %17 = math.rsqrt %16 : vector<64x1xf32>
    %18 = vector.broadcast %17 : vector<64x1xf32> to vector<64x128xf32>
    %19 = arith.mulf %14, %18 : vector<64x128xf32>
    %c0_6 = arith.constant 0 : index
    %c0_7 = arith.constant 0 : index
    %20 = vector.load %arg2[%c0_6, %c0_7] : memref<1x128xf32, #tpu.memory_space<vmem>>, vector<1x128xf32>
    %21 = vector.broadcast %20 : vector<1x128xf32> to vector<64x128xf32>
    %22 = arith.mulf %19, %21 : vector<64x128xf32>
    %c0_8 = arith.constant 0 : index
    %c0_9 = arith.constant 0 : index
    %23 = vector.load %arg3[%c0_8, %c0_9] : memref<1x128xf32, #tpu.memory_space<vmem>>, vector<1x128xf32>
    %24 = vector.broadcast %23 : vector<1x128xf32> to vector<64x128xf32>
    %25 = arith.addf %22, %24 : vector<64x128xf32>
    %26 = arith.truncf %25 : vector<64x128xf32> to vector<64x128xbf16>
    %c0_10 = arith.constant 0 : index
    %c0_11 = arith.constant 0 : index
    %27 = vector.load %arg4[%c0_10, %c0_11] : memref<128x384xbf16, #tpu.memory_space<vmem>>, vector<128x384xbf16>
    %cst_12 = arith.constant dense<0.000000e+00> : vector<64x384xf32>
    %28 = tpu.matmul %26, %27, %cst_12 {dimension_numbers = #tpu.dot_dimension_numbers<[1], [0], [0], [1], [0, 0, 1, 1], [], []>} : vector<64x128xbf16>, vector<128x384xbf16>, vector<64x384xf32> -> vector<64x384xf32>
    %29 = vector.extract_strided_slice %28 {offsets = [0, 0], sizes = [64, 128], strides = [1, 1]} : vector<64x384xf32> to vector<64x128xf32>
    %30 = vector.shape_cast %29 : vector<64x128xf32> to vector<4x16x128xf32>
    %31 = vector.extract_strided_slice %28 {offsets = [0, 128], sizes = [64, 128], strides = [1, 1]} : vector<64x384xf32> to vector<64x128xf32>
    %32 = vector.shape_cast %31 : vector<64x128xf32> to vector<4x16x128xf32>
    %33 = vector.extract_strided_slice %28 {offsets = [0, 256], sizes = [64, 128], strides = [1, 1]} : vector<64x384xf32> to vector<64x128xf32>
    %34 = vector.shape_cast %33 : vector<64x128xf32> to vector<4x16x128xf32>
    %35 = vector.extract_strided_slice %30 {offsets = [0, 0, 0], sizes = [4, 16, 32], strides = [1, 1, 1]} : vector<4x16x128xf32> to vector<4x16x32xf32>
    %36 = arith.truncf %35 : vector<4x16x32xf32> to vector<4x16x32xbf16>
    %37 = vector.extract_strided_slice %32 {offsets = [0, 0, 0], sizes = [4, 16, 32], strides = [1, 1, 1]} : vector<4x16x128xf32> to vector<4x16x32xf32>
    %38 = arith.truncf %37 : vector<4x16x32xf32> to vector<4x16x32xbf16>
    %39 = vector.extract_strided_slice %34 {offsets = [0, 0, 0], sizes = [4, 16, 32], strides = [1, 1, 1]} : vector<4x16x128xf32> to vector<4x16x32xf32>
    %40 = arith.truncf %39 : vector<4x16x32xf32> to vector<4x16x32xbf16>
    "tpu.trace_start"() <{level = 10 : i32, message = "bqd,bkd->bqk"}> : () -> ()
    %cst_13 = arith.constant dense<0.000000e+00> : vector<4x16x16xf32>
    %41 = tpu.matmul %36, %38, %cst_13 {dimension_numbers = #tpu.dot_dimension_numbers<[2], [2], [1], [1], [0, 0, 0, 1, 1, 1], [0], [0]>} : vector<4x16x32xbf16>, vector<4x16x32xbf16>, vector<4x16x16xf32> -> vector<4x16x16xf32>
    "tpu.trace_stop"() : () -> ()
    %cst_14 = arith.constant dense<0xFF800000> : vector<4x16xf32>
    %42 = vector.multi_reduction <maximumf>, %41, %cst_14 [2] : vector<4x16x16xf32> to vector<4x16xf32>
    %43 = vector.shape_cast %42 : vector<4x16xf32> to vector<4x16x1xf32>
    %44 = vector.broadcast %43 : vector<4x16x1xf32> to vector<4x16x16xf32>
    %45 = arith.subf %41, %44 : vector<4x16x16xf32>
    %46 = math.exp %45 : vector<4x16x16xf32>
    %cst_15 = arith.constant dense<0.000000e+00> : vector<4x16xf32>
    %47 = vector.multi_reduction <add>, %46, %cst_15 [2] : vector<4x16x16xf32> to vector<4x16xf32>
    %48 = vector.shape_cast %47 : vector<4x16xf32> to vector<4x16x1xf32>
    %49 = tpu.reciprocal %48 {approx = true} : vector<4x16x1xf32> -> vector<4x16x1xf32>
    %50 = vector.broadcast %49 : vector<4x16x1xf32> to vector<4x16x16xf32>
    %51 = arith.mulf %46, %50 : vector<4x16x16xf32>
    %52 = arith.truncf %51 : vector<4x16x16xf32> to vector<4x16x16xbf16>
    "tpu.trace_start"() <{level = 10 : i32, message = "bqk,bkd->bqd"}> : () -> ()
    %cst_16 = arith.constant dense<0.000000e+00> : vector<4x16x32xf32>
    %53 = tpu.matmul %52, %40, %cst_16 {dimension_numbers = #tpu.dot_dimension_numbers<[2], [1], [1], [2], [0, 0, 0, 1, 1, 2], [0], [0]>} : vector<4x16x16xbf16>, vector<4x16x32xbf16>, vector<4x16x32xf32> -> vector<4x16x32xf32>
    "tpu.trace_stop"() : () -> ()
    %54 = vector.shape_cast %53 : vector<4x16x32xf32> to vector<64x32xf32>
    %c0_17 = arith.constant 0 : index
    %c0_18 = arith.constant 0 : index
    %55 = vector.load %arg14[%c0_17, %c0_18] : memref<64x128xf32, #tpu.memory_space<vmem>>, vector<64x32xf32>
    tpu.vector_store %arg14[%c0_17, %c0_18], %54 {strides = array<i32>} : memref<64x128xf32, #tpu.memory_space<vmem>>, vector<64x32xf32>,
    %56 = vector.extract_strided_slice %30 {offsets = [0, 0, 32], sizes = [4, 16, 32], strides = [1, 1, 1]} : vector<4x16x128xf32> to vector<4x16x32xf32>
    %57 = arith.truncf %56 : vector<4x16x32xf32> to vector<4x16x32xbf16>
    %58 = vector.extract_strided_slice %32 {offsets = [0, 0, 32], sizes = [4, 16, 32], strides = [1, 1, 1]} : vector<4x16x128xf32> to vector<4x16x32xf32>
    %59 = arith.truncf %58 : vector<4x16x32xf32> to vector<4x16x32xbf16>
    %60 = vector.extract_strided_slice %34 {offsets = [0, 0, 32], sizes = [4, 16, 32], strides = [1, 1, 1]} : vector<4x16x128xf32> to vector<4x16x32xf32>
    %61 = arith.truncf %60 : vector<4x16x32xf32> to vector<4x16x32xbf16>
    "tpu.trace_start"() <{level = 10 : i32, message = "bqd,bkd->bqk"}> : () -> ()
    %cst_19 = arith.constant dense<0.000000e+00> : vector<4x16x16xf32>
    %62 = tpu.matmul %57, %59, %cst_19 {dimension_numbers = #tpu.dot_dimension_numbers<[2], [2], [1], [1], [0, 0, 0, 1, 1, 1], [0], [0]>} : vector<4x16x32xbf16>, vector<4x16x32xbf16>, vector<4x16x16xf32> -> vector<4x16x16xf32>
    "tpu.trace_stop"() : () -> ()
    %cst_20 = arith.constant dense<0xFF800000> : vector<4x16xf32>
    %63 = vector.multi_reduction <maximumf>, %62, %cst_20 [2] : vector<4x16x16xf32> to vector<4x16xf32>
    %64 = vector.shape_cast %63 : vector<4x16xf32> to vector<4x16x1xf32>
    %65 = vector.broadcast %64 : vector<4x16x1xf32> to vector<4x16x16xf32>
    %66 = arith.subf %62, %65 : vector<4x16x16xf32>
    %67 = math.exp %66 : vector<4x16x16xf32>
    %cst_21 = arith.constant dense<0.000000e+00> : vector<4x16xf32>
    %68 = vector.multi_reduction <add>, %67, %cst_21 [2] : vector<4x16x16xf32> to vector<4x16xf32>
    %69 = vector.shape_cast %68 : vector<4x16xf32> to vector<4x16x1xf32>
    %70 = tpu.reciprocal %69 {approx = true} : vector<4x16x1xf32> -> vector<4x16x1xf32>
    %71 = vector.broadcast %70 : vector<4x16x1xf32> to vector<4x16x16xf32>
    %72 = arith.mulf %67, %71 : vector<4x16x16xf32>
    %73 = arith.truncf %72 : vector<4x16x16xf32> to vector<4x16x16xbf16>
    "tpu.trace_start"() <{level = 10 : i32, message = "bqk,bkd->bqd"}> : () -> ()
    %cst_22 = arith.constant dense<0.000000e+00> : vector<4x16x32xf32>
    %74 = tpu.matmul %73, %61, %cst_22 {dimension_numbers = #tpu.dot_dimension_numbers<[2], [1], [1], [2], [0, 0, 0, 1, 1, 2], [0], [0]>} : vector<4x16x16xbf16>, vector<4x16x32xbf16>, vector<4x16x32xf32> -> vector<4x16x32xf32>
    "tpu.trace_stop"() : () -> ()
    %75 = vector.shape_cast %74 : vector<4x16x32xf32> to vector<64x32xf32>
    %c0_23 = arith.constant 0 : index
    %c32 = arith.constant 32 : index
    %76 = vector.load %arg14[%c0_23, %c32] : memref<64x128xf32, #tpu.memory_space<vmem>>, vector<64x32xf32>
    tpu.vector_store %arg14[%c0_23, %c32], %75 {strides = array<i32>} : memref<64x128xf32, #tpu.memory_space<vmem>>, vector<64x32xf32>,
    %77 = vector.extract_strided_slice %30 {offsets = [0, 0, 64], sizes = [4, 16, 32], strides = [1, 1, 1]} : vector<4x16x128xf32> to vector<4x16x32xf32>
    %78 = arith.truncf %77 : vector<4x16x32xf32> to vector<4x16x32xbf16>
    %79 = vector.extract_strided_slice %32 {offsets = [0, 0, 64], sizes = [4, 16, 32], strides = [1, 1, 1]} : vector<4x16x128xf32> to vector<4x16x32xf32>
    %80 = arith.truncf %79 : vector<4x16x32xf32> to vector<4x16x32xbf16>
    %81 = vector.extract_strided_slice %34 {offsets = [0, 0, 64], sizes = [4, 16, 32], strides = [1, 1, 1]} : vector<4x16x128xf32> to vector<4x16x32xf32>
    %82 = arith.truncf %81 : vector<4x16x32xf32> to vector<4x16x32xbf16>
    "tpu.trace_start"() <{level = 10 : i32, message = "bqd,bkd->bqk"}> : () -> ()
    %cst_24 = arith.constant dense<0.000000e+00> : vector<4x16x16xf32>
    %83 = tpu.matmul %78, %80, %cst_24 {dimension_numbers = #tpu.dot_dimension_numbers<[2], [2], [1], [1], [0, 0, 0, 1, 1, 1], [0], [0]>} : vector<4x16x32xbf16>, vector<4x16x32xbf16>, vector<4x16x16xf32> -> vector<4x16x16xf32>
    "tpu.trace_stop"() : () -> ()
    %cst_25 = arith.constant dense<0xFF800000> : vector<4x16xf32>
    %84 = vector.multi_reduction <maximumf>, %83, %cst_25 [2] : vector<4x16x16xf32> to vector<4x16xf32>
    %85 = vector.shape_cast %84 : vector<4x16xf32> to vector<4x16x1xf32>
    %86 = vector.broadcast %85 : vector<4x16x1xf32> to vector<4x16x16xf32>
    %87 = arith.subf %83, %86 : vector<4x16x16xf32>
    %88 = math.exp %87 : vector<4x16x16xf32>
    %cst_26 = arith.constant dense<0.000000e+00> : vector<4x16xf32>
    %89 = vector.multi_reduction <add>, %88, %cst_26 [2] : vector<4x16x16xf32> to vector<4x16xf32>
    %90 = vector.shape_cast %89 : vector<4x16xf32> to vector<4x16x1xf32>
    %91 = tpu.reciprocal %90 {approx = true} : vector<4x16x1xf32> -> vector<4x16x1xf32>
    %92 = vector.broadcast %91 : vector<4x16x1xf32> to vector<4x16x16xf32>
    %93 = arith.mulf %88, %92 : vector<4x16x16xf32>
    %94 = arith.truncf %93 : vector<4x16x16xf32> to vector<4x16x16xbf16>
    "tpu.trace_start"() <{level = 10 : i32, message = "bqk,bkd->bqd"}> : () -> ()
    %cst_27 = arith.constant dense<0.000000e+00> : vector<4x16x32xf32>
    %95 = tpu.matmul %94, %82, %cst_27 {dimension_numbers = #tpu.dot_dimension_numbers<[2], [1], [1], [2], [0, 0, 0, 1, 1, 2], [0], [0]>} : vector<4x16x16xbf16>, vector<4x16x32xbf16>, vector<4x16x32xf32> -> vector<4x16x32xf32>
    "tpu.trace_stop"() : () -> ()
    %96 = vector.shape_cast %95 : vector<4x16x32xf32> to vector<64x32xf32>
    %c0_28 = arith.constant 0 : index
    %c64 = arith.constant 64 : index
    %97 = vector.load %arg14[%c0_28, %c64] : memref<64x128xf32, #tpu.memory_space<vmem>>, vector<64x32xf32>
    tpu.vector_store %arg14[%c0_28, %c64], %96 {strides = array<i32>} : memref<64x128xf32, #tpu.memory_space<vmem>>, vector<64x32xf32>,
    %98 = vector.extract_strided_slice %30 {offsets = [0, 0, 96], sizes = [4, 16, 32], strides = [1, 1, 1]} : vector<4x16x128xf32> to vector<4x16x32xf32>
    %99 = arith.truncf %98 : vector<4x16x32xf32> to vector<4x16x32xbf16>
    %100 = vector.extract_strided_slice %32 {offsets = [0, 0, 96], sizes = [4, 16, 32], strides = [1, 1, 1]} : vector<4x16x128xf32> to vector<4x16x32xf32>
    %101 = arith.truncf %100 : vector<4x16x32xf32> to vector<4x16x32xbf16>
    %102 = vector.extract_strided_slice %34 {offsets = [0, 0, 96], sizes = [4, 16, 32], strides = [1, 1, 1]} : vector<4x16x128xf32> to vector<4x16x32xf32>
    %103 = arith.truncf %102 : vector<4x16x32xf32> to vector<4x16x32xbf16>
    "tpu.trace_start"() <{level = 10 : i32, message = "bqd,bkd->bqk"}> : () -> ()
    %cst_29 = arith.constant dense<0.000000e+00> : vector<4x16x16xf32>
    %104 = tpu.matmul %99, %101, %cst_29 {dimension_numbers = #tpu.dot_dimension_numbers<[2], [2], [1], [1], [0, 0, 0, 1, 1, 1], [0], [0]>} : vector<4x16x32xbf16>, vector<4x16x32xbf16>, vector<4x16x16xf32> -> vector<4x16x16xf32>
    "tpu.trace_stop"() : () -> ()
    %cst_30 = arith.constant dense<0xFF800000> : vector<4x16xf32>
    %105 = vector.multi_reduction <maximumf>, %104, %cst_30 [2] : vector<4x16x16xf32> to vector<4x16xf32>
    %106 = vector.shape_cast %105 : vector<4x16xf32> to vector<4x16x1xf32>
    %107 = vector.broadcast %106 : vector<4x16x1xf32> to vector<4x16x16xf32>
    %108 = arith.subf %104, %107 : vector<4x16x16xf32>
    %109 = math.exp %108 : vector<4x16x16xf32>
    %cst_31 = arith.constant dense<0.000000e+00> : vector<4x16xf32>
    %110 = vector.multi_reduction <add>, %109, %cst_31 [2] : vector<4x16x16xf32> to vector<4x16xf32>
    %111 = vector.shape_cast %110 : vector<4x16xf32> to vector<4x16x1xf32>
    %112 = tpu.reciprocal %111 {approx = true} : vector<4x16x1xf32> -> vector<4x16x1xf32>
    %113 = vector.broadcast %112 : vector<4x16x1xf32> to vector<4x16x16xf32>
    %114 = arith.mulf %109, %113 : vector<4x16x16xf32>
    %115 = arith.truncf %114 : vector<4x16x16xf32> to vector<4x16x16xbf16>
    "tpu.trace_start"() <{level = 10 : i32, message = "bqk,bkd->bqd"}> : () -> ()
    %cst_32 = arith.constant dense<0.000000e+00> : vector<4x16x32xf32>
    %116 = tpu.matmul %115, %103, %cst_32 {dimension_numbers = #tpu.dot_dimension_numbers<[2], [1], [1], [2], [0, 0, 0, 1, 1, 2], [0], [0]>} : vector<4x16x16xbf16>, vector<4x16x32xbf16>, vector<4x16x32xf32> -> vector<4x16x32xf32>
    "tpu.trace_stop"() : () -> ()
    %117 = vector.shape_cast %116 : vector<4x16x32xf32> to vector<64x32xf32>
    %c0_33 = arith.constant 0 : index
    %c96 = arith.constant 96 : index
    %118 = vector.load %arg14[%c0_33, %c96] : memref<64x128xf32, #tpu.memory_space<vmem>>, vector<64x32xf32>
    tpu.vector_store %arg14[%c0_33, %c96], %117 {strides = array<i32>} : memref<64x128xf32, #tpu.memory_space<vmem>>, vector<64x32xf32>,
    %c0_34 = arith.constant 0 : index
    %c0_35 = arith.constant 0 : index
    %119 = vector.load %arg14[%c0_34, %c0_35] : memref<64x128xf32, #tpu.memory_space<vmem>>, vector<64x128xf32>
    %120 = arith.truncf %119 : vector<64x128xf32> to vector<64x128xbf16>
    %c0_36 = arith.constant 0 : index
    %c0_37 = arith.constant 0 : index
    %121 = vector.load %arg5[%c0_36, %c0_37] : memref<128x128xbf16, #tpu.memory_space<vmem>>, vector<128x128xbf16>
    %cst_38 = arith.constant dense<0.000000e+00> : vector<64x128xf32>
    %122 = tpu.matmul %120, %121, %cst_38 {dimension_numbers = #tpu.dot_dimension_numbers<[1], [0], [0], [1], [0, 0, 1, 1], [], []>} : vector<64x128xbf16>, vector<128x128xbf16>, vector<64x128xf32> -> vector<64x128xf32>
    %c0_39 = arith.constant 0 : index
    %c0_40 = arith.constant 0 : index
    %123 = vector.load %arg6[%c0_39, %c0_40] : memref<1x128xf32, #tpu.memory_space<vmem>>, vector<1x128xf32>
    %124 = vector.broadcast %123 : vector<1x128xf32> to vector<64x128xf32>
    %125 = arith.addf %122, %124 : vector<64x128xf32>
    %126 = arith.addf %1, %125 : vector<64x128xf32>
    %cst_41 = arith.constant dense<0.000000e+00> : vector<64xf32>
    %127 = vector.multi_reduction <add>, %126, %cst_41 [1] : vector<64x128xf32> to vector<64xf32>
    %128 = vector.shape_cast %127 : vector<64xf32> to vector<64x1xf32>
    %cst_42 = arith.constant 1.280000e+02 : f32
    %129 = vector.broadcast %cst_42 : f32 to vector<64x1xf32>
    %130 = arith.divf %128, %129 : vector<64x1xf32>
    %131 = vector.broadcast %130 : vector<64x1xf32> to vector<64x128xf32>
    %132 = arith.subf %126, %131 : vector<64x128xf32>
    %133 = arith.mulf %132, %132 : vector<64x128xf32>
    %cst_43 = arith.constant dense<0.000000e+00> : vector<64xf32>
    %134 = vector.multi_reduction <add>, %133, %cst_43 [1] : vector<64x128xf32> to vector<64xf32>
    %135 = vector.shape_cast %134 : vector<64xf32> to vector<64x1xf32>
    %cst_44 = arith.constant 1.280000e+02 : f32
    %136 = vector.broadcast %cst_44 : f32 to vector<64x1xf32>
    %137 = arith.divf %135, %136 : vector<64x1xf32>
    %138 = vector.broadcast %130 : vector<64x1xf32> to vector<64x128xf32>
    %139 = arith.subf %126, %138 : vector<64x128xf32>
    %cst_45 = arith.constant 9.99999974E-6 : f32
    %140 = vector.broadcast %cst_45 : f32 to vector<64x1xf32>
    %141 = arith.addf %137, %140 : vector<64x1xf32>
    %142 = math.rsqrt %141 : vector<64x1xf32>
    %143 = vector.broadcast %142 : vector<64x1xf32> to vector<64x128xf32>
    %144 = arith.mulf %139, %143 : vector<64x128xf32>
    %c0_46 = arith.constant 0 : index
    %c0_47 = arith.constant 0 : index
    %145 = vector.load %arg7[%c0_46, %c0_47] : memref<1x128xf32, #tpu.memory_space<vmem>>, vector<1x128xf32>
    %146 = vector.broadcast %145 : vector<1x128xf32> to vector<64x128xf32>
    %147 = arith.mulf %144, %146 : vector<64x128xf32>
    %c0_48 = arith.constant 0 : index
    %c0_49 = arith.constant 0 : index
    %148 = vector.load %arg8[%c0_48, %c0_49] : memref<1x128xf32, #tpu.memory_space<vmem>>, vector<1x128xf32>
    %149 = vector.broadcast %148 : vector<1x128xf32> to vector<64x128xf32>
    %150 = arith.addf %147, %149 : vector<64x128xf32>
    %151 = arith.truncf %150 : vector<64x128xf32> to vector<64x128xbf16>
    %c0_50 = arith.constant 0 : index
    %c0_51 = arith.constant 0 : index
    %152 = vector.load %arg9[%c0_50, %c0_51] : memref<128x256xbf16, #tpu.memory_space<vmem>>, vector<128x256xbf16>
    %cst_52 = arith.constant dense<0.000000e+00> : vector<64x256xf32>
    %153 = tpu.matmul %151, %152, %cst_52 {dimension_numbers = #tpu.dot_dimension_numbers<[1], [0], [0], [1], [0, 0, 1, 1], [], []>} : vector<64x128xbf16>, vector<128x256xbf16>, vector<64x256xf32> -> vector<64x256xf32>
    %c0_53 = arith.constant 0 : index
    %c0_54 = arith.constant 0 : index
    %154 = vector.load %arg10[%c0_53, %c0_54] : memref<1x256xf32, #tpu.memory_space<vmem>>, vector<1x256xf32>
    %155 = vector.broadcast %154 : vector<1x256xf32> to vector<64x256xf32>
    %156 = arith.addf %153, %155 : vector<64x256xf32>
    %cst_55 = arith.constant 5.000000e-01 : f32
    %157 = vector.broadcast %cst_55 : f32 to vector<64x256xf32>
    %158 = arith.mulf %157, %156 : vector<64x256xf32>
    %cst_56 = arith.constant 0.707106769 : f32
    %159 = vector.broadcast %cst_56 : f32 to vector<64x256xf32>
    %160 = arith.mulf %156, %159 : vector<64x256xf32>
    %161 = math.erf %160 : vector<64x256xf32>
    %cst_57 = arith.constant 1.000000e+00 : f32
    %162 = vector.broadcast %cst_57 : f32 to vector<64x256xf32>
    %163 = arith.addf %162, %161 : vector<64x256xf32>
    %164 = arith.mulf %158, %163 : vector<64x256xf32>
    %165 = arith.truncf %164 : vector<64x256xf32> to vector<64x256xbf16>
    %c0_58 = arith.constant 0 : index
    %c0_59 = arith.constant 0 : index
    %166 = vector.load %arg11[%c0_58, %c0_59] : memref<256x128xbf16, #tpu.memory_space<vmem>>, vector<256x128xbf16>
    %cst_60 = arith.constant dense<0.000000e+00> : vector<64x128xf32>
    %167 = tpu.matmul %165, %166, %cst_60 {dimension_numbers = #tpu.dot_dimension_numbers<[1], [0], [0], [1], [0, 0, 1, 1], [], []>} : vector<64x256xbf16>, vector<256x128xbf16>, vector<64x128xf32> -> vector<64x128xf32>
    %c0_61 = arith.constant 0 : index
    %c0_62 = arith.constant 0 : index
    %168 = vector.load %arg12[%c0_61, %c0_62] : memref<1x128xf32, #tpu.memory_space<vmem>>, vector<1x128xf32>
    %169 = vector.broadcast %168 : vector<1x128xf32> to vector<64x128xf32>
    %170 = arith.addf %167, %169 : vector<64x128xf32>
    %171 = arith.addf %126, %170 : vector<64x128xf32>
    %172 = vector.shape_cast %171 : vector<64x128xf32> to vector<4x16x128xf32>
    %c0_63 = arith.constant 0 : index
    %c0_64 = arith.constant 0 : index
    %c0_65 = arith.constant 0 : index
    %173 = vector.load %arg13[%c0_63, %c0_64, %c0_65] : memref<4x16x128xf32, #tpu.memory_space<vmem>>, vector<4x16x128xf32>
    tpu.vector_store %arg13[%c0_63, %c0_64, %c0_65], %172 {strides = array<i32>} : memref<4x16x128xf32, #tpu.memory_space<vmem>>, vector<4x16x128xf32>,
    return
  }
  func.func @transform_0(%arg0: i32) -> (i32, i32, i32) {
    %c0_i32 = arith.constant 0 : i32
    %c0_i32_0 = arith.constant 0 : i32
    %c0_i32_1 = arith.constant 0 : i32
    return %arg0, %c0_i32, %c0_i32_0 : i32, i32, i32
  }
  func.func @transform_1(%arg0: i32) -> (i32, i32) {
    %c0_i32 = arith.constant 0 : i32
    %c0_i32_0 = arith.constant 0 : i32
    %c0_i32_1 = arith.constant 0 : i32
    return %c0_i32, %c0_i32_0 : i32, i32
  }
  func.func @transform_2(%arg0: i32) -> (i32, i32) {
    %c0_i32 = arith.constant 0 : i32
    %c0_i32_0 = arith.constant 0 : i32
    %c0_i32_1 = arith.constant 0 : i32
    return %c0_i32, %c0_i32_0 : i32, i32
  }
  func.func @transform_3(%arg0: i32) -> (i32, i32) {
    %c0_i32 = arith.constant 0 : i32
    %c0_i32_0 = arith.constant 0 : i32
    %c0_i32_1 = arith.constant 0 : i32
    return %c0_i32, %c0_i32_0 : i32, i32
  }
  func.func @transform_4(%arg0: i32) -> (i32, i32) {
    %c0_i32 = arith.constant 0 : i32
    %c0_i32_0 = arith.constant 0 : i32
    %c0_i32_1 = arith.constant 0 : i32
    return %c0_i32, %c0_i32_0 : i32, i32
  }
  func.func @transform_5(%arg0: i32) -> (i32, i32) {
    %c0_i32 = arith.constant 0 : i32
    %c0_i32_0 = arith.constant 0 : i32
    %c0_i32_1 = arith.constant 0 : i32
    return %c0_i32, %c0_i32_0 : i32, i32
  }
  func.func @transform_6(%arg0: i32) -> (i32, i32) {
    %c0_i32 = arith.constant 0 : i32
    %c0_i32_0 = arith.constant 0 : i32
    %c0_i32_1 = arith.constant 0 : i32
    return %c0_i32, %c0_i32_0 : i32, i32
  }
  func.func @transform_7(%arg0: i32) -> (i32, i32) {
    %c0_i32 = arith.constant 0 : i32
    %c0_i32_0 = arith.constant 0 : i32
    %c0_i32_1 = arith.constant 0 : i32
    return %c0_i32, %c0_i32_0 : i32, i32
  }
  func.func @transform_8(%arg0: i32) -> (i32, i32) {
    %c0_i32 = arith.constant 0 : i32
    %c0_i32_0 = arith.constant 0 : i32
    %c0_i32_1 = arith.constant 0 : i32
    return %c0_i32, %c0_i32_0 : i32, i32
  }
  func.func @transform_9(%arg0: i32) -> (i32, i32) {
    %c0_i32 = arith.constant 0 : i32
    %c0_i32_0 = arith.constant 0 : i32
    %c0_i32_1 = arith.constant 0 : i32
    return %c0_i32, %c0_i32_0 : i32, i32
  }
  func.func @transform_10(%arg0: i32) -> (i32, i32) {
    %c0_i32 = arith.constant 0 : i32
    %c0_i32_0 = arith.constant 0 : i32
    %c0_i32_1 = arith.constant 0 : i32
    return %c0_i32, %c0_i32_0 : i32, i32
  }
  func.func @transform_11(%arg0: i32) -> (i32, i32) {
    %c0_i32 = arith.constant 0 : i32
    %c0_i32_0 = arith.constant 0 : i32
    %c0_i32_1 = arith.constant 0 : i32
    return %c0_i32, %c0_i32_0 : i32, i32
  }
  func.func @transform_12(%arg0: i32) -> (i32, i32, i32) {
    %c0_i32 = arith.constant 0 : i32
    %c0_i32_0 = arith.constant 0 : i32
    %c0_i32_1 = arith.constant 0 : i32
    return %arg0, %c0_i32, %c0_i32_0 : i32, i32, i32
  }
}

</mosaic_0001>

<llo_original>
// kernel: tpu_custom_call.1
$region0: #{tpu_custom_call.1}
  #allocation0 [shape = 'u32[]', space=smem, size = 0x4, offset = 0x4, fixed_abs, tag = 'smem constant byte address 0x4 - core index']
  #allocation1 [shape = 'u32[144,128]{1,0:T(1,128)}', space=vmem, size = 0x12000, scoped, tag = 'internal scratch']
  #allocation2 [shape = 'f32[64,128]{1,0:T(8,128)}', space=vmem, size = 0x8000, scoped, tag = 'scratch operand']
  %s0 = inlined_call_operand.hbm [shape: f32[8,16,128], index: 0, kind: input, shape index: {}]
  %s1 = inlined_call_operand.vmem [shape: f32[1,128], index: 1, kind: input, shape index: {}]
  %s2 = inlined_call_operand.hbm [shape: f32[1,128], index: 2, kind: input, shape index: {}]
  %s3 = inlined_call_operand.hbm [shape: bf16[128,384], index: 3, kind: input, shape index: {}]
  %s4 = inlined_call_operand.hbm [shape: bf16[128,128], index: 4, kind: input, shape index: {}]
  %s5 = inlined_call_operand.vmem [shape: f32[1,128], index: 5, kind: input, shape index: {}]
  %s6 = inlined_call_operand.vmem [shape: f32[1,128], index: 6, kind: input, shape index: {}]
  %s7 = inlined_call_operand.vmem [shape: f32[1,128], index: 7, kind: input, shape index: {}]
  %s8 = inlined_call_operand.hbm [shape: bf16[128,256], index: 8, kind: input, shape index: {}]
  %s9 = inlined_call_operand.vmem [shape: f32[1,256], index: 9, kind: input, shape index: {}]
  %s10 = inlined_call_operand.hbm [shape: bf16[256,128], index: 10, kind: input, shape index: {}]
  %s11 = inlined_call_operand.vmem [shape: f32[1,128], index: 11, kind: input, shape index: {}]
  %s12 = inlined_call_operand.hbm [shape: f32[8,16,128], index: 12, kind: output, shape index: {}]
  %s13 = sld [smem:[#allocation0]]
  $region105: #{tpu_custom_call.1} parent=0
    _
  %s15 = ssub.s32 1, %s13
  %s16 = scalar_select 0, %s15, %s13
  $region1: #{tpu_custom_call.1} parent=0
    #allocation3 [shape = 'u8[65536]{0}', space=vmem, size = 0x10000, scoped, tag = 'input window, operand 0']
    #allocation4 [shape = 's32[2]{0}', space=sflag, size = 0x8, scoped, tag = 'scoped memory for tpu_custom_call.1']
    #allocation5 [shape = 's32[2]{0}', space=sflag, size = 0x8, scoped, tag = 'scoped memory for tpu_custom_call.1']
    #allocation6 [shape = 'u8[512]{0}', space=vmem, size = 0x400, scoped, tag = 'input window, operand 2, single buffered']
    #allocation7 [shape = 's32[1]{0}', space=sflag, size = 0x4, scoped, tag = 'scoped memory for tpu_custom_call.1']
    #allocation8 [shape = 'u8[98304]{0}', space=vmem, size = 0x18000, scoped, tag = 'input window, operand 3, single buffered']
    #allocation9 [shape = 'u8[32768]{0}', space=vmem, size = 0x8000, scoped, tag = 'input window, operand 4, single buffered']
    #allocation10 [shape = 's32[1]{0}', space=sflag, size = 0x4, scoped, tag = 'scoped memory for tpu_custom_call.1']
    #allocation11 [shape = 'u8[65536]{0}', space=vmem, size = 0x10000, scoped, tag = 'input window, operand 8, single buffered']
    #allocation12 [shape = 'u8[65536]{0}', space=vmem, size = 0x10000, scoped, tag = 'input window, operand 10, single buffered']
    #allocation13 [shape = 's32[1]{0}', space=sflag, size = 0x4, scoped, tag = 'scoped memory for tpu_custom_call.1']
    #allocation14 [shape = 'u8[65536]{0}', space=vmem, size = 0x10000, scoped, tag = 'output window, operand 0']
    %17 = vsyncpa [#allocation4], 0
    %s18 = scalar_lea.sflag [#allocation4], 1
    %19 = vsyncpa %s18, 0
    %20 = vsyncpa [#allocation7], 0
    %21 = vsyncpa [#allocation10], 0
    %22 = vsyncpa [#allocation13], 0
    %23 = vsyncpa [#allocation5], 0
    %s24 = scalar_lea.sflag [#allocation5], 1
    %25 = vsyncpa %s24, 0
    loop: start=0, step=1, limit=4
    $region2: #{tpu_custom_call.1} parent=1 // loop_pre_header
      _
    $region3: #{tpu_custom_call.1} parent=1 // loop_header
      %s27 = sphi 0, %s31
      %p28 = scmp.ge.s32.totalorder %s27, 4
      %s37 = sphi 0, %s39
      %s40 = sphi 0, %s37
      %s41 = sphi 0, %s40
      %s57 = sphi 0, %s41
      %s61 = sphi 0, %s61
      %s63 = sphi 0, %s61
      %s64 = sphi 0, %s63
      %s78 = sphi 0, %s64
      %s82 = sphi 0, %s82
      %s84 = sphi 0, %s82
      %s85 = sphi 0, %s84
      %s99 = sphi 0, %s85
      %s103 = sphi 0, %s103
      %s105 = sphi 0, %s103
      %s106 = sphi 0, %s105
      %s120 = sphi 0, %s106
      %s124 = sphi 0, %s124
      %s126 = sphi 0, %s124
      %s127 = sphi 0, %s126
      %s141 = sphi 0, %s127
      %s145 = sphi 0, %s145
      %s147 = sphi 0, %s145
      %s148 = sphi 0, %s147
      %s162 = sphi 0, %s148
      %s166 = sphi 0, %s166
      %s168 = sphi 0, %s166
      %s169 = sphi 0, %s168
      %s183 = sphi 0, %s169
      %s187 = sphi 0, %s187
      %s189 = sphi 0, %s187
      %s190 = sphi 0, %s189
      %s204 = sphi 0, %s190
      %s208 = sphi 0, %s208
      %s210 = sphi 0, %s208
      %s211 = sphi 0, %s210
      %s225 = sphi 0, %s211
      %s229 = sphi 0, %s229
      %s231 = sphi 0, %s229
      %s232 = sphi 0, %s231
      %s246 = sphi 0, %s232
      %s250 = sphi 0, %s250
      %s252 = sphi 0, %s250
      %s253 = sphi 0, %s252
      %s267 = sphi 0, %s253
      %s271 = sphi 0, %s271
      %s273 = sphi 0, %s271
      %s274 = sphi 0, %s273
      %s288 = sphi 0, %s274
      %s294 = sphi 0, %s296
      %s297 = sphi 0, %s294
      %s298 = sphi 0, %s297
      %s314 = sphi 0, %s298
    $region4: #{tpu_custom_call.1} parent=1 // loop_header_branch
      %30 = sbr.rel (%p28) target = $region8
    $region5: #{tpu_custom_call.1} parent=1 // loop_body
      %s32 = ssub.s32 %s27, 1
      %s33 = ssub.s32 %s27, 2
      %s34 = sadd.s32 %s27, 1
      %s35 = ssub.s32 %s27, %s34
      %p36 = scmp.eq.s32.totalorder %s35, 0
      %s38 = sadd.s32 %s37, 1
      %s39 = scalar_select %p36, %s37, %s38
      %p42 = pneg %p36
      %p43 = scmp.eq.s32.totalorder %s27, 1
      %p44 = por %p42, %p43
      %p45 = scmp.ne.s32.totalorder %s37, %s40
      %p46 = scmp.eq.s32.totalorder %s27, 0
      %p47 = por %p45, %p46
      %p48 = scmp.ne.s32.totalorder %s37, %s40
      %p49 = scmp.eq.s32.totalorder %s32, 1
      %p50 = por %p48, %p49
      %p51 = scmp.ne.s32.totalorder %s40, %s41
      %p52 = scmp.eq.s32.totalorder %s32, 0
      %p53 = por %p51, %p52
      %p54 = scmp.ne.s32.totalorder %s40, %s41
      %p55 = scmp.eq.s32.totalorder %s33, 1
      %p56 = por %p54, %p55
      %p58 = scmp.ne.s32.totalorder %s41, %s57
      %p59 = scmp.eq.s32.totalorder %s33, 0
      %p60 = por %p58, %p59
      %s62 = sadd.s32 %s61, 1
      %p65 = scmp.eq.s32.totalorder %s27, 1
      %p66 = scmp.ne.s32.totalorder %s61, %s63
      %p67 = scmp.eq.s32.totalorder %s27, 0
      %p68 = por %p66, %p67
      %p69 = scmp.ne.s32.totalorder %s61, %s63
      %p70 = scmp.eq.s32.totalorder %s32, 1
      %p71 = por %p69, %p70
      %p72 = scmp.ne.s32.totalorder %s63, %s64
      %p73 = scmp.eq.s32.totalorder %s32, 0
      %p74 = por %p72, %p73
      %p75 = scmp.ne.s32.totalorder %s63, %s64
      %p76 = scmp.eq.s32.totalorder %s33, 1
      %p77 = por %p75, %p76
      %p79 = scmp.ne.s32.totalorder %s64, %s78
      %p80 = scmp.eq.s32.totalorder %s33, 0
      %p81 = por %p79, %p80
      %s83 = sadd.s32 %s82, 1
      %p86 = scmp.eq.s32.totalorder %s27, 1
      %p87 = scmp.ne.s32.totalorder %s82, %s84
      %p88 = scmp.eq.s32.totalorder %s27, 0
      %p89 = por %p87, %p88
      %p90 = scmp.ne.s32.totalorder %s82, %s84
      %p91 = scmp.eq.s32.totalorder %s32, 1
      %p92 = por %p90, %p91
      %p93 = scmp.ne.s32.totalorder %s84, %s85
      %p94 = scmp.eq.s32.totalorder %s32, 0
      %p95 = por %p93, %p94
      %p96 = scmp.ne.s32.totalorder %s84, %s85
      %p97 = scmp.eq.s32.totalorder %s33, 1
      %p98 = por %p96, %p97
      %p100 = scmp.ne.s32.totalorder %s85, %s99
      %p101 = scmp.eq.s32.totalorder %s33, 0
      %p102 = por %p100, %p101
      %s104 = sadd.s32 %s103, 1
      %p107 = scmp.eq.s32.totalorder %s27, 1
      %p108 = scmp.ne.s32.totalorder %s103, %s105
      %p109 = scmp.eq.s32.totalorder %s27, 0
      %p110 = por %p108, %p109
      %p111 = scmp.ne.s32.totalorder %s103, %s105
      %p112 = scmp.eq.s32.totalorder %s32, 1
      %p113 = por %p111, %p112
      %p114 = scmp.ne.s32.totalorder %s105, %s106
      %p115 = scmp.eq.s32.totalorder %s32, 0
      %p116 = por %p114, %p115
      %p117 = scmp.ne.s32.totalorder %s105, %s106
      %p118 = scmp.eq.s32.totalorder %s33, 1
      %p119 = por %p117, %p118
      %p121 = scmp.ne.s32.totalorder %s106, %s120
      %p122 = scmp.eq.s32.totalorder %s33, 0
      %p123 = por %p121, %p122
      %s125 = sadd.s32 %s124, 1
      %p128 = scmp.eq.s32.totalorder %s27, 1
      %p129 = scmp.ne.s32.totalorder %s124, %s126
      %p130 = scmp.eq.s32.totalorder %s27, 0
      %p131 = por %p129, %p130
      %p132 = scmp.ne.s32.totalorder %s124, %s126
      %p133 = scmp.eq.s32.totalorder %s32, 1
      %p134 = por %p132, %p133
      %p135 = scmp.ne.s32.totalorder %s126, %s127
      %p136 = scmp.eq.s32.totalorder %s32, 0
      %p137 = por %p135, %p136
      %p138 = scmp.ne.s32.totalorder %s126, %s127
      %p139 = scmp.eq.s32.totalorder %s33, 1
      %p140 = por %p138, %p139
      %p142 = scmp.ne.s32.totalorder %s127, %s141
      %p143 = scmp.eq.s32.totalorder %s33, 0
      %p144 = por %p142, %p143
      %s146 = sadd.s32 %s145, 1
      %p149 = scmp.eq.s32.totalorder %s27, 1
      %p150 = scmp.ne.s32.totalorder %s145, %s147
      %p151 = scmp.eq.s32.totalorder %s27, 0
      %p152 = por %p150, %p151
      %p153 = scmp.ne.s32.totalorder %s145, %s147
      %p154 = scmp.eq.s32.totalorder %s32, 1
      %p155 = por %p153, %p154
      %p156 = scmp.ne.s32.totalorder %s147, %s148
      %p157 = scmp.eq.s32.totalorder %s32, 0
      %p158 = por %p156, %p157
      %p159 = scmp.ne.s32.totalorder %s147, %s148
      %p160 = scmp.eq.s32.totalorder %s33, 1
      %p161 = por %p159, %p160
      %p163 = scmp.ne.s32.totalorder %s148, %s162
      %p164 = scmp.eq.s32.totalorder %s33, 0
      %p165 = por %p163, %p164
      %s167 = sadd.s32 %s166, 1
      %p170 = scmp.eq.s32.totalorder %s27, 1
      %p171 = scmp.ne.s32.totalorder %s166, %s168
      %p172 = scmp.eq.s32.totalorder %s27, 0
      %p173 = por %p171, %p172
      %p174 = scmp.ne.s32.totalorder %s166, %s168
      %p175 = scmp.eq.s32.totalorder %s32, 1
      %p176 = por %p174, %p175
      %p177 = scmp.ne.s32.totalorder %s168, %s169
      %p178 = scmp.eq.s32.totalorder %s32, 0
      %p179 = por %p177, %p178
      %p180 = scmp.ne.s32.totalorder %s168, %s169
      %p181 = scmp.eq.s32.totalorder %s33, 1
      %p182 = por %p180, %p181
      %p184 = scmp.ne.s32.totalorder %s169, %s183
      %p185 = scmp.eq.s32.totalorder %s33, 0
      %p186 = por %p184, %p185
      %s188 = sadd.s32 %s187, 1
      %p191 = scmp.eq.s32.totalorder %s27, 1
      %p192 = scmp.ne.s32.totalorder %s187, %s189
      %p193 = scmp.eq.s32.totalorder %s27, 0
      %p194 = por %p192, %p193
      %p195 = scmp.ne.s32.totalorder %s187, %s189
      %p196 = scmp.eq.s32.totalorder %s32, 1
      %p197 = por %p195, %p196
      %p198 = scmp.ne.s32.totalorder %s189, %s190
      %p199 = scmp.eq.s32.totalorder %s32, 0
      %p200 = por %p198, %p199
      %p201 = scmp.ne.s32.totalorder %s189, %s190
      %p202 = scmp.eq.s32.totalorder %s33, 1
      %p203 = por %p201, %p202
      %p205 = scmp.ne.s32.totalorder %s190, %s204
      %p206 = scmp.eq.s32.totalorder %s33, 0
      %p207 = por %p205, %p206
      %s209 = sadd.s32 %s208, 1
      %p212 = scmp.eq.s32.totalorder %s27, 1
      %p213 = scmp.ne.s32.totalorder %s208, %s210
      %p214 = scmp.eq.s32.totalorder %s27, 0
      %p215 = por %p213, %p214
      %p216 = scmp.ne.s32.totalorder %s208, %s210
      %p217 = scmp.eq.s32.totalorder %s32, 1
      %p218 = por %p216, %p217
      %p219 = scmp.ne.s32.totalorder %s210, %s211
      %p220 = scmp.eq.s32.totalorder %s32, 0
      %p221 = por %p219, %p220
      %p222 = scmp.ne.s32.totalorder %s210, %s211
      %p223 = scmp.eq.s32.totalorder %s33, 1
      %p224 = por %p222, %p223
      %p226 = scmp.ne.s32.totalorder %s211, %s225
      %p227 = scmp.eq.s32.totalorder %s33, 0
      %p228 = por %p226, %p227
      %s230 = sadd.s32 %s229, 1
      %p233 = scmp.eq.s32.totalorder %s27, 1
      %p234 = scmp.ne.s32.totalorder %s229, %s231
      %p235 = scmp.eq.s32.totalorder %s27, 0
      %p236 = por %p234, %p235
      %p237 = scmp.ne.s32.totalorder %s229, %s231
      %p238 = scmp.eq.s32.totalorder %s32, 1
      %p239 = por %p237, %p238
      %p240 = scmp.ne.s32.totalorder %s231, %s232
      %p241 = scmp.eq.s32.totalorder %s32, 0
      %p242 = por %p240, %p241
      %p243 = scmp.ne.s32.totalorder %s231, %s232
      %p244 = scmp.eq.s32.totalorder %s33, 1
      %p245 = por %p243, %p244
      %p247 = scmp.ne.s32.totalorder %s232, %s246
      %p248 = scmp.eq.s32.totalorder %s33, 0
      %p249 = por %p247, %p248
      %s251 = sadd.s32 %s250, 1
      %p254 = scmp.eq.s32.totalorder %s27, 1
      %p255 = scmp.ne.s32.totalorder %s250, %s252
      %p256 = scmp.eq.s32.totalorder %s27, 0
      %p257 = por %p255, %p256
      %p258 = scmp.ne.s32.totalorder %s250, %s252
      %p259 = scmp.eq.s32.totalorder %s32, 1
      %p260 = por %p258, %p259
      %p261 = scmp.ne.s32.totalorder %s252, %s253
      %p262 = scmp.eq.s32.totalorder %s32, 0
      %p263 = por %p261, %p262
      %p264 = scmp.ne.s32.totalorder %s252, %s253
      %p265 = scmp.eq.s32.totalorder %s33, 1
      %p266 = por %p264, %p265
      %p268 = scmp.ne.s32.totalorder %s253, %s267
      %p269 = scmp.eq.s32.totalorder %s33, 0
      %p270 = por %p268, %p269
      %s272 = sadd.s32 %s271, 1
      %p275 = scmp.eq.s32.totalorder %s27, 1
      %p276 = scmp.ne.s32.totalorder %s271, %s273
      %p277 = scmp.eq.s32.totalorder %s27, 0
      %p278 = por %p276, %p277
      %p279 = scmp.ne.s32.totalorder %s271, %s273
      %p280 = scmp.eq.s32.totalorder %s32, 1
      %p281 = por %p279, %p280
      %p282 = scmp.ne.s32.totalorder %s273, %s274
      %p283 = scmp.eq.s32.totalorder %s32, 0
      %p284 = por %p282, %p283
      %p285 = scmp.ne.s32.totalorder %s273, %s274
      %p286 = scmp.eq.s32.totalorder %s33, 1
      %p287 = por %p285, %p286
      %p289 = scmp.ne.s32.totalorder %s274, %s288
      %p290 = scmp.eq.s32.totalorder %s33, 0
      %p291 = por %p289, %p290
      %s292 = ssub.s32 %s27, %s34
      %p293 = scmp.eq.s32.totalorder %s292, 0
      %s295 = sadd.s32 %s294, 1
      %s296 = scalar_select %p293, %s294, %s295
      %p299 = pneg %p293
      %p300 = scmp.eq.s32.totalorder %s27, 1
      %p301 = por %p299, %p300
      %p302 = scmp.ne.s32.totalorder %s294, %s297
      %p303 = scmp.eq.s32.totalorder %s27, 0
      %p304 = por %p302, %p303
      %p305 = scmp.ne.s32.totalorder %s294, %s297
      %p306 = scmp.eq.s32.totalorder %s32, 1
      %p307 = por %p305, %p306
      %p308 = scmp.ne.s32.totalorder %s297, %s298
      %p309 = scmp.eq.s32.totalorder %s32, 0
      %p310 = por %p308, %p309
      %p311 = scmp.ne.s32.totalorder %s297, %s298
      %p312 = scmp.eq.s32.totalorder %s33, 1
      %p313 = por %p311, %p312
      %p315 = scmp.ne.s32.totalorder %s298, %s314
      %p316 = scmp.eq.s32.totalorder %s33, 0
      %p317 = por %p315, %p316
      %p318 = scmp.le.s32.totalorder 1, %s27
      %p319 = scmp.lt.s32.totalorder %s27, 3
      %p320 = pnand %p318, %p319
      %p321 = pneg %p320
      // Predicated region
      $region9: #{tpu_custom_call.1} parent=5 // pred_check
        _
      $region10: #{tpu_custom_call.1} parent=5 // pred_check_branch
        %323 = sbr.rel (%p320) target = $region12
      $region11: #{tpu_custom_call.1} parent=5 // pred_region
        %s324 = ssub.s32 %s27, 1
        // Predicated region
        $region13: #{tpu_custom_call.1} parent=11 // pred_check
          %p325 = pneg %p74
        $region14: #{tpu_custom_call.1} parent=11 // pred_check_branch
          %327 = sbr.rel (%p325) target = $region16
        $region15: #{tpu_custom_call.1} parent=11 // pred_region
          _
        $region16: #{tpu_custom_call.1} parent=11 // pred_fallthru
          _
        // Predicated region
        $region17: #{tpu_custom_call.1} parent=11 // pred_check
          %p328 = pneg %p95
        $region18: #{tpu_custom_call.1} parent=11 // pred_check_branch
          %330 = sbr.rel (%p328) target = $region20
        $region19: #{tpu_custom_call.1} parent=11 // pred_region
          %s332 = ssub.s32 16, 16
          %333 = vsyncadd [#allocation7], %s332
          %s335 = sshll.u32 [#allocation6], 4
          %s336 = int_to_ptr.vmem [resolvable:$true] %s335
          %338 = dma.hbm_to_vmem [thread:$0]  %s2, 16, %s336, [#allocation7]
        $region20: #{tpu_custom_call.1} parent=11 // pred_fallthru
          _
        // Predicated region
        $region21: #{tpu_custom_call.1} parent=11 // pred_check
          %p339 = pneg %p116
        $region22: #{tpu_custom_call.1} parent=11 // pred_check_branch
          %341 = sbr.rel (%p339) target = $region24
        $region23: #{tpu_custom_call.1} parent=11 // pred_region
          %s343 = ssub.s32 3072, 3072
          %344 = vsyncadd [#allocation7], %s343
          %s345 = sshll.u32 [#allocation8], 4
          %s346 = int_to_ptr.vmem [resolvable:$true] %s345
          %351 = dma.hbm_to_vmem [thread:$0]  %s3, 3072, %s346, [#allocation7], 192, 192, 12
        $region24: #{tpu_custom_call.1} parent=11 // pred_fallthru
          _
        // Predicated region
        $region25: #{tpu_custom_call.1} parent=11 // pred_check
          %p352 = pneg %p137
        $region26: #{tpu_custom_call.1} parent=11 // pred_check_branch
          %354 = sbr.rel (%p352) target = $region28
        $region27: #{tpu_custom_call.1} parent=11 // pred_region
          %s356 = ssub.s32 1024, 1024
          %357 = vsyncadd [#allocation10], %s356
          %s358 = sshll.u32 [#allocation9], 4
          %s359 = int_to_ptr.vmem [resolvable:$true] %s358
          %364 = dma.hbm_to_vmem [thread:$0]  %s4, 1024, %s359, [#allocation10], 64, 64, 4
        $region28: #{tpu_custom_call.1} parent=11 // pred_fallthru
          _
        // Predicated region
        $region29: #{tpu_custom_call.1} parent=11 // pred_check
          %p365 = pneg %p158
        $region30: #{tpu_custom_call.1} parent=11 // pred_check_branch
          %367 = sbr.rel (%p365) target = $region32
        $region31: #{tpu_custom_call.1} parent=11 // pred_region
          _
        $region32: #{tpu_custom_call.1} parent=11 // pred_fallthru
          _
        // Predicated region
        $region33: #{tpu_custom_call.1} parent=11 // pred_check
          %p368 = pneg %p179
        $region34: #{tpu_custom_call.1} parent=11 // pred_check_branch
          %370 = sbr.rel (%p368) target = $region36
        $region35: #{tpu_custom_call.1} parent=11 // pred_region
          _
        $region36: #{tpu_custom_call.1} parent=11 // pred_fallthru
          _
        // Predicated region
        $region37: #{tpu_custom_call.1} parent=11 // pred_check
          %p371 = pneg %p200
        $region38: #{tpu_custom_call.1} parent=11 // pred_check_branch
          %373 = sbr.rel (%p371) target = $region40
        $region39: #{tpu_custom_call.1} parent=11 // pred_region
          _
        $region40: #{tpu_custom_call.1} parent=11 // pred_fallthru
          _
        // Predicated region
        $region41: #{tpu_custom_call.1} parent=11 // pred_check
          %p374 = pneg %p221
        $region42: #{tpu_custom_call.1} parent=11 // pred_check_branch
          %376 = sbr.rel (%p374) target = $region44
        $region43: #{tpu_custom_call.1} parent=11 // pred_region
          %s378 = ssub.s32 2048, 2048
          %379 = vsyncadd [#allocation10], %s378
          %s380 = sshll.u32 [#allocation11], 4
          %s381 = int_to_ptr.vmem [resolvable:$true] %s380
          %386 = dma.hbm_to_vmem [thread:$0]  %s8, 2048, %s381, [#allocation10], 128, 128, 8
        $region44: #{tpu_custom_call.1} parent=11 // pred_fallthru
          _
        // Predicated region
        $region45: #{tpu_custom_call.1} parent=11 // pred_check
          %p387 = pneg %p242
        $region46: #{tpu_custom_call.1} parent=11 // pred_check_branch
          %389 = sbr.rel (%p387) target = $region48
        $region47: #{tpu_custom_call.1} parent=11 // pred_region
          _
        $region48: #{tpu_custom_call.1} parent=11 // pred_fallthru
          _
        // Predicated region
        $region49: #{tpu_custom_call.1} parent=11 // pred_check
          %p390 = pneg %p263
        $region50: #{tpu_custom_call.1} parent=11 // pred_check_branch
          %392 = sbr.rel (%p390) target = $region52
        $region51: #{tpu_custom_call.1} parent=11 // pred_region
          %s394 = ssub.s32 2048, 2048
          %395 = vsyncadd [#allocation13], %s394
          %s396 = sshll.u32 [#allocation12], 4
          %s397 = int_to_ptr.vmem [resolvable:$true] %s396
          %402 = dma.hbm_to_vmem [thread:$0]  %s10, 2048, %s397, [#allocation13], 64, 64, 4
        $region52: #{tpu_custom_call.1} parent=11 // pred_fallthru
          _
        // Predicated region
        $region53: #{tpu_custom_call.1} parent=11 // pred_check
          %p403 = pneg %p284
        $region54: #{tpu_custom_call.1} parent=11 // pred_check_branch
          %405 = sbr.rel (%p403) target = $region56
        $region55: #{tpu_custom_call.1} parent=11 // pred_region
          _
        $region56: #{tpu_custom_call.1} parent=11 // pred_fallthru
          _
      $region12: #{tpu_custom_call.1} parent=5 // pred_fallthru
        _
      %p406 = scmp.lt.s32.totalorder %s27, 2
      // Predicated region
      $region57: #{tpu_custom_call.1} parent=5 // pred_check
        %p407 = pneg %p406
      $region58: #{tpu_custom_call.1} parent=5 // pred_check_branch
        %409 = sbr.rel (%p407) target = $region60
      $region59: #{tpu_custom_call.1} parent=5 // pred_region
        // Predicated region
        $region61: #{tpu_custom_call.1} parent=59 // pred_check
          %p410 = pneg %p47
        $region62: #{tpu_custom_call.1} parent=59 // pred_check_branch
          %412 = sbr.rel (%p410) target = $region64
        $region63: #{tpu_custom_call.1} parent=59 // pred_region
          %s413 = sand.u32 %s37, 1
          %s414 = scalar_lea.sflag [#allocation4], %s413
          %s415 = sand.u32 %s37, 1
          %s416 = smul.addr %s415, 64
          %s417 = scalar_lea.vmem [#allocation3], %s416
          %s418 = smul.u32 4, %s27
          %s420 = ssub.s32 1024, 1024
          %421 = vsyncadd %s414, %s420
          %s422 = smul.addr %s418, 2
          %s423 = smul.addr %s422, 128
          %s424 = scalar_lea.hbm %s0, %s423
          %s425 = sshll.u32 %s417, 4
          %s426 = int_to_ptr.vmem [resolvable:$true] %s425
          %431 = dma.hbm_to_vmem [thread:$0]  %s424, 1024, %s426, %s414, 128, 128, 8
        $region64: #{tpu_custom_call.1} parent=59 // pred_fallthru
          _
      $region60: #{tpu_custom_call.1} parent=5 // pred_fallthru
        _
      %p432 = scmp.le.s32.totalorder 1, %s27
      %p433 = scmp.lt.s32.totalorder %s27, 3
      %p434 = pnand %p432, %p433
      %p435 = pneg %p434
      // Predicated region
      $region65: #{tpu_custom_call.1} parent=5 // pred_check
        _
      $region66: #{tpu_custom_call.1} parent=5 // pred_check_branch
        %437 = sbr.rel (%p434) target = $region68
      $region67: #{tpu_custom_call.1} parent=5 // pred_region
        %s438 = ssub.s32 %s27, 1
        %s439 = sand.u32 %s40, 1
        %s440 = scalar_lea.sflag [#allocation4], %s439
        %s441 = sand.u32 %s40, 1
        %s442 = smul.addr %s441, 64
        %s443 = scalar_lea.vmem [#allocation3], %s442
        // Predicated region
        $region69: #{tpu_custom_call.1} parent=67 // pred_check
          %p444 = pneg %p53
        $region70: #{tpu_custom_call.1} parent=67 // pred_check_branch
          %446 = sbr.rel (%p444) target = $region72
        $region71: #{tpu_custom_call.1} parent=67 // pred_region
          %447 = dma.done %s440, 1024
        $region72: #{tpu_custom_call.1} parent=67 // pred_fallthru
          _
        // Predicated region
        $region73: #{tpu_custom_call.1} parent=67 // pred_check
          %p448 = pneg %p95
        $region74: #{tpu_custom_call.1} parent=67 // pred_check_branch
          %450 = sbr.rel (%p448) target = $region76
        $region75: #{tpu_custom_call.1} parent=67 // pred_region
          %451 = dma.done [#allocation7], 16
        $region76: #{tpu_custom_call.1} parent=67 // pred_fallthru
          _
        // Predicated region
        $region77: #{tpu_custom_call.1} parent=67 // pred_check
          %p452 = pneg %p116
        $region78: #{tpu_custom_call.1} parent=67 // pred_check_branch
          %454 = sbr.rel (%p452) target = $region80
        $region79: #{tpu_custom_call.1} parent=67 // pred_region
          %455 = dma.done [#allocation7], 3072
        $region80: #{tpu_custom_call.1} parent=67 // pred_fallthru
          _
        // Predicated region
        $region81: #{tpu_custom_call.1} parent=67 // pred_check
          %p456 = pneg %p137
        $region82: #{tpu_custom_call.1} parent=67 // pred_check_branch
          %458 = sbr.rel (%p456) target = $region84
        $region83: #{tpu_custom_call.1} parent=67 // pred_region
          %459 = dma.done [#allocation10], 1024
        $region84: #{tpu_custom_call.1} parent=67 // pred_fallthru
          _
        // Predicated region
        $region85: #{tpu_custom_call.1} parent=67 // pred_check
          %p460 = pneg %p221
        $region86: #{tpu_custom_call.1} parent=67 // pred_check_branch
          %462 = sbr.rel (%p460) target = $region88
        $region87: #{tpu_custom_call.1} parent=67 // pred_region
          %463 = dma.done [#allocation10], 2048
        $region88: #{tpu_custom_call.1} parent=67 // pred_fallthru
          _
        // Predicated region
        $region89: #{tpu_custom_call.1} parent=67 // pred_check
          %p464 = pneg %p263
        $region90: #{tpu_custom_call.1} parent=67 // pred_check_branch
          %466 = sbr.rel (%p464) target = $region92
        $region91: #{tpu_custom_call.1} parent=67 // pred_region
          %467 = dma.done [#allocation13], 2048
        $region92: #{tpu_custom_call.1} parent=67 // pred_fallthru
          _
        %s468 = sand.u32 %s40, 1
        %s469 = scalar_lea.sflag [#allocation4], %s468
        %s470 = sand.u32 %s40, 1
        %s471 = smul.addr %s470, 64
        %s472 = scalar_lea.vmem [#allocation3], %s471
        %p473 = pneg %p53
        %p474 = pneg %p50
        %p475 = pneg %p74
        %p476 = pneg %p71
        %p477 = pneg %p95
        %p478 = pneg %p92
        %p479 = pneg %p116
        %p480 = pneg %p113
        %p481 = pneg %p137
        %p482 = pneg %p134
        %p483 = pneg %p158
        %p484 = pneg %p155
        %p485 = pneg %p179
        %p486 = pneg %p176
        %p487 = pneg %p200
        %p488 = pneg %p197
        %p489 = pneg %p221
        %p490 = pneg %p218
        %p491 = pneg %p242
        %p492 = pneg %p239
        %p493 = pneg %p263
        %p494 = pneg %p260
        %p495 = pneg %p284
        %p496 = pneg %p281
        %p497 = pneg %p310
        %p498 = pneg %p307
        %s499 = sand.u32 %s297, 1
        %s500 = scalar_lea.sflag [#allocation5], %s499
        %s501 = sand.u32 %s297, 1
        %s502 = smul.addr %s501, 64
        %s503 = scalar_lea.vmem [#allocation14], %s502
        %s504 = smul.u32 4, %s32
        %s505 = smul.u32 4, %s32
        %v507 = vld [vmem:[%s443] sm:$0xff]
        %v508 = vld [vmem:[%s443 + $0x8] sm:$0xff]
        %v509 = vld [vmem:[%s443 + $0x10] sm:$0xff]
        %v510 = vld [vmem:[%s443 + $0x18] sm:$0xff]
        %v511 = vld [vmem:[%s443 + $0x20] sm:$0xff]
        %v512 = vld [vmem:[%s443 + $0x28] sm:$0xff]
        %v513 = vld [vmem:[%s443 + $0x30] sm:$0xff]
        %v514 = vld [vmem:[%s443 + $0x38] sm:$0xff]
        %515 = vadd.xlane.f32.xlu0 %v507
        %v516 = vpop.xlane.xlu0 %515
        %517 = vadd.xlane.f32.xlu0 %v508
        %v518 = vpop.xlane.xlu0 %517
        %519 = vadd.xlane.f32.xlu0 %v509
        %v520 = vpop.xlane.xlu0 %519
        %521 = vadd.xlane.f32.xlu0 %v510
        %v522 = vpop.xlane.xlu0 %521
        %523 = vadd.xlane.f32.xlu0 %v511
        %v524 = vpop.xlane.xlu0 %523
        %525 = vadd.xlane.f32.xlu0 %v512
        %v526 = vpop.xlane.xlu0 %525
        %527 = vadd.xlane.f32.xlu0 %v513
        %v528 = vpop.xlane.xlu0 %527
        %529 = vadd.xlane.f32.xlu0 %v514
        %v530 = vpop.xlane.xlu0 %529
        %v531 = vrcp.pop 128.0
        %v532 = vmul.f32 %v516, %v531
        %v533 = vmul.f32 %v518, %v531
        %v534 = vmul.f32 %v520, %v531
        %v535 = vmul.f32 %v522, %v531
        %v536 = vmul.f32 %v524, %v531
        %v537 = vmul.f32 %v526, %v531
        %v538 = vmul.f32 %v528, %v531
        %v539 = vmul.f32 %v530, %v531
        %v540 = vsub.f32 %v507, %v532
        %v541 = vsub.f32 %v508, %v533
        %v542 = vsub.f32 %v509, %v534
        %v543 = vsub.f32 %v510, %v535
        %v544 = vsub.f32 %v511, %v536
        %v545 = vsub.f32 %v512, %v537
        %v546 = vsub.f32 %v513, %v538
        %v547 = vsub.f32 %v514, %v539
        %v548 = vmul.f32 %v540, %v540
        %v549 = vmul.f32 %v541, %v541
        %v550 = vmul.f32 %v542, %v542
        %v551 = vmul.f32 %v543, %v543
        %v552 = vmul.f32 %v544, %v544
        %v553 = vmul.f32 %v545, %v545
        %v554 = vmul.f32 %v546, %v546
        %v555 = vmul.f32 %v547, %v547
        %556 = vadd.xlane.f32.xlu0 %v548
        %v557 = vpop.xlane.xlu0 %556
        %558 = vadd.xlane.f32.xlu0 %v549
        %v559 = vpop.xlane.xlu0 %558
        %560 = vadd.xlane.f32.xlu0 %v550
        %v561 = vpop.xlane.xlu0 %560
        %562 = vadd.xlane.f32.xlu0 %v551
        %v563 = vpop.xlane.xlu0 %562
        %564 = vadd.xlane.f32.xlu0 %v552
        %v565 = vpop.xlane.xlu0 %564
        %566 = vadd.xlane.f32.xlu0 %v553
        %v567 = vpop.xlane.xlu0 %566
        %568 = vadd.xlane.f32.xlu0 %v554
        %v569 = vpop.xlane.xlu0 %568
        %570 = vadd.xlane.f32.xlu0 %v555
        %v571 = vpop.xlane.xlu0 %570
        %v572 = vmul.f32 %v557, %v531
        %v573 = vmul.f32 %v559, %v531
        %v574 = vmul.f32 %v561, %v531
        %v575 = vmul.f32 %v563, %v531
        %v576 = vmul.f32 %v565, %v531
        %v577 = vmul.f32 %v567, %v531
        %v578 = vmul.f32 %v569, %v531
        %v579 = vmul.f32 %v571, %v531
        %v580 = vadd.f32 %v572, 1e-05
        %v581 = vadd.f32 %v573, 1e-05
        %v582 = vadd.f32 %v574, 1e-05
        %v583 = vadd.f32 %v575, 1e-05
        %v584 = vadd.f32 %v576, 1e-05
        %v585 = vadd.f32 %v577, 1e-05
        %v586 = vadd.f32 %v578, 1e-05
        %v587 = vadd.f32 %v579, 1e-05
        %v588 = vrsqrt.pop %v580
        %v589 = vrsqrt.pop %v581
        %v590 = vrsqrt.pop %v582
        %v591 = vrsqrt.pop %v583
        %v592 = vrsqrt.pop %v584
        %v593 = vrsqrt.pop %v585
        %v594 = vrsqrt.pop %v586
        %v595 = vrsqrt.pop %v587
        %v596 = vmul.f32 %v540, %v588
        %v597 = vmul.f32 %v541, %v589
        %v598 = vmul.f32 %v542, %v590
        %v599 = vmul.f32 %v543, %v591
        %v600 = vmul.f32 %v544, %v592
        %v601 = vmul.f32 %v545, %v593
        %v602 = vmul.f32 %v546, %v594
        %v603 = vmul.f32 %v547, %v595
        %v604 = vld [vmem:[%s1] sm:$0x1]
        %v606 = vlaneseq
        %v607 = vshrl.u32 %v606, 7
        %v608 = vsub.s32 0, %v607
        %v609 = vrot.slane %v604, %v608
        %v611 = vmul.f32 %v596, %v609
        %v612 = vmul.f32 %v597, %v609
        %v613 = vmul.f32 %v598, %v609
        %v614 = vmul.f32 %v599, %v609
        %v615 = vmul.f32 %v600, %v609
        %v616 = vmul.f32 %v601, %v609
        %v617 = vmul.f32 %v602, %v609
        %v618 = vmul.f32 %v603, %v609
        %v619 = vld [vmem:[#allocation6] sm:$0x1]
        %v621 = vlaneseq
        %v622 = vshrl.u32 %v621, 7
        %v623 = vsub.s32 0, %v622
        %v624 = vrot.slane %v619, %v623
        %v626 = vadd.f32 %v611, %v624
        %v627 = vadd.f32 %v612, %v624
        %v628 = vadd.f32 %v613, %v624
        %v629 = vadd.f32 %v614, %v624
        %v630 = vadd.f32 %v615, %v624
        %v631 = vadd.f32 %v616, %v624
        %v632 = vadd.f32 %v617, %v624
        %v633 = vadd.f32 %v618, %v624
        %v634 = vpack.c.bf16 %v627, %v626
        %v635 = vpack.c.bf16 %v629, %v628
        %v636 = vpack.c.bf16 %v631, %v630
        %v637 = vpack.c.bf16 %v633, %v632
        %v638 = vld [vmem:[#allocation8] sm:$0xff]
        %v639 = vld [vmem:[#allocation8 + $0x8] sm:$0xf]
        %v640 = vld [vmem:[#allocation8 + $0xc] sm:$0xff]
        %v641 = vld [vmem:[#allocation8 + $0x14] sm:$0xf]
        %v642 = vld [vmem:[#allocation8 + $0x18] sm:$0xff]
        %v643 = vld [vmem:[#allocation8 + $0x20] sm:$0xf]
        %v644 = vld [vmem:[#allocation8 + $0x24] sm:$0xff]
        %v645 = vld [vmem:[#allocation8 + $0x2c] sm:$0xf]
        %v646 = vld [vmem:[#allocation8 + $0x30] sm:$0xff]
        %v647 = vld [vmem:[#allocation8 + $0x38] sm:$0xf]
        %v648 = vld [vmem:[#allocation8 + $0x3c] sm:$0xff]
        %v649 = vld [vmem:[#allocation8 + $0x44] sm:$0xf]
        %v650 = vld [vmem:[#allocation8 + $0x48] sm:$0xff]
        %v651 = vld [vmem:[#allocation8 + $0x50] sm:$0xf]
        %v652 = vld [vmem:[#allocation8 + $0x54] sm:$0xff]
        %v653 = vld [vmem:[#allocation8 + $0x5c] sm:$0xf]
        %v654 = vld [vmem:[#allocation8 + $0x60] sm:$0xff]
        %v655 = vld [vmem:[#allocation8 + $0x68] sm:$0xf]
        %v656 = vld [vmem:[#allocation8 + $0x6c] sm:$0xff]
        %v657 = vld [vmem:[#allocation8 + $0x74] sm:$0xf]
        %v658 = vld [vmem:[#allocation8 + $0x78] sm:$0xff]
        %v659 = vld [vmem:[#allocation8 + $0x80] sm:$0xf]
        %v660 = vld [vmem:[#allocation8 + $0x84] sm:$0xff]
        %v661 = vld [vmem:[#allocation8 + $0x8c] sm:$0xf]
        %v662 = vld [vmem:[#allocation8 + $0x90] sm:$0xff]
        %v663 = vld [vmem:[#allocation8 + $0x98] sm:$0xf]
        %v664 = vld [vmem:[#allocation8 + $0x9c] sm:$0xff]
        %v665 = vld [vmem:[#allocation8 + $0xa4] sm:$0xf]
        %v666 = vld [vmem:[#allocation8 + $0xa8] sm:$0xff]
        %v667 = vld [vmem:[#allocation8 + $0xb0] sm:$0xf]
        %v668 = vld [vmem:[#allocation8 + $0xb4] sm:$0xff]
        %v669 = vld [vmem:[#allocation8 + $0xbc] sm:$0xf]
        %v702 = vunpack.c.l.b16 %v638
        %v703 = vunpack.c.h.b16 %v638
        %v704 = vunpack.c.l.b16 %v639
        %v705 = vunpack.c.l.b16 %v640
        %v706 = vunpack.c.h.b16 %v640
        %v707 = vunpack.c.l.b16 %v641
        %v708 = vunpack.c.l.b16 %v642
        %v709 = vunpack.c.h.b16 %v642
        %v710 = vunpack.c.l.b16 %v643
        %v711 = vunpack.c.l.b16 %v644
        %v712 = vunpack.c.h.b16 %v644
        %v713 = vunpack.c.l.b16 %v645
        %v714 = vunpack.c.l.b16 %v646
        %v715 = vunpack.c.h.b16 %v646
        %v716 = vunpack.c.l.b16 %v647
        %v717 = vunpack.c.l.b16 %v648
        %v718 = vunpack.c.h.b16 %v648
        %v719 = vunpack.c.l.b16 %v649
        %v720 = vunpack.c.l.b16 %v650
        %v721 = vunpack.c.h.b16 %v650
        %v722 = vunpack.c.l.b16 %v651
        %v723 = vunpack.c.l.b16 %v652
        %v724 = vunpack.c.h.b16 %v652
        %v725 = vunpack.c.l.b16 %v653
        %v726 = vunpack.c.l.b16 %v654
        %v727 = vunpack.c.h.b16 %v654
        %v728 = vunpack.c.l.b16 %v655
        %v729 = vunpack.c.l.b16 %v656
        %v730 = vunpack.c.h.b16 %v656
        %v731 = vunpack.c.l.b16 %v657
        %v732 = vunpack.c.l.b16 %v658
        %v733 = vunpack.c.h.b16 %v658
        %v734 = vunpack.c.l.b16 %v659
        %v735 = vunpack.c.l.b16 %v660
        %v736 = vunpack.c.h.b16 %v660
        %v737 = vunpack.c.l.b16 %v661
        %v738 = vunpack.c.l.b16 %v662
        %v739 = vunpack.c.h.b16 %v662
        %v740 = vunpack.c.l.b16 %v663
        %v741 = vunpack.c.l.b16 %v664
        %v742 = vunpack.c.h.b16 %v664
        %v743 = vunpack.c.l.b16 %v665
        %v744 = vunpack.c.l.b16 %v666
        %v745 = vunpack.c.h.b16 %v666
        %v746 = vunpack.c.l.b16 %v667
        %v747 = vunpack.c.l.b16 %v668
        %v748 = vunpack.c.h.b16 %v668
        %v749 = vunpack.c.l.b16 %v669
        %v750 = vpack.c.b16 %v705, %v702
        %v751 = vpack.c.b16 %v706, %v703
        %v752 = vpack.c.b16 %v707, %v704
        %v753 = vpack.c.b16 %v711, %v708
        %v754 = vpack.c.b16 %v712, %v709
        %v755 = vpack.c.b16 %v713, %v710
        %v756 = vpack.c.b16 %v717, %v714
        %v757 = vpack.c.b16 %v718, %v715
        %v758 = vpack.c.b16 %v719, %v716
        %v759 = vpack.c.b16 %v723, %v720
        %v760 = vpack.c.b16 %v724, %v721
        %v761 = vpack.c.b16 %v725, %v722
        %v762 = vpack.c.b16 %v729, %v726
        %v763 = vpack.c.b16 %v730, %v727
        %v764 = vpack.c.b16 %v731, %v728
        %v765 = vpack.c.b16 %v735, %v732
        %v766 = vpack.c.b16 %v736, %v733
        %v767 = vpack.c.b16 %v737, %v734
        %v768 = vpack.c.b16 %v741, %v738
        %v769 = vpack.c.b16 %v742, %v739
        %v770 = vpack.c.b16 %v743, %v740
        %v771 = vpack.c.b16 %v747, %v744
        %v772 = vpack.c.b16 %v748, %v745
        %v773 = vpack.c.b16 %v749, %v746
        %798 = vmatprep.subr.bf16.mxu0 %v772
        %799 = vmatpush1.bf16.msra.mxu0 %v771
        %800 = vmatprep.subr.bf16.mxu0 %v769
        %801 = vmatpush1.bf16.msra.mxu0 %v768
        %802 = vmatprep.subr.bf16.mxu0 %v766
        %803 = vmatpush1.bf16.msra.mxu0 %v765
        %804 = vmatprep.subr.bf16.mxu0 %v763
        %805 = vmatpush1.bf16.msra.mxu0 %v762
        %806 = vmatprep.subr.bf16.mxu0 %v760
        %807 = vmatpush1.bf16.msra.mxu0 %v759
        %808 = vmatprep.subr.bf16.mxu0 %v757
        %809 = vmatpush1.bf16.msra.mxu0 %v756
        %810 = vmatprep.subr.bf16.mxu0 %v754
        %811 = vmatpush1.bf16.msra.mxu0 %v753
        %812 = vmatprep.subr.bf16.mxu0 %v751
        %813 = vmatpush1.bf16.msra.mxu0 %v750
        %814 = vmatprep.subr.bf16.mxu0 0
        %815 = vmatpush2.bf16.msra.mxu0 0
        %816 = vmatprep.subr.bf16.mxu0 0
        %817 = vmatpush2.bf16.msra.mxu0 0
        %818 = vmatprep.subr.bf16.mxu0 0
        %819 = vmatpush2.bf16.msra.mxu0 0
        %820 = vmatprep.subr.bf16.mxu0 0
        %821 = vmatpush2.bf16.msra.mxu0 0
        %822 = vmatprep.subr.bf16.mxu0 0
        %823 = vmatpush2.bf16.msra.mxu0 0
        %824 = vmatprep.subr.bf16.mxu0 0
        %825 = vmatpush2.bf16.msra.mxu0 0
        %826 = vmatprep.subr.bf16.mxu0 0
        %827 = vmatpush2.bf16.msra.mxu0 0
        %828 = vmatprep.subr.bf16.mxu0 0
        %829 = vmatpush2.bf16.msra.mxu0 0
        %830 = vmatprep.mubr.bf16.mxu0 0
        %831 = vmatmul.mubr.bf16.gmra.mxu0 %v634
        %v832 = vpop.f32.mrf.mxu0
        %v833 = vadd.f32 0.0, %v832
        %v834 = vpop.f32.mrf.mxu0
        %v835 = vadd.f32 0.0, %v834
        %v836 = vpop.f32.mrf.mxu0
        %v837 = vadd.f32 0.0, %v836
        %v838 = vpop.f32.mrf.mxu0
        %v839 = vadd.f32 0.0, %v838
        %840 = vmatprep.mubr.bf16.mxu0 0
        %841 = vmatmul.mubr.bf16.gmra.mxu0 %v635
        %v842 = vpop.f32.mrf.mxu0
        %v843 = vadd.f32 0.0, %v842
        %v844 = vpop.f32.mrf.mxu0
        %v845 = vadd.f32 0.0, %v844
        %v846 = vpop.f32.mrf.mxu0
        %v847 = vadd.f32 0.0, %v846
        %v848 = vpop.f32.mrf.mxu0
        %v849 = vadd.f32 0.0, %v848
        %850 = vmatprep.mubr.bf16.mxu0 0
        %851 = vmatmul.mubr.bf16.gmra.mxu0 %v636
        %v852 = vpop.f32.mrf.mxu0
        %v853 = vadd.f32 0.0, %v852
        %v854 = vpop.f32.mrf.mxu0
        %v855 = vadd.f32 0.0, %v854
        %v856 = vpop.f32.mrf.mxu0
        %v857 = vadd.f32 0.0, %v856
        %v858 = vpop.f32.mrf.mxu0
        %v859 = vadd.f32 0.0, %v858
        %860 = vmatprep.mubr.bf16.mxu0 0
        %861 = vmatmul.mubr.bf16.gmra.mxu0 %v637
        %v862 = vpop.f32.mrf.mxu0
        %v863 = vadd.f32 0.0, %v862
        %v864 = vpop.f32.mrf.mxu0
        %v865 = vadd.f32 0.0, %v864
        %v866 = vpop.f32.mrf.mxu0
        %v867 = vadd.f32 0.0, %v866
        %v868 = vpop.f32.mrf.mxu0
        %v869 = vadd.f32 0.0, %v868
        %870 = vdwg.mxu0
        %871 = vmatprep.subr.bf16.mxu0 0
        %872 = vmatpush1.bf16.msra.mxu0 %v773
        %873 = vmatprep.subr.bf16.mxu0 0
        %874 = vmatpush1.bf16.msra.mxu0 %v770
        %875 = vmatprep.subr.bf16.mxu0 0
        %876 = vmatpush1.bf16.msra.mxu0 %v767
        %877 = vmatprep.subr.bf16.mxu0 0
        %878 = vmatpush1.bf16.msra.mxu0 %v764
        %879 = vmatprep.subr.bf16.mxu0 0
        %880 = vmatpush1.bf16.msra.mxu0 %v761
        %881 = vmatprep.subr.bf16.mxu0 0
        %882 = vmatpush1.bf16.msra.mxu0 %v758
        %883 = vmatprep.subr.bf16.mxu0 0
        %884 = vmatpush1.bf16.msra.mxu0 %v755
        %885 = vmatprep.subr.bf16.mxu0 0
        %886 = vmatpush1.bf16.msra.mxu0 %v752
        %887 = vmatprep.subr.bf16.mxu0 0
        %888 = vmatpush2.bf16.msra.mxu0 0
        %889 = vmatprep.subr.bf16.mxu0 0
        %890 = vmatpush2.bf16.msra.mxu0 0
        %891 = vmatprep.subr.bf16.mxu0 0
        %892 = vmatpush2.bf16.msra.mxu0 0
        %893 = vmatprep.subr.bf16.mxu0 0
        %894 = vmatpush2.bf16.msra.mxu0 0
        %895 = vmatprep.subr.bf16.mxu0 0
        %896 = vmatpush2.bf16.msra.mxu0 0
        %897 = vmatprep.subr.bf16.mxu0 0
        %898 = vmatpush2.bf16.msra.mxu0 0
        %899 = vmatprep.subr.bf16.mxu0 0
        %900 = vmatpush2.bf16.msra.mxu0 0
        %901 = vmatprep.subr.bf16.mxu0 0
        %902 = vmatpush2.bf16.msra.mxu0 0
        %903 = vmatprep.mubr.bf16.mxu0 0
        %904 = vmatmul.mubr.bf16.gmra.mxu0 %v634
        %v905 = vpop.f32.mrf.mxu0
        %v906 = vadd.f32 0.0, %v905
        %v907 = vpop.f32.mrf.mxu0
        %v908 = vpop.f32.mrf.mxu0
        %v909 = vadd.f32 0.0, %v908
        %v910 = vpop.f32.mrf.mxu0
        %911 = vmatprep.mubr.bf16.mxu0 0
        %912 = vmatmul.mubr.bf16.gmra.mxu0 %v635
        %v913 = vpop.f32.mrf.mxu0
        %v914 = vadd.f32 0.0, %v913
        %v915 = vpop.f32.mrf.mxu0
        %v916 = vpop.f32.mrf.mxu0
        %v917 = vadd.f32 0.0, %v916
        %v918 = vpop.f32.mrf.mxu0
        %919 = vmatprep.mubr.bf16.mxu0 0
        %920 = vmatmul.mubr.bf16.gmra.mxu0 %v636
        %v921 = vpop.f32.mrf.mxu0
        %v922 = vadd.f32 0.0, %v921
        %v923 = vpop.f32.mrf.mxu0
        %v924 = vpop.f32.mrf.mxu0
        %v925 = vadd.f32 0.0, %v924
        %v926 = vpop.f32.mrf.mxu0
        %927 = vmatprep.mubr.bf16.mxu0 0
        %928 = vmatmul.mubr.bf16.gmra.mxu0 %v637
        %v929 = vpop.f32.mrf.mxu0
        %v930 = vadd.f32 0.0, %v929
        %v931 = vpop.f32.mrf.mxu0
        %v932 = vpop.f32.mrf.mxu0
        %v933 = vadd.f32 0.0, %v932
        %v934 = vpop.f32.mrf.mxu0
        %935 = vdwg.mxu0
        %v936 = vpack.c.bf16 %v837, %v833
        %v937 = vpack.c.bf16 %v847, %v843
        %v938 = vpack.c.bf16 %v857, %v853
        %v939 = vpack.c.bf16 %v867, %v863
        %v940 = vpack.c.bf16 %v839, %v835
        %v941 = vpack.c.bf16 %v849, %v845
        %v942 = vpack.c.bf16 %v859, %v855
        %v943 = vpack.c.bf16 %v869, %v865
        %v944 = vpack.c.bf16 %v909, %v906
        %v945 = vpack.c.bf16 %v917, %v914
        %v946 = vpack.c.bf16 %v925, %v922
        %v947 = vpack.c.bf16 %v933, %v930
        %vm948 = vcmask 261120
        %v950 = vsel %vm948, %v936, 0
        %v953 = vsel %vm948, %v940, 0
        %955 = vmatprep.subr.bf16.mxu0 0
        %956 = vmatpush1.bf16.xpose.msra.mxu0 0
        %957 = vmatprep.subr.bf16.mxu0 0
        %958 = vmatpush1.bf16.xpose.msra.mxu0 0
        %959 = vmatprep.subr.bf16.mxu0 0
        %960 = vmatpush1.bf16.xpose.msra.mxu0 0
        %961 = vmatprep.subr.bf16.mxu0 0
        %962 = vmatpush1.bf16.xpose.msra.mxu0 0
        %963 = vmatprep.subr.bf16.mxu0 0
        %964 = vmatpush1.bf16.xpose.msra.mxu0 0
        %965 = vmatprep.subr.bf16.mxu0 0
        %966 = vmatpush1.bf16.xpose.msra.mxu0 0
        %967 = vmatprep.subr.bf16.mxu0 0
        %968 = vmatpush1.bf16.xpose.msra.mxu0 0
        %969 = vmatprep.subr.bf16.mxu0 0
        %970 = vmatpush1.bf16.xpose.msra.mxu0 %v953
        %971 = vmatprep.subr.bf16.mxu0 0
        %972 = vmatpush2.bf16.xpose.msra.mxu0 0
        %973 = vmatprep.subr.bf16.mxu0 0
        %974 = vmatpush2.bf16.xpose.msra.mxu0 0
        %975 = vmatprep.subr.bf16.mxu0 0
        %976 = vmatpush2.bf16.xpose.msra.mxu0 0
        %977 = vmatprep.subr.bf16.mxu0 0
        %978 = vmatpush2.bf16.xpose.msra.mxu0 0
        %979 = vmatprep.subr.bf16.mxu0 0
        %980 = vmatpush2.bf16.xpose.msra.mxu0 0
        %981 = vmatprep.subr.bf16.mxu0 0
        %982 = vmatpush2.bf16.xpose.msra.mxu0 0
        %983 = vmatprep.subr.bf16.mxu0 0
        %984 = vmatpush2.bf16.xpose.msra.mxu0 0
        %985 = vmatprep.subr.bf16.mxu0 0
        %986 = vmatpush2.bf16.xpose.msra.mxu0 0
        %987 = vmatprep.mubr.bf16.mxu0 0
        %988 = vmatmul.mubr.bf16.gmra.mxu0 %v950
        %v989 = vpop.f32.mrf.mxu0
        %v990 = vadd.f32 0.0, %v989
        %v991 = vpop.f32.mrf.mxu0
        %v992 = vpop.f32.mrf.mxu0
        %v993 = vadd.f32 0.0, %v992
        %v994 = vpop.f32.mrf.mxu0
        %995 = vdwg.mxu0
        %v997 = vsel %vm948, %v937, 0
        %v1000 = vsel %vm948, %v941, 0
        %1002 = vmatprep.subr.bf16.mxu0 0
        %1003 = vmatpush1.bf16.xpose.msra.mxu0 0
        %1004 = vmatprep.subr.bf16.mxu0 0
        %1005 = vmatpush1.bf16.xpose.msra.mxu0 0
        %1006 = vmatprep.subr.bf16.mxu0 0
        %1007 = vmatpush1.bf16.xpose.msra.mxu0 0
        %1008 = vmatprep.subr.bf16.mxu0 0
        %1009 = vmatpush1.bf16.xpose.msra.mxu0 0
        %1010 = vmatprep.subr.bf16.mxu0 0
        %1011 = vmatpush1.bf16.xpose.msra.mxu0 0
        %1012 = vmatprep.subr.bf16.mxu0 0
        %1013 = vmatpush1.bf16.xpose.msra.mxu0 0
        %1014 = vmatprep.subr.bf16.mxu0 0
        %1015 = vmatpush1.bf16.xpose.msra.mxu0 0
        %1016 = vmatprep.subr.bf16.mxu0 0
        %1017 = vmatpush1.bf16.xpose.msra.mxu0 %v1000
        %1018 = vmatprep.subr.bf16.mxu0 0
        %1019 = vmatpush2.bf16.xpose.msra.mxu0 0
        %1020 = vmatprep.subr.bf16.mxu0 0
        %1021 = vmatpush2.bf16.xpose.msra.mxu0 0
        %1022 = vmatprep.subr.bf16.mxu0 0
        %1023 = vmatpush2.bf16.xpose.msra.mxu0 0
        %1024 = vmatprep.subr.bf16.mxu0 0
        %1025 = vmatpush2.bf16.xpose.msra.mxu0 0
        %1026 = vmatprep.subr.bf16.mxu0 0
        %1027 = vmatpush2.bf16.xpose.msra.mxu0 0
        %1028 = vmatprep.subr.bf16.mxu0 0
        %1029 = vmatpush2.bf16.xpose.msra.mxu0 0
        %1030 = vmatprep.subr.bf16.mxu0 0
        %1031 = vmatpush2.bf16.xpose.msra.mxu0 0
        %1032 = vmatprep.subr.bf16.mxu0 0
        %1033 = vmatpush2.bf16.xpose.msra.mxu0 0
        %1034 = vmatprep.mubr.bf16.mxu0 0
        %1035 = vmatmul.mubr.bf16.gmra.mxu0 %v997
        %v1036 = vpop.f32.mrf.mxu0
        %v1037 = vadd.f32 0.0, %v1036
        %v1038 = vpop.f32.mrf.mxu0
        %v1039 = vpop.f32.mrf.mxu0
        %v1040 = vadd.f32 0.0, %v1039
        %v1041 = vpop.f32.mrf.mxu0
        %1042 = vdwg.mxu0
        %v1044 = vsel %vm948, %v938, 0
        %v1047 = vsel %vm948, %v942, 0
        %1049 = vmatprep.subr.bf16.mxu0 0
        %1050 = vmatpush1.bf16.xpose.msra.mxu0 0
        %1051 = vmatprep.subr.bf16.mxu0 0
        %1052 = vmatpush1.bf16.xpose.msra.mxu0 0
        %1053 = vmatprep.subr.bf16.mxu0 0
        %1054 = vmatpush1.bf16.xpose.msra.mxu0 0
        %1055 = vmatprep.subr.bf16.mxu0 0
        %1056 = vmatpush1.bf16.xpose.msra.mxu0 0
        %1057 = vmatprep.subr.bf16.mxu0 0
        %1058 = vmatpush1.bf16.xpose.msra.mxu0 0
        %1059 = vmatprep.subr.bf16.mxu0 0
        %1060 = vmatpush1.bf16.xpose.msra.mxu0 0
        %1061 = vmatprep.subr.bf16.mxu0 0
        %1062 = vmatpush1.bf16.xpose.msra.mxu0 0
        %1063 = vmatprep.subr.bf16.mxu0 0
        %1064 = vmatpush1.bf16.xpose.msra.mxu0 %v1047
        %1065 = vmatprep.subr.bf16.mxu0 0
        %1066 = vmatpush2.bf16.xpose.msra.mxu0 0
        %1067 = vmatprep.subr.bf16.mxu0 0
        %1068 = vmatpush2.bf16.xpose.msra.mxu0 0
        %1069 = vmatprep.subr.bf16.mxu0 0
        %1070 = vmatpush2.bf16.xpose.msra.mxu0 0
        %1071 = vmatprep.subr.bf16.mxu0 0
        %1072 = vmatpush2.bf16.xpose.msra.mxu0 0
        %1073 = vmatprep.subr.bf16.mxu0 0
        %1074 = vmatpush2.bf16.xpose.msra.mxu0 0
        %1075 = vmatprep.subr.bf16.mxu0 0
        %1076 = vmatpush2.bf16.xpose.msra.mxu0 0
        %1077 = vmatprep.subr.bf16.mxu0 0
        %1078 = vmatpush2.bf16.xpose.msra.mxu0 0
        %1079 = vmatprep.subr.bf16.mxu0 0
        %1080 = vmatpush2.bf16.xpose.msra.mxu0 0
        %1081 = vmatprep.mubr.bf16.mxu0 0
        %1082 = vmatmul.mubr.bf16.gmra.mxu0 %v1044
        %v1083 = vpop.f32.mrf.mxu0
        %v1084 = vadd.f32 0.0, %v1083
        %v1085 = vpop.f32.mrf.mxu0
        %v1086 = vpop.f32.mrf.mxu0
        %v1087 = vadd.f32 0.0, %v1086
        %v1088 = vpop.f32.mrf.mxu0
        %1089 = vdwg.mxu0
        %v1091 = vsel %vm948, %v939, 0
        %v1094 = vsel %vm948, %v943, 0
        %1096 = vmatprep.subr.bf16.mxu0 0
        %1097 = vmatpush1.bf16.xpose.msra.mxu0 0
        %1098 = vmatprep.subr.bf16.mxu0 0
        %1099 = vmatpush1.bf16.xpose.msra.mxu0 0
        %1100 = vmatprep.subr.bf16.mxu0 0
        %1101 = vmatpush1.bf16.xpose.msra.mxu0 0
        %1102 = vmatprep.subr.bf16.mxu0 0
        %1103 = vmatpush1.bf16.xpose.msra.mxu0 0
        %1104 = vmatprep.subr.bf16.mxu0 0
        %1105 = vmatpush1.bf16.xpose.msra.mxu0 0
        %1106 = vmatprep.subr.bf16.mxu0 0
        %1107 = vmatpush1.bf16.xpose.msra.mxu0 0
        %1108 = vmatprep.subr.bf16.mxu0 0
        %1109 = vmatpush1.bf16.xpose.msra.mxu0 0
        %1110 = vmatprep.subr.bf16.mxu0 0
        %1111 = vmatpush1.bf16.xpose.msra.mxu0 %v1094
        %1112 = vmatprep.subr.bf16.mxu0 0
        %1113 = vmatpush2.bf16.xpose.msra.mxu0 0
        %1114 = vmatprep.subr.bf16.mxu0 0
        %1115 = vmatpush2.bf16.xpose.msra.mxu0 0
        %1116 = vmatprep.subr.bf16.mxu0 0
        %1117 = vmatpush2.bf16.xpose.msra.mxu0 0
        %1118 = vmatprep.subr.bf16.mxu0 0
        %1119 = vmatpush2.bf16.xpose.msra.mxu0 0
        %1120 = vmatprep.subr.bf16.mxu0 0
        %1121 = vmatpush2.bf16.xpose.msra.mxu0 0
        %1122 = vmatprep.subr.bf16.mxu0 0
        %1123 = vmatpush2.bf16.xpose.msra.mxu0 0
        %1124 = vmatprep.subr.bf16.mxu0 0
        %1125 = vmatpush2.bf16.xpose.msra.mxu0 0
        %1126 = vmatprep.subr.bf16.mxu0 0
        %1127 = vmatpush2.bf16.xpose.msra.mxu0 0
        %1128 = vmatprep.mubr.bf16.mxu0 0
        %1129 = vmatmul.mubr.bf16.gmra.mxu0 %v1091
        %v1130 = vpop.f32.mrf.mxu0
        %v1131 = vadd.f32 0.0, %v1130
        %v1132 = vpop.f32.mrf.mxu0
        %v1133 = vpop.f32.mrf.mxu0
        %v1134 = vadd.f32 0.0, %v1133
        %v1135 = vpop.f32.mrf.mxu0
        %1136 = vdwg.mxu0
        %vm1137 = vcmask 130048
        %v1138 = vsel %vm1137, %v990, -inf
        %1139 = vmax.xlane.f32.xlu0 %v1138
        %v1140 = vpop.xlane.xlu0 %1139
        %v1141 = vsel %vm1137, %v993, -inf
        %1142 = vmax.xlane.f32.xlu0 %v1141
        %v1143 = vpop.xlane.xlu0 %1142
        %v1144 = vsel %vm1137, %v1037, -inf
        %1145 = vmax.xlane.f32.xlu0 %v1144
        %v1146 = vpop.xlane.xlu0 %1145
        %v1147 = vsel %vm1137, %v1040, -inf
        %1148 = vmax.xlane.f32.xlu0 %v1147
        %v1149 = vpop.xlane.xlu0 %1148
        %v1150 = vsel %vm1137, %v1084, -inf
        %1151 = vmax.xlane.f32.xlu0 %v1150
        %v1152 = vpop.xlane.xlu0 %1151
        %v1153 = vsel %vm1137, %v1087, -inf
        %1154 = vmax.xlane.f32.xlu0 %v1153
        %v1155 = vpop.xlane.xlu0 %1154
        %v1156 = vsel %vm1137, %v1131, -inf
        %1157 = vmax.xlane.f32.xlu0 %v1156
        %v1158 = vpop.xlane.xlu0 %1157
        %v1159 = vsel %vm1137, %v1134, -inf
        %1160 = vmax.xlane.f32.xlu0 %v1159
        %v1161 = vpop.xlane.xlu0 %1160
        %v1162 = vsub.f32 %v990, %v1140
        %v1163 = vsub.f32 %v993, %v1143
        %v1164 = vsub.f32 %v1037, %v1146
        %v1165 = vsub.f32 %v1040, %v1149
        %v1166 = vsub.f32 %v1084, %v1152
        %v1167 = vsub.f32 %v1087, %v1155
        %v1168 = vsub.f32 %v1131, %v1158
        %v1169 = vsub.f32 %v1134, %v1161
        %v1170 = vmul.f32 %v1162, 1.442695
        %v1171 = vpow.pop %v1170
        %v1172 = vmul.f32 %v1163, 1.442695
        %v1173 = vpow.pop %v1172
        %v1174 = vmul.f32 %v1164, 1.442695
        %v1175 = vpow.pop %v1174
        %v1176 = vmul.f32 %v1165, 1.442695
        %v1177 = vpow.pop %v1176
        %v1178 = vmul.f32 %v1166, 1.442695
        %v1179 = vpow.pop %v1178
        %v1180 = vmul.f32 %v1167, 1.442695
        %v1181 = vpow.pop %v1180
        %v1182 = vmul.f32 %v1168, 1.442695
        %v1183 = vpow.pop %v1182
        %v1184 = vmul.f32 %v1169, 1.442695
        %v1185 = vpow.pop %v1184
        %v1186 = vsel %vm1137, %v1171, 0.0
        %1187 = vadd.xlane.f32.xlu0 %v1186
        %v1188 = vpop.xlane.xlu0 %1187
        %v1189 = vsel %vm1137, %v1173, 0.0
        %1190 = vadd.xlane.f32.xlu0 %v1189
        %v1191 = vpop.xlane.xlu0 %1190
        %v1192 = vsel %vm1137, %v1175, 0.0
        %1193 = vadd.xlane.f32.xlu0 %v1192
        %v1194 = vpop.xlane.xlu0 %1193
        %v1195 = vsel %vm1137, %v1177, 0.0
        %1196 = vadd.xlane.f32.xlu0 %v1195
        %v1197 = vpop.xlane.xlu0 %1196
        %v1198 = vsel %vm1137, %v1179, 0.0
        %1199 = vadd.xlane.f32.xlu0 %v1198
        %v1200 = vpop.xlane.xlu0 %1199
        %v1201 = vsel %vm1137, %v1181, 0.0
        %1202 = vadd.xlane.f32.xlu0 %v1201
        %v1203 = vpop.xlane.xlu0 %1202
        %v1204 = vsel %vm1137, %v1183, 0.0
        %1205 = vadd.xlane.f32.xlu0 %v1204
        %v1206 = vpop.xlane.xlu0 %1205
        %v1207 = vsel %vm1137, %v1185, 0.0
        %1208 = vadd.xlane.f32.xlu0 %v1207
        %v1209 = vpop.xlane.xlu0 %1208
        %v1210 = vrcp.pop %v1188
        %v1211 = vrcp.pop %v1191
        %v1212 = vrcp.pop %v1194
        %v1213 = vrcp.pop %v1197
        %v1214 = vrcp.pop %v1200
        %v1215 = vrcp.pop %v1203
        %v1216 = vrcp.pop %v1206
        %v1217 = vrcp.pop %v1209
        %v1218 = vmul.f32 %v1171, %v1210
        %v1219 = vmul.f32 %v1173, %v1211
        %v1220 = vmul.f32 %v1175, %v1212
        %v1221 = vmul.f32 %v1177, %v1213
        %v1222 = vmul.f32 %v1179, %v1214
        %v1223 = vmul.f32 %v1181, %v1215
        %v1224 = vmul.f32 %v1183, %v1216
        %v1225 = vmul.f32 %v1185, %v1217
        %v1226 = vpack.c.bf16 %v1219, %v1218
        %v1227 = vpack.c.bf16 %v1221, %v1220
        %v1228 = vpack.c.bf16 %v1223, %v1222
        %v1229 = vpack.c.bf16 %v1225, %v1224
        %v1231 = vsel %vm1137, %v1226, 0
        %1233 = vmatprep.subr.bf16.mxu0 0
        %1234 = vmatpush1.bf16.msra.mxu0 0
        %1235 = vmatprep.subr.bf16.mxu0 0
        %1236 = vmatpush1.bf16.msra.mxu0 0
        %1237 = vmatprep.subr.bf16.mxu0 0
        %1238 = vmatpush1.bf16.msra.mxu0 0
        %1239 = vmatprep.subr.bf16.mxu0 0
        %1240 = vmatpush1.bf16.msra.mxu0 0
        %1241 = vmatprep.subr.bf16.mxu0 0
        %1242 = vmatpush1.bf16.msra.mxu0 0
        %1243 = vmatprep.subr.bf16.mxu0 0
        %1244 = vmatpush1.bf16.msra.mxu0 0
        %1245 = vmatprep.subr.bf16.mxu0 0
        %1246 = vmatpush1.bf16.msra.mxu0 0
        %1247 = vmatprep.subr.bf16.mxu0 0
        %1248 = vmatpush1.bf16.msra.mxu0 %v944
        %1249 = vmatprep.subr.bf16.mxu0 0
        %1250 = vmatpush2.bf16.msra.mxu0 0
        %1251 = vmatprep.subr.bf16.mxu0 0
        %1252 = vmatpush2.bf16.msra.mxu0 0
        %1253 = vmatprep.subr.bf16.mxu0 0
        %1254 = vmatpush2.bf16.msra.mxu0 0
        %1255 = vmatprep.subr.bf16.mxu0 0
        %1256 = vmatpush2.bf16.msra.mxu0 0
        %1257 = vmatprep.subr.bf16.mxu0 0
        %1258 = vmatpush2.bf16.msra.mxu0 0
        %1259 = vmatprep.subr.bf16.mxu0 0
        %1260 = vmatpush2.bf16.msra.mxu0 0
        %1261 = vmatprep.subr.bf16.mxu0 0
        %1262 = vmatpush2.bf16.msra.mxu0 0
        %1263 = vmatprep.subr.bf16.mxu0 0
        %1264 = vmatpush2.bf16.msra.mxu0 0
        %1265 = vmatprep.mubr.bf16.mxu0 0
        %1266 = vmatmul.mubr.bf16.gmra.mxu0 %v1231
        %v1267 = vpop.f32.mrf.mxu0
        %v1268 = vadd.f32 0.0, %v1267
        %v1269 = vpop.f32.mrf.mxu0
        %v1270 = vpop.f32.mrf.mxu0
        %v1271 = vadd.f32 0.0, %v1270
        %v1272 = vpop.f32.mrf.mxu0
        %1273 = vdwg.mxu0
        %v1275 = vsel %vm1137, %v1227, 0
        %1277 = vmatprep.subr.bf16.mxu0 0
        %1278 = vmatpush1.bf16.msra.mxu0 0
        %1279 = vmatprep.subr.bf16.mxu0 0
        %1280 = vmatpush1.bf16.msra.mxu0 0
        %1281 = vmatprep.subr.bf16.mxu0 0
        %1282 = vmatpush1.bf16.msra.mxu0 0
        %1283 = vmatprep.subr.bf16.mxu0 0
        %1284 = vmatpush1.bf16.msra.mxu0 0
        %1285 = vmatprep.subr.bf16.mxu0 0
        %1286 = vmatpush1.bf16.msra.mxu0 0
        %1287 = vmatprep.subr.bf16.mxu0 0
        %1288 = vmatpush1.bf16.msra.mxu0 0
        %1289 = vmatprep.subr.bf16.mxu0 0
        %1290 = vmatpush1.bf16.msra.mxu0 0
        %1291 = vmatprep.subr.bf16.mxu0 0
        %1292 = vmatpush1.bf16.msra.mxu0 %v945
        %1293 = vmatprep.subr.bf16.mxu0 0
        %1294 = vmatpush2.bf16.msra.mxu0 0
        %1295 = vmatprep.subr.bf16.mxu0 0
        %1296 = vmatpush2.bf16.msra.mxu0 0
        %1297 = vmatprep.subr.bf16.mxu0 0
        %1298 = vmatpush2.bf16.msra.mxu0 0
        %1299 = vmatprep.subr.bf16.mxu0 0
        %1300 = vmatpush2.bf16.msra.mxu0 0
        %1301 = vmatprep.subr.bf16.mxu0 0
        %1302 = vmatpush2.bf16.msra.mxu0 0
        %1303 = vmatprep.subr.bf16.mxu0 0
        %1304 = vmatpush2.bf16.msra.mxu0 0
        %1305 = vmatprep.subr.bf16.mxu0 0
        %1306 = vmatpush2.bf16.msra.mxu0 0
        %1307 = vmatprep.subr.bf16.mxu0 0
        %1308 = vmatpush2.bf16.msra.mxu0 0
        %1309 = vmatprep.mubr.bf16.mxu0 0
        %1310 = vmatmul.mubr.bf16.gmra.mxu0 %v1275
        %v1311 = vpop.f32.mrf.mxu0
        %v1312 = vadd.f32 0.0, %v1311
        %v1313 = vpop.f32.mrf.mxu0
        %v1314 = vpop.f32.mrf.mxu0
        %v1315 = vadd.f32 0.0, %v1314
        %v1316 = vpop.f32.mrf.mxu0
        %1317 = vdwg.mxu0
        %v1319 = vsel %vm1137, %v1228, 0
        %1321 = vmatprep.subr.bf16.mxu0 0
        %1322 = vmatpush1.bf16.msra.mxu0 0
        %1323 = vmatprep.subr.bf16.mxu0 0
        %1324 = vmatpush1.bf16.msra.mxu0 0
        %1325 = vmatprep.subr.bf16.mxu0 0
        %1326 = vmatpush1.bf16.msra.mxu0 0
        %1327 = vmatprep.subr.bf16.mxu0 0
        %1328 = vmatpush1.bf16.msra.mxu0 0
        %1329 = vmatprep.subr.bf16.mxu0 0
        %1330 = vmatpush1.bf16.msra.mxu0 0
        %1331 = vmatprep.subr.bf16.mxu0 0
        %1332 = vmatpush1.bf16.msra.mxu0 0
        %1333 = vmatprep.subr.bf16.mxu0 0
        %1334 = vmatpush1.bf16.msra.mxu0 0
        %1335 = vmatprep.subr.bf16.mxu0 0
        %1336 = vmatpush1.bf16.msra.mxu0 %v946
        %1337 = vmatprep.subr.bf16.mxu0 0
        %1338 = vmatpush2.bf16.msra.mxu0 0
        %1339 = vmatprep.subr.bf16.mxu0 0
        %1340 = vmatpush2.bf16.msra.mxu0 0
        %1341 = vmatprep.subr.bf16.mxu0 0
        %1342 = vmatpush2.bf16.msra.mxu0 0
        %1343 = vmatprep.subr.bf16.mxu0 0
        %1344 = vmatpush2.bf16.msra.mxu0 0
        %1345 = vmatprep.subr.bf16.mxu0 0
        %1346 = vmatpush2.bf16.msra.mxu0 0
        %1347 = vmatprep.subr.bf16.mxu0 0
        %1348 = vmatpush2.bf16.msra.mxu0 0
        %1349 = vmatprep.subr.bf16.mxu0 0
        %1350 = vmatpush2.bf16.msra.mxu0 0
        %1351 = vmatprep.subr.bf16.mxu0 0
        %1352 = vmatpush2.bf16.msra.mxu0 0
        %1353 = vmatprep.mubr.bf16.mxu0 0
        %1354 = vmatmul.mubr.bf16.gmra.mxu0 %v1319
        %v1355 = vpop.f32.mrf.mxu0
        %v1356 = vadd.f32 0.0, %v1355
        %v1357 = vpop.f32.mrf.mxu0
        %v1358 = vpop.f32.mrf.mxu0
        %v1359 = vadd.f32 0.0, %v1358
        %v1360 = vpop.f32.mrf.mxu0
        %1361 = vdwg.mxu0
        %v1363 = vsel %vm1137, %v1229, 0
        %1365 = vmatprep.subr.bf16.mxu0 0
        %1366 = vmatpush1.bf16.msra.mxu0 0
        %1367 = vmatprep.subr.bf16.mxu0 0
        %1368 = vmatpush1.bf16.msra.mxu0 0
        %1369 = vmatprep.subr.bf16.mxu0 0
        %1370 = vmatpush1.bf16.msra.mxu0 0
        %1371 = vmatprep.subr.bf16.mxu0 0
        %1372 = vmatpush1.bf16.msra.mxu0 0
        %1373 = vmatprep.subr.bf16.mxu0 0
        %1374 = vmatpush1.bf16.msra.mxu0 0
        %1375 = vmatprep.subr.bf16.mxu0 0
        %1376 = vmatpush1.bf16.msra.mxu0 0
        %1377 = vmatprep.subr.bf16.mxu0 0
        %1378 = vmatpush1.bf16.msra.mxu0 0
        %1379 = vmatprep.subr.bf16.mxu0 0
        %1380 = vmatpush1.bf16.msra.mxu0 %v947
        %1381 = vmatprep.subr.bf16.mxu0 0
        %1382 = vmatpush2.bf16.msra.mxu0 0
        %1383 = vmatprep.subr.bf16.mxu0 0
        %1384 = vmatpush2.bf16.msra.mxu0 0
        %1385 = vmatprep.subr.bf16.mxu0 0
        %1386 = vmatpush2.bf16.msra.mxu0 0
        %1387 = vmatprep.subr.bf16.mxu0 0
        %1388 = vmatpush2.bf16.msra.mxu0 0
        %1389 = vmatprep.subr.bf16.mxu0 0
        %1390 = vmatpush2.bf16.msra.mxu0 0
        %1391 = vmatprep.subr.bf16.mxu0 0
        %1392 = vmatpush2.bf16.msra.mxu0 0
        %1393 = vmatprep.subr.bf16.mxu0 0
        %1394 = vmatpush2.bf16.msra.mxu0 0
        %1395 = vmatprep.subr.bf16.mxu0 0
        %1396 = vmatpush2.bf16.msra.mxu0 0
        %1397 = vmatprep.mubr.bf16.mxu0 0
        %1398 = vmatmul.mubr.bf16.gmra.mxu0 %v1363
        %v1399 = vpop.f32.mrf.mxu0
        %v1400 = vadd.f32 0.0, %v1399
        %v1401 = vpop.f32.mrf.mxu0
        %v1402 = vpop.f32.mrf.mxu0
        %v1403 = vadd.f32 0.0, %v1402
        %v1404 = vpop.f32.mrf.mxu0
        %1405 = vdwg.mxu0
        %1406 = vst.msk [vmem:[#allocation2] sm:$0xff] %vm948, %v1268
        %1407 = vst.msk [vmem:[#allocation2 + $0x8] sm:$0xff] %vm948, %v1271
        %1408 = vst.msk [vmem:[#allocation2 + $0x10] sm:$0xff] %vm948, %v1312
        %1409 = vst.msk [vmem:[#allocation2 + $0x18] sm:$0xff] %vm948, %v1315
        %1410 = vst.msk [vmem:[#allocation2 + $0x20] sm:$0xff] %vm948, %v1356
        %1411 = vst.msk [vmem:[#allocation2 + $0x28] sm:$0xff] %vm948, %v1359
        %1412 = vst.msk [vmem:[#allocation2 + $0x30] sm:$0xff] %vm948, %v1400
        %1413 = vst.msk [vmem:[#allocation2 + $0x38] sm:$0xff] %vm948, %v1403
        %1415 = vrot.lane.b32.xlu0 %v936, 96
        %v1416 = vpop.permute.xlu0 %1415
        %1418 = vrot.lane.b32.xlu0 %v940, 96
        %v1419 = vpop.permute.xlu0 %1418
        %v1421 = vsel %vm948, %v1416, 0
        %v1424 = vsel %vm948, %v1419, 0
        %1426 = vmatprep.subr.bf16.mxu0 0
        %1427 = vmatpush1.bf16.xpose.msra.mxu0 0
        %1428 = vmatprep.subr.bf16.mxu0 0
        %1429 = vmatpush1.bf16.xpose.msra.mxu0 0
        %1430 = vmatprep.subr.bf16.mxu0 0
        %1431 = vmatpush1.bf16.xpose.msra.mxu0 0
        %1432 = vmatprep.subr.bf16.mxu0 0
        %1433 = vmatpush1.bf16.xpose.msra.mxu0 0
        %1434 = vmatprep.subr.bf16.mxu0 0
        %1435 = vmatpush1.bf16.xpose.msra.mxu0 0
        %1436 = vmatprep.subr.bf16.mxu0 0
        %1437 = vmatpush1.bf16.xpose.msra.mxu0 0
        %1438 = vmatprep.subr.bf16.mxu0 0
        %1439 = vmatpush1.bf16.xpose.msra.mxu0 0
        %1440 = vmatprep.subr.bf16.mxu0 0
        %1441 = vmatpush1.bf16.xpose.msra.mxu0 %v1424
        %1442 = vmatprep.subr.bf16.mxu0 0
        %1443 = vmatpush2.bf16.xpose.msra.mxu0 0
        %1444 = vmatprep.subr.bf16.mxu0 0
        %1445 = vmatpush2.bf16.xpose.msra.mxu0 0
        %1446 = vmatprep.subr.bf16.mxu0 0
        %1447 = vmatpush2.bf16.xpose.msra.mxu0 0
        %1448 = vmatprep.subr.bf16.mxu0 0
        %1449 = vmatpush2.bf16.xpose.msra.mxu0 0
        %1450 = vmatprep.subr.bf16.mxu0 0
        %1451 = vmatpush2.bf16.xpose.msra.mxu0 0
        %1452 = vmatprep.subr.bf16.mxu0 0
        %1453 = vmatpush2.bf16.xpose.msra.mxu0 0
        %1454 = vmatprep.subr.bf16.mxu0 0
        %1455 = vmatpush2.bf16.xpose.msra.mxu0 0
        %1456 = vmatprep.subr.bf16.mxu0 0
        %1457 = vmatpush2.bf16.xpose.msra.mxu0 0
        %1458 = vmatprep.mubr.bf16.mxu0 0
        %1459 = vmatmul.mubr.bf16.gmra.mxu0 %v1421
        %v1460 = vpop.f32.mrf.mxu0
        %v1461 = vadd.f32 0.0, %v1460
        %v1462 = vpop.f32.mrf.mxu0
        %v1463 = vpop.f32.mrf.mxu0
        %v1464 = vadd.f32 0.0, %v1463
        %v1465 = vpop.f32.mrf.mxu0
        %1466 = vdwg.mxu0
        %1468 = vrot.lane.b32.xlu0 %v937, 96
        %v1469 = vpop.permute.xlu0 %1468
        %1471 = vrot.lane.b32.xlu0 %v941, 96
        %v1472 = vpop.permute.xlu0 %1471
        %v1474 = vsel %vm948, %v1469, 0
        %v1477 = vsel %vm948, %v1472, 0
        %1479 = vmatprep.subr.bf16.mxu0 0
        %1480 = vmatpush1.bf16.xpose.msra.mxu0 0
        %1481 = vmatprep.subr.bf16.mxu0 0
        %1482 = vmatpush1.bf16.xpose.msra.mxu0 0
        %1483 = vmatprep.subr.bf16.mxu0 0
        %1484 = vmatpush1.bf16.xpose.msra.mxu0 0
        %1485 = vmatprep.subr.bf16.mxu0 0
        %1486 = vmatpush1.bf16.xpose.msra.mxu0 0
        %1487 = vmatprep.subr.bf16.mxu0 0
        %1488 = vmatpush1.bf16.xpose.msra.mxu0 0
        %1489 = vmatprep.subr.bf16.mxu0 0
        %1490 = vmatpush1.bf16.xpose.msra.mxu0 0
        %1491 = vmatprep.subr.bf16.mxu0 0
        %1492 = vmatpush1.bf16.xpose.msra.mxu0 0
        %1493 = vmatprep.subr.bf16.mxu0 0
        %1494 = vmatpush1.bf16.xpose.msra.mxu0 %v1477
        %1495 = vmatprep.subr.bf16.mxu0 0
        %1496 = vmatpush2.bf16.xpose.msra.mxu0 0
        %1497 = vmatprep.subr.bf16.mxu0 0
        %1498 = vmatpush2.bf16.xpose.msra.mxu0 0
        %1499 = vmatprep.subr.bf16.mxu0 0
        %1500 = vmatpush2.bf16.xpose.msra.mxu0 0
        %1501 = vmatprep.subr.bf16.mxu0 0
        %1502 = vmatpush2.bf16.xpose.msra.mxu0 0
        %1503 = vmatprep.subr.bf16.mxu0 0
        %1504 = vmatpush2.bf16.xpose.msra.mxu0 0
        %1505 = vmatprep.subr.bf16.mxu0 0
        %1506 = vmatpush2.bf16.xpose.msra.mxu0 0
        %1507 = vmatprep.subr.bf16.mxu0 0
        %1508 = vmatpush2.bf16.xpose.msra.mxu0 0
        %1509 = vmatprep.subr.bf16.mxu0 0
        %1510 = vmatpush2.bf16.xpose.msra.mxu0 0
        %1511 = vmatprep.mubr.bf16.mxu0 0
        %1512 = vmatmul.mubr.bf16.gmra.mxu0 %v1474
        %v1513 = vpop.f32.mrf.mxu0
        %v1514 = vadd.f32 0.0, %v1513
        %v1515 = vpop.f32.mrf.mxu0
        %v1516 = vpop.f32.mrf.mxu0
        %v1517 = vadd.f32 0.0, %v1516
        %v1518 = vpop.f32.mrf.mxu0
        %1519 = vdwg.mxu0
        %1521 = vrot.lane.b32.xlu0 %v938, 96
        %v1522 = vpop.permute.xlu0 %1521
        %1524 = vrot.lane.b32.xlu0 %v942, 96
        %v1525 = vpop.permute.xlu0 %1524
        %v1527 = vsel %vm948, %v1522, 0
        %v1530 = vsel %vm948, %v1525, 0
        %1532 = vmatprep.subr.bf16.mxu0 0
        %1533 = vmatpush1.bf16.xpose.msra.mxu0 0
        %1534 = vmatprep.subr.bf16.mxu0 0
        %1535 = vmatpush1.bf16.xpose.msra.mxu0 0
        %1536 = vmatprep.subr.bf16.mxu0 0
        %1537 = vmatpush1.bf16.xpose.msra.mxu0 0
        %1538 = vmatprep.subr.bf16.mxu0 0
        %1539 = vmatpush1.bf16.xpose.msra.mxu0 0
        %1540 = vmatprep.subr.bf16.mxu0 0
        %1541 = vmatpush1.bf16.xpose.msra.mxu0 0
        %1542 = vmatprep.subr.bf16.mxu0 0
        %1543 = vmatpush1.bf16.xpose.msra.mxu0 0
        %1544 = vmatprep.subr.bf16.mxu0 0
        %1545 = vmatpush1.bf16.xpose.msra.mxu0 0
        %1546 = vmatprep.subr.bf16.mxu0 0
        %1547 = vmatpush1.bf16.xpose.msra.mxu0 %v1530
        %1548 = vmatprep.subr.bf16.mxu0 0
        %1549 = vmatpush2.bf16.xpose.msra.mxu0 0
        %1550 = vmatprep.subr.bf16.mxu0 0
        %1551 = vmatpush2.bf16.xpose.msra.mxu0 0
        %1552 = vmatprep.subr.bf16.mxu0 0
        %1553 = vmatpush2.bf16.xpose.msra.mxu0 0
        %1554 = vmatprep.subr.bf16.mxu0 0
        %1555 = vmatpush2.bf16.xpose.msra.mxu0 0
        %1556 = vmatprep.subr.bf16.mxu0 0
        %1557 = vmatpush2.bf16.xpose.msra.mxu0 0
        %1558 = vmatprep.subr.bf16.mxu0 0
        %1559 = vmatpush2.bf16.xpose.msra.mxu0 0
        %1560 = vmatprep.subr.bf16.mxu0 0
        %1561 = vmatpush2.bf16.xpose.msra.mxu0 0
        %1562 = vmatprep.subr.bf16.mxu0 0
        %1563 = vmatpush2.bf16.xpose.msra.mxu0 0
        %1564 = vmatprep.mubr.bf16.mxu0 0
        %1565 = vmatmul.mubr.bf16.gmra.mxu0 %v1527
        %v1566 = vpop.f32.mrf.mxu0
        %v1567 = vadd.f32 0.0, %v1566
        %v1568 = vpop.f32.mrf.mxu0
        %v1569 = vpop.f32.mrf.mxu0
        %v1570 = vadd.f32 0.0, %v1569
        %v1571 = vpop.f32.mrf.mxu0
        %1572 = vdwg.mxu0
        %1574 = vrot.lane.b32.xlu0 %v939, 96
        %v1575 = vpop.permute.xlu0 %1574
        %1577 = vrot.lane.b32.xlu0 %v943, 96
        %v1578 = vpop.permute.xlu0 %1577
        %v1580 = vsel %vm948, %v1575, 0
        %v1583 = vsel %vm948, %v1578, 0
        %1585 = vmatprep.subr.bf16.mxu0 0
        %1586 = vmatpush1.bf16.xpose.msra.mxu0 0
        %1587 = vmatprep.subr.bf16.mxu0 0
        %1588 = vmatpush1.bf16.xpose.msra.mxu0 0
        %1589 = vmatprep.subr.bf16.mxu0 0
        %1590 = vmatpush1.bf16.xpose.msra.mxu0 0
        %1591 = vmatprep.subr.bf16.mxu0 0
        %1592 = vmatpush1.bf16.xpose.msra.mxu0 0
        %1593 = vmatprep.subr.bf16.mxu0 0
        %1594 = vmatpush1.bf16.xpose.msra.mxu0 0
        %1595 = vmatprep.subr.bf16.mxu0 0
        %1596 = vmatpush1.bf16.xpose.msra.mxu0 0
        %1597 = vmatprep.subr.bf16.mxu0 0
        %1598 = vmatpush1.bf16.xpose.msra.mxu0 0
        %1599 = vmatprep.subr.bf16.mxu0 0
        %1600 = vmatpush1.bf16.xpose.msra.mxu0 %v1583
        %1601 = vmatprep.subr.bf16.mxu0 0
        %1602 = vmatpush2.bf16.xpose.msra.mxu0 0
        %1603 = vmatprep.subr.bf16.mxu0 0
        %1604 = vmatpush2.bf16.xpose.msra.mxu0 0
        %1605 = vmatprep.subr.bf16.mxu0 0
        %1606 = vmatpush2.bf16.xpose.msra.mxu0 0
        %1607 = vmatprep.subr.bf16.mxu0 0
        %1608 = vmatpush2.bf16.xpose.msra.mxu0 0
        %1609 = vmatprep.subr.bf16.mxu0 0
        %1610 = vmatpush2.bf16.xpose.msra.mxu0 0
        %1611 = vmatprep.subr.bf16.mxu0 0
        %1612 = vmatpush2.bf16.xpose.msra.mxu0 0
        %1613 = vmatprep.subr.bf16.mxu0 0
        %1614 = vmatpush2.bf16.xpose.msra.mxu0 0
        %1615 = vmatprep.subr.bf16.mxu0 0
        %1616 = vmatpush2.bf16.xpose.msra.mxu0 0
        %1617 = vmatprep.mubr.bf16.mxu0 0
        %1618 = vmatmul.mubr.bf16.gmra.mxu0 %v1580
        %v1619 = vpop.f32.mrf.mxu0
        %v1620 = vadd.f32 0.0, %v1619
        %v1621 = vpop.f32.mrf.mxu0
        %v1622 = vpop.f32.mrf.mxu0
        %v1623 = vadd.f32 0.0, %v1622
        %v1624 = vpop.f32.mrf.mxu0
        %1625 = vdwg.mxu0
        %v1626 = vsel %vm1137, %v1461, -inf
        %1627 = vmax.xlane.f32.xlu0 %v1626
        %v1628 = vpop.xlane.xlu0 %1627
        %v1629 = vsel %vm1137, %v1464, -inf
        %1630 = vmax.xlane.f32.xlu0 %v1629
        %v1631 = vpop.xlane.xlu0 %1630
        %v1632 = vsel %vm1137, %v1514, -inf
        %1633 = vmax.xlane.f32.xlu0 %v1632
        %v1634 = vpop.xlane.xlu0 %1633
        %v1635 = vsel %vm1137, %v1517, -inf
        %1636 = vmax.xlane.f32.xlu0 %v1635
        %v1637 = vpop.xlane.xlu0 %1636
        %v1638 = vsel %vm1137, %v1567, -inf
        %1639 = vmax.xlane.f32.xlu0 %v1638
        %v1640 = vpop.xlane.xlu0 %1639
        %v1641 = vsel %vm1137, %v1570, -inf
        %1642 = vmax.xlane.f32.xlu0 %v1641
        %v1643 = vpop.xlane.xlu0 %1642
        %v1644 = vsel %vm1137, %v1620, -inf
        %1645 = vmax.xlane.f32.xlu0 %v1644
        %v1646 = vpop.xlane.xlu0 %1645
        %v1647 = vsel %vm1137, %v1623, -inf
        %1648 = vmax.xlane.f32.xlu0 %v1647
        %v1649 = vpop.xlane.xlu0 %1648
        %v1650 = vsub.f32 %v1461, %v1628
        %v1651 = vsub.f32 %v1464, %v1631
        %v1652 = vsub.f32 %v1514, %v1634
        %v1653 = vsub.f32 %v1517, %v1637
        %v1654 = vsub.f32 %v1567, %v1640
        %v1655 = vsub.f32 %v1570, %v1643
        %v1656 = vsub.f32 %v1620, %v1646
        %v1657 = vsub.f32 %v1623, %v1649
        %v1658 = vmul.f32 %v1650, 1.442695
        %v1659 = vpow.pop %v1658
        %v1660 = vmul.f32 %v1651, 1.442695
        %v1661 = vpow.pop %v1660
        %v1662 = vmul.f32 %v1652, 1.442695
        %v1663 = vpow.pop %v1662
        %v1664 = vmul.f32 %v1653, 1.442695
        %v1665 = vpow.pop %v1664
        %v1666 = vmul.f32 %v1654, 1.442695
        %v1667 = vpow.pop %v1666
        %v1668 = vmul.f32 %v1655, 1.442695
        %v1669 = vpow.pop %v1668
        %v1670 = vmul.f32 %v1656, 1.442695
        %v1671 = vpow.pop %v1670
        %v1672 = vmul.f32 %v1657, 1.442695
        %v1673 = vpow.pop %v1672
        %v1674 = vsel %vm1137, %v1659, 0.0
        %1675 = vadd.xlane.f32.xlu0 %v1674
        %v1676 = vpop.xlane.xlu0 %1675
        %v1677 = vsel %vm1137, %v1661, 0.0
        %1678 = vadd.xlane.f32.xlu0 %v1677
        %v1679 = vpop.xlane.xlu0 %1678
        %v1680 = vsel %vm1137, %v1663, 0.0
        %1681 = vadd.xlane.f32.xlu0 %v1680
        %v1682 = vpop.xlane.xlu0 %1681
        %v1683 = vsel %vm1137, %v1665, 0.0
        %1684 = vadd.xlane.f32.xlu0 %v1683
        %v1685 = vpop.xlane.xlu0 %1684
        %v1686 = vsel %vm1137, %v1667, 0.0
        %1687 = vadd.xlane.f32.xlu0 %v1686
        %v1688 = vpop.xlane.xlu0 %1687
        %v1689 = vsel %vm1137, %v1669, 0.0
        %1690 = vadd.xlane.f32.xlu0 %v1689
        %v1691 = vpop.xlane.xlu0 %1690
        %v1692 = vsel %vm1137, %v1671, 0.0
        %1693 = vadd.xlane.f32.xlu0 %v1692
        %v1694 = vpop.xlane.xlu0 %1693
        %v1695 = vsel %vm1137, %v1673, 0.0
        %1696 = vadd.xlane.f32.xlu0 %v1695
        %v1697 = vpop.xlane.xlu0 %1696
        %v1698 = vrcp.pop %v1676
        %v1699 = vrcp.pop %v1679
        %v1700 = vrcp.pop %v1682
        %v1701 = vrcp.pop %v1685
        %v1702 = vrcp.pop %v1688
        %v1703 = vrcp.pop %v1691
        %v1704 = vrcp.pop %v1694
        %v1705 = vrcp.pop %v1697
        %v1706 = vmul.f32 %v1659, %v1698
        %v1707 = vmul.f32 %v1661, %v1699
        %v1708 = vmul.f32 %v1663, %v1700
        %v1709 = vmul.f32 %v1665, %v1701
        %v1710 = vmul.f32 %v1667, %v1702
        %v1711 = vmul.f32 %v1669, %v1703
        %v1712 = vmul.f32 %v1671, %v1704
        %v1713 = vmul.f32 %v1673, %v1705
        %v1714 = vpack.c.bf16 %v1707, %v1706
        %v1715 = vpack.c.bf16 %v1709, %v1708
        %v1716 = vpack.c.bf16 %v1711, %v1710
        %v1717 = vpack.c.bf16 %v1713, %v1712
        %1719 = vrot.lane.b32.xlu0 %v944, 96
        %v1720 = vpop.permute.xlu0 %1719
        %v1723 = vsel %vm1137, %v1714, 0
        %1725 = vmatprep.subr.bf16.mxu0 0
        %1726 = vmatpush1.bf16.msra.mxu0 0
        %1727 = vmatprep.subr.bf16.mxu0 0
        %1728 = vmatpush1.bf16.msra.mxu0 0
        %1729 = vmatprep.subr.bf16.mxu0 0
        %1730 = vmatpush1.bf16.msra.mxu0 0
        %1731 = vmatprep.subr.bf16.mxu0 0
        %1732 = vmatpush1.bf16.msra.mxu0 0
        %1733 = vmatprep.subr.bf16.mxu0 0
        %1734 = vmatpush1.bf16.msra.mxu0 0
        %1735 = vmatprep.subr.bf16.mxu0 0
        %1736 = vmatpush1.bf16.msra.mxu0 0
        %1737 = vmatprep.subr.bf16.mxu0 0
        %1738 = vmatpush1.bf16.msra.mxu0 0
        %1739 = vmatprep.subr.bf16.mxu0 0
        %1740 = vmatpush1.bf16.msra.mxu0 %v1720
        %1741 = vmatprep.subr.bf16.mxu0 0
        %1742 = vmatpush2.bf16.msra.mxu0 0
        %1743 = vmatprep.subr.bf16.mxu0 0
        %1744 = vmatpush2.bf16.msra.mxu0 0
        %1745 = vmatprep.subr.bf16.mxu0 0
        %1746 = vmatpush2.bf16.msra.mxu0 0
        %1747 = vmatprep.subr.bf16.mxu0 0
        %1748 = vmatpush2.bf16.msra.mxu0 0
        %1749 = vmatprep.subr.bf16.mxu0 0
        %1750 = vmatpush2.bf16.msra.mxu0 0
        %1751 = vmatprep.subr.bf16.mxu0 0
        %1752 = vmatpush2.bf16.msra.mxu0 0
        %1753 = vmatprep.subr.bf16.mxu0 0
        %1754 = vmatpush2.bf16.msra.mxu0 0
        %1755 = vmatprep.subr.bf16.mxu0 0
        %1756 = vmatpush2.bf16.msra.mxu0 0
        %1757 = vmatprep.mubr.bf16.mxu0 0
        %1758 = vmatmul.mubr.bf16.gmra.mxu0 %v1723
        %v1759 = vpop.f32.mrf.mxu0
        %v1760 = vadd.f32 0.0, %v1759
        %v1761 = vpop.f32.mrf.mxu0
        %v1762 = vpop.f32.mrf.mxu0
        %v1763 = vadd.f32 0.0, %v1762
        %v1764 = vpop.f32.mrf.mxu0
        %1765 = vdwg.mxu0
        %1767 = vrot.lane.b32.xlu0 %v945, 96
        %v1768 = vpop.permute.xlu0 %1767
        %v1771 = vsel %vm1137, %v1715, 0
        %1773 = vmatprep.subr.bf16.mxu0 0
        %1774 = vmatpush1.bf16.msra.mxu0 0
        %1775 = vmatprep.subr.bf16.mxu0 0
        %1776 = vmatpush1.bf16.msra.mxu0 0
        %1777 = vmatprep.subr.bf16.mxu0 0
        %1778 = vmatpush1.bf16.msra.mxu0 0
        %1779 = vmatprep.subr.bf16.mxu0 0
        %1780 = vmatpush1.bf16.msra.mxu0 0
        %1781 = vmatprep.subr.bf16.mxu0 0
        %1782 = vmatpush1.bf16.msra.mxu0 0
        %1783 = vmatprep.subr.bf16.mxu0 0
        %1784 = vmatpush1.bf16.msra.mxu0 0
        %1785 = vmatprep.subr.bf16.mxu0 0
        %1786 = vmatpush1.bf16.msra.mxu0 0
        %1787 = vmatprep.subr.bf16.mxu0 0
        %1788 = vmatpush1.bf16.msra.mxu0 %v1768
        %1789 = vmatprep.subr.bf16.mxu0 0
        %1790 = vmatpush2.bf16.msra.mxu0 0
        %1791 = vmatprep.subr.bf16.mxu0 0
        %1792 = vmatpush2.bf16.msra.mxu0 0
        %1793 = vmatprep.subr.bf16.mxu0 0
        %1794 = vmatpush2.bf16.msra.mxu0 0
        %1795 = vmatprep.subr.bf16.mxu0 0
        %1796 = vmatpush2.bf16.msra.mxu0 0
        %1797 = vmatprep.subr.bf16.mxu0 0
        %1798 = vmatpush2.bf16.msra.mxu0 0
        %1799 = vmatprep.subr.bf16.mxu0 0
        %1800 = vmatpush2.bf16.msra.mxu0 0
        %1801 = vmatprep.subr.bf16.mxu0 0
        %1802 = vmatpush2.bf16.msra.mxu0 0
        %1803 = vmatprep.subr.bf16.mxu0 0
        %1804 = vmatpush2.bf16.msra.mxu0 0
        %1805 = vmatprep.mubr.bf16.mxu0 0
        %1806 = vmatmul.mubr.bf16.gmra.mxu0 %v1771
        %v1807 = vpop.f32.mrf.mxu0
        %v1808 = vadd.f32 0.0, %v1807
        %v1809 = vpop.f32.mrf.mxu0
        %v1810 = vpop.f32.mrf.mxu0
        %v1811 = vadd.f32 0.0, %v1810
        %v1812 = vpop.f32.mrf.mxu0
        %1813 = vdwg.mxu0
        %1815 = vrot.lane.b32.xlu0 %v946, 96
        %v1816 = vpop.permute.xlu0 %1815
        %v1819 = vsel %vm1137, %v1716, 0
        %1821 = vmatprep.subr.bf16.mxu0 0
        %1822 = vmatpush1.bf16.msra.mxu0 0
        %1823 = vmatprep.subr.bf16.mxu0 0
        %1824 = vmatpush1.bf16.msra.mxu0 0
        %1825 = vmatprep.subr.bf16.mxu0 0
        %1826 = vmatpush1.bf16.msra.mxu0 0
        %1827 = vmatprep.subr.bf16.mxu0 0
        %1828 = vmatpush1.bf16.msra.mxu0 0
        %1829 = vmatprep.subr.bf16.mxu0 0
        %1830 = vmatpush1.bf16.msra.mxu0 0
        %1831 = vmatprep.subr.bf16.mxu0 0
        %1832 = vmatpush1.bf16.msra.mxu0 0
        %1833 = vmatprep.subr.bf16.mxu0 0
        %1834 = vmatpush1.bf16.msra.mxu0 0
        %1835 = vmatprep.subr.bf16.mxu0 0
        %1836 = vmatpush1.bf16.msra.mxu0 %v1816
        %1837 = vmatprep.subr.bf16.mxu0 0
        %1838 = vmatpush2.bf16.msra.mxu0 0
        %1839 = vmatprep.subr.bf16.mxu0 0
        %1840 = vmatpush2.bf16.msra.mxu0 0
        %1841 = vmatprep.subr.bf16.mxu0 0
        %1842 = vmatpush2.bf16.msra.mxu0 0
        %1843 = vmatprep.subr.bf16.mxu0 0
        %1844 = vmatpush2.bf16.msra.mxu0 0
        %1845 = vmatprep.subr.bf16.mxu0 0
        %1846 = vmatpush2.bf16.msra.mxu0 0
        %1847 = vmatprep.subr.bf16.mxu0 0
        %1848 = vmatpush2.bf16.msra.mxu0 0
        %1849 = vmatprep.subr.bf16.mxu0 0
        %1850 = vmatpush2.bf16.msra.mxu0 0
        %1851 = vmatprep.subr.bf16.mxu0 0
        %1852 = vmatpush2.bf16.msra.mxu0 0
        %1853 = vmatprep.mubr.bf16.mxu0 0
        %1854 = vmatmul.mubr.bf16.gmra.mxu0 %v1819
        %v1855 = vpop.f32.mrf.mxu0
        %v1856 = vadd.f32 0.0, %v1855
        %v1857 = vpop.f32.mrf.mxu0
        %v1858 = vpop.f32.mrf.mxu0
        %v1859 = vadd.f32 0.0, %v1858
        %v1860 = vpop.f32.mrf.mxu0
        %1861 = vdwg.mxu0
        %1863 = vrot.lane.b32.xlu0 %v947, 96
        %v1864 = vpop.permute.xlu0 %1863
        %v1867 = vsel %vm1137, %v1717, 0
        %1869 = vmatprep.subr.bf16.mxu0 0
        %1870 = vmatpush1.bf16.msra.mxu0 0
        %1871 = vmatprep.subr.bf16.mxu0 0
        %1872 = vmatpush1.bf16.msra.mxu0 0
        %1873 = vmatprep.subr.bf16.mxu0 0
        %1874 = vmatpush1.bf16.msra.mxu0 0
        %1875 = vmatprep.subr.bf16.mxu0 0
        %1876 = vmatpush1.bf16.msra.mxu0 0
        %1877 = vmatprep.subr.bf16.mxu0 0
        %1878 = vmatpush1.bf16.msra.mxu0 0
        %1879 = vmatprep.subr.bf16.mxu0 0
        %1880 = vmatpush1.bf16.msra.mxu0 0
        %1881 = vmatprep.subr.bf16.mxu0 0
        %1882 = vmatpush1.bf16.msra.mxu0 0
        %1883 = vmatprep.subr.bf16.mxu0 0
        %1884 = vmatpush1.bf16.msra.mxu0 %v1864
        %1885 = vmatprep.subr.bf16.mxu0 0
        %1886 = vmatpush2.bf16.msra.mxu0 0
        %1887 = vmatprep.subr.bf16.mxu0 0
        %1888 = vmatpush2.bf16.msra.mxu0 0
        %1889 = vmatprep.subr.bf16.mxu0 0
        %1890 = vmatpush2.bf16.msra.mxu0 0
        %1891 = vmatprep.subr.bf16.mxu0 0
        %1892 = vmatpush2.bf16.msra.mxu0 0
        %1893 = vmatprep.subr.bf16.mxu0 0
        %1894 = vmatpush2.bf16.msra.mxu0 0
        %1895 = vmatprep.subr.bf16.mxu0 0
        %1896 = vmatpush2.bf16.msra.mxu0 0
        %1897 = vmatprep.subr.bf16.mxu0 0
        %1898 = vmatpush2.bf16.msra.mxu0 0
        %1899 = vmatprep.subr.bf16.mxu0 0
        %1900 = vmatpush2.bf16.msra.mxu0 0
        %1901 = vmatprep.mubr.bf16.mxu0 0
        %1902 = vmatmul.mubr.bf16.gmra.mxu0 %v1867
        %v1903 = vpop.f32.mrf.mxu0
        %v1904 = vadd.f32 0.0, %v1903
        %v1905 = vpop.f32.mrf.mxu0
        %v1906 = vpop.f32.mrf.mxu0
        %v1907 = vadd.f32 0.0, %v1906
        %v1908 = vpop.f32.mrf.mxu0
        %1909 = vdwg.mxu0
        %1918 = vrot.lane.b32.xlu0 %v1760, 32
        %v1919 = vpop.permute.xlu0 %1918
        %1920 = vrot.lane.b32.xlu0 %v1763, 32
        %v1921 = vpop.permute.xlu0 %1920
        %1922 = vrot.lane.b32.xlu0 %v1808, 32
        %v1923 = vpop.permute.xlu0 %1922
        %1924 = vrot.lane.b32.xlu0 %v1811, 32
        %v1925 = vpop.permute.xlu0 %1924
        %1926 = vrot.lane.b32.xlu0 %v1856, 32
        %v1927 = vpop.permute.xlu0 %1926
        %1928 = vrot.lane.b32.xlu0 %v1859, 32
        %v1929 = vpop.permute.xlu0 %1928
        %1930 = vrot.lane.b32.xlu0 %v1904, 32
        %v1931 = vpop.permute.xlu0 %1930
        %1932 = vrot.lane.b32.xlu0 %v1907, 32
        %v1933 = vpop.permute.xlu0 %1932
        %vm1942 = vcmask 523520
        %1943 = vst.msk [vmem:[#allocation2] sm:$0xff] %vm1942, %v1919
        %1944 = vst.msk [vmem:[#allocation2 + $0x8] sm:$0xff] %vm1942, %v1921
        %1945 = vst.msk [vmem:[#allocation2 + $0x10] sm:$0xff] %vm1942, %v1923
        %1946 = vst.msk [vmem:[#allocation2 + $0x18] sm:$0xff] %vm1942, %v1925
        %1947 = vst.msk [vmem:[#allocation2 + $0x20] sm:$0xff] %vm1942, %v1927
        %1948 = vst.msk [vmem:[#allocation2 + $0x28] sm:$0xff] %vm1942, %v1929
        %1949 = vst.msk [vmem:[#allocation2 + $0x30] sm:$0xff] %vm1942, %v1931
        %1950 = vst.msk [vmem:[#allocation2 + $0x38] sm:$0xff] %vm1942, %v1933
        %1951 = vrot.lane.b32.xlu0 %v936, 64
        %v1952 = vpop.permute.xlu0 %1951
        %1953 = vrot.lane.b32.xlu0 %v940, 64
        %v1954 = vpop.permute.xlu0 %1953
        %v1956 = vsel %vm948, %v1952, 0
        %v1959 = vsel %vm948, %v1954, 0
        %1961 = vmatprep.subr.bf16.mxu0 0
        %1962 = vmatpush1.bf16.xpose.msra.mxu0 0
        %1963 = vmatprep.subr.bf16.mxu0 0
        %1964 = vmatpush1.bf16.xpose.msra.mxu0 0
        %1965 = vmatprep.subr.bf16.mxu0 0
        %1966 = vmatpush1.bf16.xpose.msra.mxu0 0
        %1967 = vmatprep.subr.bf16.mxu0 0
        %1968 = vmatpush1.bf16.xpose.msra.mxu0 0
        %1969 = vmatprep.subr.bf16.mxu0 0
        %1970 = vmatpush1.bf16.xpose.msra.mxu0 0
        %1971 = vmatprep.subr.bf16.mxu0 0
        %1972 = vmatpush1.bf16.xpose.msra.mxu0 0
        %1973 = vmatprep.subr.bf16.mxu0 0
        %1974 = vmatpush1.bf16.xpose.msra.mxu0 0
        %1975 = vmatprep.subr.bf16.mxu0 0
        %1976 = vmatpush1.bf16.xpose.msra.mxu0 %v1959
        %1977 = vmatprep.subr.bf16.mxu0 0
        %1978 = vmatpush2.bf16.xpose.msra.mxu0 0
        %1979 = vmatprep.subr.bf16.mxu0 0
        %1980 = vmatpush2.bf16.xpose.msra.mxu0 0
        %1981 = vmatprep.subr.bf16.mxu0 0
        %1982 = vmatpush2.bf16.xpose.msra.mxu0 0
        %1983 = vmatprep.subr.bf16.mxu0 0
        %1984 = vmatpush2.bf16.xpose.msra.mxu0 0
        %1985 = vmatprep.subr.bf16.mxu0 0
        %1986 = vmatpush2.bf16.xpose.msra.mxu0 0
        %1987 = vmatprep.subr.bf16.mxu0 0
        %1988 = vmatpush2.bf16.xpose.msra.mxu0 0
        %1989 = vmatprep.subr.bf16.mxu0 0
        %1990 = vmatpush2.bf16.xpose.msra.mxu0 0
        %1991 = vmatprep.subr.bf16.mxu0 0
        %1992 = vmatpush2.bf16.xpose.msra.mxu0 0
        %1993 = vmatprep.mubr.bf16.mxu0 0
        %1994 = vmatmul.mubr.bf16.gmra.mxu0 %v1956
        %v1995 = vpop.f32.mrf.mxu0
        %v1996 = vadd.f32 0.0, %v1995
        %v1997 = vpop.f32.mrf.mxu0
        %v1998 = vpop.f32.mrf.mxu0
        %v1999 = vadd.f32 0.0, %v1998
        %v2000 = vpop.f32.mrf.mxu0
        %2001 = vdwg.mxu0
        %2002 = vrot.lane.b32.xlu0 %v937, 64
        %v2003 = vpop.permute.xlu0 %2002
        %2004 = vrot.lane.b32.xlu0 %v941, 64
        %v2005 = vpop.permute.xlu0 %2004
        %v2007 = vsel %vm948, %v2003, 0
        %v2010 = vsel %vm948, %v2005, 0
        %2012 = vmatprep.subr.bf16.mxu0 0
        %2013 = vmatpush1.bf16.xpose.msra.mxu0 0
        %2014 = vmatprep.subr.bf16.mxu0 0
        %2015 = vmatpush1.bf16.xpose.msra.mxu0 0
        %2016 = vmatprep.subr.bf16.mxu0 0
        %2017 = vmatpush1.bf16.xpose.msra.mxu0 0
        %2018 = vmatprep.subr.bf16.mxu0 0
        %2019 = vmatpush1.bf16.xpose.msra.mxu0 0
        %2020 = vmatprep.subr.bf16.mxu0 0
        %2021 = vmatpush1.bf16.xpose.msra.mxu0 0
        %2022 = vmatprep.subr.bf16.mxu0 0
        %2023 = vmatpush1.bf16.xpose.msra.mxu0 0
        %2024 = vmatprep.subr.bf16.mxu0 0
        %2025 = vmatpush1.bf16.xpose.msra.mxu0 0
        %2026 = vmatprep.subr.bf16.mxu0 0
        %2027 = vmatpush1.bf16.xpose.msra.mxu0 %v2010
        %2028 = vmatprep.subr.bf16.mxu0 0
        %2029 = vmatpush2.bf16.xpose.msra.mxu0 0
        %2030 = vmatprep.subr.bf16.mxu0 0
        %2031 = vmatpush2.bf16.xpose.msra.mxu0 0
        %2032 = vmatprep.subr.bf16.mxu0 0
        %2033 = vmatpush2.bf16.xpose.msra.mxu0 0
        %2034 = vmatprep.subr.bf16.mxu0 0
        %2035 = vmatpush2.bf16.xpose.msra.mxu0 0
        %2036 = vmatprep.subr.bf16.mxu0 0
        %2037 = vmatpush2.bf16.xpose.msra.mxu0 0
        %2038 = vmatprep.subr.bf16.mxu0 0
        %2039 = vmatpush2.bf16.xpose.msra.mxu0 0
        %2040 = vmatprep.subr.bf16.mxu0 0
        %2041 = vmatpush2.bf16.xpose.msra.mxu0 0
        %2042 = vmatprep.subr.bf16.mxu0 0
        %2043 = vmatpush2.bf16.xpose.msra.mxu0 0
        %2044 = vmatprep.mubr.bf16.mxu0 0
        %2045 = vmatmul.mubr.bf16.gmra.mxu0 %v2007
        %v2046 = vpop.f32.mrf.mxu0
        %v2047 = vadd.f32 0.0, %v2046
        %v2048 = vpop.f32.mrf.mxu0
        %v2049 = vpop.f32.mrf.mxu0
        %v2050 = vadd.f32 0.0, %v2049
        %v2051 = vpop.f32.mrf.mxu0
        %2052 = vdwg.mxu0
        %2053 = vrot.lane.b32.xlu0 %v938, 64
        %v2054 = vpop.permute.xlu0 %2053
        %2055 = vrot.lane.b32.xlu0 %v942, 64
        %v2056 = vpop.permute.xlu0 %2055
        %v2058 = vsel %vm948, %v2054, 0
        %v2061 = vsel %vm948, %v2056, 0
        %2063 = vmatprep.subr.bf16.mxu0 0
        %2064 = vmatpush1.bf16.xpose.msra.mxu0 0
        %2065 = vmatprep.subr.bf16.mxu0 0
        %2066 = vmatpush1.bf16.xpose.msra.mxu0 0
        %2067 = vmatprep.subr.bf16.mxu0 0
        %2068 = vmatpush1.bf16.xpose.msra.mxu0 0
        %2069 = vmatprep.subr.bf16.mxu0 0
        %2070 = vmatpush1.bf16.xpose.msra.mxu0 0
        %2071 = vmatprep.subr.bf16.mxu0 0
        %2072 = vmatpush1.bf16.xpose.msra.mxu0 0
        %2073 = vmatprep.subr.bf16.mxu0 0
        %2074 = vmatpush1.bf16.xpose.msra.mxu0 0
        %2075 = vmatprep.subr.bf16.mxu0 0
        %2076 = vmatpush1.bf16.xpose.msra.mxu0 0
        %2077 = vmatprep.subr.bf16.mxu0 0
        %2078 = vmatpush1.bf16.xpose.msra.mxu0 %v2061
        %2079 = vmatprep.subr.bf16.mxu0 0
        %2080 = vmatpush2.bf16.xpose.msra.mxu0 0
        %2081 = vmatprep.subr.bf16.mxu0 0
        %2082 = vmatpush2.bf16.xpose.msra.mxu0 0
        %2083 = vmatprep.subr.bf16.mxu0 0
        %2084 = vmatpush2.bf16.xpose.msra.mxu0 0
        %2085 = vmatprep.subr.bf16.mxu0 0
        %2086 = vmatpush2.bf16.xpose.msra.mxu0 0
        %2087 = vmatprep.subr.bf16.mxu0 0
        %2088 = vmatpush2.bf16.xpose.msra.mxu0 0
        %2089 = vmatprep.subr.bf16.mxu0 0
        %2090 = vmatpush2.bf16.xpose.msra.mxu0 0
        %2091 = vmatprep.subr.bf16.mxu0 0
        %2092 = vmatpush2.bf16.xpose.msra.mxu0 0
        %2093 = vmatprep.subr.bf16.mxu0 0
        %2094 = vmatpush2.bf16.xpose.msra.mxu0 0
        %2095 = vmatprep.mubr.bf16.mxu0 0
        %2096 = vmatmul.mubr.bf16.gmra.mxu0 %v2058
        %v2097 = vpop.f32.mrf.mxu0
        %v2098 = vadd.f32 0.0, %v2097
        %v2099 = vpop.f32.mrf.mxu0
        %v2100 = vpop.f32.mrf.mxu0
        %v2101 = vadd.f32 0.0, %v2100
        %v2102 = vpop.f32.mrf.mxu0
        %2103 = vdwg.mxu0
        %2104 = vrot.lane.b32.xlu0 %v939, 64
        %v2105 = vpop.permute.xlu0 %2104
        %2106 = vrot.lane.b32.xlu0 %v943, 64
        %v2107 = vpop.permute.xlu0 %2106
        %v2109 = vsel %vm948, %v2105, 0
        %v2112 = vsel %vm948, %v2107, 0
        %2114 = vmatprep.subr.bf16.mxu0 0
        %2115 = vmatpush1.bf16.xpose.msra.mxu0 0
        %2116 = vmatprep.subr.bf16.mxu0 0
        %2117 = vmatpush1.bf16.xpose.msra.mxu0 0
        %2118 = vmatprep.subr.bf16.mxu0 0
        %2119 = vmatpush1.bf16.xpose.msra.mxu0 0
        %2120 = vmatprep.subr.bf16.mxu0 0
        %2121 = vmatpush1.bf16.xpose.msra.mxu0 0
        %2122 = vmatprep.subr.bf16.mxu0 0
        %2123 = vmatpush1.bf16.xpose.msra.mxu0 0
        %2124 = vmatprep.subr.bf16.mxu0 0
        %2125 = vmatpush1.bf16.xpose.msra.mxu0 0
        %2126 = vmatprep.subr.bf16.mxu0 0
        %2127 = vmatpush1.bf16.xpose.msra.mxu0 0
        %2128 = vmatprep.subr.bf16.mxu0 0
        %2129 = vmatpush1.bf16.xpose.msra.mxu0 %v2112
        %2130 = vmatprep.subr.bf16.mxu0 0
        %2131 = vmatpush2.bf16.xpose.msra.mxu0 0
        %2132 = vmatprep.subr.bf16.mxu0 0
        %2133 = vmatpush2.bf16.xpose.msra.mxu0 0
        %2134 = vmatprep.subr.bf16.mxu0 0
        %2135 = vmatpush2.bf16.xpose.msra.mxu0 0
        %2136 = vmatprep.subr.bf16.mxu0 0
        %2137 = vmatpush2.bf16.xpose.msra.mxu0 0
        %2138 = vmatprep.subr.bf16.mxu0 0
        %2139 = vmatpush2.bf16.xpose.msra.mxu0 0
        %2140 = vmatprep.subr.bf16.mxu0 0
        %2141 = vmatpush2.bf16.xpose.msra.mxu0 0
        %2142 = vmatprep.subr.bf16.mxu0 0
        %2143 = vmatpush2.bf16.xpose.msra.mxu0 0
        %2144 = vmatprep.subr.bf16.mxu0 0
        %2145 = vmatpush2.bf16.xpose.msra.mxu0 0
        %2146 = vmatprep.mubr.bf16.mxu0 0
        %2147 = vmatmul.mubr.bf16.gmra.mxu0 %v2109
        %v2148 = vpop.f32.mrf.mxu0
        %v2149 = vadd.f32 0.0, %v2148
        %v2150 = vpop.f32.mrf.mxu0
        %v2151 = vpop.f32.mrf.mxu0
        %v2152 = vadd.f32 0.0, %v2151
        %v2153 = vpop.f32.mrf.mxu0
        %2154 = vdwg.mxu0
        %v2155 = vsel %vm1137, %v1996, -inf
        %2156 = vmax.xlane.f32.xlu0 %v2155
        %v2157 = vpop.xlane.xlu0 %2156
        %v2158 = vsel %vm1137, %v1999, -inf
        %2159 = vmax.xlane.f32.xlu0 %v2158
        %v2160 = vpop.xlane.xlu0 %2159
        %v2161 = vsel %vm1137, %v2047, -inf
        %2162 = vmax.xlane.f32.xlu0 %v2161
        %v2163 = vpop.xlane.xlu0 %2162
        %v2164 = vsel %vm1137, %v2050, -inf
        %2165 = vmax.xlane.f32.xlu0 %v2164
        %v2166 = vpop.xlane.xlu0 %2165
        %v2167 = vsel %vm1137, %v2098, -inf
        %2168 = vmax.xlane.f32.xlu0 %v2167
        %v2169 = vpop.xlane.xlu0 %2168
        %v2170 = vsel %vm1137, %v2101, -inf
        %2171 = vmax.xlane.f32.xlu0 %v2170
        %v2172 = vpop.xlane.xlu0 %2171
        %v2173 = vsel %vm1137, %v2149, -inf
        %2174 = vmax.xlane.f32.xlu0 %v2173
        %v2175 = vpop.xlane.xlu0 %2174
        %v2176 = vsel %vm1137, %v2152, -inf
        %2177 = vmax.xlane.f32.xlu0 %v2176
        %v2178 = vpop.xlane.xlu0 %2177
        %v2179 = vsub.f32 %v1996, %v2157
        %v2180 = vsub.f32 %v1999, %v2160
        %v2181 = vsub.f32 %v2047, %v2163
        %v2182 = vsub.f32 %v2050, %v2166
        %v2183 = vsub.f32 %v2098, %v2169
        %v2184 = vsub.f32 %v2101, %v2172
        %v2185 = vsub.f32 %v2149, %v2175
        %v2186 = vsub.f32 %v2152, %v2178
        %v2187 = vmul.f32 %v2179, 1.442695
        %v2188 = vpow.pop %v2187
        %v2189 = vmul.f32 %v2180, 1.442695
        %v2190 = vpow.pop %v2189
        %v2191 = vmul.f32 %v2181, 1.442695
        %v2192 = vpow.pop %v2191
        %v2193 = vmul.f32 %v2182, 1.442695
        %v2194 = vpow.pop %v2193
        %v2195 = vmul.f32 %v2183, 1.442695
        %v2196 = vpow.pop %v2195
        %v2197 = vmul.f32 %v2184, 1.442695
        %v2198 = vpow.pop %v2197
        %v2199 = vmul.f32 %v2185, 1.442695
        %v2200 = vpow.pop %v2199
        %v2201 = vmul.f32 %v2186, 1.442695
        %v2202 = vpow.pop %v2201
        %v2203 = vsel %vm1137, %v2188, 0.0
        %2204 = vadd.xlane.f32.xlu0 %v2203
        %v2205 = vpop.xlane.xlu0 %2204
        %v2206 = vsel %vm1137, %v2190, 0.0
        %2207 = vadd.xlane.f32.xlu0 %v2206
        %v2208 = vpop.xlane.xlu0 %2207
        %v2209 = vsel %vm1137, %v2192, 0.0
        %2210 = vadd.xlane.f32.xlu0 %v2209
        %v2211 = vpop.xlane.xlu0 %2210
        %v2212 = vsel %vm1137, %v2194, 0.0
        %2213 = vadd.xlane.f32.xlu0 %v2212
        %v2214 = vpop.xlane.xlu0 %2213
        %v2215 = vsel %vm1137, %v2196, 0.0
        %2216 = vadd.xlane.f32.xlu0 %v2215
        %v2217 = vpop.xlane.xlu0 %2216
        %v2218 = vsel %vm1137, %v2198, 0.0
        %2219 = vadd.xlane.f32.xlu0 %v2218
        %v2220 = vpop.xlane.xlu0 %2219
        %v2221 = vsel %vm1137, %v2200, 0.0
        %2222 = vadd.xlane.f32.xlu0 %v2221
        %v2223 = vpop.xlane.xlu0 %2222
        %v2224 = vsel %vm1137, %v2202, 0.0
        %2225 = vadd.xlane.f32.xlu0 %v2224
        %v2226 = vpop.xlane.xlu0 %2225
        %v2227 = vrcp.pop %v2205
        %v2228 = vrcp.pop %v2208
        %v2229 = vrcp.pop %v2211
        %v2230 = vrcp.pop %v2214
        %v2231 = vrcp.pop %v2217
        %v2232 = vrcp.pop %v2220
        %v2233 = vrcp.pop %v2223
        %v2234 = vrcp.pop %v2226
        %v2235 = vmul.f32 %v2188, %v2227
        %v2236 = vmul.f32 %v2190, %v2228
        %v2237 = vmul.f32 %v2192, %v2229
        %v2238 = vmul.f32 %v2194, %v2230
        %v2239 = vmul.f32 %v2196, %v2231
        %v2240 = vmul.f32 %v2198, %v2232
        %v2241 = vmul.f32 %v2200, %v2233
        %v2242 = vmul.f32 %v2202, %v2234
        %v2243 = vpack.c.bf16 %v2236, %v2235
        %v2244 = vpack.c.bf16 %v2238, %v2237
        %v2245 = vpack.c.bf16 %v2240, %v2239
        %v2246 = vpack.c.bf16 %v2242, %v2241
        %2247 = vrot.lane.b32.xlu0 %v944, 64
        %v2248 = vpop.permute.xlu0 %2247
        %v2251 = vsel %vm1137, %v2243, 0
        %2253 = vmatprep.subr.bf16.mxu0 0
        %2254 = vmatpush1.bf16.msra.mxu0 0
        %2255 = vmatprep.subr.bf16.mxu0 0
        %2256 = vmatpush1.bf16.msra.mxu0 0
        %2257 = vmatprep.subr.bf16.mxu0 0
        %2258 = vmatpush1.bf16.msra.mxu0 0
        %2259 = vmatprep.subr.bf16.mxu0 0
        %2260 = vmatpush1.bf16.msra.mxu0 0
        %2261 = vmatprep.subr.bf16.mxu0 0
        %2262 = vmatpush1.bf16.msra.mxu0 0
        %2263 = vmatprep.subr.bf16.mxu0 0
        %2264 = vmatpush1.bf16.msra.mxu0 0
        %2265 = vmatprep.subr.bf16.mxu0 0
        %2266 = vmatpush1.bf16.msra.mxu0 0
        %2267 = vmatprep.subr.bf16.mxu0 0
        %2268 = vmatpush1.bf16.msra.mxu0 %v2248
        %2269 = vmatprep.subr.bf16.mxu0 0
        %2270 = vmatpush2.bf16.msra.mxu0 0
        %2271 = vmatprep.subr.bf16.mxu0 0
        %2272 = vmatpush2.bf16.msra.mxu0 0
        %2273 = vmatprep.subr.bf16.mxu0 0
        %2274 = vmatpush2.bf16.msra.mxu0 0
        %2275 = vmatprep.subr.bf16.mxu0 0
        %2276 = vmatpush2.bf16.msra.mxu0 0
        %2277 = vmatprep.subr.bf16.mxu0 0
        %2278 = vmatpush2.bf16.msra.mxu0 0
        %2279 = vmatprep.subr.bf16.mxu0 0
        %2280 = vmatpush2.bf16.msra.mxu0 0
        %2281 = vmatprep.subr.bf16.mxu0 0
        %2282 = vmatpush2.bf16.msra.mxu0 0
        %2283 = vmatprep.subr.bf16.mxu0 0
        %2284 = vmatpush2.bf16.msra.mxu0 0
        %2285 = vmatprep.mubr.bf16.mxu0 0
        %2286 = vmatmul.mubr.bf16.gmra.mxu0 %v2251
        %v2287 = vpop.f32.mrf.mxu0
        %v2288 = vadd.f32 0.0, %v2287
        %v2289 = vpop.f32.mrf.mxu0
        %v2290 = vpop.f32.mrf.mxu0
        %v2291 = vadd.f32 0.0, %v2290
        %v2292 = vpop.f32.mrf.mxu0
        %2293 = vdwg.mxu0
        %2294 = vrot.lane.b32.xlu0 %v945, 64
        %v2295 = vpop.permute.xlu0 %2294
        %v2298 = vsel %vm1137, %v2244, 0
        %2300 = vmatprep.subr.bf16.mxu0 0
        %2301 = vmatpush1.bf16.msra.mxu0 0
        %2302 = vmatprep.subr.bf16.mxu0 0
        %2303 = vmatpush1.bf16.msra.mxu0 0
        %2304 = vmatprep.subr.bf16.mxu0 0
        %2305 = vmatpush1.bf16.msra.mxu0 0
        %2306 = vmatprep.subr.bf16.mxu0 0
        %2307 = vmatpush1.bf16.msra.mxu0 0
        %2308 = vmatprep.subr.bf16.mxu0 0
        %2309 = vmatpush1.bf16.msra.mxu0 0
        %2310 = vmatprep.subr.bf16.mxu0 0
        %2311 = vmatpush1.bf16.msra.mxu0 0
        %2312 = vmatprep.subr.bf16.mxu0 0
        %2313 = vmatpush1.bf16.msra.mxu0 0
        %2314 = vmatprep.subr.bf16.mxu0 0
        %2315 = vmatpush1.bf16.msra.mxu0 %v2295
        %2316 = vmatprep.subr.bf16.mxu0 0
        %2317 = vmatpush2.bf16.msra.mxu0 0
        %2318 = vmatprep.subr.bf16.mxu0 0
        %2319 = vmatpush2.bf16.msra.mxu0 0
        %2320 = vmatprep.subr.bf16.mxu0 0
        %2321 = vmatpush2.bf16.msra.mxu0 0
        %2322 = vmatprep.subr.bf16.mxu0 0
        %2323 = vmatpush2.bf16.msra.mxu0 0
        %2324 = vmatprep.subr.bf16.mxu0 0
        %2325 = vmatpush2.bf16.msra.mxu0 0
        %2326 = vmatprep.subr.bf16.mxu0 0
        %2327 = vmatpush2.bf16.msra.mxu0 0
        %2328 = vmatprep.subr.bf16.mxu0 0
        %2329 = vmatpush2.bf16.msra.mxu0 0
        %2330 = vmatprep.subr.bf16.mxu0 0
        %2331 = vmatpush2.bf16.msra.mxu0 0
        %2332 = vmatprep.mubr.bf16.mxu0 0
        %2333 = vmatmul.mubr.bf16.gmra.mxu0 %v2298
        %v2334 = vpop.f32.mrf.mxu0
        %v2335 = vadd.f32 0.0, %v2334
        %v2336 = vpop.f32.mrf.mxu0
        %v2337 = vpop.f32.mrf.mxu0
        %v2338 = vadd.f32 0.0, %v2337
        %v2339 = vpop.f32.mrf.mxu0
        %2340 = vdwg.mxu0
        %2341 = vrot.lane.b32.xlu0 %v946, 64
        %v2342 = vpop.permute.xlu0 %2341
        %v2345 = vsel %vm1137, %v2245, 0
        %2347 = vmatprep.subr.bf16.mxu0 0
        %2348 = vmatpush1.bf16.msra.mxu0 0
        %2349 = vmatprep.subr.bf16.mxu0 0
        %2350 = vmatpush1.bf16.msra.mxu0 0
        %2351 = vmatprep.subr.bf16.mxu0 0
        %2352 = vmatpush1.bf16.msra.mxu0 0
        %2353 = vmatprep.subr.bf16.mxu0 0
        %2354 = vmatpush1.bf16.msra.mxu0 0
        %2355 = vmatprep.subr.bf16.mxu0 0
        %2356 = vmatpush1.bf16.msra.mxu0 0
        %2357 = vmatprep.subr.bf16.mxu0 0
        %2358 = vmatpush1.bf16.msra.mxu0 0
        %2359 = vmatprep.subr.bf16.mxu0 0
        %2360 = vmatpush1.bf16.msra.mxu0 0
        %2361 = vmatprep.subr.bf16.mxu0 0
        %2362 = vmatpush1.bf16.msra.mxu0 %v2342
        %2363 = vmatprep.subr.bf16.mxu0 0
        %2364 = vmatpush2.bf16.msra.mxu0 0
        %2365 = vmatprep.subr.bf16.mxu0 0
        %2366 = vmatpush2.bf16.msra.mxu0 0
        %2367 = vmatprep.subr.bf16.mxu0 0
        %2368 = vmatpush2.bf16.msra.mxu0 0
        %2369 = vmatprep.subr.bf16.mxu0 0
        %2370 = vmatpush2.bf16.msra.mxu0 0
        %2371 = vmatprep.subr.bf16.mxu0 0
        %2372 = vmatpush2.bf16.msra.mxu0 0
        %2373 = vmatprep.subr.bf16.mxu0 0
        %2374 = vmatpush2.bf16.msra.mxu0 0
        %2375 = vmatprep.subr.bf16.mxu0 0
        %2376 = vmatpush2.bf16.msra.mxu0 0
        %2377 = vmatprep.subr.bf16.mxu0 0
        %2378 = vmatpush2.bf16.msra.mxu0 0
        %2379 = vmatprep.mubr.bf16.mxu0 0
        %2380 = vmatmul.mubr.bf16.gmra.mxu0 %v2345
        %v2381 = vpop.f32.mrf.mxu0
        %v2382 = vadd.f32 0.0, %v2381
        %v2383 = vpop.f32.mrf.mxu0
        %v2384 = vpop.f32.mrf.mxu0
        %v2385 = vadd.f32 0.0, %v2384
        %v2386 = vpop.f32.mrf.mxu0
        %2387 = vdwg.mxu0
        %2388 = vrot.lane.b32.xlu0 %v947, 64
        %v2389 = vpop.permute.xlu0 %2388
        %v2392 = vsel %vm1137, %v2246, 0
        %2394 = vmatprep.subr.bf16.mxu0 0
        %2395 = vmatpush1.bf16.msra.mxu0 0
        %2396 = vmatprep.subr.bf16.mxu0 0
        %2397 = vmatpush1.bf16.msra.mxu0 0
        %2398 = vmatprep.subr.bf16.mxu0 0
        %2399 = vmatpush1.bf16.msra.mxu0 0
        %2400 = vmatprep.subr.bf16.mxu0 0
        %2401 = vmatpush1.bf16.msra.mxu0 0
        %2402 = vmatprep.subr.bf16.mxu0 0
        %2403 = vmatpush1.bf16.msra.mxu0 0
        %2404 = vmatprep.subr.bf16.mxu0 0
        %2405 = vmatpush1.bf16.msra.mxu0 0
        %2406 = vmatprep.subr.bf16.mxu0 0
        %2407 = vmatpush1.bf16.msra.mxu0 0
        %2408 = vmatprep.subr.bf16.mxu0 0
        %2409 = vmatpush1.bf16.msra.mxu0 %v2389
        %2410 = vmatprep.subr.bf16.mxu0 0
        %2411 = vmatpush2.bf16.msra.mxu0 0
        %2412 = vmatprep.subr.bf16.mxu0 0
        %2413 = vmatpush2.bf16.msra.mxu0 0
        %2414 = vmatprep.subr.bf16.mxu0 0
        %2415 = vmatpush2.bf16.msra.mxu0 0
        %2416 = vmatprep.subr.bf16.mxu0 0
        %2417 = vmatpush2.bf16.msra.mxu0 0
        %2418 = vmatprep.subr.bf16.mxu0 0
        %2419 = vmatpush2.bf16.msra.mxu0 0
        %2420 = vmatprep.subr.bf16.mxu0 0
        %2421 = vmatpush2.bf16.msra.mxu0 0
        %2422 = vmatprep.subr.bf16.mxu0 0
        %2423 = vmatpush2.bf16.msra.mxu0 0
        %2424 = vmatprep.subr.bf16.mxu0 0
        %2425 = vmatpush2.bf16.msra.mxu0 0
        %2426 = vmatprep.mubr.bf16.mxu0 0
        %2427 = vmatmul.mubr.bf16.gmra.mxu0 %v2392
        %v2428 = vpop.f32.mrf.mxu0
        %v2429 = vadd.f32 0.0, %v2428
        %v2430 = vpop.f32.mrf.mxu0
        %v2431 = vpop.f32.mrf.mxu0
        %v2432 = vadd.f32 0.0, %v2431
        %v2433 = vpop.f32.mrf.mxu0
        %2434 = vdwg.mxu0
        %2443 = vrot.lane.b32.xlu0 %v2288, 64
        %v2444 = vpop.permute.xlu0 %2443
        %2445 = vrot.lane.b32.xlu0 %v2291, 64
        %v2446 = vpop.permute.xlu0 %2445
        %2447 = vrot.lane.b32.xlu0 %v2335, 64
        %v2448 = vpop.permute.xlu0 %2447
        %2449 = vrot.lane.b32.xlu0 %v2338, 64
        %v2450 = vpop.permute.xlu0 %2449
        %2451 = vrot.lane.b32.xlu0 %v2382, 64
        %v2452 = vpop.permute.xlu0 %2451
        %2453 = vrot.lane.b32.xlu0 %v2385, 64
        %v2454 = vpop.permute.xlu0 %2453
        %2455 = vrot.lane.b32.xlu0 %v2429, 64
        %v2456 = vpop.permute.xlu0 %2455
        %2457 = vrot.lane.b32.xlu0 %v2432, 64
        %v2458 = vpop.permute.xlu0 %2457
        %vm2467 = vcmask 785920
        %2468 = vst.msk [vmem:[#allocation2] sm:$0xff] %vm2467, %v2444
        %2469 = vst.msk [vmem:[#allocation2 + $0x8] sm:$0xff] %vm2467, %v2446
        %2470 = vst.msk [vmem:[#allocation2 + $0x10] sm:$0xff] %vm2467, %v2448
        %2471 = vst.msk [vmem:[#allocation2 + $0x18] sm:$0xff] %vm2467, %v2450
        %2472 = vst.msk [vmem:[#allocation2 + $0x20] sm:$0xff] %vm2467, %v2452
        %2473 = vst.msk [vmem:[#allocation2 + $0x28] sm:$0xff] %vm2467, %v2454
        %2474 = vst.msk [vmem:[#allocation2 + $0x30] sm:$0xff] %vm2467, %v2456
        %2475 = vst.msk [vmem:[#allocation2 + $0x38] sm:$0xff] %vm2467, %v2458
        %2476 = vrot.lane.b32.xlu0 %v936, 32
        %v2477 = vpop.permute.xlu0 %2476
        %2478 = vrot.lane.b32.xlu0 %v940, 32
        %v2479 = vpop.permute.xlu0 %2478
        %v2481 = vsel %vm948, %v2477, 0
        %v2484 = vsel %vm948, %v2479, 0
        %2486 = vmatprep.subr.bf16.mxu0 0
        %2487 = vmatpush1.bf16.xpose.msra.mxu0 0
        %2488 = vmatprep.subr.bf16.mxu0 0
        %2489 = vmatpush1.bf16.xpose.msra.mxu0 0
        %2490 = vmatprep.subr.bf16.mxu0 0
        %2491 = vmatpush1.bf16.xpose.msra.mxu0 0
        %2492 = vmatprep.subr.bf16.mxu0 0
        %2493 = vmatpush1.bf16.xpose.msra.mxu0 0
        %2494 = vmatprep.subr.bf16.mxu0 0
        %2495 = vmatpush1.bf16.xpose.msra.mxu0 0
        %2496 = vmatprep.subr.bf16.mxu0 0
        %2497 = vmatpush1.bf16.xpose.msra.mxu0 0
        %2498 = vmatprep.subr.bf16.mxu0 0
        %2499 = vmatpush1.bf16.xpose.msra.mxu0 0
        %2500 = vmatprep.subr.bf16.mxu0 0
        %2501 = vmatpush1.bf16.xpose.msra.mxu0 %v2484
        %2502 = vmatprep.subr.bf16.mxu0 0
        %2503 = vmatpush2.bf16.xpose.msra.mxu0 0
        %2504 = vmatprep.subr.bf16.mxu0 0
        %2505 = vmatpush2.bf16.xpose.msra.mxu0 0
        %2506 = vmatprep.subr.bf16.mxu0 0
        %2507 = vmatpush2.bf16.xpose.msra.mxu0 0
        %2508 = vmatprep.subr.bf16.mxu0 0
        %2509 = vmatpush2.bf16.xpose.msra.mxu0 0
        %2510 = vmatprep.subr.bf16.mxu0 0
        %2511 = vmatpush2.bf16.xpose.msra.mxu0 0
        %2512 = vmatprep.subr.bf16.mxu0 0
        %2513 = vmatpush2.bf16.xpose.msra.mxu0 0
        %2514 = vmatprep.subr.bf16.mxu0 0
        %2515 = vmatpush2.bf16.xpose.msra.mxu0 0
        %2516 = vmatprep.subr.bf16.mxu0 0
        %2517 = vmatpush2.bf16.xpose.msra.mxu0 0
        %2518 = vmatprep.mubr.bf16.mxu0 0
        %2519 = vmatmul.mubr.bf16.gmra.mxu0 %v2481
        %v2520 = vpop.f32.mrf.mxu0
        %v2521 = vadd.f32 0.0, %v2520
        %v2522 = vpop.f32.mrf.mxu0
        %v2523 = vpop.f32.mrf.mxu0
        %v2524 = vadd.f32 0.0, %v2523
        %v2525 = vpop.f32.mrf.mxu0
        %2526 = vdwg.mxu0
        %2527 = vrot.lane.b32.xlu0 %v937, 32
        %v2528 = vpop.permute.xlu0 %2527
        %2529 = vrot.lane.b32.xlu0 %v941, 32
        %v2530 = vpop.permute.xlu0 %2529
        %v2532 = vsel %vm948, %v2528, 0
        %v2535 = vsel %vm948, %v2530, 0
        %2537 = vmatprep.subr.bf16.mxu0 0
        %2538 = vmatpush1.bf16.xpose.msra.mxu0 0
        %2539 = vmatprep.subr.bf16.mxu0 0
        %2540 = vmatpush1.bf16.xpose.msra.mxu0 0
        %2541 = vmatprep.subr.bf16.mxu0 0
        %2542 = vmatpush1.bf16.xpose.msra.mxu0 0
        %2543 = vmatprep.subr.bf16.mxu0 0
        %2544 = vmatpush1.bf16.xpose.msra.mxu0 0
        %2545 = vmatprep.subr.bf16.mxu0 0
        %2546 = vmatpush1.bf16.xpose.msra.mxu0 0
        %2547 = vmatprep.subr.bf16.mxu0 0
        %2548 = vmatpush1.bf16.xpose.msra.mxu0 0
        %2549 = vmatprep.subr.bf16.mxu0 0
        %2550 = vmatpush1.bf16.xpose.msra.mxu0 0
        %2551 = vmatprep.subr.bf16.mxu0 0
        %2552 = vmatpush1.bf16.xpose.msra.mxu0 %v2535
        %2553 = vmatprep.subr.bf16.mxu0 0
        %2554 = vmatpush2.bf16.xpose.msra.mxu0 0
        %2555 = vmatprep.subr.bf16.mxu0 0
        %2556 = vmatpush2.bf16.xpose.msra.mxu0 0
        %2557 = vmatprep.subr.bf16.mxu0 0
        %2558 = vmatpush2.bf16.xpose.msra.mxu0 0
        %2559 = vmatprep.subr.bf16.mxu0 0
        %2560 = vmatpush2.bf16.xpose.msra.mxu0 0
        %2561 = vmatprep.subr.bf16.mxu0 0
        %2562 = vmatpush2.bf16.xpose.msra.mxu0 0
        %2563 = vmatprep.subr.bf16.mxu0 0
        %2564 = vmatpush2.bf16.xpose.msra.mxu0 0
        %2565 = vmatprep.subr.bf16.mxu0 0
        %2566 = vmatpush2.bf16.xpose.msra.mxu0 0
        %2567 = vmatprep.subr.bf16.mxu0 0
        %2568 = vmatpush2.bf16.xpose.msra.mxu0 0
        %2569 = vmatprep.mubr.bf16.mxu0 0
        %2570 = vmatmul.mubr.bf16.gmra.mxu0 %v2532
        %v2571 = vpop.f32.mrf.mxu0
        %v2572 = vadd.f32 0.0, %v2571
        %v2573 = vpop.f32.mrf.mxu0
        %v2574 = vpop.f32.mrf.mxu0
        %v2575 = vadd.f32 0.0, %v2574
        %v2576 = vpop.f32.mrf.mxu0
        %2577 = vdwg.mxu0
        %2578 = vrot.lane.b32.xlu0 %v938, 32
        %v2579 = vpop.permute.xlu0 %2578
        %2580 = vrot.lane.b32.xlu0 %v942, 32
        %v2581 = vpop.permute.xlu0 %2580
        %v2583 = vsel %vm948, %v2579, 0
        %v2586 = vsel %vm948, %v2581, 0
        %2588 = vmatprep.subr.bf16.mxu0 0
        %2589 = vmatpush1.bf16.xpose.msra.mxu0 0
        %2590 = vmatprep.subr.bf16.mxu0 0
        %2591 = vmatpush1.bf16.xpose.msra.mxu0 0
        %2592 = vmatprep.subr.bf16.mxu0 0
        %2593 = vmatpush1.bf16.xpose.msra.mxu0 0
        %2594 = vmatprep.subr.bf16.mxu0 0
        %2595 = vmatpush1.bf16.xpose.msra.mxu0 0
        %2596 = vmatprep.subr.bf16.mxu0 0
        %2597 = vmatpush1.bf16.xpose.msra.mxu0 0
        %2598 = vmatprep.subr.bf16.mxu0 0
        %2599 = vmatpush1.bf16.xpose.msra.mxu0 0
        %2600 = vmatprep.subr.bf16.mxu0 0
        %2601 = vmatpush1.bf16.xpose.msra.mxu0 0
        %2602 = vmatprep.subr.bf16.mxu0 0
        %2603 = vmatpush1.bf16.xpose.msra.mxu0 %v2586
        %2604 = vmatprep.subr.bf16.mxu0 0
        %2605 = vmatpush2.bf16.xpose.msra.mxu0 0
        %2606 = vmatprep.subr.bf16.mxu0 0
        %2607 = vmatpush2.bf16.xpose.msra.mxu0 0
        %2608 = vmatprep.subr.bf16.mxu0 0
        %2609 = vmatpush2.bf16.xpose.msra.mxu0 0
        %2610 = vmatprep.subr.bf16.mxu0 0
        %2611 = vmatpush2.bf16.xpose.msra.mxu0 0
        %2612 = vmatprep.subr.bf16.mxu0 0
        %2613 = vmatpush2.bf16.xpose.msra.mxu0 0
        %2614 = vmatprep.subr.bf16.mxu0 0
        %2615 = vmatpush2.bf16.xpose.msra.mxu0 0
        %2616 = vmatprep.subr.bf16.mxu0 0
        %2617 = vmatpush2.bf16.xpose.msra.mxu0 0
        %2618 = vmatprep.subr.bf16.mxu0 0
        %2619 = vmatpush2.bf16.xpose.msra.mxu0 0
        %2620 = vmatprep.mubr.bf16.mxu0 0
        %2621 = vmatmul.mubr.bf16.gmra.mxu0 %v2583
        %v2622 = vpop.f32.mrf.mxu0
        %v2623 = vadd.f32 0.0, %v2622
        %v2624 = vpop.f32.mrf.mxu0
        %v2625 = vpop.f32.mrf.mxu0
        %v2626 = vadd.f32 0.0, %v2625
        %v2627 = vpop.f32.mrf.mxu0
        %2628 = vdwg.mxu0
        %2629 = vrot.lane.b32.xlu0 %v939, 32
        %v2630 = vpop.permute.xlu0 %2629
        %2631 = vrot.lane.b32.xlu0 %v943, 32
        %v2632 = vpop.permute.xlu0 %2631
        %v2634 = vsel %vm948, %v2630, 0
        %v2637 = vsel %vm948, %v2632, 0
        %2639 = vmatprep.subr.bf16.mxu0 0
        %2640 = vmatpush1.bf16.xpose.msra.mxu0 0
        %2641 = vmatprep.subr.bf16.mxu0 0
        %2642 = vmatpush1.bf16.xpose.msra.mxu0 0
        %2643 = vmatprep.subr.bf16.mxu0 0
        %2644 = vmatpush1.bf16.xpose.msra.mxu0 0
        %2645 = vmatprep.subr.bf16.mxu0 0
        %2646 = vmatpush1.bf16.xpose.msra.mxu0 0
        %2647 = vmatprep.subr.bf16.mxu0 0
        %2648 = vmatpush1.bf16.xpose.msra.mxu0 0
        %2649 = vmatprep.subr.bf16.mxu0 0
        %2650 = vmatpush1.bf16.xpose.msra.mxu0 0
        %2651 = vmatprep.subr.bf16.mxu0 0
        %2652 = vmatpush1.bf16.xpose.msra.mxu0 0
        %2653 = vmatprep.subr.bf16.mxu0 0
        %2654 = vmatpush1.bf16.xpose.msra.mxu0 %v2637
        %2655 = vmatprep.subr.bf16.mxu0 0
        %2656 = vmatpush2.bf16.xpose.msra.mxu0 0
        %2657 = vmatprep.subr.bf16.mxu0 0
        %2658 = vmatpush2.bf16.xpose.msra.mxu0 0
        %2659 = vmatprep.subr.bf16.mxu0 0
        %2660 = vmatpush2.bf16.xpose.msra.mxu0 0
        %2661 = vmatprep.subr.bf16.mxu0 0
        %2662 = vmatpush2.bf16.xpose.msra.mxu0 0
        %2663 = vmatprep.subr.bf16.mxu0 0
        %2664 = vmatpush2.bf16.xpose.msra.mxu0 0
        %2665 = vmatprep.subr.bf16.mxu0 0
        %2666 = vmatpush2.bf16.xpose.msra.mxu0 0
        %2667 = vmatprep.subr.bf16.mxu0 0
        %2668 = vmatpush2.bf16.xpose.msra.mxu0 0
        %2669 = vmatprep.subr.bf16.mxu0 0
        %2670 = vmatpush2.bf16.xpose.msra.mxu0 0
        %2671 = vmatprep.mubr.bf16.mxu0 0
        %2672 = vmatmul.mubr.bf16.gmra.mxu0 %v2634
        %v2673 = vpop.f32.mrf.mxu0
        %v2674 = vadd.f32 0.0, %v2673
        %v2675 = vpop.f32.mrf.mxu0
        %v2676 = vpop.f32.mrf.mxu0
        %v2677 = vadd.f32 0.0, %v2676
        %v2678 = vpop.f32.mrf.mxu0
        %2679 = vdwg.mxu0
        %v2680 = vsel %vm1137, %v2521, -inf
        %2681 = vmax.xlane.f32.xlu0 %v2680
        %v2682 = vpop.xlane.xlu0 %2681
        %v2683 = vsel %vm1137, %v2524, -inf
        %2684 = vmax.xlane.f32.xlu0 %v2683
        %v2685 = vpop.xlane.xlu0 %2684
        %v2686 = vsel %vm1137, %v2572, -inf
        %2687 = vmax.xlane.f32.xlu0 %v2686
        %v2688 = vpop.xlane.xlu0 %2687
        %v2689 = vsel %vm1137, %v2575, -inf
        %2690 = vmax.xlane.f32.xlu0 %v2689
        %v2691 = vpop.xlane.xlu0 %2690
        %v2692 = vsel %vm1137, %v2623, -inf
        %2693 = vmax.xlane.f32.xlu0 %v2692
        %v2694 = vpop.xlane.xlu0 %2693
        %v2695 = vsel %vm1137, %v2626, -inf
        %2696 = vmax.xlane.f32.xlu0 %v2695
        %v2697 = vpop.xlane.xlu0 %2696
        %v2698 = vsel %vm1137, %v2674, -inf
        %2699 = vmax.xlane.f32.xlu0 %v2698
        %v2700 = vpop.xlane.xlu0 %2699
        %v2701 = vsel %vm1137, %v2677, -inf
        %2702 = vmax.xlane.f32.xlu0 %v2701
        %v2703 = vpop.xlane.xlu0 %2702
        %v2704 = vsub.f32 %v2521, %v2682
        %v2705 = vsub.f32 %v2524, %v2685
        %v2706 = vsub.f32 %v2572, %v2688
        %v2707 = vsub.f32 %v2575, %v2691
        %v2708 = vsub.f32 %v2623, %v2694
        %v2709 = vsub.f32 %v2626, %v2697
        %v2710 = vsub.f32 %v2674, %v2700
        %v2711 = vsub.f32 %v2677, %v2703
        %v2712 = vmul.f32 %v2704, 1.442695
        %v2713 = vpow.pop %v2712
        %v2714 = vmul.f32 %v2705, 1.442695
        %v2715 = vpow.pop %v2714
        %v2716 = vmul.f32 %v2706, 1.442695
        %v2717 = vpow.pop %v2716
        %v2718 = vmul.f32 %v2707, 1.442695
        %v2719 = vpow.pop %v2718
        %v2720 = vmul.f32 %v2708, 1.442695
        %v2721 = vpow.pop %v2720
        %v2722 = vmul.f32 %v2709, 1.442695
        %v2723 = vpow.pop %v2722
        %v2724 = vmul.f32 %v2710, 1.442695
        %v2725 = vpow.pop %v2724
        %v2726 = vmul.f32 %v2711, 1.442695
        %v2727 = vpow.pop %v2726
        %v2728 = vsel %vm1137, %v2713, 0.0
        %2729 = vadd.xlane.f32.xlu0 %v2728
        %v2730 = vpop.xlane.xlu0 %2729
        %v2731 = vsel %vm1137, %v2715, 0.0
        %2732 = vadd.xlane.f32.xlu0 %v2731
        %v2733 = vpop.xlane.xlu0 %2732
        %v2734 = vsel %vm1137, %v2717, 0.0
        %2735 = vadd.xlane.f32.xlu0 %v2734
        %v2736 = vpop.xlane.xlu0 %2735
        %v2737 = vsel %vm1137, %v2719, 0.0
        %2738 = vadd.xlane.f32.xlu0 %v2737
        %v2739 = vpop.xlane.xlu0 %2738
        %v2740 = vsel %vm1137, %v2721, 0.0
        %2741 = vadd.xlane.f32.xlu0 %v2740
        %v2742 = vpop.xlane.xlu0 %2741
        %v2743 = vsel %vm1137, %v2723, 0.0
        %2744 = vadd.xlane.f32.xlu0 %v2743
        %v2745 = vpop.xlane.xlu0 %2744
        %v2746 = vsel %vm1137, %v2725, 0.0
        %2747 = vadd.xlane.f32.xlu0 %v2746
        %v2748 = vpop.xlane.xlu0 %2747
        %v2749 = vsel %vm1137, %v2727, 0.0
        %2750 = vadd.xlane.f32.xlu0 %v2749
        %v2751 = vpop.xlane.xlu0 %2750
        %v2752 = vrcp.pop %v2730
        %v2753 = vrcp.pop %v2733
        %v2754 = vrcp.pop %v2736
        %v2755 = vrcp.pop %v2739
        %v2756 = vrcp.pop %v2742
        %v2757 = vrcp.pop %v2745
        %v2758 = vrcp.pop %v2748
        %v2759 = vrcp.pop %v2751
        %v2760 = vmul.f32 %v2713, %v2752
        %v2761 = vmul.f32 %v2715, %v2753
        %v2762 = vmul.f32 %v2717, %v2754
        %v2763 = vmul.f32 %v2719, %v2755
        %v2764 = vmul.f32 %v2721, %v2756
        %v2765 = vmul.f32 %v2723, %v2757
        %v2766 = vmul.f32 %v2725, %v2758
        %v2767 = vmul.f32 %v2727, %v2759
        %v2768 = vpack.c.bf16 %v2761, %v2760
        %v2769 = vpack.c.bf16 %v2763, %v2762
        %v2770 = vpack.c.bf16 %v2765, %v2764
        %v2771 = vpack.c.bf16 %v2767, %v2766
        %2772 = vrot.lane.b32.xlu0 %v944, 32
        %v2773 = vpop.permute.xlu0 %2772
        %v2776 = vsel %vm1137, %v2768, 0
        %2778 = vmatprep.subr.bf16.mxu0 0
        %2779 = vmatpush1.bf16.msra.mxu0 0
        %2780 = vmatprep.subr.bf16.mxu0 0
        %2781 = vmatpush1.bf16.msra.mxu0 0
        %2782 = vmatprep.subr.bf16.mxu0 0
        %2783 = vmatpush1.bf16.msra.mxu0 0
        %2784 = vmatprep.subr.bf16.mxu0 0
        %2785 = vmatpush1.bf16.msra.mxu0 0
        %2786 = vmatprep.subr.bf16.mxu0 0
        %2787 = vmatpush1.bf16.msra.mxu0 0
        %2788 = vmatprep.subr.bf16.mxu0 0
        %2789 = vmatpush1.bf16.msra.mxu0 0
        %2790 = vmatprep.subr.bf16.mxu0 0
        %2791 = vmatpush1.bf16.msra.mxu0 0
        %2792 = vmatprep.subr.bf16.mxu0 0
        %2793 = vmatpush1.bf16.msra.mxu0 %v2773
        %2794 = vmatprep.subr.bf16.mxu0 0
        %2795 = vmatpush2.bf16.msra.mxu0 0
        %2796 = vmatprep.subr.bf16.mxu0 0
        %2797 = vmatpush2.bf16.msra.mxu0 0
        %2798 = vmatprep.subr.bf16.mxu0 0
        %2799 = vmatpush2.bf16.msra.mxu0 0
        %2800 = vmatprep.subr.bf16.mxu0 0
        %2801 = vmatpush2.bf16.msra.mxu0 0
        %2802 = vmatprep.subr.bf16.mxu0 0
        %2803 = vmatpush2.bf16.msra.mxu0 0
        %2804 = vmatprep.subr.bf16.mxu0 0
        %2805 = vmatpush2.bf16.msra.mxu0 0
        %2806 = vmatprep.subr.bf16.mxu0 0
        %2807 = vmatpush2.bf16.msra.mxu0 0
        %2808 = vmatprep.subr.bf16.mxu0 0
        %2809 = vmatpush2.bf16.msra.mxu0 0
        %2810 = vmatprep.mubr.bf16.mxu0 0
        %2811 = vmatmul.mubr.bf16.gmra.mxu0 %v2776
        %v2812 = vpop.f32.mrf.mxu0
        %v2813 = vadd.f32 0.0, %v2812
        %v2814 = vpop.f32.mrf.mxu0
        %v2815 = vpop.f32.mrf.mxu0
        %v2816 = vadd.f32 0.0, %v2815
        %v2817 = vpop.f32.mrf.mxu0
        %2818 = vdwg.mxu0
        %2819 = vrot.lane.b32.xlu0 %v945, 32
        %v2820 = vpop.permute.xlu0 %2819
        %v2823 = vsel %vm1137, %v2769, 0
        %2825 = vmatprep.subr.bf16.mxu0 0
        %2826 = vmatpush1.bf16.msra.mxu0 0
        %2827 = vmatprep.subr.bf16.mxu0 0
        %2828 = vmatpush1.bf16.msra.mxu0 0
        %2829 = vmatprep.subr.bf16.mxu0 0
        %2830 = vmatpush1.bf16.msra.mxu0 0
        %2831 = vmatprep.subr.bf16.mxu0 0
        %2832 = vmatpush1.bf16.msra.mxu0 0
        %2833 = vmatprep.subr.bf16.mxu0 0
        %2834 = vmatpush1.bf16.msra.mxu0 0
        %2835 = vmatprep.subr.bf16.mxu0 0
        %2836 = vmatpush1.bf16.msra.mxu0 0
        %2837 = vmatprep.subr.bf16.mxu0 0
        %2838 = vmatpush1.bf16.msra.mxu0 0
        %2839 = vmatprep.subr.bf16.mxu0 0
        %2840 = vmatpush1.bf16.msra.mxu0 %v2820
        %2841 = vmatprep.subr.bf16.mxu0 0
        %2842 = vmatpush2.bf16.msra.mxu0 0
        %2843 = vmatprep.subr.bf16.mxu0 0
        %2844 = vmatpush2.bf16.msra.mxu0 0
        %2845 = vmatprep.subr.bf16.mxu0 0
        %2846 = vmatpush2.bf16.msra.mxu0 0
        %2847 = vmatprep.subr.bf16.mxu0 0
        %2848 = vmatpush2.bf16.msra.mxu0 0
        %2849 = vmatprep.subr.bf16.mxu0 0
        %2850 = vmatpush2.bf16.msra.mxu0 0
        %2851 = vmatprep.subr.bf16.mxu0 0
        %2852 = vmatpush2.bf16.msra.mxu0 0
        %2853 = vmatprep.subr.bf16.mxu0 0
        %2854 = vmatpush2.bf16.msra.mxu0 0
        %2855 = vmatprep.subr.bf16.mxu0 0
        %2856 = vmatpush2.bf16.msra.mxu0 0
        %2857 = vmatprep.mubr.bf16.mxu0 0
        %2858 = vmatmul.mubr.bf16.gmra.mxu0 %v2823
        %v2859 = vpop.f32.mrf.mxu0
        %v2860 = vadd.f32 0.0, %v2859
        %v2861 = vpop.f32.mrf.mxu0
        %v2862 = vpop.f32.mrf.mxu0
        %v2863 = vadd.f32 0.0, %v2862
        %v2864 = vpop.f32.mrf.mxu0
        %2865 = vdwg.mxu0
        %2866 = vrot.lane.b32.xlu0 %v946, 32
        %v2867 = vpop.permute.xlu0 %2866
        %v2870 = vsel %vm1137, %v2770, 0
        %2872 = vmatprep.subr.bf16.mxu0 0
        %2873 = vmatpush1.bf16.msra.mxu0 0
        %2874 = vmatprep.subr.bf16.mxu0 0
        %2875 = vmatpush1.bf16.msra.mxu0 0
        %2876 = vmatprep.subr.bf16.mxu0 0
        %2877 = vmatpush1.bf16.msra.mxu0 0
        %2878 = vmatprep.subr.bf16.mxu0 0
        %2879 = vmatpush1.bf16.msra.mxu0 0
        %2880 = vmatprep.subr.bf16.mxu0 0
        %2881 = vmatpush1.bf16.msra.mxu0 0
        %2882 = vmatprep.subr.bf16.mxu0 0
        %2883 = vmatpush1.bf16.msra.mxu0 0
        %2884 = vmatprep.subr.bf16.mxu0 0
        %2885 = vmatpush1.bf16.msra.mxu0 0
        %2886 = vmatprep.subr.bf16.mxu0 0
        %2887 = vmatpush1.bf16.msra.mxu0 %v2867
        %2888 = vmatprep.subr.bf16.mxu0 0
        %2889 = vmatpush2.bf16.msra.mxu0 0
        %2890 = vmatprep.subr.bf16.mxu0 0
        %2891 = vmatpush2.bf16.msra.mxu0 0
        %2892 = vmatprep.subr.bf16.mxu0 0
        %2893 = vmatpush2.bf16.msra.mxu0 0
        %2894 = vmatprep.subr.bf16.mxu0 0
        %2895 = vmatpush2.bf16.msra.mxu0 0
        %2896 = vmatprep.subr.bf16.mxu0 0
        %2897 = vmatpush2.bf16.msra.mxu0 0
        %2898 = vmatprep.subr.bf16.mxu0 0
        %2899 = vmatpush2.bf16.msra.mxu0 0
        %2900 = vmatprep.subr.bf16.mxu0 0
        %2901 = vmatpush2.bf16.msra.mxu0 0
        %2902 = vmatprep.subr.bf16.mxu0 0
        %2903 = vmatpush2.bf16.msra.mxu0 0
        %2904 = vmatprep.mubr.bf16.mxu0 0
        %2905 = vmatmul.mubr.bf16.gmra.mxu0 %v2870
        %v2906 = vpop.f32.mrf.mxu0
        %v2907 = vadd.f32 0.0, %v2906
        %v2908 = vpop.f32.mrf.mxu0
        %v2909 = vpop.f32.mrf.mxu0
        %v2910 = vadd.f32 0.0, %v2909
        %v2911 = vpop.f32.mrf.mxu0
        %2912 = vdwg.mxu0
        %2913 = vrot.lane.b32.xlu0 %v947, 32
        %v2914 = vpop.permute.xlu0 %2913
        %v2917 = vsel %vm1137, %v2771, 0
        %2919 = vmatprep.subr.bf16.mxu0 0
        %2920 = vmatpush1.bf16.msra.mxu0 0
        %2921 = vmatprep.subr.bf16.mxu0 0
        %2922 = vmatpush1.bf16.msra.mxu0 0
        %2923 = vmatprep.subr.bf16.mxu0 0
        %2924 = vmatpush1.bf16.msra.mxu0 0
        %2925 = vmatprep.subr.bf16.mxu0 0
        %2926 = vmatpush1.bf16.msra.mxu0 0
        %2927 = vmatprep.subr.bf16.mxu0 0
        %2928 = vmatpush1.bf16.msra.mxu0 0
        %2929 = vmatprep.subr.bf16.mxu0 0
        %2930 = vmatpush1.bf16.msra.mxu0 0
        %2931 = vmatprep.subr.bf16.mxu0 0
        %2932 = vmatpush1.bf16.msra.mxu0 0
        %2933 = vmatprep.subr.bf16.mxu0 0
        %2934 = vmatpush1.bf16.msra.mxu0 %v2914
        %2935 = vmatprep.subr.bf16.mxu0 0
        %2936 = vmatpush2.bf16.msra.mxu0 0
        %2937 = vmatprep.subr.bf16.mxu0 0
        %2938 = vmatpush2.bf16.msra.mxu0 0
        %2939 = vmatprep.subr.bf16.mxu0 0
        %2940 = vmatpush2.bf16.msra.mxu0 0
        %2941 = vmatprep.subr.bf16.mxu0 0
        %2942 = vmatpush2.bf16.msra.mxu0 0
        %2943 = vmatprep.subr.bf16.mxu0 0
        %2944 = vmatpush2.bf16.msra.mxu0 0
        %2945 = vmatprep.subr.bf16.mxu0 0
        %2946 = vmatpush2.bf16.msra.mxu0 0
        %2947 = vmatprep.subr.bf16.mxu0 0
        %2948 = vmatpush2.bf16.msra.mxu0 0
        %2949 = vmatprep.subr.bf16.mxu0 0
        %2950 = vmatpush2.bf16.msra.mxu0 0
        %2951 = vmatprep.mubr.bf16.mxu0 0
        %2952 = vmatmul.mubr.bf16.gmra.mxu0 %v2917
        %v2953 = vpop.f32.mrf.mxu0
        %v2954 = vadd.f32 0.0, %v2953
        %v2955 = vpop.f32.mrf.mxu0
        %v2956 = vpop.f32.mrf.mxu0
        %v2957 = vadd.f32 0.0, %v2956
        %v2958 = vpop.f32.mrf.mxu0
        %2959 = vdwg.mxu0
        %2968 = vrot.lane.b32.xlu0 %v2813, 96
        %v2969 = vpop.permute.xlu0 %2968
        %2970 = vrot.lane.b32.xlu0 %v2816, 96
        %v2971 = vpop.permute.xlu0 %2970
        %2972 = vrot.lane.b32.xlu0 %v2860, 96
        %v2973 = vpop.permute.xlu0 %2972
        %2974 = vrot.lane.b32.xlu0 %v2863, 96
        %v2975 = vpop.permute.xlu0 %2974
        %2976 = vrot.lane.b32.xlu0 %v2907, 96
        %v2977 = vpop.permute.xlu0 %2976
        %2978 = vrot.lane.b32.xlu0 %v2910, 96
        %v2979 = vpop.permute.xlu0 %2978
        %2980 = vrot.lane.b32.xlu0 %v2954, 96
        %v2981 = vpop.permute.xlu0 %2980
        %2982 = vrot.lane.b32.xlu0 %v2957, 96
        %v2983 = vpop.permute.xlu0 %2982
        %vm2992 = vcmask 1048320
        %2993 = vst.msk [vmem:[#allocation2] sm:$0xff] %vm2992, %v2969
        %2994 = vst.msk [vmem:[#allocation2 + $0x8] sm:$0xff] %vm2992, %v2971
        %2995 = vst.msk [vmem:[#allocation2 + $0x10] sm:$0xff] %vm2992, %v2973
        %2996 = vst.msk [vmem:[#allocation2 + $0x18] sm:$0xff] %vm2992, %v2975
        %2997 = vst.msk [vmem:[#allocation2 + $0x20] sm:$0xff] %vm2992, %v2977
        %2998 = vst.msk [vmem:[#allocation2 + $0x28] sm:$0xff] %vm2992, %v2979
        %2999 = vst.msk [vmem:[#allocation2 + $0x30] sm:$0xff] %vm2992, %v2981
        %3000 = vst.msk [vmem:[#allocation2 + $0x38] sm:$0xff] %vm2992, %v2983
        %v3001 = vld [vmem:[#allocation2] sm:$0xff]
        %v3002 = vld [vmem:[#allocation2 + $0x8] sm:$0xff]
        %v3003 = vld [vmem:[#allocation2 + $0x10] sm:$0xff]
        %v3004 = vld [vmem:[#allocation2 + $0x18] sm:$0xff]
        %v3005 = vld [vmem:[#allocation2 + $0x20] sm:$0xff]
        %v3006 = vld [vmem:[#allocation2 + $0x28] sm:$0xff]
        %v3007 = vld [vmem:[#allocation2 + $0x30] sm:$0xff]
        %v3008 = vld [vmem:[#allocation2 + $0x38] sm:$0xff]
        %v3009 = vpack.c.bf16 %v3002, %v3001
        %v3010 = vpack.c.bf16 %v3004, %v3003
        %v3011 = vpack.c.bf16 %v3006, %v3005
        %v3012 = vpack.c.bf16 %v3008, %v3007
        %v3013 = vld [vmem:[#allocation9] sm:$0xf]
        %v3014 = vld [vmem:[#allocation9 + $0x4] sm:$0xf]
        %v3015 = vld [vmem:[#allocation9 + $0x8] sm:$0xf]
        %v3016 = vld [vmem:[#allocation9 + $0xc] sm:$0xf]
        %v3017 = vld [vmem:[#allocation9 + $0x10] sm:$0xf]
        %v3018 = vld [vmem:[#allocation9 + $0x14] sm:$0xf]
        %v3019 = vld [vmem:[#allocation9 + $0x18] sm:$0xf]
        %v3020 = vld [vmem:[#allocation9 + $0x1c] sm:$0xf]
        %v3021 = vld [vmem:[#allocation9 + $0x20] sm:$0xf]
        %v3022 = vld [vmem:[#allocation9 + $0x24] sm:$0xf]
        %v3023 = vld [vmem:[#allocation9 + $0x28] sm:$0xf]
        %v3024 = vld [vmem:[#allocation9 + $0x2c] sm:$0xf]
        %v3025 = vld [vmem:[#allocation9 + $0x30] sm:$0xf]
        %v3026 = vld [vmem:[#allocation9 + $0x34] sm:$0xf]
        %v3027 = vld [vmem:[#allocation9 + $0x38] sm:$0xf]
        %v3028 = vld [vmem:[#allocation9 + $0x3c] sm:$0xf]
        %v3029 = vld [vmem:[%s5] sm:$0x1]
        %v3031 = vlaneseq
        %v3032 = vshrl.u32 %v3031, 7
        %v3033 = vsub.s32 0, %v3032
        %v3034 = vrot.slane %v3029, %v3033
        %v3052 = vunpack.c.l.b16 %v3013
        %v3053 = vunpack.c.l.b16 %v3014
        %v3054 = vunpack.c.l.b16 %v3015
        %v3055 = vunpack.c.l.b16 %v3016
        %v3056 = vunpack.c.l.b16 %v3017
        %v3057 = vunpack.c.l.b16 %v3018
        %v3058 = vunpack.c.l.b16 %v3019
        %v3059 = vunpack.c.l.b16 %v3020
        %v3060 = vunpack.c.l.b16 %v3021
        %v3061 = vunpack.c.l.b16 %v3022
        %v3062 = vunpack.c.l.b16 %v3023
        %v3063 = vunpack.c.l.b16 %v3024
        %v3064 = vunpack.c.l.b16 %v3025
        %v3065 = vunpack.c.l.b16 %v3026
        %v3066 = vunpack.c.l.b16 %v3027
        %v3067 = vunpack.c.l.b16 %v3028
        %v3068 = vpack.c.b16 %v3053, %v3052
        %v3069 = vpack.c.b16 %v3055, %v3054
        %v3070 = vpack.c.b16 %v3057, %v3056
        %v3071 = vpack.c.b16 %v3059, %v3058
        %v3072 = vpack.c.b16 %v3061, %v3060
        %v3073 = vpack.c.b16 %v3063, %v3062
        %v3074 = vpack.c.b16 %v3065, %v3064
        %v3075 = vpack.c.b16 %v3067, %v3066
        %3084 = vmatprep.subr.bf16.mxu0 0
        %3085 = vmatpush1.bf16.msra.mxu0 %v3075
        %3086 = vmatprep.subr.bf16.mxu0 0
        %3087 = vmatpush1.bf16.msra.mxu0 %v3074
        %3088 = vmatprep.subr.bf16.mxu0 0
        %3089 = vmatpush1.bf16.msra.mxu0 %v3073
        %3090 = vmatprep.subr.bf16.mxu0 0
        %3091 = vmatpush1.bf16.msra.mxu0 %v3072
        %3092 = vmatprep.subr.bf16.mxu0 0
        %3093 = vmatpush1.bf16.msra.mxu0 %v3071
        %3094 = vmatprep.subr.bf16.mxu0 0
        %3095 = vmatpush1.bf16.msra.mxu0 %v3070
        %3096 = vmatprep.subr.bf16.mxu0 0
        %3097 = vmatpush1.bf16.msra.mxu0 %v3069
        %3098 = vmatprep.subr.bf16.mxu0 0
        %3099 = vmatpush1.bf16.msra.mxu0 %v3068
        %3100 = vmatprep.subr.bf16.mxu0 0
        %3101 = vmatpush2.bf16.msra.mxu0 0
        %3102 = vmatprep.subr.bf16.mxu0 0
        %3103 = vmatpush2.bf16.msra.mxu0 0
        %3104 = vmatprep.subr.bf16.mxu0 0
        %3105 = vmatpush2.bf16.msra.mxu0 0
        %3106 = vmatprep.subr.bf16.mxu0 0
        %3107 = vmatpush2.bf16.msra.mxu0 0
        %3108 = vmatprep.subr.bf16.mxu0 0
        %3109 = vmatpush2.bf16.msra.mxu0 0
        %3110 = vmatprep.subr.bf16.mxu0 0
        %3111 = vmatpush2.bf16.msra.mxu0 0
        %3112 = vmatprep.subr.bf16.mxu0 0
        %3113 = vmatpush2.bf16.msra.mxu0 0
        %3114 = vmatprep.subr.bf16.mxu0 0
        %3115 = vmatpush2.bf16.msra.mxu0 0
        %3116 = vmatprep.mubr.bf16.mxu0 0
        %3117 = vmatmul.mubr.bf16.gmra.mxu0 %v3009
        %v3118 = vpop.f32.mrf.mxu0
        %v3119 = vadd.f32 %v3034, %v3118
        %v3120 = vpop.f32.mrf.mxu0
        %v3121 = vpop.f32.mrf.mxu0
        %v3122 = vadd.f32 %v3034, %v3121
        %v3123 = vpop.f32.mrf.mxu0
        %3124 = vmatprep.mubr.bf16.mxu0 0
        %3125 = vmatmul.mubr.bf16.gmra.mxu0 %v3010
        %v3126 = vpop.f32.mrf.mxu0
        %v3127 = vadd.f32 %v3034, %v3126
        %v3128 = vpop.f32.mrf.mxu0
        %v3129 = vpop.f32.mrf.mxu0
        %v3130 = vadd.f32 %v3034, %v3129
        %v3131 = vpop.f32.mrf.mxu0
        %3132 = vmatprep.mubr.bf16.mxu0 0
        %3133 = vmatmul.mubr.bf16.gmra.mxu0 %v3011
        %v3134 = vpop.f32.mrf.mxu0
        %v3135 = vadd.f32 %v3034, %v3134
        %v3136 = vpop.f32.mrf.mxu0
        %v3137 = vpop.f32.mrf.mxu0
        %v3138 = vadd.f32 %v3034, %v3137
        %v3139 = vpop.f32.mrf.mxu0
        %3140 = vmatprep.mubr.bf16.mxu0 0
        %3141 = vmatmul.mubr.bf16.gmra.mxu0 %v3012
        %v3142 = vpop.f32.mrf.mxu0
        %v3143 = vadd.f32 %v3034, %v3142
        %v3144 = vpop.f32.mrf.mxu0
        %v3145 = vpop.f32.mrf.mxu0
        %v3146 = vadd.f32 %v3034, %v3145
        %v3147 = vpop.f32.mrf.mxu0
        %3148 = vdwg.mxu0
        %v3149 = vadd.f32 %v507, %v3119
        %v3150 = vadd.f32 %v508, %v3122
        %v3151 = vadd.f32 %v509, %v3127
        %v3152 = vadd.f32 %v510, %v3130
        %v3153 = vadd.f32 %v511, %v3135
        %v3154 = vadd.f32 %v512, %v3138
        %v3155 = vadd.f32 %v513, %v3143
        %v3156 = vadd.f32 %v514, %v3146
        %3157 = vadd.xlane.f32.xlu0 %v3149
        %v3158 = vpop.xlane.xlu0 %3157
        %3159 = vadd.xlane.f32.xlu0 %v3150
        %v3160 = vpop.xlane.xlu0 %3159
        %3161 = vadd.xlane.f32.xlu0 %v3151
        %v3162 = vpop.xlane.xlu0 %3161
        %3163 = vadd.xlane.f32.xlu0 %v3152
        %v3164 = vpop.xlane.xlu0 %3163
        %3165 = vadd.xlane.f32.xlu0 %v3153
        %v3166 = vpop.xlane.xlu0 %3165
        %3167 = vadd.xlane.f32.xlu0 %v3154
        %v3168 = vpop.xlane.xlu0 %3167
        %3169 = vadd.xlane.f32.xlu0 %v3155
        %v3170 = vpop.xlane.xlu0 %3169
        %3171 = vadd.xlane.f32.xlu0 %v3156
        %v3172 = vpop.xlane.xlu0 %3171
        %v3173 = vmul.f32 %v3158, %v531
        %v3174 = vmul.f32 %v3160, %v531
        %v3175 = vmul.f32 %v3162, %v531
        %v3176 = vmul.f32 %v3164, %v531
        %v3177 = vmul.f32 %v3166, %v531
        %v3178 = vmul.f32 %v3168, %v531
        %v3179 = vmul.f32 %v3170, %v531
        %v3180 = vmul.f32 %v3172, %v531
        %v3181 = vsub.f32 %v3149, %v3173
        %v3182 = vsub.f32 %v3150, %v3174
        %v3183 = vsub.f32 %v3151, %v3175
        %v3184 = vsub.f32 %v3152, %v3176
        %v3185 = vsub.f32 %v3153, %v3177
        %v3186 = vsub.f32 %v3154, %v3178
        %v3187 = vsub.f32 %v3155, %v3179
        %v3188 = vsub.f32 %v3156, %v3180
        %v3189 = vmul.f32 %v3181, %v3181
        %v3190 = vmul.f32 %v3182, %v3182
        %v3191 = vmul.f32 %v3183, %v3183
        %v3192 = vmul.f32 %v3184, %v3184
        %v3193 = vmul.f32 %v3185, %v3185
        %v3194 = vmul.f32 %v3186, %v3186
        %v3195 = vmul.f32 %v3187, %v3187
        %v3196 = vmul.f32 %v3188, %v3188
        %3197 = vadd.xlane.f32.xlu0 %v3189
        %v3198 = vpop.xlane.xlu0 %3197
        %3199 = vadd.xlane.f32.xlu0 %v3190
        %v3200 = vpop.xlane.xlu0 %3199
        %3201 = vadd.xlane.f32.xlu0 %v3191
        %v3202 = vpop.xlane.xlu0 %3201
        %3203 = vadd.xlane.f32.xlu0 %v3192
        %v3204 = vpop.xlane.xlu0 %3203
        %3205 = vadd.xlane.f32.xlu0 %v3193
        %v3206 = vpop.xlane.xlu0 %3205
        %3207 = vadd.xlane.f32.xlu0 %v3194
        %v3208 = vpop.xlane.xlu0 %3207
        %3209 = vadd.xlane.f32.xlu0 %v3195
        %v3210 = vpop.xlane.xlu0 %3209
        %3211 = vadd.xlane.f32.xlu0 %v3196
        %v3212 = vpop.xlane.xlu0 %3211
        %v3213 = vmul.f32 %v3198, %v531
        %v3214 = vmul.f32 %v3200, %v531
        %v3215 = vmul.f32 %v3202, %v531
        %v3216 = vmul.f32 %v3204, %v531
        %v3217 = vmul.f32 %v3206, %v531
        %v3218 = vmul.f32 %v3208, %v531
        %v3219 = vmul.f32 %v3210, %v531
        %v3220 = vmul.f32 %v3212, %v531
        %v3221 = vadd.f32 %v3213, 1e-05
        %v3222 = vadd.f32 %v3214, 1e-05
        %v3223 = vadd.f32 %v3215, 1e-05
        %v3224 = vadd.f32 %v3216, 1e-05
        %v3225 = vadd.f32 %v3217, 1e-05
        %v3226 = vadd.f32 %v3218, 1e-05
        %v3227 = vadd.f32 %v3219, 1e-05
        %v3228 = vadd.f32 %v3220, 1e-05
        %v3229 = vrsqrt.pop %v3221
        %v3230 = vrsqrt.pop %v3222
        %v3231 = vrsqrt.pop %v3223
        %v3232 = vrsqrt.pop %v3224
        %v3233 = vrsqrt.pop %v3225
        %v3234 = vrsqrt.pop %v3226
        %v3235 = vrsqrt.pop %v3227
        %v3236 = vrsqrt.pop %v3228
        %v3237 = vmul.f32 %v3181, %v3229
        %v3238 = vmul.f32 %v3182, %v3230
        %v3239 = vmul.f32 %v3183, %v3231
        %v3240 = vmul.f32 %v3184, %v3232
        %v3241 = vmul.f32 %v3185, %v3233
        %v3242 = vmul.f32 %v3186, %v3234
        %v3243 = vmul.f32 %v3187, %v3235
        %v3244 = vmul.f32 %v3188, %v3236
        %v3245 = vld [vmem:[%s6] sm:$0x1]
        %v3247 = vlaneseq
        %v3248 = vshrl.u32 %v3247, 7
        %v3249 = vsub.s32 0, %v3248
        %v3250 = vrot.slane %v3245, %v3249
        %v3252 = vmul.f32 %v3237, %v3250
        %v3253 = vmul.f32 %v3238, %v3250
        %v3254 = vmul.f32 %v3239, %v3250
        %v3255 = vmul.f32 %v3240, %v3250
        %v3256 = vmul.f32 %v3241, %v3250
        %v3257 = vmul.f32 %v3242, %v3250
        %v3258 = vmul.f32 %v3243, %v3250
        %v3259 = vmul.f32 %v3244, %v3250
        %v3260 = vld [vmem:[%s7] sm:$0x1]
        %v3262 = vlaneseq
        %v3263 = vshrl.u32 %v3262, 7
        %v3264 = vsub.s32 0, %v3263
        %v3265 = vrot.slane %v3260, %v3264
        %v3267 = vadd.f32 %v3252, %v3265
        %v3268 = vadd.f32 %v3253, %v3265
        %v3269 = vadd.f32 %v3254, %v3265
        %v3270 = vadd.f32 %v3255, %v3265
        %v3271 = vadd.f32 %v3256, %v3265
        %v3272 = vadd.f32 %v3257, %v3265
        %v3273 = vadd.f32 %v3258, %v3265
        %v3274 = vadd.f32 %v3259, %v3265
        %v3275 = vpack.c.bf16 %v3268, %v3267
        %v3276 = vpack.c.bf16 %v3270, %v3269
        %v3277 = vpack.c.bf16 %v3272, %v3271
        %v3278 = vpack.c.bf16 %v3274, %v3273
        %v3279 = vld [vmem:[#allocation11] sm:$0xff]
        %v3280 = vld [vmem:[#allocation11 + $0x8] sm:$0xff]
        %v3281 = vld [vmem:[#allocation11 + $0x10] sm:$0xff]
        %v3282 = vld [vmem:[#allocation11 + $0x18] sm:$0xff]
        %v3283 = vld [vmem:[#allocation11 + $0x20] sm:$0xff]
        %v3284 = vld [vmem:[#allocation11 + $0x28] sm:$0xff]
        %v3285 = vld [vmem:[#allocation11 + $0x30] sm:$0xff]
        %v3286 = vld [vmem:[#allocation11 + $0x38] sm:$0xff]
        %v3287 = vld [vmem:[#allocation11 + $0x40] sm:$0xff]
        %v3288 = vld [vmem:[#allocation11 + $0x48] sm:$0xff]
        %v3289 = vld [vmem:[#allocation11 + $0x50] sm:$0xff]
        %v3290 = vld [vmem:[#allocation11 + $0x58] sm:$0xff]
        %v3291 = vld [vmem:[#allocation11 + $0x60] sm:$0xff]
        %v3292 = vld [vmem:[#allocation11 + $0x68] sm:$0xff]
        %v3293 = vld [vmem:[#allocation11 + $0x70] sm:$0xff]
        %v3294 = vld [vmem:[#allocation11 + $0x78] sm:$0xff]
        %v3295 = vld [vmem:[%s9] sm:$0x3]
        %v3297 = vlaneseq
        %v3298 = vshrl.u32 %v3297, 7
        %v3299 = vsub.s32 0, %v3298
        %v3300 = vrot.slane %v3295, %v3299
        %v3301 = vlaneseq
        %v3302 = vshrl.u32 %v3301, 7
        %v3303 = vsub.s32 1, %v3302
        %v3304 = vrot.slane %v3295, %v3303
        %v3323 = vunpack.c.l.b16 %v3279
        %v3324 = vunpack.c.h.b16 %v3279
        %v3325 = vunpack.c.l.b16 %v3280
        %v3326 = vunpack.c.h.b16 %v3280
        %v3327 = vunpack.c.l.b16 %v3281
        %v3328 = vunpack.c.h.b16 %v3281
        %v3329 = vunpack.c.l.b16 %v3282
        %v3330 = vunpack.c.h.b16 %v3282
        %v3331 = vunpack.c.l.b16 %v3283
        %v3332 = vunpack.c.h.b16 %v3283
        %v3333 = vunpack.c.l.b16 %v3284
        %v3334 = vunpack.c.h.b16 %v3284
        %v3335 = vunpack.c.l.b16 %v3285
        %v3336 = vunpack.c.h.b16 %v3285
        %v3337 = vunpack.c.l.b16 %v3286
        %v3338 = vunpack.c.h.b16 %v3286
        %v3339 = vunpack.c.l.b16 %v3287
        %v3340 = vunpack.c.h.b16 %v3287
        %v3341 = vunpack.c.l.b16 %v3288
        %v3342 = vunpack.c.h.b16 %v3288
        %v3343 = vunpack.c.l.b16 %v3289
        %v3344 = vunpack.c.h.b16 %v3289
        %v3345 = vunpack.c.l.b16 %v3290
        %v3346 = vunpack.c.h.b16 %v3290
        %v3347 = vunpack.c.l.b16 %v3291
        %v3348 = vunpack.c.h.b16 %v3291
        %v3349 = vunpack.c.l.b16 %v3292
        %v3350 = vunpack.c.h.b16 %v3292
        %v3351 = vunpack.c.l.b16 %v3293
        %v3352 = vunpack.c.h.b16 %v3293
        %v3353 = vunpack.c.l.b16 %v3294
        %v3354 = vunpack.c.h.b16 %v3294
        %v3355 = vpack.c.b16 %v3325, %v3323
        %v3356 = vpack.c.b16 %v3326, %v3324
        %v3357 = vpack.c.b16 %v3329, %v3327
        %v3358 = vpack.c.b16 %v3330, %v3328
        %v3359 = vpack.c.b16 %v3333, %v3331
        %v3360 = vpack.c.b16 %v3334, %v3332
        %v3361 = vpack.c.b16 %v3337, %v3335
        %v3362 = vpack.c.b16 %v3338, %v3336
        %v3363 = vpack.c.b16 %v3341, %v3339
        %v3364 = vpack.c.b16 %v3342, %v3340
        %v3365 = vpack.c.b16 %v3345, %v3343
        %v3366 = vpack.c.b16 %v3346, %v3344
        %v3367 = vpack.c.b16 %v3349, %v3347
        %v3368 = vpack.c.b16 %v3350, %v3348
        %v3369 = vpack.c.b16 %v3353, %v3351
        %v3370 = vpack.c.b16 %v3354, %v3352
        %3387 = vmatprep.subr.bf16.mxu0 %v3370
        %3388 = vmatpush1.bf16.msra.mxu0 %v3369
        %3389 = vmatprep.subr.bf16.mxu0 %v3368
        %3390 = vmatpush1.bf16.msra.mxu0 %v3367
        %3391 = vmatprep.subr.bf16.mxu0 %v3366
        %3392 = vmatpush1.bf16.msra.mxu0 %v3365
        %3393 = vmatprep.subr.bf16.mxu0 %v3364
        %3394 = vmatpush1.bf16.msra.mxu0 %v3363
        %3395 = vmatprep.subr.bf16.mxu0 %v3362
        %3396 = vmatpush1.bf16.msra.mxu0 %v3361
        %3397 = vmatprep.subr.bf16.mxu0 %v3360
        %3398 = vmatpush1.bf16.msra.mxu0 %v3359
        %3399 = vmatprep.subr.bf16.mxu0 %v3358
        %3400 = vmatpush1.bf16.msra.mxu0 %v3357
        %3401 = vmatprep.subr.bf16.mxu0 %v3356
        %3402 = vmatpush1.bf16.msra.mxu0 %v3355
        %3403 = vmatprep.subr.bf16.mxu0 0
        %3404 = vmatpush2.bf16.msra.mxu0 0
        %3405 = vmatprep.subr.bf16.mxu0 0
        %3406 = vmatpush2.bf16.msra.mxu0 0
        %3407 = vmatprep.subr.bf16.mxu0 0
        %3408 = vmatpush2.bf16.msra.mxu0 0
        %3409 = vmatprep.subr.bf16.mxu0 0
        %3410 = vmatpush2.bf16.msra.mxu0 0
        %3411 = vmatprep.subr.bf16.mxu0 0
        %3412 = vmatpush2.bf16.msra.mxu0 0
        %3413 = vmatprep.subr.bf16.mxu0 0
        %3414 = vmatpush2.bf16.msra.mxu0 0
        %3415 = vmatprep.subr.bf16.mxu0 0
        %3416 = vmatpush2.bf16.msra.mxu0 0
        %3417 = vmatprep.subr.bf16.mxu0 0
        %3418 = vmatpush2.bf16.msra.mxu0 0
        %3419 = vmatprep.mubr.bf16.mxu0 0
        %3420 = vmatmul.mubr.bf16.gmra.mxu0 %v3275
        %v3421 = vpop.f32.mrf.mxu0
        %v3422 = vadd.f32 %v3300, %v3421
        %v3423 = vpop.f32.mrf.mxu0
        %v3424 = vadd.f32 %v3304, %v3423
        %v3425 = vpop.f32.mrf.mxu0
        %v3426 = vadd.f32 %v3300, %v3425
        %v3427 = vpop.f32.mrf.mxu0
        %v3428 = vadd.f32 %v3304, %v3427
        %3429 = vmatprep.mubr.bf16.mxu0 0
        %3430 = vmatmul.mubr.bf16.gmra.mxu0 %v3276
        %v3431 = vpop.f32.mrf.mxu0
        %v3432 = vadd.f32 %v3300, %v3431
        %v3433 = vpop.f32.mrf.mxu0
        %v3434 = vadd.f32 %v3304, %v3433
        %v3435 = vpop.f32.mrf.mxu0
        %v3436 = vadd.f32 %v3300, %v3435
        %v3437 = vpop.f32.mrf.mxu0
        %v3438 = vadd.f32 %v3304, %v3437
        %3439 = vmatprep.mubr.bf16.mxu0 0
        %3440 = vmatmul.mubr.bf16.gmra.mxu0 %v3277
        %v3441 = vpop.f32.mrf.mxu0
        %v3442 = vadd.f32 %v3300, %v3441
        %v3443 = vpop.f32.mrf.mxu0
        %v3444 = vadd.f32 %v3304, %v3443
        %v3445 = vpop.f32.mrf.mxu0
        %v3446 = vadd.f32 %v3300, %v3445
        %v3447 = vpop.f32.mrf.mxu0
        %v3448 = vadd.f32 %v3304, %v3447
        %3449 = vmatprep.mubr.bf16.mxu0 0
        %3450 = vmatmul.mubr.bf16.gmra.mxu0 %v3278
        %v3451 = vpop.f32.mrf.mxu0
        %v3452 = vadd.f32 %v3300, %v3451
        %v3453 = vpop.f32.mrf.mxu0
        %v3454 = vadd.f32 %v3304, %v3453
        %v3455 = vpop.f32.mrf.mxu0
        %v3456 = vadd.f32 %v3300, %v3455
        %v3457 = vpop.f32.mrf.mxu0
        %v3458 = vadd.f32 %v3304, %v3457
        %3459 = vdwg.mxu0
        %v3460 = vmul.f32 %v3422, 0.5
        %v3461 = vmul.f32 %v3424, 0.5
        %v3462 = vmul.f32 %v3426, 0.5
        %v3463 = vmul.f32 %v3428, 0.5
        %v3464 = vmul.f32 %v3432, 0.5
        %v3465 = vmul.f32 %v3434, 0.5
        %v3466 = vmul.f32 %v3436, 0.5
        %v3467 = vmul.f32 %v3438, 0.5
        %v3468 = vmul.f32 %v3442, 0.5
        %v3469 = vmul.f32 %v3444, 0.5
        %v3470 = vmul.f32 %v3446, 0.5
        %v3471 = vmul.f32 %v3448, 0.5
        %v3472 = vmul.f32 %v3452, 0.5
        %v3473 = vmul.f32 %v3454, 0.5
        %v3474 = vmul.f32 %v3456, 0.5
        %v3475 = vmul.f32 %v3458, 0.5
        %v3476 = vmul.f32 %v3422, 0.70710677
        %v3477 = vmul.f32 %v3424, 0.70710677
        %v3478 = vmul.f32 %v3426, 0.70710677
        %v3479 = vmul.f32 %v3428, 0.70710677
        %v3480 = vmul.f32 %v3432, 0.70710677
        %v3481 = vmul.f32 %v3434, 0.70710677
        %v3482 = vmul.f32 %v3436, 0.70710677
        %v3483 = vmul.f32 %v3438, 0.70710677
        %v3484 = vmul.f32 %v3442, 0.70710677
        %v3485 = vmul.f32 %v3444, 0.70710677
        %v3486 = vmul.f32 %v3446, 0.70710677
        %v3487 = vmul.f32 %v3448, 0.70710677
        %v3488 = vmul.f32 %v3452, 0.70710677
        %v3489 = vmul.f32 %v3454, 0.70710677
        %v3490 = vmul.f32 %v3456, 0.70710677
        %v3491 = vmul.f32 %v3458, 0.70710677
        %v3492 = verf.f32.pop %v3476
        %v3493 = verf.f32.pop %v3477
        %v3494 = verf.f32.pop %v3478
        %v3495 = verf.f32.pop %v3479
        %v3496 = verf.f32.pop %v3480
        %v3497 = verf.f32.pop %v3481
        %v3498 = verf.f32.pop %v3482
        %v3499 = verf.f32.pop %v3483
        %v3500 = verf.f32.pop %v3484
        %v3501 = verf.f32.pop %v3485
        %v3502 = verf.f32.pop %v3486
        %v3503 = verf.f32.pop %v3487
        %v3504 = verf.f32.pop %v3488
        %v3505 = verf.f32.pop %v3489
        %v3506 = verf.f32.pop %v3490
        %v3507 = verf.f32.pop %v3491
        %v3508 = vadd.f32 %v3492, 1.0
        %v3509 = vadd.f32 %v3493, 1.0
        %v3510 = vadd.f32 %v3494, 1.0
        %v3511 = vadd.f32 %v3495, 1.0
        %v3512 = vadd.f32 %v3496, 1.0
        %v3513 = vadd.f32 %v3497, 1.0
        %v3514 = vadd.f32 %v3498, 1.0
        %v3515 = vadd.f32 %v3499, 1.0
        %v3516 = vadd.f32 %v3500, 1.0
        %v3517 = vadd.f32 %v3501, 1.0
        %v3518 = vadd.f32 %v3502, 1.0
        %v3519 = vadd.f32 %v3503, 1.0
        %v3520 = vadd.f32 %v3504, 1.0
        %v3521 = vadd.f32 %v3505, 1.0
        %v3522 = vadd.f32 %v3506, 1.0
        %v3523 = vadd.f32 %v3507, 1.0
        %v3524 = vmul.f32 %v3460, %v3508
        %v3525 = vmul.f32 %v3461, %v3509
        %v3526 = vmul.f32 %v3462, %v3510
        %v3527 = vmul.f32 %v3463, %v3511
        %v3528 = vmul.f32 %v3464, %v3512
        %v3529 = vmul.f32 %v3465, %v3513
        %v3530 = vmul.f32 %v3466, %v3514
        %v3531 = vmul.f32 %v3467, %v3515
        %v3532 = vmul.f32 %v3468, %v3516
        %v3533 = vmul.f32 %v3469, %v3517
        %v3534 = vmul.f32 %v3470, %v3518
        %v3535 = vmul.f32 %v3471, %v3519
        %v3536 = vmul.f32 %v3472, %v3520
        %v3537 = vmul.f32 %v3473, %v3521
        %v3538 = vmul.f32 %v3474, %v3522
        %v3539 = vmul.f32 %v3475, %v3523
        %v3540 = vpack.c.bf16 %v3526, %v3524
        %v3541 = vpack.c.bf16 %v3527, %v3525
        %v3542 = vpack.c.bf16 %v3530, %v3528
        %v3543 = vpack.c.bf16 %v3531, %v3529
        %v3544 = vpack.c.bf16 %v3534, %v3532
        %v3545 = vpack.c.bf16 %v3535, %v3533
        %v3546 = vpack.c.bf16 %v3538, %v3536
        %v3547 = vpack.c.bf16 %v3539, %v3537
        %v3548 = vld [vmem:[#allocation12] sm:$0xf]
        %v3549 = vld [vmem:[#allocation12 + $0x4] sm:$0xf]
        %v3550 = vld [vmem:[#allocation12 + $0x8] sm:$0xf]
        %v3551 = vld [vmem:[#allocation12 + $0xc] sm:$0xf]
        %v3552 = vld [vmem:[#allocation12 + $0x10] sm:$0xf]
        %v3553 = vld [vmem:[#allocation12 + $0x14] sm:$0xf]
        %v3554 = vld [vmem:[#allocation12 + $0x18] sm:$0xf]
        %v3555 = vld [vmem:[#allocation12 + $0x1c] sm:$0xf]
        %v3556 = vld [vmem:[#allocation12 + $0x20] sm:$0xf]
        %v3557 = vld [vmem:[#allocation12 + $0x24] sm:$0xf]
        %v3558 = vld [vmem:[#allocation12 + $0x28] sm:$0xf]
        %v3559 = vld [vmem:[#allocation12 + $0x2c] sm:$0xf]
        %v3560 = vld [vmem:[#allocation12 + $0x30] sm:$0xf]
        %v3561 = vld [vmem:[#allocation12 + $0x34] sm:$0xf]
        %v3562 = vld [vmem:[#allocation12 + $0x38] sm:$0xf]
        %v3563 = vld [vmem:[#allocation12 + $0x3c] sm:$0xf]
        %v3564 = vld [vmem:[#allocation12 + $0x40] sm:$0xf]
        %v3565 = vld [vmem:[#allocation12 + $0x44] sm:$0xf]
        %v3566 = vld [vmem:[#allocation12 + $0x48] sm:$0xf]
        %v3567 = vld [vmem:[#allocation12 + $0x4c] sm:$0xf]
        %v3568 = vld [vmem:[#allocation12 + $0x50] sm:$0xf]
        %v3569 = vld [vmem:[#allocation12 + $0x54] sm:$0xf]
        %v3570 = vld [vmem:[#allocation12 + $0x58] sm:$0xf]
        %v3571 = vld [vmem:[#allocation12 + $0x5c] sm:$0xf]
        %v3572 = vld [vmem:[#allocation12 + $0x60] sm:$0xf]
        %v3573 = vld [vmem:[#allocation12 + $0x64] sm:$0xf]
        %v3574 = vld [vmem:[#allocation12 + $0x68] sm:$0xf]
        %v3575 = vld [vmem:[#allocation12 + $0x6c] sm:$0xf]
        %v3576 = vld [vmem:[#allocation12 + $0x70] sm:$0xf]
        %v3577 = vld [vmem:[#allocation12 + $0x74] sm:$0xf]
        %v3578 = vld [vmem:[#allocation12 + $0x78] sm:$0xf]
        %v3579 = vld [vmem:[#allocation12 + $0x7c] sm:$0xf]
        %v3580 = vld [vmem:[%s11] sm:$0x1]
        %v3582 = vlaneseq
        %v3583 = vshrl.u32 %v3582, 7
        %v3584 = vsub.s32 0, %v3583
        %v3585 = vrot.slane %v3580, %v3584
        %v3619 = vunpack.c.l.b16 %v3548
        %v3620 = vunpack.c.l.b16 %v3549
        %v3621 = vunpack.c.l.b16 %v3550
        %v3622 = vunpack.c.l.b16 %v3551
        %v3623 = vunpack.c.l.b16 %v3552
        %v3624 = vunpack.c.l.b16 %v3553
        %v3625 = vunpack.c.l.b16 %v3554
        %v3626 = vunpack.c.l.b16 %v3555
        %v3627 = vunpack.c.l.b16 %v3556
        %v3628 = vunpack.c.l.b16 %v3557
        %v3629 = vunpack.c.l.b16 %v3558
        %v3630 = vunpack.c.l.b16 %v3559
        %v3631 = vunpack.c.l.b16 %v3560
        %v3632 = vunpack.c.l.b16 %v3561
        %v3633 = vunpack.c.l.b16 %v3562
        %v3634 = vunpack.c.l.b16 %v3563
        %v3635 = vunpack.c.l.b16 %v3564
        %v3636 = vunpack.c.l.b16 %v3565
        %v3637 = vunpack.c.l.b16 %v3566
        %v3638 = vunpack.c.l.b16 %v3567
        %v3639 = vunpack.c.l.b16 %v3568
        %v3640 = vunpack.c.l.b16 %v3569
        %v3641 = vunpack.c.l.b16 %v3570
        %v3642 = vunpack.c.l.b16 %v3571
        %v3643 = vunpack.c.l.b16 %v3572
        %v3644 = vunpack.c.l.b16 %v3573
        %v3645 = vunpack.c.l.b16 %v3574
        %v3646 = vunpack.c.l.b16 %v3575
        %v3647 = vunpack.c.l.b16 %v3576
        %v3648 = vunpack.c.l.b16 %v3577
        %v3649 = vunpack.c.l.b16 %v3578
        %v3650 = vunpack.c.l.b16 %v3579
        %v3651 = vpack.c.b16 %v3620, %v3619
        %v3652 = vpack.c.b16 %v3622, %v3621
        %v3653 = vpack.c.b16 %v3624, %v3623
        %v3654 = vpack.c.b16 %v3626, %v3625
        %v3655 = vpack.c.b16 %v3628, %v3627
        %v3656 = vpack.c.b16 %v3630, %v3629
        %v3657 = vpack.c.b16 %v3632, %v3631
        %v3658 = vpack.c.b16 %v3634, %v3633
        %v3659 = vpack.c.b16 %v3636, %v3635
        %v3660 = vpack.c.b16 %v3638, %v3637
        %v3661 = vpack.c.b16 %v3640, %v3639
        %v3662 = vpack.c.b16 %v3642, %v3641
        %v3663 = vpack.c.b16 %v3644, %v3643
        %v3664 = vpack.c.b16 %v3646, %v3645
        %v3665 = vpack.c.b16 %v3648, %v3647
        %v3666 = vpack.c.b16 %v3650, %v3649
        %3683 = vmatprep.subr.bf16.mxu0 0
        %3684 = vmatpush1.bf16.msra.mxu0 %v3658
        %3685 = vmatprep.subr.bf16.mxu0 0
        %3686 = vmatpush1.bf16.msra.mxu0 %v3657
        %3687 = vmatprep.subr.bf16.mxu0 0
        %3688 = vmatpush1.bf16.msra.mxu0 %v3656
        %3689 = vmatprep.subr.bf16.mxu0 0
        %3690 = vmatpush1.bf16.msra.mxu0 %v3655
        %3691 = vmatprep.subr.bf16.mxu0 0
        %3692 = vmatpush1.bf16.msra.mxu0 %v3654
        %3693 = vmatprep.subr.bf16.mxu0 0
        %3694 = vmatpush1.bf16.msra.mxu0 %v3653
        %3695 = vmatprep.subr.bf16.mxu0 0
        %3696 = vmatpush1.bf16.msra.mxu0 %v3652
        %3697 = vmatprep.subr.bf16.mxu0 0
        %3698 = vmatpush1.bf16.msra.mxu0 %v3651
        %3699 = vmatprep.subr.bf16.mxu0 0
        %3700 = vmatpush2.bf16.msra.mxu0 %v3666
        %3701 = vmatprep.subr.bf16.mxu0 0
        %3702 = vmatpush2.bf16.msra.mxu0 %v3665
        %3703 = vmatprep.subr.bf16.mxu0 0
        %3704 = vmatpush2.bf16.msra.mxu0 %v3664
        %3705 = vmatprep.subr.bf16.mxu0 0
        %3706 = vmatpush2.bf16.msra.mxu0 %v3663
        %3707 = vmatprep.subr.bf16.mxu0 0
        %3708 = vmatpush2.bf16.msra.mxu0 %v3662
        %3709 = vmatprep.subr.bf16.mxu0 0
        %3710 = vmatpush2.bf16.msra.mxu0 %v3661
        %3711 = vmatprep.subr.bf16.mxu0 0
        %3712 = vmatpush2.bf16.msra.mxu0 %v3660
        %3713 = vmatprep.subr.bf16.mxu0 0
        %3714 = vmatpush2.bf16.msra.mxu0 %v3659
        %3715 = vmatprep.mubr.bf16.mxu0 %v3541
        %3716 = vmatmul.mubr.bf16.gmra.mxu0 %v3540
        %v3717 = vpop.f32.mrf.mxu0
        %v3718 = vadd.f32 %v3585, %v3717
        %v3719 = vpop.f32.mrf.mxu0
        %v3720 = vpop.f32.mrf.mxu0
        %v3721 = vadd.f32 %v3585, %v3720
        %v3722 = vpop.f32.mrf.mxu0
        %3723 = vmatprep.mubr.bf16.mxu0 %v3543
        %3724 = vmatmul.mubr.bf16.gmra.mxu0 %v3542
        %v3725 = vpop.f32.mrf.mxu0
        %v3726 = vadd.f32 %v3585, %v3725
        %v3727 = vpop.f32.mrf.mxu0
        %v3728 = vpop.f32.mrf.mxu0
        %v3729 = vadd.f32 %v3585, %v3728
        %v3730 = vpop.f32.mrf.mxu0
        %3731 = vmatprep.mubr.bf16.mxu0 %v3545
        %3732 = vmatmul.mubr.bf16.gmra.mxu0 %v3544
        %v3733 = vpop.f32.mrf.mxu0
        %v3734 = vadd.f32 %v3585, %v3733
        %v3735 = vpop.f32.mrf.mxu0
        %v3736 = vpop.f32.mrf.mxu0
        %v3737 = vadd.f32 %v3585, %v3736
        %v3738 = vpop.f32.mrf.mxu0
        %3739 = vmatprep.mubr.bf16.mxu0 %v3547
        %3740 = vmatmul.mubr.bf16.gmra.mxu0 %v3546
        %v3741 = vpop.f32.mrf.mxu0
        %v3742 = vadd.f32 %v3585, %v3741
        %v3743 = vpop.f32.mrf.mxu0
        %v3744 = vpop.f32.mrf.mxu0
        %v3745 = vadd.f32 %v3585, %v3744
        %v3746 = vpop.f32.mrf.mxu0
        %3747 = vdwg.mxu0
        %v3748 = vadd.f32 %v3149, %v3718
        %v3749 = vadd.f32 %v3150, %v3721
        %v3750 = vadd.f32 %v3151, %v3726
        %v3751 = vadd.f32 %v3152, %v3729
        %v3752 = vadd.f32 %v3153, %v3734
        %v3753 = vadd.f32 %v3154, %v3737
        %v3754 = vadd.f32 %v3155, %v3742
        %v3755 = vadd.f32 %v3156, %v3745
        %3756 = vst [vmem:[%s503] sm:$0xff] %v3748
        %3757 = vst [vmem:[%s503 + $0x8] sm:$0xff] %v3749
        %3758 = vst [vmem:[%s503 + $0x10] sm:$0xff] %v3750
        %3759 = vst [vmem:[%s503 + $0x18] sm:$0xff] %v3751
        %3760 = vst [vmem:[%s503 + $0x20] sm:$0xff] %v3752
        %3761 = vst [vmem:[%s503 + $0x28] sm:$0xff] %v3753
        %3762 = vst [vmem:[%s503 + $0x30] sm:$0xff] %v3754
        %3763 = vst [vmem:[%s503 + $0x38] sm:$0xff] %v3755
        %s3764 = sand.u32 %s297, 1
        %s3765 = scalar_lea.sflag [#allocation5], %s3764
        %s3766 = sand.u32 %s297, 1
        %s3767 = smul.addr %s3766, 64
        %s3768 = scalar_lea.vmem [#allocation14], %s3767
        // Predicated region
        $region93: #{tpu_custom_call.1} parent=67 // pred_check
          %p3769 = pneg %p307
        $region94: #{tpu_custom_call.1} parent=67 // pred_check_branch
          %3771 = sbr.rel (%p3769) target = $region96
        $region95: #{tpu_custom_call.1} parent=67 // pred_region
          %s3772 = smul.u32 4, %s32
          %s3774 = ssub.s32 1024, 1024
          %3775 = vsyncadd %s3765, %s3774
          %s3776 = smul.addr %s3772, 2
          %s3777 = smul.addr %s3776, 128
          %s3778 = scalar_lea.hbm %s12, %s3777
          %s3779 = sshll.u32 %s3768, 4
          %s3780 = int_to_ptr.vmem [resolvable:$true] %s3779
          %3785 = dma.vmem_to_hbm [thread:$0]  %s3780, 1024, %s3778, %s3765, 128, 128, 8
        $region96: #{tpu_custom_call.1} parent=67 // pred_fallthru
          _
      $region68: #{tpu_custom_call.1} parent=5 // pred_fallthru
        _
      %p3786 = scmp.le.s32.totalorder 2, %s27
      // Predicated region
      $region97: #{tpu_custom_call.1} parent=5 // pred_check
        %p3787 = pneg %p3786
      $region98: #{tpu_custom_call.1} parent=5 // pred_check_branch
        %3789 = sbr.rel (%p3787) target = $region100
      $region99: #{tpu_custom_call.1} parent=5 // pred_region
        %s3790 = ssub.s32 %s27, 2
        // Predicated region
        $region101: #{tpu_custom_call.1} parent=99 // pred_check
          %p3791 = pneg %p313
        $region102: #{tpu_custom_call.1} parent=99 // pred_check_branch
          %3793 = sbr.rel (%p3791) target = $region104
        $region103: #{tpu_custom_call.1} parent=99 // pred_region
          %s3794 = sand.u32 %s298, 1
          %s3795 = scalar_lea.sflag [#allocation5], %s3794
          %s3796 = sand.u32 %s298, 1
          %s3797 = smul.addr %s3796, 64
          %s3798 = scalar_lea.vmem [#allocation14], %s3797
          %3799 = dma.done %s3795, 1024
        $region104: #{tpu_custom_call.1} parent=99 // pred_fallthru
          _
      $region100: #{tpu_custom_call.1} parent=5 // pred_fallthru
        _
    $region6: #{tpu_custom_call.1} parent=1 // loop_footer
      %s31 = sadd.s32 1, %s27
    $region7: #{tpu_custom_call.1} parent=1 // loop_footer_branch
      %26 = sbr.rel target = $region3
    $region8: #{tpu_custom_call.1} parent=1 // loop_exit
      _
    %3800 = vsyncpa [#allocation4], 1
    %s3801 = scalar_lea.sflag [#allocation4], 1
    %3802 = vsyncpa %s3801, 1
    %3803 = vsyncpa [#allocation7], 1
    %3804 = vsyncpa [#allocation10], 1
    %3805 = vsyncpa [#allocation13], 1
    %3806 = vsyncpa [#allocation5], 1
    %s3807 = scalar_lea.sflag [#allocation5], 1
    %3808 = vsyncpa %s3807, 1

// kernel: tpu_custom_call.1
$region0: #{tpu_custom_call.1}
  #allocation0 [shape = 'u32[]', space=smem, size = 0x4, offset = 0x4, fixed_abs, tag = 'smem constant byte address 0x4 - core index']
  #allocation1 [shape = 'u32[144,128]{1,0:T(1,128)}', space=vmem, size = 0x12000, scoped, tag = 'internal scratch']
  #allocation2 [shape = 'f32[64,128]{1,0:T(8,128)}', space=vmem, size = 0x8000, scoped, tag = 'scratch operand']
  %s0 = inlined_call_operand.hbm [shape: f32[8,16,128], index: 0, kind: input, shape index: {}]
  %s1 = inlined_call_operand.vmem [shape: f32[1,128], index: 1, kind: input, shape index: {}]
  %s2 = inlined_call_operand.hbm [shape: f32[1,128], index: 2, kind: input, shape index: {}]
  %s3 = inlined_call_operand.hbm [shape: bf16[128,384], index: 3, kind: input, shape index: {}]
  %s4 = inlined_call_operand.hbm [shape: bf16[128,128], index: 4, kind: input, shape index: {}]
  %s5 = inlined_call_operand.vmem [shape: f32[1,128], index: 5, kind: input, shape index: {}]
  %s6 = inlined_call_operand.vmem [shape: f32[1,128], index: 6, kind: input, shape index: {}]
  %s7 = inlined_call_operand.vmem [shape: f32[1,128], index: 7, kind: input, shape index: {}]
  %s8 = inlined_call_operand.hbm [shape: bf16[128,256], index: 8, kind: input, shape index: {}]
  %s9 = inlined_call_operand.vmem [shape: f32[1,256], index: 9, kind: input, shape index: {}]
  %s10 = inlined_call_operand.hbm [shape: bf16[256,128], index: 10, kind: input, shape index: {}]
  %s11 = inlined_call_operand.vmem [shape: f32[1,128], index: 11, kind: input, shape index: {}]
  %s12 = inlined_call_operand.hbm [shape: f32[8,16,128], index: 12, kind: output, shape index: {}]
  %s13 = sld [smem:[#allocation0]]
  $region105: #{tpu_custom_call.1} parent=0
    _
  %s15 = ssub.s32 1, %s13
  %s16 = scalar_select 0, %s15, %s13
  $region1: #{tpu_custom_call.1} parent=0
    #allocation3 [shape = 'u8[65536]{0}', space=vmem, size = 0x10000, scoped, tag = 'input window, operand 0']
    #allocation4 [shape = 's32[2]{0}', space=sflag, size = 0x8, scoped, tag = 'scoped memory for tpu_custom_call.1']
    #allocation5 [shape = 's32[2]{0}', space=sflag, size = 0x8, scoped, tag = 'scoped memory for tpu_custom_call.1']
    #allocation6 [shape = 'u8[512]{0}', space=vmem, size = 0x400, scoped, tag = 'input window, operand 2, single buffered']
    #allocation7 [shape = 's32[1]{0}', space=sflag, size = 0x4, scoped, tag = 'scoped memory for tpu_custom_call.1']
    #allocation8 [shape = 'u8[98304]{0}', space=vmem, size = 0x18000, scoped, tag = 'input window, operand 3, single buffered']
    #allocation9 [shape = 'u8[32768]{0}', space=vmem, size = 0x8000, scoped, tag = 'input window, operand 4, single buffered']
    #allocation10 [shape = 's32[1]{0}', space=sflag, size = 0x4, scoped, tag = 'scoped memory for tpu_custom_call.1']
    #allocation11 [shape = 'u8[65536]{0}', space=vmem, size = 0x10000, scoped, tag = 'input window, operand 8, single buffered']
    #allocation12 [shape = 'u8[65536]{0}', space=vmem, size = 0x10000, scoped, tag = 'input window, operand 10, single buffered']
    #allocation13 [shape = 's32[1]{0}', space=sflag, size = 0x4, scoped, tag = 'scoped memory for tpu_custom_call.1']
    #allocation14 [shape = 'u8[65536]{0}', space=vmem, size = 0x10000, scoped, tag = 'output window, operand 0']
    %17 = vsyncpa [#allocation4], 0
    %s18 = scalar_lea.sflag [#allocation4], 1
    %19 = vsyncpa %s18, 0
    %20 = vsyncpa [#allocation7], 0
    %21 = vsyncpa [#allocation10], 0
    %22 = vsyncpa [#allocation13], 0
    %23 = vsyncpa [#allocation5], 0
    %s24 = scalar_lea.sflag [#allocation5], 1
    %25 = vsyncpa %s24, 0
    loop: start=0, step=1, limit=4
    $region2: #{tpu_custom_call.1} parent=1 // loop_pre_header
      _
    $region3: #{tpu_custom_call.1} parent=1 // loop_header
      %s27 = sphi 0, %s31
      %p28 = scmp.ge.s32.totalorder %s27, 4
      %s37 = sphi 0, %s39
      %s40 = sphi 0, %s37
      %s41 = sphi 0, %s40
      %s57 = sphi 0, %s41
      %s61 = sphi 0, %s61
      %s63 = sphi 0, %s61
      %s64 = sphi 0, %s63
      %s78 = sphi 0, %s64
      %s82 = sphi 0, %s82
      %s84 = sphi 0, %s82
      %s85 = sphi 0, %s84
      %s99 = sphi 0, %s85
      %s103 = sphi 0, %s103
      %s105 = sphi 0, %s103
      %s106 = sphi 0, %s105
      %s120 = sphi 0, %s106
      %s124 = sphi 0, %s124
      %s126 = sphi 0, %s124
      %s127 = sphi 0, %s126
      %s141 = sphi 0, %s127
      %s145 = sphi 0, %s145
      %s147 = sphi 0, %s145
      %s148 = sphi 0, %s147
      %s162 = sphi 0, %s148
      %s166 = sphi 0, %s166
      %s168 = sphi 0, %s166
      %s169 = sphi 0, %s168
      %s183 = sphi 0, %s169
      %s187 = sphi 0, %s187
      %s189 = sphi 0, %s187
      %s190 = sphi 0, %s189
      %s204 = sphi 0, %s190
      %s208 = sphi 0, %s208
      %s210 = sphi 0, %s208
      %s211 = sphi 0, %s210
      %s225 = sphi 0, %s211
      %s229 = sphi 0, %s229
      %s231 = sphi 0, %s229
      %s232 = sphi 0, %s231
      %s246 = sphi 0, %s232
      %s250 = sphi 0, %s250
      %s252 = sphi 0, %s250
      %s253 = sphi 0, %s252
      %s267 = sphi 0, %s253
      %s271 = sphi 0, %s271
      %s273 = sphi 0, %s271
      %s274 = sphi 0, %s273
      %s288 = sphi 0, %s274
      %s294 = sphi 0, %s296
      %s297 = sphi 0, %s294
      %s298 = sphi 0, %s297
      %s314 = sphi 0, %s298
    $region4: #{tpu_custom_call.1} parent=1 // loop_header_branch
      %30 = sbr.rel (%p28) target = $region8
    $region5: #{tpu_custom_call.1} parent=1 // loop_body
      %s32 = ssub.s32 %s27, 1
      %s33 = ssub.s32 %s27, 2
      %s34 = sadd.s32 %s27, 1
      %s35 = ssub.s32 %s27, %s34
      %p36 = scmp.eq.s32.totalorder %s35, 0
      %s38 = sadd.s32 %s37, 1
      %s39 = scalar_select %p36, %s37, %s38
      %p42 = pneg %p36
      %p43 = scmp.eq.s32.totalorder %s27, 1
      %p44 = por %p42, %p43
      %p45 = scmp.ne.s32.totalorder %s37, %s40
      %p46 = scmp.eq.s32.totalorder %s27, 0
      %p47 = por %p45, %p46
      %p48 = scmp.ne.s32.totalorder %s37, %s40
      %p49 = scmp.eq.s32.totalorder %s32, 1
      %p50 = por %p48, %p49
      %p51 = scmp.ne.s32.totalorder %s40, %s41
      %p52 = scmp.eq.s32.totalorder %s32, 0
      %p53 = por %p51, %p52
      %p54 = scmp.ne.s32.totalorder %s40, %s41
      %p55 = scmp.eq.s32.totalorder %s33, 1
      %p56 = por %p54, %p55
      %p58 = scmp.ne.s32.totalorder %s41, %s57
      %p59 = scmp.eq.s32.totalorder %s33, 0
      %p60 = por %p58, %p59
      %s62 = sadd.s32 %s61, 1
      %p65 = scmp.eq.s32.totalorder %s27, 1
      %p66 = scmp.ne.s32.totalorder %s61, %s63
      %p67 = scmp.eq.s32.totalorder %s27, 0
      %p68 = por %p66, %p67
      %p69 = scmp.ne.s32.totalorder %s61, %s63
      %p70 = scmp.eq.s32.totalorder %s32, 1
      %p71 = por %p69, %p70
      %p72 = scmp.ne.s32.totalorder %s63, %s64
      %p73 = scmp.eq.s32.totalorder %s32, 0
      %p74 = por %p72, %p73
      %p75 = scmp.ne.s32.totalorder %s63, %s64
      %p76 = scmp.eq.s32.totalorder %s33, 1
      %p77 = por %p75, %p76
      %p79 = scmp.ne.s32.totalorder %s64, %s78
      %p80 = scmp.eq.s32.totalorder %s33, 0
      %p81 = por %p79, %p80
      %s83 = sadd.s32 %s82, 1
      %p86 = scmp.eq.s32.totalorder %s27, 1
      %p87 = scmp.ne.s32.totalorder %s82, %s84
      %p88 = scmp.eq.s32.totalorder %s27, 0
      %p89 = por %p87, %p88
      %p90 = scmp.ne.s32.totalorder %s82, %s84
      %p91 = scmp.eq.s32.totalorder %s32, 1
      %p92 = por %p90, %p91
      %p93 = scmp.ne.s32.totalorder %s84, %s85
      %p94 = scmp.eq.s32.totalorder %s32, 0
      %p95 = por %p93, %p94
      %p96 = scmp.ne.s32.totalorder %s84, %s85
      %p97 = scmp.eq.s32.totalorder %s33, 1
      %p98 = por %p96, %p97
      %p100 = scmp.ne.s32.totalorder %s85, %s99
      %p101 = scmp.eq.s32.totalorder %s33, 0
      %p102 = por %p100, %p101
      %s104 = sadd.s32 %s103, 1
      %p107 = scmp.eq.s32.totalorder %s27, 1
      %p108 = scmp.ne.s32.totalorder %s103, %s105
      %p109 = scmp.eq.s32.totalorder %s27, 0
      %p110 = por %p108, %p109
      %p111 = scmp.ne.s32.totalorder %s103, %s105
      %p112 = scmp.eq.s32.totalorder %s32, 1
      %p113 = por %p111, %p112
      %p114 = scmp.ne.s32.totalorder %s105, %s106
      %p115 = scmp.eq.s32.totalorder %s32, 0
      %p116 = por %p114, %p115
      %p117 = scmp.ne.s32.totalorder %s105, %s106
      %p118 = scmp.eq.s32.totalorder %s33, 1
      %p119 = por %p117, %p118
      %p121 = scmp.ne.s32.totalorder %s106, %s120
      %p122 = scmp.eq.s32.totalorder %s33, 0
      %p123 = por %p121, %p122
      %s125 = sadd.s32 %s124, 1
      %p128 = scmp.eq.s32.totalorder %s27, 1
      %p129 = scmp.ne.s32.totalorder %s124, %s126
      %p130 = scmp.eq.s32.totalorder %s27, 0
      %p131 = por %p129, %p130
      %p132 = scmp.ne.s32.totalorder %s124, %s126
      %p133 = scmp.eq.s32.totalorder %s32, 1
      %p134 = por %p132, %p133
      %p135 = scmp.ne.s32.totalorder %s126, %s127
      %p136 = scmp.eq.s32.totalorder %s32, 0
      %p137 = por %p135, %p136
      %p138 = scmp.ne.s32.totalorder %s126, %s127
      %p139 = scmp.eq.s32.totalorder %s33, 1
      %p140 = por %p138, %p139
      %p142 = scmp.ne.s32.totalorder %s127, %s141
      %p143 = scmp.eq.s32.totalorder %s33, 0
      %p144 = por %p142, %p143
      %s146 = sadd.s32 %s145, 1
      %p149 = scmp.eq.s32.totalorder %s27, 1
      %p150 = scmp.ne.s32.totalorder %s145, %s147
      %p151 = scmp.eq.s32.totalorder %s27, 0
      %p152 = por %p150, %p151
      %p153 = scmp.ne.s32.totalorder %s145, %s147
      %p154 = scmp.eq.s32.totalorder %s32, 1
      %p155 = por %p153, %p154
      %p156 = scmp.ne.s32.totalorder %s147, %s148
      %p157 = scmp.eq.s32.totalorder %s32, 0
      %p158 = por %p156, %p157
      %p159 = scmp.ne.s32.totalorder %s147, %s148
      %p160 = scmp.eq.s32.totalorder %s33, 1
      %p161 = por %p159, %p160
      %p163 = scmp.ne.s32.totalorder %s148, %s162
      %p164 = scmp.eq.s32.totalorder %s33, 0
      %p165 = por %p163, %p164
      %s167 = sadd.s32 %s166, 1
      %p170 = scmp.eq.s32.totalorder %s27, 1
      %p171 = scmp.ne.s32.totalorder %s166, %s168
      %p172 = scmp.eq.s32.totalorder %s27, 0
      %p173 = por %p171, %p172
      %p174 = scmp.ne.s32.totalorder %s166, %s168
      %p175 = scmp.eq.s32.totalorder %s32, 1
      %p176 = por %p174, %p175
      %p177 = scmp.ne.s32.totalorder %s168, %s169
      %p178 = scmp.eq.s32.totalorder %s32, 0
      %p179 = por %p177, %p178
      %p180 = scmp.ne.s32.totalorder %s168, %s169
      %p181 = scmp.eq.s32.totalorder %s33, 1
      %p182 = por %p180, %p181
      %p184 = scmp.ne.s32.totalorder %s169, %s183
      %p185 = scmp.eq.s32.totalorder %s33, 0
      %p186 = por %p184, %p185
      %s188 = sadd.s32 %s187, 1
      %p191 = scmp.eq.s32.totalorder %s27, 1
      %p192 = scmp.ne.s32.totalorder %s187, %s189
      %p193 = scmp.eq.s32.totalorder %s27, 0
      %p194 = por %p192, %p193
      %p195 = scmp.ne.s32.totalorder %s187, %s189
      %p196 = scmp.eq.s32.totalorder %s32, 1
      %p197 = por %p195, %p196
      %p198 = scmp.ne.s32.totalorder %s189, %s190
      %p199 = scmp.eq.s32.totalorder %s32, 0
      %p200 = por %p198, %p199
      %p201 = scmp.ne.s32.totalorder %s189, %s190
      %p202 = scmp.eq.s32.totalorder %s33, 1
      %p203 = por %p201, %p202
      %p205 = scmp.ne.s32.totalorder %s190, %s204
      %p206 = scmp.eq.s32.totalorder %s33, 0
      %p207 = por %p205, %p206
      %s209 = sadd.s32 %s208, 1
      %p212 = scmp.eq.s32.totalorder %s27, 1
      %p213 = scmp.ne.s32.totalorder %s208, %s210
      %p214 = scmp.eq.s32.totalorder %s27, 0
      %p215 = por %p213, %p214
      %p216 = scmp.ne.s32.totalorder %s208, %s210
      %p217 = scmp.eq.s32.totalorder %s32, 1
      %p218 = por %p216, %p217
      %p219 = scmp.ne.s32.totalorder %s210, %s211
      %p220 = scmp.eq.s32.totalorder %s32, 0
      %p221 = por %p219, %p220
      %p222 = scmp.ne.s32.totalorder %s210, %s211
      %p223 = scmp.eq.s32.totalorder %s33, 1
      %p224 = por %p222, %p223
      %p226 = scmp.ne.s32.totalorder %s211, %s225
      %p227 = scmp.eq.s32.totalorder %s33, 0
      %p228 = por %p226, %p227
      %s230 = sadd.s32 %s229, 1
      %p233 = scmp.eq.s32.totalorder %s27, 1
      %p234 = scmp.ne.s32.totalorder %s229, %s231
      %p235 = scmp.eq.s32.totalorder %s27, 0
      %p236 = por %p234, %p235
      %p237 = scmp.ne.s32.totalorder %s229, %s231
      %p238 = scmp.eq.s32.totalorder %s32, 1
      %p239 = por %p237, %p238
      %p240 = scmp.ne.s32.totalorder %s231, %s232
      %p241 = scmp.eq.s32.totalorder %s32, 0
      %p242 = por %p240, %p241
      %p243 = scmp.ne.s32.totalorder %s231, %s232
      %p244 = scmp.eq.s32.totalorder %s33, 1
      %p245 = por %p243, %p244
      %p247 = scmp.ne.s32.totalorder %s232, %s246
      %p248 = scmp.eq.s32.totalorder %s33, 0
      %p249 = por %p247, %p248
      %s251 = sadd.s32 %s250, 1
      %p254 = scmp.eq.s32.totalorder %s27, 1
      %p255 = scmp.ne.s32.totalorder %s250, %s252
      %p256 = scmp.eq.s32.totalorder %s27, 0
      %p257 = por %p255, %p256
      %p258 = scmp.ne.s32.totalorder %s250, %s252
      %p259 = scmp.eq.s32.totalorder %s32, 1
      %p260 = por %p258, %p259
      %p261 = scmp.ne.s32.totalorder %s252, %s253
      %p262 = scmp.eq.s32.totalorder %s32, 0
      %p263 = por %p261, %p262
      %p264 = scmp.ne.s32.totalorder %s252, %s253
      %p265 = scmp.eq.s32.totalorder %s33, 1
      %p266 = por %p264, %p265
      %p268 = scmp.ne.s32.totalorder %s253, %s267
      %p269 = scmp.eq.s32.totalorder %s33, 0
      %p270 = por %p268, %p269
      %s272 = sadd.s32 %s271, 1
      %p275 = scmp.eq.s32.totalorder %s27, 1
      %p276 = scmp.ne.s32.totalorder %s271, %s273
      %p277 = scmp.eq.s32.totalorder %s27, 0
      %p278 = por %p276, %p277
      %p279 = scmp.ne.s32.totalorder %s271, %s273
      %p280 = scmp.eq.s32.totalorder %s32, 1
      %p281 = por %p279, %p280
      %p282 = scmp.ne.s32.totalorder %s273, %s274
      %p283 = scmp.eq.s32.totalorder %s32, 0
      %p284 = por %p282, %p283
      %p285 = scmp.ne.s32.totalorder %s273, %s274
      %p286 = scmp.eq.s32.totalorder %s33, 1
      %p287 = por %p285, %p286
      %p289 = scmp.ne.s32.totalorder %s274, %s288
      %p290 = scmp.eq.s32.totalorder %s33, 0
      %p291 = por %p289, %p290
      %s292 = ssub.s32 %s27, %s34
      %p293 = scmp.eq.s32.totalorder %s292, 0
      %s295 = sadd.s32 %s294, 1
      %s296 = scalar_select %p293, %s294, %s295
      %p299 = pneg %p293
      %p300 = scmp.eq.s32.totalorder %s27, 1
      %p301 = por %p299, %p300
      %p302 = scmp.ne.s32.totalorder %s294, %s297
      %p303 = scmp.eq.s32.totalorder %s27, 0
      %p304 = por %p302, %p303
      %p305 = scmp.ne.s32.totalorder %s294, %s297
      %p306 = scmp.eq.s32.totalorder %s32, 1
      %p307 = por %p305, %p306
      %p308 = scmp.ne.s32.totalorder %s297, %s298
      %p309 = scmp.eq.s32.totalorder %s32, 0
      %p310 = por %p308, %p309
      %p311 = scmp.ne.s32.totalorder %s297, %s298
      %p312 = scmp.eq.s32.totalorder %s33, 1
      %p313 = por %p311, %p312
      %p315 = scmp.ne.s32.totalorder %s298, %s314
      %p316 = scmp.eq.s32.totalorder %s33, 0
      %p317 = por %p315, %p316
      %p318 = scmp.le.s32.totalorder 1, %s27
      %p319 = scmp.lt.s32.totalorder %s27, 3
      %p320 = pnand %p318, %p319
      %p321 = pneg %p320
      // Predicated region
      $region9: #{tpu_custom_call.1} parent=5 // pred_check
        _
      $region10: #{tpu_custom_call.1} parent=5 // pred_check_branch
        %323 = sbr.rel (%p320) target = $region12
      $region11: #{tpu_custom_call.1} parent=5 // pred_region
        %s324 = ssub.s32 %s27, 1
        // Predicated region
        $region13: #{tpu_custom_call.1} parent=11 // pred_check
          %p325 = pneg %p74
        $region14: #{tpu_custom_call.1} parent=11 // pred_check_branch
          %327 = sbr.rel (%p325) target = $region16
        $region15: #{tpu_custom_call.1} parent=11 // pred_region
          _
        $region16: #{tpu_custom_call.1} parent=11 // pred_fallthru
          _
        // Predicated region
        $region17: #{tpu_custom_call.1} parent=11 // pred_check
          %p328 = pneg %p95
        $region18: #{tpu_custom_call.1} parent=11 // pred_check_branch
          %330 = sbr.rel (%p328) target = $region20
        $region19: #{tpu_custom_call.1} parent=11 // pred_region
          %s332 = ssub.s32 16, 16
          %333 = vsyncadd [#allocation7], %s332
          %s335 = sshll.u32 [#allocation6], 4
          %s336 = int_to_ptr.vmem [resolvable:$true] %s335
          %338 = dma.hbm_to_vmem [thread:$0]  %s2, 16, %s336, [#allocation7]
        $region20: #{tpu_custom_call.1} parent=11 // pred_fallthru
          _
        // Predicated region
        $region21: #{tpu_custom_call.1} parent=11 // pred_check
          %p339 = pneg %p116
        $region22: #{tpu_custom_call.1} parent=11 // pred_check_branch
          %341 = sbr.rel (%p339) target = $region24
        $region23: #{tpu_custom_call.1} parent=11 // pred_region
          %s343 = ssub.s32 3072, 3072
          %344 = vsyncadd [#allocation7], %s343
          %s345 = sshll.u32 [#allocation8], 4
          %s346 = int_to_ptr.vmem [resolvable:$true] %s345
          %351 = dma.hbm_to_vmem [thread:$0]  %s3, 3072, %s346, [#allocation7], 192, 192, 12
        $region24: #{tpu_custom_call.1} parent=11 // pred_fallthru
          _
        // Predicated region
        $region25: #{tpu_custom_call.1} parent=11 // pred_check
          %p352 = pneg %p137
        $region26: #{tpu_custom_call.1} parent=11 // pred_check_branch
          %354 = sbr.rel (%p352) target = $region28
        $region27: #{tpu_custom_call.1} parent=11 // pred_region
          %s356 = ssub.s32 1024, 1024
          %357 = vsyncadd [#allocation10], %s356
          %s358 = sshll.u32 [#allocation9], 4
          %s359 = int_to_ptr.vmem [resolvable:$true] %s358
          %364 = dma.hbm_to_vmem [thread:$0]  %s4, 1024, %s359, [#allocation10], 64, 64, 4
        $region28: #{tpu_custom_call.1} parent=11 // pred_fallthru
          _
        // Predicated region
        $region29: #{tpu_custom_call.1} parent=11 // pred_check
          %p365 = pneg %p158
        $region30: #{tpu_custom_call.1} parent=11 // pred_check_branch
          %367 = sbr.rel (%p365) target = $region32
        $region31: #{tpu_custom_call.1} parent=11 // pred_region
          _
        $region32: #{tpu_custom_call.1} parent=11 // pred_fallthru
          _
        // Predicated region
        $region33: #{tpu_custom_call.1} parent=11 // pred_check
          %p368 = pneg %p179
        $region34: #{tpu_custom_call.1} parent=11 // pred_check_branch
          %370 = sbr.rel (%p368) target = $region36
        $region35: #{tpu_custom_call.1} parent=11 // pred_region
          _
        $region36: #{tpu_custom_call.1} parent=11 // pred_fallthru
          _
        // Predicated region
        $region37: #{tpu_custom_call.1} parent=11 // pred_check
          %p371 = pneg %p200
        $region38: #{tpu_custom_call.1} parent=11 // pred_check_branch
          %373 = sbr.rel (%p371) target = $region40
        $region39: #{tpu_custom_call.1} parent=11 // pred_region
          _
        $region40: #{tpu_custom_call.1} parent=11 // pred_fallthru
          _
        // Predicated region
        $region41: #{tpu_custom_call.1} parent=11 // pred_check
          %p374 = pneg %p221
        $region42: #{tpu_custom_call.1} parent=11 // pred_check_branch
          %376 = sbr.rel (%p374) target = $region44
        $region43: #{tpu_custom_call.1} parent=11 // pred_region
          %s378 = ssub.s32 2048, 2048
          %379 = vsyncadd [#allocation10], %s378
          %s380 = sshll.u32 [#allocation11], 4
          %s381 = int_to_ptr.vmem [resolvable:$true] %s380
          %386 = dma.hbm_to_vmem [thread:$0]  %s8, 2048, %s381, [#allocation10], 128, 128, 8
        $region44: #{tpu_custom_call.1} parent=11 // pred_fallthru
          _
        // Predicated region
        $region45: #{tpu_custom_call.1} parent=11 // pred_check
          %p387 = pneg %p242
        $region46: #{tpu_custom_call.1} parent=11 // pred_check_branch
          %389 = sbr.rel (%p387) target = $region48
        $region47: #{tpu_custom_call.1} parent=11 // pred_region
          _
        $region48: #{tpu_custom_call.1} parent=11 // pred_fallthru
          _
        // Predicated region
        $region49: #{tpu_custom_call.1} parent=11 // pred_check
          %p390 = pneg %p263
        $region50: #{tpu_custom_call.1} parent=11 // pred_check_branch
          %392 = sbr.rel (%p390) target = $region52
        $region51: #{tpu_custom_call.1} parent=11 // pred_region
          %s394 = ssub.s32 2048, 2048
          %395 = vsyncadd [#allocation13], %s394
          %s396 = sshll.u32 [#allocation12], 4
          %s397 = int_to_ptr.vmem [resolvable:$true] %s396
          %402 = dma.hbm_to_vmem [thread:$0]  %s10, 2048, %s397, [#allocation13], 64, 64, 4
        $region52: #{tpu_custom_call.1} parent=11 // pred_fallthru
          _
        // Predicated region
        $region53: #{tpu_custom_call.1} parent=11 // pred_check
          %p403 = pneg %p284
        $region54: #{tpu_custom_call.1} parent=11 // pred_check_branch
          %405 = sbr.rel (%p403) target = $region56
        $region55: #{tpu_custom_call.1} parent=11 // pred_region
          _
        $region56: #{tpu_custom_call.1} parent=11 // pred_fallthru
          _
      $region12: #{tpu_custom_call.1} parent=5 // pred_fallthru
        _
      %p406 = scmp.lt.s32.totalorder %s27, 2
      // Predicated region
      $region57: #{tpu_custom_call.1} parent=5 // pred_check
        %p407 = pneg %p406
      $region58: #{tpu_custom_call.1} parent=5 // pred_check_branch
        %409 = sbr.rel (%p407) target = $region60
      $region59: #{tpu_custom_call.1} parent=5 // pred_region
        // Predicated region
        $region61: #{tpu_custom_call.1} parent=59 // pred_check
          %p410 = pneg %p47
        $region62: #{tpu_custom_call.1} parent=59 // pred_check_branch
          %412 = sbr.rel (%p410) target = $region64
        $region63: #{tpu_custom_call.1} parent=59 // pred_region
          %s413 = sand.u32 %s37, 1
          %s414 = scalar_lea.sflag [#allocation4], %s413
          %s415 = sand.u32 %s37, 1
          %s416 = smul.addr %s415, 64
          %s417 = scalar_lea.vmem [#allocation3], %s416
          %s418 = smul.u32 4, %s27
          %s420 = ssub.s32 1024, 1024
          %421 = vsyncadd %s414, %s420
          %s422 = smul.addr %s418, 2
          %s423 = smul.addr %s422, 128
          %s424 = scalar_lea.hbm %s0, %s423
          %s425 = sshll.u32 %s417, 4
          %s426 = int_to_ptr.vmem [resolvable:$true] %s425
          %431 = dma.hbm_to_vmem [thread:$0]  %s424, 1024, %s426, %s414, 128, 128, 8
        $region64: #{tpu_custom_call.1} parent=59 // pred_fallthru
          _
      $region60: #{tpu_custom_call.1} parent=5 // pred_fallthru
        _
      %p432 = scmp.le.s32.totalorder 1, %s27
      %p433 = scmp.lt.s32.totalorder %s27, 3
      %p434 = pnand %p432, %p433
      %p435 = pneg %p434
      // Predicated region
      $region65: #{tpu_custom_call.1} parent=5 // pred_check
        _
      $region66: #{tpu_custom_call.1} parent=5 // pred_check_branch
        %437 = sbr.rel (%p434) target = $region68
      $region67: #{tpu_custom_call.1} parent=5 // pred_region
        %s438 = ssub.s32 %s27, 1
        %s439 = sand.u32 %s40, 1
        %s440 = scalar_lea.sflag [#allocation4], %s439
        %s441 = sand.u32 %s40, 1
        %s442 = smul.addr %s441, 64
        %s443 = scalar_lea.vmem [#allocation3], %s442
        // Predicated region
        $region69: #{tpu_custom_call.1} parent=67 // pred_check
          %p444 = pneg %p53
        $region70: #{tpu_custom_call.1} parent=67 // pred_check_branch
          %446 = sbr.rel (%p444) target = $region72
        $region71: #{tpu_custom_call.1} parent=67 // pred_region
          %447 = dma.done %s440, 1024
        $region72: #{tpu_custom_call.1} parent=67 // pred_fallthru
          _
        // Predicated region
        $region73: #{tpu_custom_call.1} parent=67 // pred_check
          %p448 = pneg %p95
        $region74: #{tpu_custom_call.1} parent=67 // pred_check_branch
          %450 = sbr.rel (%p448) target = $region76
        $region75: #{tpu_custom_call.1} parent=67 // pred_region
          %451 = dma.done [#allocation7], 16
        $region76: #{tpu_custom_call.1} parent=67 // pred_fallthru
          _
        // Predicated region
        $region77: #{tpu_custom_call.1} parent=67 // pred_check
          %p452 = pneg %p116
        $region78: #{tpu_custom_call.1} parent=67 // pred_check_branch
          %454 = sbr.rel (%p452) target = $region80
        $region79: #{tpu_custom_call.1} parent=67 // pred_region
          %455 = dma.done [#allocation7], 3072
        $region80: #{tpu_custom_call.1} parent=67 // pred_fallthru
          _
        // Predicated region
        $region81: #{tpu_custom_call.1} parent=67 // pred_check
          %p456 = pneg %p137
        $region82: #{tpu_custom_call.1} parent=67 // pred_check_branch
          %458 = sbr.rel (%p456) target = $region84
        $region83: #{tpu_custom_call.1} parent=67 // pred_region
          %459 = dma.done [#allocation10], 1024
        $region84: #{tpu_custom_call.1} parent=67 // pred_fallthru
          _
        // Predicated region
        $region85: #{tpu_custom_call.1} parent=67 // pred_check
          %p460 = pneg %p221
        $region86: #{tpu_custom_call.1} parent=67 // pred_check_branch
          %462 = sbr.rel (%p460) target = $region88
        $region87: #{tpu_custom_call.1} parent=67 // pred_region
          %463 = dma.done [#allocation10], 2048
        $region88: #{tpu_custom_call.1} parent=67 // pred_fallthru
          _
        // Predicated region
        $region89: #{tpu_custom_call.1} parent=67 // pred_check
          %p464 = pneg %p263
        $region90: #{tpu_custom_call.1} parent=67 // pred_check_branch
          %466 = sbr.rel (%p464) target = $region92
        $region91: #{tpu_custom_call.1} parent=67 // pred_region
          %467 = dma.done [#allocation13], 2048
        $region92: #{tpu_custom_call.1} parent=67 // pred_fallthru
          _
        %s468 = sand.u32 %s40, 1
        %s469 = scalar_lea.sflag [#allocation4], %s468
        %s470 = sand.u32 %s40, 1
        %s471 = smul.addr %s470, 64
        %s472 = scalar_lea.vmem [#allocation3], %s471
        %p473 = pneg %p53
        %p474 = pneg %p50
        %p475 = pneg %p74
        %p476 = pneg %p71
        %p477 = pneg %p95
        %p478 = pneg %p92
        %p479 = pneg %p116
        %p480 = pneg %p113
        %p481 = pneg %p137
        %p482 = pneg %p134
        %p483 = pneg %p158
        %p484 = pneg %p155
        %p485 = pneg %p179
        %p486 = pneg %p176
        %p487 = pneg %p200
        %p488 = pneg %p197
        %p489 = pneg %p221
        %p490 = pneg %p218
        %p491 = pneg %p242
        %p492 = pneg %p239
        %p493 = pneg %p263
        %p494 = pneg %p260
        %p495 = pneg %p284
        %p496 = pneg %p281
        %p497 = pneg %p310
        %p498 = pneg %p307
        %s499 = sand.u32 %s297, 1
        %s500 = scalar_lea.sflag [#allocation5], %s499
        %s501 = sand.u32 %s297, 1
        %s502 = smul.addr %s501, 64
        %s503 = scalar_lea.vmem [#allocation14], %s502
        %s504 = smul.u32 4, %s32
        %s505 = smul.u32 4, %s32
        %v507 = vld [vmem:[%s443] sm:$0xff]
        %v508 = vld [vmem:[%s443 + $0x8] sm:$0xff]
        %v509 = vld [vmem:[%s443 + $0x10] sm:$0xff]
        %v510 = vld [vmem:[%s443 + $0x18] sm:$0xff]
        %v511 = vld [vmem:[%s443 + $0x20] sm:$0xff]
        %v512 = vld [vmem:[%s443 + $0x28] sm:$0xff]
        %v513 = vld [vmem:[%s443 + $0x30] sm:$0xff]
        %v514 = vld [vmem:[%s443 + $0x38] sm:$0xff]
        %515 = vadd.xlane.f32.xlu0 %v507
        %v516 = vpop.xlane.xlu0 %515
        %517 = vadd.xlane.f32.xlu0 %v508
        %v518 = vpop.xlane.xlu0 %517
        %519 = vadd.xlane.f32.xlu0 %v509
        %v520 = vpop.xlane.xlu0 %519
        %521 = vadd.xlane.f32.xlu0 %v510
        %v522 = vpop.xlane.xlu0 %521
        %523 = vadd.xlane.f32.xlu0 %v511
        %v524 = vpop.xlane.xlu0 %523
        %525 = vadd.xlane.f32.xlu0 %v512
        %v526 = vpop.xlane.xlu0 %525
        %527 = vadd.xlane.f32.xlu0 %v513
        %v528 = vpop.xlane.xlu0 %527
        %529 = vadd.xlane.f32.xlu0 %v514
        %v530 = vpop.xlane.xlu0 %529
        %v531 = vrcp.pop 128.0
        %v532 = vmul.f32 %v516, %v531
        %v533 = vmul.f32 %v518, %v531
        %v534 = vmul.f32 %v520, %v531
        %v535 = vmul.f32 %v522, %v531
        %v536 = vmul.f32 %v524, %v531
        %v537 = vmul.f32 %v526, %v531
        %v538 = vmul.f32 %v528, %v531
        %v539 = vmul.f32 %v530, %v531
        %v540 = vsub.f32 %v507, %v532
        %v541 = vsub.f32 %v508, %v533
        %v542 = vsub.f32 %v509, %v534
        %v543 = vsub.f32 %v510, %v535
        %v544 = vsub.f32 %v511, %v536
        %v545 = vsub.f32 %v512, %v537
        %v546 = vsub.f32 %v513, %v538
        %v547 = vsub.f32 %v514, %v539
        %v548 = vmul.f32 %v540, %v540
        %v549 = vmul.f32 %v541, %v541
        %v550 = vmul.f32 %v542, %v542
        %v551 = vmul.f32 %v543, %v543
        %v552 = vmul.f32 %v544, %v544
        %v553 = vmul.f32 %v545, %v545
        %v554 = vmul.f32 %v546, %v546
        %v555 = vmul.f32 %v547, %v547
        %556 = vadd.xlane.f32.xlu0 %v548
        %v557 = vpop.xlane.xlu0 %556
        %558 = vadd.xlane.f32.xlu0 %v549
        %v559 = vpop.xlane.xlu0 %558
        %560 = vadd.xlane.f32.xlu0 %v550
        %v561 = vpop.xlane.xlu0 %560
        %562 = vadd.xlane.f32.xlu0 %v551
        %v563 = vpop.xlane.xlu0 %562
        %564 = vadd.xlane.f32.xlu0 %v552
        %v565 = vpop.xlane.xlu0 %564
        %566 = vadd.xlane.f32.xlu0 %v553
        %v567 = vpop.xlane.xlu0 %566
        %568 = vadd.xlane.f32.xlu0 %v554
        %v569 = vpop.xlane.xlu0 %568
        %570 = vadd.xlane.f32.xlu0 %v555
        %v571 = vpop.xlane.xlu0 %570
        %v572 = vmul.f32 %v557, %v531
        %v573 = vmul.f32 %v559, %v531
        %v574 = vmul.f32 %v561, %v531
        %v575 = vmul.f32 %v563, %v531
        %v576 = vmul.f32 %v565, %v531
        %v577 = vmul.f32 %v567, %v531
        %v578 = vmul.f32 %v569, %v531
        %v579 = vmul.f32 %v571, %v531
        %v580 = vadd.f32 %v572, 1e-05
        %v581 = vadd.f32 %v573, 1e-05
        %v582 = vadd.f32 %v574, 1e-05
        %v583 = vadd.f32 %v575, 1e-05
        %v584 = vadd.f32 %v576, 1e-05
        %v585 = vadd.f32 %v577, 1e-05
        %v586 = vadd.f32 %v578, 1e-05
        %v587 = vadd.f32 %v579, 1e-05
        %v588 = vrsqrt.pop %v580
        %v589 = vrsqrt.pop %v581
        %v590 = vrsqrt.pop %v582
        %v591 = vrsqrt.pop %v583
        %v592 = vrsqrt.pop %v584
        %v593 = vrsqrt.pop %v585
        %v594 = vrsqrt.pop %v586
        %v595 = vrsqrt.pop %v587
        %v596 = vmul.f32 %v540, %v588
        %v597 = vmul.f32 %v541, %v589
        %v598 = vmul.f32 %v542, %v590
        %v599 = vmul.f32 %v543, %v591
        %v600 = vmul.f32 %v544, %v592
        %v601 = vmul.f32 %v545, %v593
        %v602 = vmul.f32 %v546, %v594
        %v603 = vmul.f32 %v547, %v595
        %v604 = vld [vmem:[%s1] sm:$0x1]
        %v606 = vlaneseq
        %v607 = vshrl.u32 %v606, 7
        %v608 = vsub.s32 0, %v607
        %v609 = vrot.slane %v604, %v608
        %v611 = vmul.f32 %v596, %v609
        %v612 = vmul.f32 %v597, %v609
        %v613 = vmul.f32 %v598, %v609
        %v614 = vmul.f32 %v599, %v609
        %v615 = vmul.f32 %v600, %v609
        %v616 = vmul.f32 %v601, %v609
        %v617 = vmul.f32 %v602, %v609
        %v618 = vmul.f32 %v603, %v609
        %v619 = vld [vmem:[#allocation6] sm:$0x1]
        %v621 = vlaneseq
        %v622 = vshrl.u32 %v621, 7
        %v623 = vsub.s32 0, %v622
        %v624 = vrot.slane %v619, %v623
        %v626 = vadd.f32 %v611, %v624
        %v627 = vadd.f32 %v612, %v624
        %v628 = vadd.f32 %v613, %v624
        %v629 = vadd.f32 %v614, %v624
        %v630 = vadd.f32 %v615, %v624
        %v631 = vadd.f32 %v616, %v624
        %v632 = vadd.f32 %v617, %v624
        %v633 = vadd.f32 %v618, %v624
        %v634 = vpack.c.bf16 %v627, %v626
        %v635 = vpack.c.bf16 %v629, %v628
        %v636 = vpack.c.bf16 %v631, %v630
        %v637 = vpack.c.bf16 %v633, %v632
        %v638 = vld [vmem:[#allocation8] sm:$0xff]
        %v639 = vld [vmem:[#allocation8 + $0x8] sm:$0xf]
        %v640 = vld [vmem:[#allocation8 + $0xc] sm:$0xff]
        %v641 = vld [vmem:[#allocation8 + $0x14] sm:$0xf]
        %v642 = vld [vmem:[#allocation8 + $0x18] sm:$0xff]
        %v643 = vld [vmem:[#allocation8 + $0x20] sm:$0xf]
        %v644 = vld [vmem:[#allocation8 + $0x24] sm:$0xff]
        %v645 = vld [vmem:[#allocation8 + $0x2c] sm:$0xf]
        %v646 = vld [vmem:[#allocation8 + $0x30] sm:$0xff]
        %v647 = vld [vmem:[#allocation8 + $0x38] sm:$0xf]
        %v648 = vld [vmem:[#allocation8 + $0x3c] sm:$0xff]
        %v649 = vld [vmem:[#allocation8 + $0x44] sm:$0xf]
        %v650 = vld [vmem:[#allocation8 + $0x48] sm:$0xff]
        %v651 = vld [vmem:[#allocation8 + $0x50] sm:$0xf]
        %v652 = vld [vmem:[#allocation8 + $0x54] sm:$0xff]
        %v653 = vld [vmem:[#allocation8 + $0x5c] sm:$0xf]
        %v654 = vld [vmem:[#allocation8 + $0x60] sm:$0xff]
        %v655 = vld [vmem:[#allocation8 + $0x68] sm:$0xf]
        %v656 = vld [vmem:[#allocation8 + $0x6c] sm:$0xff]
        %v657 = vld [vmem:[#allocation8 + $0x74] sm:$0xf]
        %v658 = vld [vmem:[#allocation8 + $0x78] sm:$0xff]
        %v659 = vld [vmem:[#allocation8 + $0x80] sm:$0xf]
        %v660 = vld [vmem:[#allocation8 + $0x84] sm:$0xff]
        %v661 = vld [vmem:[#allocation8 + $0x8c] sm:$0xf]
        %v662 = vld [vmem:[#allocation8 + $0x90] sm:$0xff]
        %v663 = vld [vmem:[#allocation8 + $0x98] sm:$0xf]
        %v664 = vld [vmem:[#allocation8 + $0x9c] sm:$0xff]
        %v665 = vld [vmem:[#allocation8 + $0xa4] sm:$0xf]
        %v666 = vld [vmem:[#allocation8 + $0xa8] sm:$0xff]
        %v667 = vld [vmem:[#allocation8 + $0xb0] sm:$0xf]
        %v668 = vld [vmem:[#allocation8 + $0xb4] sm:$0xff]
        %v669 = vld [vmem:[#allocation8 + $0xbc] sm:$0xf]
        %v702 = vunpack.c.l.b16 %v638
        %v703 = vunpack.c.h.b16 %v638
        %v704 = vunpack.c.l.b16 %v639
        %v705 = vunpack.c.l.b16 %v640
        %v706 = vunpack.c.h.b16 %v640
        %v707 = vunpack.c.l.b16 %v641
        %v708 = vunpack.c.l.b16 %v642
        %v709 = vunpack.c.h.b16 %v642
        %v710 = vunpack.c.l.b16 %v643
        %v711 = vunpack.c.l.b16 %v644
        %v712 = vunpack.c.h.b16 %v644
        %v713 = vunpack.c.l.b16 %v645
        %v714 = vunpack.c.l.b16 %v646
        %v715 = vunpack.c.h.b16 %v646
        %v716 = vunpack.c.l.b16 %v647
        %v717 = vunpack.c.l.b16 %v648
        %v718 = vunpack.c.h.b16 %v648
        %v719 = vunpack.c.l.b16 %v649
        %v720 = vunpack.c.l.b16 %v650
        %v721 = vunpack.c.h.b16 %v650
        %v722 = vunpack.c.l.b16 %v651
        %v723 = vunpack.c.l.b16 %v652
        %v724 = vunpack.c.h.b16 %v652
        %v725 = vunpack.c.l.b16 %v653
        %v726 = vunpack.c.l.b16 %v654
        %v727 = vunpack.c.h.b16 %v654
        %v728 = vunpack.c.l.b16 %v655
        %v729 = vunpack.c.l.b16 %v656
        %v730 = vunpack.c.h.b16 %v656
        %v731 = vunpack.c.l.b16 %v657
        %v732 = vunpack.c.l.b16 %v658
        %v733 = vunpack.c.h.b16 %v658
        %v734 = vunpack.c.l.b16 %v659
        %v735 = vunpack.c.l.b16 %v660
        %v736 = vunpack.c.h.b16 %v660
        %v737 = vunpack.c.l.b16 %v661
        %v738 = vunpack.c.l.b16 %v662
        %v739 = vunpack.c.h.b16 %v662
        %v740 = vunpack.c.l.b16 %v663
        %v741 = vunpack.c.l.b16 %v664
        %v742 = vunpack.c.h.b16 %v664
        %v743 = vunpack.c.l.b16 %v665
        %v744 = vunpack.c.l.b16 %v666
        %v745 = vunpack.c.h.b16 %v666
        %v746 = vunpack.c.l.b16 %v667
        %v747 = vunpack.c.l.b16 %v668
        %v748 = vunpack.c.h.b16 %v668
        %v749 = vunpack.c.l.b16 %v669
        %v750 = vpack.c.b16 %v705, %v702
        %v751 = vpack.c.b16 %v706, %v703
        %v752 = vpack.c.b16 %v707, %v704
        %v753 = vpack.c.b16 %v711, %v708
        %v754 = vpack.c.b16 %v712, %v709
        %v755 = vpack.c.b16 %v713, %v710
        %v756 = vpack.c.b16 %v717, %v714
        %v757 = vpack.c.b16 %v718, %v715
        %v758 = vpack.c.b16 %v719, %v716
        %v759 = vpack.c.b16 %v723, %v720
        %v760 = vpack.c.b16 %v724, %v721
        %v761 = vpack.c.b16 %v725, %v722
        %v762 = vpack.c.b16 %v729, %v726
        %v763 = vpack.c.b16 %v730, %v727
        %v764 = vpack.c.b16 %v731, %v728
        %v765 = vpack.c.b16 %v735, %v732
        %v766 = vpack.c.b16 %v736, %v733
        %v767 = vpack.c.b16 %v737, %v734
        %v768 = vpack.c.b16 %v741, %v738
        %v769 = vpack.c.b16 %v742, %v739
        %v770 = vpack.c.b16 %v743, %v740
        %v771 = vpack.c.b16 %v747, %v744
        %v772 = vpack.c.b16 %v748, %v745
        %v773 = vpack.c.b16 %v749, %v746
        %798 = vmatprep.subr.bf16.mxu0 %v772
        %799 = vmatpush1.bf16.msra.mxu0 %v771
        %800 = vmatprep.subr.bf16.mxu0 %v769
        %801 = vmatpush1.bf16.msra.mxu0 %v768
        %802 = vmatprep.subr.bf16.mxu0 %v766
        %803 = vmatpush1.bf16.msra.mxu0 %v765
        %804 = vmatprep.subr.bf16.mxu0 %v763
        %805 = vmatpush1.bf16.msra.mxu0 %v762
        %806 = vmatprep.subr.bf16.mxu0 %v760
        %807 = vmatpush1.bf16.msra.mxu0 %v759
        %808 = vmatprep.subr.bf16.mxu0 %v757
        %809 = vmatpush1.bf16.msra.mxu0 %v756
        %810 = vmatprep.subr.bf16.mxu0 %v754
        %811 = vmatpush1.bf16.msra.mxu0 %v753
        %812 = vmatprep.subr.bf16.mxu0 %v751
        %813 = vmatpush1.bf16.msra.mxu0 %v750
        %814 = vmatprep.subr.bf16.mxu0 0
        %815 = vmatpush2.bf16.msra.mxu0 0
        %816 = vmatprep.subr.bf16.mxu0 0
        %817 = vmatpush2.bf16.msra.mxu0 0
        %818 = vmatprep.subr.bf16.mxu0 0
        %819 = vmatpush2.bf16.msra.mxu0 0
        %820 = vmatprep.subr.bf16.mxu0 0
        %821 = vmatpush2.bf16.msra.mxu0 0
        %822 = vmatprep.subr.bf16.mxu0 0
        %823 = vmatpush2.bf16.msra.mxu0 0
        %824 = vmatprep.subr.bf16.mxu0 0
        %825 = vmatpush2.bf16.msra.mxu0 0
        %826 = vmatprep.subr.bf16.mxu0 0
        %827 = vmatpush2.bf16.msra.mxu0 0
        %828 = vmatprep.subr.bf16.mxu0 0
        %829 = vmatpush2.bf16.msra.mxu0 0
        %830 = vmatprep.mubr.bf16.mxu0 0
        %831 = vmatmul.mubr.bf16.gmra.mxu0 %v634
        %v832 = vpop.f32.mrf.mxu0
        %v833 = vadd.f32 0.0, %v832
        %v834 = vpop.f32.mrf.mxu0
        %v835 = vadd.f32 0.0, %v834
        %v836 = vpop.f32.mrf.mxu0
        %v837 = vadd.f32 0.0, %v836
        %v838 = vpop.f32.mrf.mxu0
        %v839 = vadd.f32 0.0, %v838
        %840 = vmatprep.mubr.bf16.mxu0 0
        %841 = vmatmul.mubr.bf16.gmra.mxu0 %v635
        %v842 = vpop.f32.mrf.mxu0
        %v843 = vadd.f32 0.0, %v842
        %v844 = vpop.f32.mrf.mxu0
        %v845 = vadd.f32 0.0, %v844
        %v846 = vpop.f32.mrf.mxu0
        %v847 = vadd.f32 0.0, %v846
        %v848 = vpop.f32.mrf.mxu0
        %v849 = vadd.f32 0.0, %v848
        %850 = vmatprep.mubr.bf16.mxu0 0
        %851 = vmatmul.mubr.bf16.gmra.mxu0 %v636
        %v852 = vpop.f32.mrf.mxu0
        %v853 = vadd.f32 0.0, %v852
        %v854 = vpop.f32.mrf.mxu0
        %v855 = vadd.f32 0.0, %v854
        %v856 = vpop.f32.mrf.mxu0
        %v857 = vadd.f32 0.0, %v856
        %v858 = vpop.f32.mrf.mxu0
        %v859 = vadd.f32 0.0, %v858
        %860 = vmatprep.mubr.bf16.mxu0 0
        %861 = vmatmul.mubr.bf16.gmra.mxu0 %v637
        %v862 = vpop.f32.mrf.mxu0
        %v863 = vadd.f32 0.0, %v862
        %v864 = vpop.f32.mrf.mxu0
        %v865 = vadd.f32 0.0, %v864
        %v866 = vpop.f32.mrf.mxu0
        %v867 = vadd.f32 0.0, %v866
        %v868 = vpop.f32.mrf.mxu0
        %v869 = vadd.f32 0.0, %v868
        %870 = vdwg.mxu0
        %871 = vmatprep.subr.bf16.mxu0 0
        %872 = vmatpush1.bf16.msra.mxu0 %v773
        %873 = vmatprep.subr.bf16.mxu0 0
        %874 = vmatpush1.bf16.msra.mxu0 %v770
        %875 = vmatprep.subr.bf16.mxu0 0
        %876 = vmatpush1.bf16.msra.mxu0 %v767
        %877 = vmatprep.subr.bf16.mxu0 0
        %878 = vmatpush1.bf16.msra.mxu0 %v764
        %879 = vmatprep.subr.bf16.mxu0 0
        %880 = vmatpush1.bf16.msra.mxu0 %v761
        %881 = vmatprep.subr.bf16.mxu0 0
        %882 = vmatpush1.bf16.msra.mxu0 %v758
        %883 = vmatprep.subr.bf16.mxu0 0
        %884 = vmatpush1.bf16.msra.mxu0 %v755
        %885 = vmatprep.subr.bf16.mxu0 0
        %886 = vmatpush1.bf16.msra.mxu0 %v752
        %887 = vmatprep.subr.bf16.mxu0 0
        %888 = vmatpush2.bf16.msra.mxu0 0
        %889 = vmatprep.subr.bf16.mxu0 0
        %890 = vmatpush2.bf16.msra.mxu0 0
        %891 = vmatprep.subr.bf16.mxu0 0
        %892 = vmatpush2.bf16.msra.mxu0 0
        %893 = vmatprep.subr.bf16.mxu0 0
        %894 = vmatpush2.bf16.msra.mxu0 0
        %895 = vmatprep.subr.bf16.mxu0 0
        %896 = vmatpush2.bf16.msra.mxu0 0
        %897 = vmatprep.subr.bf16.mxu0 0
        %898 = vmatpush2.bf16.msra.mxu0 0
        %899 = vmatprep.subr.bf16.mxu0 0
        %900 = vmatpush2.bf16.msra.mxu0 0
        %901 = vmatprep.subr.bf16.mxu0 0
        %902 = vmatpush2.bf16.msra.mxu0 0
        %903 = vmatprep.mubr.bf16.mxu0 0
        %904 = vmatmul.mubr.bf16.gmra.mxu0 %v634
        %v905 = vpop.f32.mrf.mxu0
        %v906 = vadd.f32 0.0, %v905
        %v907 = vpop.f32.mrf.mxu0
        %v908 = vpop.f32.mrf.mxu0
        %v909 = vadd.f32 0.0, %v908
        %v910 = vpop.f32.mrf.mxu0
        %911 = vmatprep.mubr.bf16.mxu0 0
        %912 = vmatmul.mubr.bf16.gmra.mxu0 %v635
        %v913 = vpop.f32.mrf.mxu0
        %v914 = vadd.f32 0.0, %v913
        %v915 = vpop.f32.mrf.mxu0
        %v916 = vpop.f32.mrf.mxu0
        %v917 = vadd.f32 0.0, %v916
        %v918 = vpop.f32.mrf.mxu0
        %919 = vmatprep.mubr.bf16.mxu0 0
        %920 = vmatmul.mubr.bf16.gmra.mxu0 %v636
        %v921 = vpop.f32.mrf.mxu0
        %v922 = vadd.f32 0.0, %v921
        %v923 = vpop.f32.mrf.mxu0
        %v924 = vpop.f32.mrf.mxu0
        %v925 = vadd.f32 0.0, %v924
        %v926 = vpop.f32.mrf.mxu0
        %927 = vmatprep.mubr.bf16.mxu0 0
        %928 = vmatmul.mubr.bf16.gmra.mxu0 %v637
        %v929 = vpop.f32.mrf.mxu0
        %v930 = vadd.f32 0.0, %v929
        %v931 = vpop.f32.mrf.mxu0
        %v932 = vpop.f32.mrf.mxu0
        %v933 = vadd.f32 0.0, %v932
        %v934 = vpop.f32.mrf.mxu0
        %935 = vdwg.mxu0
        %v936 = vpack.c.bf16 %v837, %v833
        %v937 = vpack.c.bf16 %v847, %v843
        %v938 = vpack.c.bf16 %v857, %v853
        %v939 = vpack.c.bf16 %v867, %v863
        %v940 = vpack.c.bf16 %v839, %v835
        %v941 = vpack.c.bf16 %v849, %v845
        %v942 = vpack.c.bf16 %v859, %v855
        %v943 = vpack.c.bf16 %v869, %v865
        %v944 = vpack.c.bf16 %v909, %v906
        %v945 = vpack.c.bf16 %v917, %v914
        %v946 = vpack.c.bf16 %v925, %v922
        %v947 = vpack.c.bf16 %v933, %v930
        %vm948 = vcmask 261120
        %v950 = vsel %vm948, %v936, 0
        %v953 = vsel %vm948, %v940, 0
        %955 = vmatprep.subr.bf16.mxu0 0
        %956 = vmatpush1.bf16.xpose.msra.mxu0 0
        %957 = vmatprep.subr.bf16.mxu0 0
        %958 = vmatpush1.bf16.xpose.msra.mxu0 0
        %959 = vmatprep.subr.bf16.mxu0 0
        %960 = vmatpush1.bf16.xpose.msra.mxu0 0
        %961 = vmatprep.subr.bf16.mxu0 0
        %962 = vmatpush1.bf16.xpose.msra.mxu0 0
        %963 = vmatprep.subr.bf16.mxu0 0
        %964 = vmatpush1.bf16.xpose.msra.mxu0 0
        %965 = vmatprep.subr.bf16.mxu0 0
        %966 = vmatpush1.bf16.xpose.msra.mxu0 0
        %967 = vmatprep.subr.bf16.mxu0 0
        %968 = vmatpush1.bf16.xpose.msra.mxu0 0
        %969 = vmatprep.subr.bf16.mxu0 0
        %970 = vmatpush1.bf16.xpose.msra.mxu0 %v953
        %971 = vmatprep.subr.bf16.mxu0 0
        %972 = vmatpush2.bf16.xpose.msra.mxu0 0
        %973 = vmatprep.subr.bf16.mxu0 0
        %974 = vmatpush2.bf16.xpose.msra.mxu0 0
        %975 = vmatprep.subr.bf16.mxu0 0
        %976 = vmatpush2.bf16.xpose.msra.mxu0 0
        %977 = vmatprep.subr.bf16.mxu0 0
        %978 = vmatpush2.bf16.xpose.msra.mxu0 0
        %979 = vmatprep.subr.bf16.mxu0 0
        %980 = vmatpush2.bf16.xpose.msra.mxu0 0
        %981 = vmatprep.subr.bf16.mxu0 0
        %982 = vmatpush2.bf16.xpose.msra.mxu0 0
        %983 = vmatprep.subr.bf16.mxu0 0
        %984 = vmatpush2.bf16.xpose.msra.mxu0 0
        %985 = vmatprep.subr.bf16.mxu0 0
        %986 = vmatpush2.bf16.xpose.msra.mxu0 0
        %987 = vmatprep.mubr.bf16.mxu0 0
        %988 = vmatmul.mubr.bf16.gmra.mxu0 %v950
        %v989 = vpop.f32.mrf.mxu0
        %v990 = vadd.f32 0.0, %v989
        %v991 = vpop.f32.mrf.mxu0
        %v992 = vpop.f32.mrf.mxu0
        %v993 = vadd.f32 0.0, %v992
        %v994 = vpop.f32.mrf.mxu0
        %995 = vdwg.mxu0
        %v997 = vsel %vm948, %v937, 0
        %v1000 = vsel %vm948, %v941, 0
        %1002 = vmatprep.subr.bf16.mxu0 0
        %1003 = vmatpush1.bf16.xpose.msra.mxu0 0
        %1004 = vmatprep.subr.bf16.mxu0 0
        %1005 = vmatpush1.bf16.xpose.msra.mxu0 0
        %1006 = vmatprep.subr.bf16.mxu0 0
        %1007 = vmatpush1.bf16.xpose.msra.mxu0 0
        %1008 = vmatprep.subr.bf16.mxu0 0
        %1009 = vmatpush1.bf16.xpose.msra.mxu0 0
        %1010 = vmatprep.subr.bf16.mxu0 0
        %1011 = vmatpush1.bf16.xpose.msra.mxu0 0
        %1012 = vmatprep.subr.bf16.mxu0 0
        %1013 = vmatpush1.bf16.xpose.msra.mxu0 0
        %1014 = vmatprep.subr.bf16.mxu0 0
        %1015 = vmatpush1.bf16.xpose.msra.mxu0 0
        %1016 = vmatprep.subr.bf16.mxu0 0
        %1017 = vmatpush1.bf16.xpose.msra.mxu0 %v1000
        %1018 = vmatprep.subr.bf16.mxu0 0
        %1019 = vmatpush2.bf16.xpose.msra.mxu0 0
        %1020 = vmatprep.subr.bf16.mxu0 0
        %1021 = vmatpush2.bf16.xpose.msra.mxu0 0
        %1022 = vmatprep.subr.bf16.mxu0 0
        %1023 = vmatpush2.bf16.xpose.msra.mxu0 0
        %1024 = vmatprep.subr.bf16.mxu0 0
        %1025 = vmatpush2.bf16.xpose.msra.mxu0 0
        %1026 = vmatprep.subr.bf16.mxu0 0
        %1027 = vmatpush2.bf16.xpose.msra.mxu0 0
        %1028 = vmatprep.subr.bf16.mxu0 0
        %1029 = vmatpush2.bf16.xpose.msra.mxu0 0
        %1030 = vmatprep.subr.bf16.mxu0 0
        %1031 = vmatpush2.bf16.xpose.msra.mxu0 0
        %1032 = vmatprep.subr.bf16.mxu0 0
        %1033 = vmatpush2.bf16.xpose.msra.mxu0 0
        %1034 = vmatprep.mubr.bf16.mxu0 0
        %1035 = vmatmul.mubr.bf16.gmra.mxu0 %v997
        %v1036 = vpop.f32.mrf.mxu0
        %v1037 = vadd.f32 0.0, %v1036
        %v1038 = vpop.f32.mrf.mxu0
        %v1039 = vpop.f32.mrf.mxu0
        %v1040 = vadd.f32 0.0, %v1039
        %v1041 = vpop.f32.mrf.mxu0
        %1042 = vdwg.mxu0
        %v1044 = vsel %vm948, %v938, 0
        %v1047 = vsel %vm948, %v942, 0
        %1049 = vmatprep.subr.bf16.mxu0 0
        %1050 = vmatpush1.bf16.xpose.msra.mxu0 0
        %1051 = vmatprep.subr.bf16.mxu0 0
        %1052 = vmatpush1.bf16.xpose.msra.mxu0 0
        %1053 = vmatprep.subr.bf16.mxu0 0
        %1054 = vmatpush1.bf16.xpose.msra.mxu0 0
        %1055 = vmatprep.subr.bf16.mxu0 0
        %1056 = vmatpush1.bf16.xpose.msra.mxu0 0
        %1057 = vmatprep.subr.bf16.mxu0 0
        %1058 = vmatpush1.bf16.xpose.msra.mxu0 0
        %1059 = vmatprep.subr.bf16.mxu0 0
        %1060 = vmatpush1.bf16.xpose.msra.mxu0 0
        %1061 = vmatprep.subr.bf16.mxu0 0
        %1062 = vmatpush1.bf16.xpose.msra.mxu0 0
        %1063 = vmatprep.subr.bf16.mxu0 0
        %1064 = vmatpush1.bf16.xpose.msra.mxu0 %v1047
        %1065 = vmatprep.subr.bf16.mxu0 0
        %1066 = vmatpush2.bf16.xpose.msra.mxu0 0
        %1067 = vmatprep.subr.bf16.mxu0 0
        %1068 = vmatpush2.bf16.xpose.msra.mxu0 0
        %1069 = vmatprep.subr.bf16.mxu0 0
        %1070 = vmatpush2.bf16.xpose.msra.mxu0 0
        %1071 = vmatprep.subr.bf16.mxu0 0
        %1072 = vmatpush2.bf16.xpose.msra.mxu0 0
        %1073 = vmatprep.subr.bf16.mxu0 0
        %1074 = vmatpush2.bf16.xpose.msra.mxu0 0
        %1075 = vmatprep.subr.bf16.mxu0 0
        %1076 = vmatpush2.bf16.xpose.msra.mxu0 0
        %1077 = vmatprep.subr.bf16.mxu0 0
        %1078 = vmatpush2.bf16.xpose.msra.mxu0 0
        %1079 = vmatprep.subr.bf16.mxu0 0
        %1080 = vmatpush2.bf16.xpose.msra.mxu0 0
        %1081 = vmatprep.mubr.bf16.mxu0 0
        %1082 = vmatmul.mubr.bf16.gmra.mxu0 %v1044
        %v1083 = vpop.f32.mrf.mxu0
        %v1084 = vadd.f32 0.0, %v1083
        %v1085 = vpop.f32.mrf.mxu0
        %v1086 = vpop.f32.mrf.mxu0
        %v1087 = vadd.f32 0.0, %v1086
        %v1088 = vpop.f32.mrf.mxu0
        %1089 = vdwg.mxu0
        %v1091 = vsel %vm948, %v939, 0
        %v1094 = vsel %vm948, %v943, 0
        %1096 = vmatprep.subr.bf16.mxu0 0
        %1097 = vmatpush1.bf16.xpose.msra.mxu0 0
        %1098 = vmatprep.subr.bf16.mxu0 0
        %1099 = vmatpush1.bf16.xpose.msra.mxu0 0
        %1100 = vmatprep.subr.bf16.mxu0 0
        %1101 = vmatpush1.bf16.xpose.msra.mxu0 0
        %1102 = vmatprep.subr.bf16.mxu0 0
        %1103 = vmatpush1.bf16.xpose.msra.mxu0 0
        %1104 = vmatprep.subr.bf16.mxu0 0
        %1105 = vmatpush1.bf16.xpose.msra.mxu0 0
        %1106 = vmatprep.subr.bf16.mxu0 0
        %1107 = vmatpush1.bf16.xpose.msra.mxu0 0
        %1108 = vmatprep.subr.bf16.mxu0 0
        %1109 = vmatpush1.bf16.xpose.msra.mxu0 0
        %1110 = vmatprep.subr.bf16.mxu0 0
        %1111 = vmatpush1.bf16.xpose.msra.mxu0 %v1094
        %1112 = vmatprep.subr.bf16.mxu0 0
        %1113 = vmatpush2.bf16.xpose.msra.mxu0 0
        %1114 = vmatprep.subr.bf16.mxu0 0
        %1115 = vmatpush2.bf16.xpose.msra.mxu0 0
        %1116 = vmatprep.subr.bf16.mxu0 0
        %1117 = vmatpush2.bf16.xpose.msra.mxu0 0
        %1118 = vmatprep.subr.bf16.mxu0 0
        %1119 = vmatpush2.bf16.xpose.msra.mxu0 0
        %1120 = vmatprep.subr.bf16.mxu0 0
        %1121 = vmatpush2.bf16.xpose.msra.mxu0 0
        %1122 = vmatprep.subr.bf16.mxu0 0
        %1123 = vmatpush2.bf16.xpose.msra.mxu0 0
        %1124 = vmatprep.subr.bf16.mxu0 0
        %1125 = vmatpush2.bf16.xpose.msra.mxu0 0
        %1126 = vmatprep.subr.bf16.mxu0 0
        %1127 = vmatpush2.bf16.xpose.msra.mxu0 0
        %1128 = vmatprep.mubr.bf16.mxu0 0
        %1129 = vmatmul.mubr.bf16.gmra.mxu0 %v1091
        %v1130 = vpop.f32.mrf.mxu0
        %v1131 = vadd.f32 0.0, %v1130
        %v1132 = vpop.f32.mrf.mxu0
        %v1133 = vpop.f32.mrf.mxu0
        %v1134 = vadd.f32 0.0, %v1133
        %v1135 = vpop.f32.mrf.mxu0
        %1136 = vdwg.mxu0
        %vm1137 = vcmask 130048
        %v1138 = vsel %vm1137, %v990, -inf
        %1139 = vmax.xlane.f32.xlu0 %v1138
        %v1140 = vpop.xlane.xlu0 %1139
        %v1141 = vsel %vm1137, %v993, -inf
        %1142 = vmax.xlane.f32.xlu0 %v1141
        %v1143 = vpop.xlane.xlu0 %1142
        %v1144 = vsel %vm1137, %v1037, -inf
        %1145 = vmax.xlane.f32.xlu0 %v1144
        %v1146 = vpop.xlane.xlu0 %1145
        %v1147 = vsel %vm1137, %v1040, -inf
        %1148 = vmax.xlane.f32.xlu0 %v1147
        %v1149 = vpop.xlane.xlu0 %1148
        %v1150 = vsel %vm1137, %v1084, -inf
        %1151 = vmax.xlane.f32.xlu0 %v1150
        %v1152 = vpop.xlane.xlu0 %1151
        %v1153 = vsel %vm1137, %v1087, -inf
        %1154 = vmax.xlane.f32.xlu0 %v1153
        %v1155 = vpop.xlane.xlu0 %1154
        %v1156 = vsel %vm1137, %v1131, -inf
        %1157 = vmax.xlane.f32.xlu0 %v1156
        %v1158 = vpop.xlane.xlu0 %1157
        %v1159 = vsel %vm1137, %v1134, -inf
        %1160 = vmax.xlane.f32.xlu0 %v1159
        %v1161 = vpop.xlane.xlu0 %1160
        %v1162 = vsub.f32 %v990, %v1140
        %v1163 = vsub.f32 %v993, %v1143
        %v1164 = vsub.f32 %v1037, %v1146
        %v1165 = vsub.f32 %v1040, %v1149
        %v1166 = vsub.f32 %v1084, %v1152
        %v1167 = vsub.f32 %v1087, %v1155
        %v1168 = vsub.f32 %v1131, %v1158
        %v1169 = vsub.f32 %v1134, %v1161
        %v1170 = vmul.f32 %v1162, 1.442695
        %v1171 = vpow.pop %v1170
        %v1172 = vmul.f32 %v1163, 1.442695
        %v1173 = vpow.pop %v1172
        %v1174 = vmul.f32 %v1164, 1.442695
        %v1175 = vpow.pop %v1174
        %v1176 = vmul.f32 %v1165, 1.442695
        %v1177 = vpow.pop %v1176
        %v1178 = vmul.f32 %v1166, 1.442695
        %v1179 = vpow.pop %v1178
        %v1180 = vmul.f32 %v1167, 1.442695
        %v1181 = vpow.pop %v1180
        %v1182 = vmul.f32 %v1168, 1.442695
        %v1183 = vpow.pop %v1182
        %v1184 = vmul.f32 %v1169, 1.442695
        %v1185 = vpow.pop %v1184
        %v1186 = vsel %vm1137, %v1171, 0.0
        %1187 = vadd.xlane.f32.xlu0 %v1186
        %v1188 = vpop.xlane.xlu0 %1187
        %v1189 = vsel %vm1137, %v1173, 0.0
        %1190 = vadd.xlane.f32.xlu0 %v1189
        %v1191 = vpop.xlane.xlu0 %1190
        %v1192 = vsel %vm1137, %v1175, 0.0
        %1193 = vadd.xlane.f32.xlu0 %v1192
        %v1194 = vpop.xlane.xlu0 %1193
        %v1195 = vsel %vm1137, %v1177, 0.0
        %1196 = vadd.xlane.f32.xlu0 %v1195
        %v1197 = vpop.xlane.xlu0 %1196
        %v1198 = vsel %vm1137, %v1179, 0.0
        %1199 = vadd.xlane.f32.xlu0 %v1198
        %v1200 = vpop.xlane.xlu0 %1199
        %v1201 = vsel %vm1137, %v1181, 0.0
        %1202 = vadd.xlane.f32.xlu0 %v1201
        %v1203 = vpop.xlane.xlu0 %1202
        %v1204 = vsel %vm1137, %v1183, 0.0
        %1205 = vadd.xlane.f32.xlu0 %v1204
        %v1206 = vpop.xlane.xlu0 %1205
        %v1207 = vsel %vm1137, %v1185, 0.0
        %1208 = vadd.xlane.f32.xlu0 %v1207
        %v1209 = vpop.xlane.xlu0 %1208
        %v1210 = vrcp.pop %v1188
        %v1211 = vrcp.pop %v1191
        %v1212 = vrcp.pop %v1194
        %v1213 = vrcp.pop %v1197
        %v1214 = vrcp.pop %v1200
        %v1215 = vrcp.pop %v1203
        %v1216 = vrcp.pop %v1206
        %v1217 = vrcp.pop %v1209
        %v1218 = vmul.f32 %v1171, %v1210
        %v1219 = vmul.f32 %v1173, %v1211
        %v1220 = vmul.f32 %v1175, %v1212
        %v1221 = vmul.f32 %v1177, %v1213
        %v1222 = vmul.f32 %v1179, %v1214
        %v1223 = vmul.f32 %v1181, %v1215
        %v1224 = vmul.f32 %v1183, %v1216
        %v1225 = vmul.f32 %v1185, %v1217
        %v1226 = vpack.c.bf16 %v1219, %v1218
        %v1227 = vpack.c.bf16 %v1221, %v1220
        %v1228 = vpack.c.bf16 %v1223, %v1222
        %v1229 = vpack.c.bf16 %v1225, %v1224
        %v1231 = vsel %vm1137, %v1226, 0
        %1233 = vmatprep.subr.bf16.mxu0 0
        %1234 = vmatpush1.bf16.msra.mxu0 0
        %1235 = vmatprep.subr.bf16.mxu0 0
        %1236 = vmatpush1.bf16.msra.mxu0 0
        %1237 = vmatprep.subr.bf16.mxu0 0
        %1238 = vmatpush1.bf16.msra.mxu0 0
        %1239 = vmatprep.subr.bf16.mxu0 0
        %1240 = vmatpush1.bf16.msra.mxu0 0
        %1241 = vmatprep.subr.bf16.mxu0 0
        %1242 = vmatpush1.bf16.msra.mxu0 0
        %1243 = vmatprep.subr.bf16.mxu0 0
        %1244 = vmatpush1.bf16.msra.mxu0 0
        %1245 = vmatprep.subr.bf16.mxu0 0
        %1246 = vmatpush1.bf16.msra.mxu0 0
        %1247 = vmatprep.subr.bf16.mxu0 0
        %1248 = vmatpush1.bf16.msra.mxu0 %v944
        %1249 = vmatprep.subr.bf16.mxu0 0
        %1250 = vmatpush2.bf16.msra.mxu0 0
        %1251 = vmatprep.subr.bf16.mxu0 0
        %1252 = vmatpush2.bf16.msra.mxu0 0
        %1253 = vmatprep.subr.bf16.mxu0 0
        %1254 = vmatpush2.bf16.msra.mxu0 0
        %1255 = vmatprep.subr.bf16.mxu0 0
        %1256 = vmatpush2.bf16.msra.mxu0 0
        %1257 = vmatprep.subr.bf16.mxu0 0
        %1258 = vmatpush2.bf16.msra.mxu0 0
        %1259 = vmatprep.subr.bf16.mxu0 0
        %1260 = vmatpush2.bf16.msra.mxu0 0
        %1261 = vmatprep.subr.bf16.mxu0 0
        %1262 = vmatpush2.bf16.msra.mxu0 0
        %1263 = vmatprep.subr.bf16.mxu0 0
        %1264 = vmatpush2.bf16.msra.mxu0 0
        %1265 = vmatprep.mubr.bf16.mxu0 0
        %1266 = vmatmul.mubr.bf16.gmra.mxu0 %v1231
        %v1267 = vpop.f32.mrf.mxu0
        %v1268 = vadd.f32 0.0, %v1267
        %v1269 = vpop.f32.mrf.mxu0
        %v1270 = vpop.f32.mrf.mxu0
        %v1271 = vadd.f32 0.0, %v1270
        %v1272 = vpop.f32.mrf.mxu0
        %1273 = vdwg.mxu0
        %v1275 = vsel %vm1137, %v1227, 0
        %1277 = vmatprep.subr.bf16.mxu0 0
        %1278 = vmatpush1.bf16.msra.mxu0 0
        %1279 = vmatprep.subr.bf16.mxu0 0
        %1280 = vmatpush1.bf16.msra.mxu0 0
        %1281 = vmatprep.subr.bf16.mxu0 0
        %1282 = vmatpush1.bf16.msra.mxu0 0
        %1283 = vmatprep.subr.bf16.mxu0 0
        %1284 = vmatpush1.bf16.msra.mxu0 0
        %1285 = vmatprep.subr.bf16.mxu0 0
        %1286 = vmatpush1.bf16.msra.mxu0 0
        %1287 = vmatprep.subr.bf16.mxu0 0
        %1288 = vmatpush1.bf16.msra.mxu0 0
        %1289 = vmatprep.subr.bf16.mxu0 0
        %1290 = vmatpush1.bf16.msra.mxu0 0
        %1291 = vmatprep.subr.bf16.mxu0 0
        %1292 = vmatpush1.bf16.msra.mxu0 %v945
        %1293 = vmatprep.subr.bf16.mxu0 0
        %1294 = vmatpush2.bf16.msra.mxu0 0
        %1295 = vmatprep.subr.bf16.mxu0 0
        %1296 = vmatpush2.bf16.msra.mxu0 0
        %1297 = vmatprep.subr.bf16.mxu0 0
        %1298 = vmatpush2.bf16.msra.mxu0 0
        %1299 = vmatprep.subr.bf16.mxu0 0
        %1300 = vmatpush2.bf16.msra.mxu0 0
        %1301 = vmatprep.subr.bf16.mxu0 0
        %1302 = vmatpush2.bf16.msra.mxu0 0
        %1303 = vmatprep.subr.bf16.mxu0 0
        %1304 = vmatpush2.bf16.msra.mxu0 0
        %1305 = vmatprep.subr.bf16.mxu0 0
        %1306 = vmatpush2.bf16.msra.mxu0 0
        %1307 = vmatprep.subr.bf16.mxu0 0
        %1308 = vmatpush2.bf16.msra.mxu0 0
        %1309 = vmatprep.mubr.bf16.mxu0 0
        %1310 = vmatmul.mubr.bf16.gmra.mxu0 %v1275
        %v1311 = vpop.f32.mrf.mxu0
        %v1312 = vadd.f32 0.0, %v1311
        %v1313 = vpop.f32.mrf.mxu0
        %v1314 = vpop.f32.mrf.mxu0
        %v1315 = vadd.f32 0.0, %v1314
        %v1316 = vpop.f32.mrf.mxu0
        %1317 = vdwg.mxu0
        %v1319 = vsel %vm1137, %v1228, 0
        %1321 = vmatprep.subr.bf16.mxu0 0
        %1322 = vmatpush1.bf16.msra.mxu0 0
        %1323 = vmatprep.subr.bf16.mxu0 0
        %1324 = vmatpush1.bf16.msra.mxu0 0
        %1325 = vmatprep.subr.bf16.mxu0 0
        %1326 = vmatpush1.bf16.msra.mxu0 0
        %1327 = vmatprep.subr.bf16.mxu0 0
        %1328 = vmatpush1.bf16.msra.mxu0 0
        %1329 = vmatprep.subr.bf16.mxu0 0
        %1330 = vmatpush1.bf16.msra.mxu0 0
        %1331 = vmatprep.subr.bf16.mxu0 0
        %1332 = vmatpush1.bf16.msra.mxu0 0
        %1333 = vmatprep.subr.bf16.mxu0 0
        %1334 = vmatpush1.bf16.msra.mxu0 0
        %1335 = vmatprep.subr.bf16.mxu0 0
        %1336 = vmatpush1.bf16.msra.mxu0 %v946
        %1337 = vmatprep.subr.bf16.mxu0 0
        %1338 = vmatpush2.bf16.msra.mxu0 0
        %1339 = vmatprep.subr.bf16.mxu0 0
        %1340 = vmatpush2.bf16.msra.mxu0 0
        %1341 = vmatprep.subr.bf16.mxu0 0
        %1342 = vmatpush2.bf16.msra.mxu0 0
        %1343 = vmatprep.subr.bf16.mxu0 0
        %1344 = vmatpush2.bf16.msra.mxu0 0
        %1345 = vmatprep.subr.bf16.mxu0 0
        %1346 = vmatpush2.bf16.msra.mxu0 0
        %1347 = vmatprep.subr.bf16.mxu0 0
        %1348 = vmatpush2.bf16.msra.mxu0 0
        %1349 = vmatprep.subr.bf16.mxu0 0
        %1350 = vmatpush2.bf16.msra.mxu0 0
        %1351 = vmatprep.subr.bf16.mxu0 0
        %1352 = vmatpush2.bf16.msra.mxu0 0
        %1353 = vmatprep.mubr.bf16.mxu0 0
        %1354 = vmatmul.mubr.bf16.gmra.mxu0 %v1319
        %v1355 = vpop.f32.mrf.mxu0
        %v1356 = vadd.f32 0.0, %v1355
        %v1357 = vpop.f32.mrf.mxu0
        %v1358 = vpop.f32.mrf.mxu0
        %v1359 = vadd.f32 0.0, %v1358
        %v1360 = vpop.f32.mrf.mxu0
        %1361 = vdwg.mxu0
        %v1363 = vsel %vm1137, %v1229, 0
        %1365 = vmatprep.subr.bf16.mxu0 0
        %1366 = vmatpush1.bf16.msra.mxu0 0
        %1367 = vmatprep.subr.bf16.mxu0 0
        %1368 = vmatpush1.bf16.msra.mxu0 0
        %1369 = vmatprep.subr.bf16.mxu0 0
        %1370 = vmatpush1.bf16.msra.mxu0 0
        %1371 = vmatprep.subr.bf16.mxu0 0
        %1372 = vmatpush1.bf16.msra.mxu0 0
        %1373 = vmatprep.subr.bf16.mxu0 0
        %1374 = vmatpush1.bf16.msra.mxu0 0
        %1375 = vmatprep.subr.bf16.mxu0 0
        %1376 = vmatpush1.bf16.msra.mxu0 0
        %1377 = vmatprep.subr.bf16.mxu0 0
        %1378 = vmatpush1.bf16.msra.mxu0 0
        %1379 = vmatprep.subr.bf16.mxu0 0
        %1380 = vmatpush1.bf16.msra.mxu0 %v947
        %1381 = vmatprep.subr.bf16.mxu0 0
        %1382 = vmatpush2.bf16.msra.mxu0 0
        %1383 = vmatprep.subr.bf16.mxu0 0
        %1384 = vmatpush2.bf16.msra.mxu0 0
        %1385 = vmatprep.subr.bf16.mxu0 0
        %1386 = vmatpush2.bf16.msra.mxu0 0
        %1387 = vmatprep.subr.bf16.mxu0 0
        %1388 = vmatpush2.bf16.msra.mxu0 0
        %1389 = vmatprep.subr.bf16.mxu0 0
        %1390 = vmatpush2.bf16.msra.mxu0 0
        %1391 = vmatprep.subr.bf16.mxu0 0
        %1392 = vmatpush2.bf16.msra.mxu0 0
        %1393 = vmatprep.subr.bf16.mxu0 0
        %1394 = vmatpush2.bf16.msra.mxu0 0
        %1395 = vmatprep.subr.bf16.mxu0 0
        %1396 = vmatpush2.bf16.msra.mxu0 0
        %1397 = vmatprep.mubr.bf16.mxu0 0
        %1398 = vmatmul.mubr.bf16.gmra.mxu0 %v1363
        %v1399 = vpop.f32.mrf.mxu0
        %v1400 = vadd.f32 0.0, %v1399
        %v1401 = vpop.f32.mrf.mxu0
        %v1402 = vpop.f32.mrf.mxu0
        %v1403 = vadd.f32 0.0, %v1402
        %v1404 = vpop.f32.mrf.mxu0
        %1405 = vdwg.mxu0
        %1406 = vst.msk [vmem:[#allocation2] sm:$0xff] %vm948, %v1268
        %1407 = vst.msk [vmem:[#allocation2 + $0x8] sm:$0xff] %vm948, %v1271
        %1408 = vst.msk [vmem:[#allocation2 + $0x10] sm:$0xff] %vm948, %v1312
        %1409 = vst.msk [vmem:[#allocation2 + $0x18] sm:$0xff] %vm948, %v1315
        %1410 = vst.msk [vmem:[#allocation2 + $0x20] sm:$0xff] %vm948, %v1356
        %1411 = vst.msk [vmem:[#allocation2 + $0x28] sm:$0xff] %vm948, %v1359
        %1412 = vst.msk [vmem:[#allocation2 + $0x30] sm:$0xff] %vm948, %v1400
        %1413 = vst.msk [vmem:[#allocation2 + $0x38] sm:$0xff] %vm948, %v1403
        %1415 = vrot.lane.b32.xlu0 %v936, 96
        %v1416 = vpop.permute.xlu0 %1415
        %1418 = vrot.lane.b32.xlu0 %v940, 96
        %v1419 = vpop.permute.xlu0 %1418
        %v1421 = vsel %vm948, %v1416, 0
        %v1424 = vsel %vm948, %v1419, 0
        %1426 = vmatprep.subr.bf16.mxu0 0
        %1427 = vmatpush1.bf16.xpose.msra.mxu0 0
        %1428 = vmatprep.subr.bf16.mxu0 0
        %1429 = vmatpush1.bf16.xpose.msra.mxu0 0
        %1430 = vmatprep.subr.bf16.mxu0 0
        %1431 = vmatpush1.bf16.xpose.msra.mxu0 0
        %1432 = vmatprep.subr.bf16.mxu0 0
        %1433 = vmatpush1.bf16.xpose.msra.mxu0 0
        %1434 = vmatprep.subr.bf16.mxu0 0
        %1435 = vmatpush1.bf16.xpose.msra.mxu0 0
        %1436 = vmatprep.subr.bf16.mxu0 0
        %1437 = vmatpush1.bf16.xpose.msra.mxu0 0
        %1438 = vmatprep.subr.bf16.mxu0 0
        %1439 = vmatpush1.bf16.xpose.msra.mxu0 0
        %1440 = vmatprep.subr.bf16.mxu0 0
        %1441 = vmatpush1.bf16.xpose.msra.mxu0 %v1424
        %1442 = vmatprep.subr.bf16.mxu0 0
        %1443 = vmatpush2.bf16.xpose.msra.mxu0 0
        %1444 = vmatprep.subr.bf16.mxu0 0
        %1445 = vmatpush2.bf16.xpose.msra.mxu0 0
        %1446 = vmatprep.subr.bf16.mxu0 0
        %1447 = vmatpush2.bf16.xpose.msra.mxu0 0
        %1448 = vmatprep.subr.bf16.mxu0 0
        %1449 = vmatpush2.bf16.xpose.msra.mxu0 0
        %1450 = vmatprep.subr.bf16.mxu0 0
        %1451 = vmatpush2.bf16.xpose.msra.mxu0 0
        %1452 = vmatprep.subr.bf16.mxu0 0
        %1453 = vmatpush2.bf16.xpose.msra.mxu0 0
        %1454 = vmatprep.subr.bf16.mxu0 0
        %1455 = vmatpush2.bf16.xpose.msra.mxu0 0
        %1456 = vmatprep.subr.bf16.mxu0 0
        %1457 = vmatpush2.bf16.xpose.msra.mxu0 0
        %1458 = vmatprep.mubr.bf16.mxu0 0
        %1459 = vmatmul.mubr.bf16.gmra.mxu0 %v1421
        %v1460 = vpop.f32.mrf.mxu0
        %v1461 = vadd.f32 0.0, %v1460
        %v1462 = vpop.f32.mrf.mxu0
        %v1463 = vpop.f32.mrf.mxu0
        %v1464 = vadd.f32 0.0, %v1463
        %v1465 = vpop.f32.mrf.mxu0
        %1466 = vdwg.mxu0
        %1468 = vrot.lane.b32.xlu0 %v937, 96
        %v1469 = vpop.permute.xlu0 %1468
        %1471 = vrot.lane.b32.xlu0 %v941, 96
        %v1472 = vpop.permute.xlu0 %1471
        %v1474 = vsel %vm948, %v1469, 0
        %v1477 = vsel %vm948, %v1472, 0
        %1479 = vmatprep.subr.bf16.mxu0 0
        %1480 = vmatpush1.bf16.xpose.msra.mxu0 0
        %1481 = vmatprep.subr.bf16.mxu0 0
        %1482 = vmatpush1.bf16.xpose.msra.mxu0 0
        %1483 = vmatprep.subr.bf16.mxu0 0
        %1484 = vmatpush1.bf16.xpose.msra.mxu0 0
        %1485 = vmatprep.subr.bf16.mxu0 0
        %1486 = vmatpush1.bf16.xpose.msra.mxu0 0
        %1487 = vmatprep.subr.bf16.mxu0 0
        %1488 = vmatpush1.bf16.xpose.msra.mxu0 0
        %1489 = vmatprep.subr.bf16.mxu0 0
        %1490 = vmatpush1.bf16.xpose.msra.mxu0 0
        %1491 = vmatprep.subr.bf16.mxu0 0
        %1492 = vmatpush1.bf16.xpose.msra.mxu0 0
        %1493 = vmatprep.subr.bf16.mxu0 0
        %1494 = vmatpush1.bf16.xpose.msra.mxu0 %v1477
        %1495 = vmatprep.subr.bf16.mxu0 0
        %1496 = vmatpush2.bf16.xpose.msra.mxu0 0
        %1497 = vmatprep.subr.bf16.mxu0 0
        %1498 = vmatpush2.bf16.xpose.msra.mxu0 0
        %1499 = vmatprep.subr.bf16.mxu0 0
        %1500 = vmatpush2.bf16.xpose.msra.mxu0 0
        %1501 = vmatprep.subr.bf16.mxu0 0
        %1502 = vmatpush2.bf16.xpose.msra.mxu0 0
        %1503 = vmatprep.subr.bf16.mxu0 0
        %1504 = vmatpush2.bf16.xpose.msra.mxu0 0
        %1505 = vmatprep.subr.bf16.mxu0 0
        %1506 = vmatpush2.bf16.xpose.msra.mxu0 0
        %1507 = vmatprep.subr.bf16.mxu0 0
        %1508 = vmatpush2.bf16.xpose.msra.mxu0 0
        %1509 = vmatprep.subr.bf16.mxu0 0
        %1510 = vmatpush2.bf16.xpose.msra.mxu0 0
        %1511 = vmatprep.mubr.bf16.mxu0 0
        %1512 = vmatmul.mubr.bf16.gmra.mxu0 %v1474
        %v1513 = vpop.f32.mrf.mxu0
        %v1514 = vadd.f32 0.0, %v1513
        %v1515 = vpop.f32.mrf.mxu0
        %v1516 = vpop.f32.mrf.mxu0
        %v1517 = vadd.f32 0.0, %v1516
        %v1518 = vpop.f32.mrf.mxu0
        %1519 = vdwg.mxu0
        %1521 = vrot.lane.b32.xlu0 %v938, 96
        %v1522 = vpop.permute.xlu0 %1521
        %1524 = vrot.lane.b32.xlu0 %v942, 96
        %v1525 = vpop.permute.xlu0 %1524
        %v1527 = vsel %vm948, %v1522, 0
        %v1530 = vsel %vm948, %v1525, 0
        %1532 = vmatprep.subr.bf16.mxu0 0
        %1533 = vmatpush1.bf16.xpose.msra.mxu0 0
        %1534 = vmatprep.subr.bf16.mxu0 0
        %1535 = vmatpush1.bf16.xpose.msra.mxu0 0
        %1536 = vmatprep.subr.bf16.mxu0 0
        %1537 = vmatpush1.bf16.xpose.msra.mxu0 0
        %1538 = vmatprep.subr.bf16.mxu0 0
        %1539 = vmatpush1.bf16.xpose.msra.mxu0 0
        %1540 = vmatprep.subr.bf16.mxu0 0
        %1541 = vmatpush1.bf16.xpose.msra.mxu0 0
        %1542 = vmatprep.subr.bf16.mxu0 0
        %1543 = vmatpush1.bf16.xpose.msra.mxu0 0
        %1544 = vmatprep.subr.bf16.mxu0 0
        %1545 = vmatpush1.bf16.xpose.msra.mxu0 0
        %1546 = vmatprep.subr.bf16.mxu0 0
        %1547 = vmatpush1.bf16.xpose.msra.mxu0 %v1530
        %1548 = vmatprep.subr.bf16.mxu0 0
        %1549 = vmatpush2.bf16.xpose.msra.mxu0 0
        %1550 = vmatprep.subr.bf16.mxu0 0
        %1551 = vmatpush2.bf16.xpose.msra.mxu0 0
        %1552 = vmatprep.subr.bf16.mxu0 0
        %1553 = vmatpush2.bf16.xpose.msra.mxu0 0
        %1554 = vmatprep.subr.bf16.mxu0 0
        %1555 = vmatpush2.bf16.xpose.msra.mxu0 0
        %1556 = vmatprep.subr.bf16.mxu0 0
        %1557 = vmatpush2.bf16.xpose.msra.mxu0 0
        %1558 = vmatprep.subr.bf16.mxu0 0
        %1559 = vmatpush2.bf16.xpose.msra.mxu0 0
        %1560 = vmatprep.subr.bf16.mxu0 0
        %1561 = vmatpush2.bf16.xpose.msra.mxu0 0
        %1562 = vmatprep.subr.bf16.mxu0 0
        %1563 = vmatpush2.bf16.xpose.msra.mxu0 0
        %1564 = vmatprep.mubr.bf16.mxu0 0
        %1565 = vmatmul.mubr.bf16.gmra.mxu0 %v1527
        %v1566 = vpop.f32.mrf.mxu0
        %v1567 = vadd.f32 0.0, %v1566
        %v1568 = vpop.f32.mrf.mxu0
        %v1569 = vpop.f32.mrf.mxu0
        %v1570 = vadd.f32 0.0, %v1569
        %v1571 = vpop.f32.mrf.mxu0
        %1572 = vdwg.mxu0
        %1574 = vrot.lane.b32.xlu0 %v939, 96
        %v1575 = vpop.permute.xlu0 %1574
        %1577 = vrot.lane.b32.xlu0 %v943, 96
        %v1578 = vpop.permute.xlu0 %1577
        %v1580 = vsel %vm948, %v1575, 0
        %v1583 = vsel %vm948, %v1578, 0
        %1585 = vmatprep.subr.bf16.mxu0 0
        %1586 = vmatpush1.bf16.xpose.msra.mxu0 0
        %1587 = vmatprep.subr.bf16.mxu0 0
        %1588 = vmatpush1.bf16.xpose.msra.mxu0 0
        %1589 = vmatprep.subr.bf16.mxu0 0
        %1590 = vmatpush1.bf16.xpose.msra.mxu0 0
        %1591 = vmatprep.subr.bf16.mxu0 0
        %1592 = vmatpush1.bf16.xpose.msra.mxu0 0
        %1593 = vmatprep.subr.bf16.mxu0 0
        %1594 = vmatpush1.bf16.xpose.msra.mxu0 0
        %1595 = vmatprep.subr.bf16.mxu0 0
        %1596 = vmatpush1.bf16.xpose.msra.mxu0 0
        %1597 = vmatprep.subr.bf16.mxu0 0
        %1598 = vmatpush1.bf16.xpose.msra.mxu0 0
        %1599 = vmatprep.subr.bf16.mxu0 0
        %1600 = vmatpush1.bf16.xpose.msra.mxu0 %v1583
        %1601 = vmatprep.subr.bf16.mxu0 0
        %1602 = vmatpush2.bf16.xpose.msra.mxu0 0
        %1603 = vmatprep.subr.bf16.mxu0 0
        %1604 = vmatpush2.bf16.xpose.msra.mxu0 0
        %1605 = vmatprep.subr.bf16.mxu0 0
        %1606 = vmatpush2.bf16.xpose.msra.mxu0 0
        %1607 = vmatprep.subr.bf16.mxu0 0
        %1608 = vmatpush2.bf16.xpose.msra.mxu0 0
        %1609 = vmatprep.subr.bf16.mxu0 0
        %1610 = vmatpush2.bf16.xpose.msra.mxu0 0
        %1611 = vmatprep.subr.bf16.mxu0 0
        %1612 = vmatpush2.bf16.xpose.msra.mxu0 0
        %1613 = vmatprep.subr.bf16.mxu0 0
        %1614 = vmatpush2.bf16.xpose.msra.mxu0 0
        %1615 = vmatprep.subr.bf16.mxu0 0
        %1616 = vmatpush2.bf16.xpose.msra.mxu0 0
        %1617 = vmatprep.mubr.bf16.mxu0 0
        %1618 = vmatmul.mubr.bf16.gmra.mxu0 %v1580
        %v1619 = vpop.f32.mrf.mxu0
        %v1620 = vadd.f32 0.0, %v1619
        %v1621 = vpop.f32.mrf.mxu0
        %v1622 = vpop.f32.mrf.mxu0
        %v1623 = vadd.f32 0.0, %v1622
        %v1624 = vpop.f32.mrf.mxu0
        %1625 = vdwg.mxu0
        %v1626 = vsel %vm1137, %v1461, -inf
        %1627 = vmax.xlane.f32.xlu0 %v1626
        %v1628 = vpop.xlane.xlu0 %1627
        %v1629 = vsel %vm1137, %v1464, -inf
        %1630 = vmax.xlane.f32.xlu0 %v1629
        %v1631 = vpop.xlane.xlu0 %1630
        %v1632 = vsel %vm1137, %v1514, -inf
        %1633 = vmax.xlane.f32.xlu0 %v1632
        %v1634 = vpop.xlane.xlu0 %1633
        %v1635 = vsel %vm1137, %v1517, -inf
        %1636 = vmax.xlane.f32.xlu0 %v1635
        %v1637 = vpop.xlane.xlu0 %1636
        %v1638 = vsel %vm1137, %v1567, -inf
        %1639 = vmax.xlane.f32.xlu0 %v1638
        %v1640 = vpop.xlane.xlu0 %1639
        %v1641 = vsel %vm1137, %v1570, -inf
        %1642 = vmax.xlane.f32.xlu0 %v1641
        %v1643 = vpop.xlane.xlu0 %1642
        %v1644 = vsel %vm1137, %v1620, -inf
        %1645 = vmax.xlane.f32.xlu0 %v1644
        %v1646 = vpop.xlane.xlu0 %1645
        %v1647 = vsel %vm1137, %v1623, -inf
        %1648 = vmax.xlane.f32.xlu0 %v1647
        %v1649 = vpop.xlane.xlu0 %1648
        %v1650 = vsub.f32 %v1461, %v1628
        %v1651 = vsub.f32 %v1464, %v1631
        %v1652 = vsub.f32 %v1514, %v1634
        %v1653 = vsub.f32 %v1517, %v1637
        %v1654 = vsub.f32 %v1567, %v1640
        %v1655 = vsub.f32 %v1570, %v1643
        %v1656 = vsub.f32 %v1620, %v1646
        %v1657 = vsub.f32 %v1623, %v1649
        %v1658 = vmul.f32 %v1650, 1.442695
        %v1659 = vpow.pop %v1658
        %v1660 = vmul.f32 %v1651, 1.442695
        %v1661 = vpow.pop %v1660
        %v1662 = vmul.f32 %v1652, 1.442695
        %v1663 = vpow.pop %v1662
        %v1664 = vmul.f32 %v1653, 1.442695
        %v1665 = vpow.pop %v1664
        %v1666 = vmul.f32 %v1654, 1.442695
        %v1667 = vpow.pop %v1666
        %v1668 = vmul.f32 %v1655, 1.442695
        %v1669 = vpow.pop %v1668
        %v1670 = vmul.f32 %v1656, 1.442695
        %v1671 = vpow.pop %v1670
        %v1672 = vmul.f32 %v1657, 1.442695
        %v1673 = vpow.pop %v1672
        %v1674 = vsel %vm1137, %v1659, 0.0
        %1675 = vadd.xlane.f32.xlu0 %v1674
        %v1676 = vpop.xlane.xlu0 %1675
        %v1677 = vsel %vm1137, %v1661, 0.0
        %1678 = vadd.xlane.f32.xlu0 %v1677
        %v1679 = vpop.xlane.xlu0 %1678
        %v1680 = vsel %vm1137, %v1663, 0.0
        %1681 = vadd.xlane.f32.xlu0 %v1680
        %v1682 = vpop.xlane.xlu0 %1681
        %v1683 = vsel %vm1137, %v1665, 0.0
        %1684 = vadd.xlane.f32.xlu0 %v1683
        %v1685 = vpop.xlane.xlu0 %1684
        %v1686 = vsel %vm1137, %v1667, 0.0
        %1687 = vadd.xlane.f32.xlu0 %v1686
        %v1688 = vpop.xlane.xlu0 %1687
        %v1689 = vsel %vm1137, %v1669, 0.0
        %1690 = vadd.xlane.f32.xlu0 %v1689
        %v1691 = vpop.xlane.xlu0 %1690
        %v1692 = vsel %vm1137, %v1671, 0.0
        %1693 = vadd.xlane.f32.xlu0 %v1692
        %v1694 = vpop.xlane.xlu0 %1693
        %v1695 = vsel %vm1137, %v1673, 0.0
        %1696 = vadd.xlane.f32.xlu0 %v1695
        %v1697 = vpop.xlane.xlu0 %1696
        %v1698 = vrcp.pop %v1676
        %v1699 = vrcp.pop %v1679
        %v1700 = vrcp.pop %v1682
        %v1701 = vrcp.pop %v1685
        %v1702 = vrcp.pop %v1688
        %v1703 = vrcp.pop %v1691
        %v1704 = vrcp.pop %v1694
        %v1705 = vrcp.pop %v1697
        %v1706 = vmul.f32 %v1659, %v1698
        %v1707 = vmul.f32 %v1661, %v1699
        %v1708 = vmul.f32 %v1663, %v1700
        %v1709 = vmul.f32 %v1665, %v1701
        %v1710 = vmul.f32 %v1667, %v1702
        %v1711 = vmul.f32 %v1669, %v1703
        %v1712 = vmul.f32 %v1671, %v1704
        %v1713 = vmul.f32 %v1673, %v1705
        %v1714 = vpack.c.bf16 %v1707, %v1706
        %v1715 = vpack.c.bf16 %v1709, %v1708
        %v1716 = vpack.c.bf16 %v1711, %v1710
        %v1717 = vpack.c.bf16 %v1713, %v1712
        %1719 = vrot.lane.b32.xlu0 %v944, 96
        %v1720 = vpop.permute.xlu0 %1719
        %v1723 = vsel %vm1137, %v1714, 0
        %1725 = vmatprep.subr.bf16.mxu0 0
        %1726 = vmatpush1.bf16.msra.mxu0 0
        %1727 = vmatprep.subr.bf16.mxu0 0
        %1728 = vmatpush1.bf16.msra.mxu0 0
        %1729 = vmatprep.subr.bf16.mxu0 0
        %1730 = vmatpush1.bf16.msra.mxu0 0
        %1731 = vmatprep.subr.bf16.mxu0 0
        %1732 = vmatpush1.bf16.msra.mxu0 0
        %1733 = vmatprep.subr.bf16.mxu0 0
        %1734 = vmatpush1.bf16.msra.mxu0 0
        %1735 = vmatprep.subr.bf16.mxu0 0
        %1736 = vmatpush1.bf16.msra.mxu0 0
        %1737 = vmatprep.subr.bf16.mxu0 0
        %1738 = vmatpush1.bf16.msra.mxu0 0
        %1739 = vmatprep.subr.bf16.mxu0 0
        %1740 = vmatpush1.bf16.msra.mxu0 %v1720
        %1741 = vmatprep.subr.bf16.mxu0 0
        %1742 = vmatpush2.bf16.msra.mxu0 0
        %1743 = vmatprep.subr.bf16.mxu0 0
        %1744 = vmatpush2.bf16.msra.mxu0 0
        %1745 = vmatprep.subr.bf16.mxu0 0
        %1746 = vmatpush2.bf16.msra.mxu0 0
        %1747 = vmatprep.subr.bf16.mxu0 0
        %1748 = vmatpush2.bf16.msra.mxu0 0
        %1749 = vmatprep.subr.bf16.mxu0 0
        %1750 = vmatpush2.bf16.msra.mxu0 0
        %1751 = vmatprep.subr.bf16.mxu0 0
        %1752 = vmatpush2.bf16.msra.mxu0 0
        %1753 = vmatprep.subr.bf16.mxu0 0
        %1754 = vmatpush2.bf16.msra.mxu0 0
        %1755 = vmatprep.subr.bf16.mxu0 0
        %1756 = vmatpush2.bf16.msra.mxu0 0
        %1757 = vmatprep.mubr.bf16.mxu0 0
        %1758 = vmatmul.mubr.bf16.gmra.mxu0 %v1723
        %v1759 = vpop.f32.mrf.mxu0
        %v1760 = vadd.f32 0.0, %v1759
        %v1761 = vpop.f32.mrf.mxu0
        %v1762 = vpop.f32.mrf.mxu0
        %v1763 = vadd.f32 0.0, %v1762
        %v1764 = vpop.f32.mrf.mxu0
        %1765 = vdwg.mxu0
        %1767 = vrot.lane.b32.xlu0 %v945, 96
        %v1768 = vpop.permute.xlu0 %1767
        %v1771 = vsel %vm1137, %v1715, 0
        %1773 = vmatprep.subr.bf16.mxu0 0
        %1774 = vmatpush1.bf16.msra.mxu0 0
        %1775 = vmatprep.subr.bf16.mxu0 0
        %1776 = vmatpush1.bf16.msra.mxu0 0
        %1777 = vmatprep.subr.bf16.mxu0 0
        %1778 = vmatpush1.bf16.msra.mxu0 0
        %1779 = vmatprep.subr.bf16.mxu0 0
        %1780 = vmatpush1.bf16.msra.mxu0 0
        %1781 = vmatprep.subr.bf16.mxu0 0
        %1782 = vmatpush1.bf16.msra.mxu0 0
        %1783 = vmatprep.subr.bf16.mxu0 0
        %1784 = vmatpush1.bf16.msra.mxu0 0
        %1785 = vmatprep.subr.bf16.mxu0 0
        %1786 = vmatpush1.bf16.msra.mxu0 0
        %1787 = vmatprep.subr.bf16.mxu0 0
        %1788 = vmatpush1.bf16.msra.mxu0 %v1768
        %1789 = vmatprep.subr.bf16.mxu0 0
        %1790 = vmatpush2.bf16.msra.mxu0 0
        %1791 = vmatprep.subr.bf16.mxu0 0
        %1792 = vmatpush2.bf16.msra.mxu0 0
        %1793 = vmatprep.subr.bf16.mxu0 0
        %1794 = vmatpush2.bf16.msra.mxu0 0
        %1795 = vmatprep.subr.bf16.mxu0 0
        %1796 = vmatpush2.bf16.msra.mxu0 0
        %1797 = vmatprep.subr.bf16.mxu0 0
        %1798 = vmatpush2.bf16.msra.mxu0 0
        %1799 = vmatprep.subr.bf16.mxu0 0
        %1800 = vmatpush2.bf16.msra.mxu0 0
        %1801 = vmatprep.subr.bf16.mxu0 0
        %1802 = vmatpush2.bf16.msra.mxu0 0
        %1803 = vmatprep.subr.bf16.mxu0 0
        %1804 = vmatpush2.bf16.msra.mxu0 0
        %1805 = vmatprep.mubr.bf16.mxu0 0
        %1806 = vmatmul.mubr.bf16.gmra.mxu0 %v1771
        %v1807 = vpop.f32.mrf.mxu0
        %v1808 = vadd.f32 0.0, %v1807
        %v1809 = vpop.f32.mrf.mxu0
        %v1810 = vpop.f32.mrf.mxu0
        %v1811 = vadd.f32 0.0, %v1810
        %v1812 = vpop.f32.mrf.mxu0
        %1813 = vdwg.mxu0
        %1815 = vrot.lane.b32.xlu0 %v946, 96
        %v1816 = vpop.permute.xlu0 %1815
        %v1819 = vsel %vm1137, %v1716, 0
        %1821 = vmatprep.subr.bf16.mxu0 0
        %1822 = vmatpush1.bf16.msra.mxu0 0
        %1823 = vmatprep.subr.bf16.mxu0 0
        %1824 = vmatpush1.bf16.msra.mxu0 0
        %1825 = vmatprep.subr.bf16.mxu0 0
        %1826 = vmatpush1.bf16.msra.mxu0 0
        %1827 = vmatprep.subr.bf16.mxu0 0
        %1828 = vmatpush1.bf16.msra.mxu0 0
        %1829 = vmatprep.subr.bf16.mxu0 0
        %1830 = vmatpush1.bf16.msra.mxu0 0
        %1831 = vmatprep.subr.bf16.mxu0 0
        %1832 = vmatpush1.bf16.msra.mxu0 0
        %1833 = vmatprep.subr.bf16.mxu0 0
        %1834 = vmatpush1.bf16.msra.mxu0 0
        %1835 = vmatprep.subr.bf16.mxu0 0
        %1836 = vmatpush1.bf16.msra.mxu0 %v1816
        %1837 = vmatprep.subr.bf16.mxu0 0
        %1838 = vmatpush2.bf16.msra.mxu0 0
        %1839 = vmatprep.subr.bf16.mxu0 0
        %1840 = vmatpush2.bf16.msra.mxu0 0
        %1841 = vmatprep.subr.bf16.mxu0 0
        %1842 = vmatpush2.bf16.msra.mxu0 0
        %1843 = vmatprep.subr.bf16.mxu0 0
        %1844 = vmatpush2.bf16.msra.mxu0 0
        %1845 = vmatprep.subr.bf16.mxu0 0
        %1846 = vmatpush2.bf16.msra.mxu0 0
        %1847 = vmatprep.subr.bf16.mxu0 0
        %1848 = vmatpush2.bf16.msra.mxu0 0
        %1849 = vmatprep.subr.bf16.mxu0 0
        %1850 = vmatpush2.bf16.msra.mxu0 0
        %1851 = vmatprep.subr.bf16.mxu0 0
        %1852 = vmatpush2.bf16.msra.mxu0 0
        %1853 = vmatprep.mubr.bf16.mxu0 0
        %1854 = vmatmul.mubr.bf16.gmra.mxu0 %v1819
        %v1855 = vpop.f32.mrf.mxu0
        %v1856 = vadd.f32 0.0, %v1855
        %v1857 = vpop.f32.mrf.mxu0
        %v1858 = vpop.f32.mrf.mxu0
        %v1859 = vadd.f32 0.0, %v1858
        %v1860 = vpop.f32.mrf.mxu0
        %1861 = vdwg.mxu0
        %1863 = vrot.lane.b32.xlu0 %v947, 96
        %v1864 = vpop.permute.xlu0 %1863
        %v1867 = vsel %vm1137, %v1717, 0
        %1869 = vmatprep.subr.bf16.mxu0 0
        %1870 = vmatpush1.bf16.msra.mxu0 0
        %1871 = vmatprep.subr.bf16.mxu0 0
        %1872 = vmatpush1.bf16.msra.mxu0 0
        %1873 = vmatprep.subr.bf16.mxu0 0
        %1874 = vmatpush1.bf16.msra.mxu0 0
        %1875 = vmatprep.subr.bf16.mxu0 0
        %1876 = vmatpush1.bf16.msra.mxu0 0
        %1877 = vmatprep.subr.bf16.mxu0 0
        %1878 = vmatpush1.bf16.msra.mxu0 0
        %1879 = vmatprep.subr.bf16.mxu0 0
        %1880 = vmatpush1.bf16.msra.mxu0 0
        %1881 = vmatprep.subr.bf16.mxu0 0
        %1882 = vmatpush1.bf16.msra.mxu0 0
        %1883 = vmatprep.subr.bf16.mxu0 0
        %1884 = vmatpush1.bf16.msra.mxu0 %v1864
        %1885 = vmatprep.subr.bf16.mxu0 0
        %1886 = vmatpush2.bf16.msra.mxu0 0
        %1887 = vmatprep.subr.bf16.mxu0 0
        %1888 = vmatpush2.bf16.msra.mxu0 0
        %1889 = vmatprep.subr.bf16.mxu0 0
        %1890 = vmatpush2.bf16.msra.mxu0 0
        %1891 = vmatprep.subr.bf16.mxu0 0
        %1892 = vmatpush2.bf16.msra.mxu0 0
        %1893 = vmatprep.subr.bf16.mxu0 0
        %1894 = vmatpush2.bf16.msra.mxu0 0
        %1895 = vmatprep.subr.bf16.mxu0 0
        %1896 = vmatpush2.bf16.msra.mxu0 0
        %1897 = vmatprep.subr.bf16.mxu0 0
        %1898 = vmatpush2.bf16.msra.mxu0 0
        %1899 = vmatprep.subr.bf16.mxu0 0
        %1900 = vmatpush2.bf16.msra.mxu0 0
        %1901 = vmatprep.mubr.bf16.mxu0 0
        %1902 = vmatmul.mubr.bf16.gmra.mxu0 %v1867
        %v1903 = vpop.f32.mrf.mxu0
        %v1904 = vadd.f32 0.0, %v1903
        %v1905 = vpop.f32.mrf.mxu0
        %v1906 = vpop.f32.mrf.mxu0
        %v1907 = vadd.f32 0.0, %v1906
        %v1908 = vpop.f32.mrf.mxu0
        %1909 = vdwg.mxu0
        %1918 = vrot.lane.b32.xlu0 %v1760, 32
        %v1919 = vpop.permute.xlu0 %1918
        %1920 = vrot.lane.b32.xlu0 %v1763, 32
        %v1921 = vpop.permute.xlu0 %1920
        %1922 = vrot.lane.b32.xlu0 %v1808, 32
        %v1923 = vpop.permute.xlu0 %1922
        %1924 = vrot.lane.b32.xlu0 %v1811, 32
        %v1925 = vpop.permute.xlu0 %1924
        %1926 = vrot.lane.b32.xlu0 %v1856, 32
        %v1927 = vpop.permute.xlu0 %1926
        %1928 = vrot.lane.b32.xlu0 %v1859, 32
        %v1929 = vpop.permute.xlu0 %1928
        %1930 = vrot.lane.b32.xlu0 %v1904, 32
        %v1931 = vpop.permute.xlu0 %1930
        %1932 = vrot.lane.b32.xlu0 %v1907, 32
        %v1933 = vpop.permute.xlu0 %1932
        %vm1942 = vcmask 523520
        %1943 = vst.msk [vmem:[#allocation2] sm:$0xff] %vm1942, %v1919
        %1944 = vst.msk [vmem:[#allocation2 + $0x8] sm:$0xff] %vm1942, %v1921
        %1945 = vst.msk [vmem:[#allocation2 + $0x10] sm:$0xff] %vm1942, %v1923
        %1946 = vst.msk [vmem:[#allocation2 + $0x18] sm:$0xff] %vm1942, %v1925
        %1947 = vst.msk [vmem:[#allocation2 + $0x20] sm:$0xff] %vm1942, %v1927
        %1948 = vst.msk [vmem:[#allocation2 + $0x28] sm:$0xff] %vm1942, %v1929
        %1949 = vst.msk [vmem:[#allocation2 + $0x30] sm:$0xff] %vm1942, %v1931
        %1950 = vst.msk [vmem:[#allocation2 + $0x38] sm:$0xff] %vm1942, %v1933
        %1951 = vrot.lane.b32.xlu0 %v936, 64
        %v1952 = vpop.permute.xlu0 %1951
        %1953 = vrot.lane.b32.xlu0 %v940, 64
        %v1954 = vpop.permute.xlu0 %1953
        %v1956 = vsel %vm948, %v1952, 0
        %v1959 = vsel %vm948, %v1954, 0
        %1961 = vmatprep.subr.bf16.mxu0 0
        %1962 = vmatpush1.bf16.xpose.msra.mxu0 0
        %1963 = vmatprep.subr.bf16.mxu0 0
        %1964 = vmatpush1.bf16.xpose.msra.mxu0 0
        %1965 = vmatprep.subr.bf16.mxu0 0
        %1966 = vmatpush1.bf16.xpose.msra.mxu0 0
        %1967 = vmatprep.subr.bf16.mxu0 0
        %1968 = vmatpush1.bf16.xpose.msra.mxu0 0
        %1969 = vmatprep.subr.bf16.mxu0 0
        %1970 = vmatpush1.bf16.xpose.msra.mxu0 0
        %1971 = vmatprep.subr.bf16.mxu0 0
        %1972 = vmatpush1.bf16.xpose.msra.mxu0 0
        %1973 = vmatprep.subr.bf16.mxu0 0
        %1974 = vmatpush1.bf16.xpose.msra.mxu0 0
        %1975 = vmatprep.subr.bf16.mxu0 0
        %1976 = vmatpush1.bf16.xpose.msra.mxu0 %v1959
        %1977 = vmatprep.subr.bf16.mxu0 0
        %1978 = vmatpush2.bf16.xpose.msra.mxu0 0
        %1979 = vmatprep.subr.bf16.mxu0 0
        %1980 = vmatpush2.bf16.xpose.msra.mxu0 0
        %1981 = vmatprep.subr.bf16.mxu0 0
        %1982 = vmatpush2.bf16.xpose.msra.mxu0 0
        %1983 = vmatprep.subr.bf16.mxu0 0
        %1984 = vmatpush2.bf16.xpose.msra.mxu0 0
        %1985 = vmatprep.subr.bf16.mxu0 0
        %1986 = vmatpush2.bf16.xpose.msra.mxu0 0
        %1987 = vmatprep.subr.bf16.mxu0 0
        %1988 = vmatpush2.bf16.xpose.msra.mxu0 0
        %1989 = vmatprep.subr.bf16.mxu0 0
        %1990 = vmatpush2.bf16.xpose.msra.mxu0 0
        %1991 = vmatprep.subr.bf16.mxu0 0
        %1992 = vmatpush2.bf16.xpose.msra.mxu0 0
        %1993 = vmatprep.mubr.bf16.mxu0 0
        %1994 = vmatmul.mubr.bf16.gmra.mxu0 %v1956
        %v1995 = vpop.f32.mrf.mxu0
        %v1996 = vadd.f32 0.0, %v1995
        %v1997 = vpop.f32.mrf.mxu0
        %v1998 = vpop.f32.mrf.mxu0
        %v1999 = vadd.f32 0.0, %v1998
        %v2000 = vpop.f32.mrf.mxu0
        %2001 = vdwg.mxu0
        %2002 = vrot.lane.b32.xlu0 %v937, 64
        %v2003 = vpop.permute.xlu0 %2002
        %2004 = vrot.lane.b32.xlu0 %v941, 64
        %v2005 = vpop.permute.xlu0 %2004
        %v2007 = vsel %vm948, %v2003, 0
        %v2010 = vsel %vm948, %v2005, 0
        %2012 = vmatprep.subr.bf16.mxu0 0
        %2013 = vmatpush1.bf16.xpose.msra.mxu0 0
        %2014 = vmatprep.subr.bf16.mxu0 0
        %2015 = vmatpush1.bf16.xpose.msra.mxu0 0
        %2016 = vmatprep.subr.bf16.mxu0 0
        %2017 = vmatpush1.bf16.xpose.msra.mxu0 0
        %2018 = vmatprep.subr.bf16.mxu0 0
        %2019 = vmatpush1.bf16.xpose.msra.mxu0 0
        %2020 = vmatprep.subr.bf16.mxu0 0
        %2021 = vmatpush1.bf16.xpose.msra.mxu0 0
        %2022 = vmatprep.subr.bf16.mxu0 0
        %2023 = vmatpush1.bf16.xpose.msra.mxu0 0
        %2024 = vmatprep.subr.bf16.mxu0 0
        %2025 = vmatpush1.bf16.xpose.msra.mxu0 0
        %2026 = vmatprep.subr.bf16.mxu0 0
        %2027 = vmatpush1.bf16.xpose.msra.mxu0 %v2010
        %2028 = vmatprep.subr.bf16.mxu0 0
        %2029 = vmatpush2.bf16.xpose.msra.mxu0 0
        %2030 = vmatprep.subr.bf16.mxu0 0
        %2031 = vmatpush2.bf16.xpose.msra.mxu0 0
        %2032 = vmatprep.subr.bf16.mxu0 0
        %2033 = vmatpush2.bf16.xpose.msra.mxu0 0
        %2034 = vmatprep.subr.bf16.mxu0 0
        %2035 = vmatpush2.bf16.xpose.msra.mxu0 0
        %2036 = vmatprep.subr.bf16.mxu0 0
        %2037 = vmatpush2.bf16.xpose.msra.mxu0 0
        %2038 = vmatprep.subr.bf16.mxu0 0
        %2039 = vmatpush2.bf16.xpose.msra.mxu0 0
        %2040 = vmatprep.subr.bf16.mxu0 0
        %2041 = vmatpush2.bf16.xpose.msra.mxu0 0
        %2042 = vmatprep.subr.bf16.mxu0 0
        %2043 = vmatpush2.bf16.xpose.msra.mxu0 0
        %2044 = vmatprep.mubr.bf16.mxu0 0
        %2045 = vmatmul.mubr.bf16.gmra.mxu0 %v2007
        %v2046 = vpop.f32.mrf.mxu0
        %v2047 = vadd.f32 0.0, %v2046
        %v2048 = vpop.f32.mrf.mxu0
        %v2049 = vpop.f32.mrf.mxu0
        %v2050 = vadd.f32 0.0, %v2049
        %v2051 = vpop.f32.mrf.mxu0
        %2052 = vdwg.mxu0
        %2053 = vrot.lane.b32.xlu0 %v938, 64
        %v2054 = vpop.permute.xlu0 %2053
        %2055 = vrot.lane.b32.xlu0 %v942, 64
        %v2056 = vpop.permute.xlu0 %2055
        %v2058 = vsel %vm948, %v2054, 0
        %v2061 = vsel %vm948, %v2056, 0
        %2063 = vmatprep.subr.bf16.mxu0 0
        %2064 = vmatpush1.bf16.xpose.msra.mxu0 0
        %2065 = vmatprep.subr.bf16.mxu0 0
        %2066 = vmatpush1.bf16.xpose.msra.mxu0 0
        %2067 = vmatprep.subr.bf16.mxu0 0
        %2068 = vmatpush1.bf16.xpose.msra.mxu0 0
        %2069 = vmatprep.subr.bf16.mxu0 0
        %2070 = vmatpush1.bf16.xpose.msra.mxu0 0
        %2071 = vmatprep.subr.bf16.mxu0 0
        %2072 = vmatpush1.bf16.xpose.msra.mxu0 0
        %2073 = vmatprep.subr.bf16.mxu0 0
        %2074 = vmatpush1.bf16.xpose.msra.mxu0 0
        %2075 = vmatprep.subr.bf16.mxu0 0
        %2076 = vmatpush1.bf16.xpose.msra.mxu0 0
        %2077 = vmatprep.subr.bf16.mxu0 0
        %2078 = vmatpush1.bf16.xpose.msra.mxu0 %v2061
        %2079 = vmatprep.subr.bf16.mxu0 0
        %2080 = vmatpush2.bf16.xpose.msra.mxu0 0
        %2081 = vmatprep.subr.bf16.mxu0 0
        %2082 = vmatpush2.bf16.xpose.msra.mxu0 0
        %2083 = vmatprep.subr.bf16.mxu0 0
        %2084 = vmatpush2.bf16.xpose.msra.mxu0 0
        %2085 = vmatprep.subr.bf16.mxu0 0
        %2086 = vmatpush2.bf16.xpose.msra.mxu0 0
        %2087 = vmatprep.subr.bf16.mxu0 0
        %2088 = vmatpush2.bf16.xpose.msra.mxu0 0
        %2089 = vmatprep.subr.bf16.mxu0 0
        %2090 = vmatpush2.bf16.xpose.msra.mxu0 0
        %2091 = vmatprep.subr.bf16.mxu0 0
        %2092 = vmatpush2.bf16.xpose.msra.mxu0 0
        %2093 = vmatprep.subr.bf16.mxu0 0
        %2094 = vmatpush2.bf16.xpose.msra.mxu0 0
        %2095 = vmatprep.mubr.bf16.mxu0 0
        %2096 = vmatmul.mubr.bf16.gmra.mxu0 %v2058
        %v2097 = vpop.f32.mrf.mxu0
        %v2098 = vadd.f32 0.0, %v2097
        %v2099 = vpop.f32.mrf.mxu0
        %v2100 = vpop.f32.mrf.mxu0
        %v2101 = vadd.f32 0.0, %v2100
        %v2102 = vpop.f32.mrf.mxu0
        %2103 = vdwg.mxu0
        %2104 = vrot.lane.b32.xlu0 %v939, 64
        %v2105 = vpop.permute.xlu0 %2104
        %2106 = vrot.lane.b32.xlu0 %v943, 64
        %v2107 = vpop.permute.xlu0 %2106
        %v2109 = vsel %vm948, %v2105, 0
        %v2112 = vsel %vm948, %v2107, 0
        %2114 = vmatprep.subr.bf16.mxu0 0
        %2115 = vmatpush1.bf16.xpose.msra.mxu0 0
        %2116 = vmatprep.subr.bf16.mxu0 0
        %2117 = vmatpush1.bf16.xpose.msra.mxu0 0
        %2118 = vmatprep.subr.bf16.mxu0 0
        %2119 = vmatpush1.bf16.xpose.msra.mxu0 0
        %2120 = vmatprep.subr.bf16.mxu0 0
        %2121 = vmatpush1.bf16.xpose.msra.mxu0 0
        %2122 = vmatprep.subr.bf16.mxu0 0
        %2123 = vmatpush1.bf16.xpose.msra.mxu0 0
        %2124 = vmatprep.subr.bf16.mxu0 0
        %2125 = vmatpush1.bf16.xpose.msra.mxu0 0
        %2126 = vmatprep.subr.bf16.mxu0 0
        %2127 = vmatpush1.bf16.xpose.msra.mxu0 0
        %2128 = vmatprep.subr.bf16.mxu0 0
        %2129 = vmatpush1.bf16.xpose.msra.mxu0 %v2112
        %2130 = vmatprep.subr.bf16.mxu0 0
        %2131 = vmatpush2.bf16.xpose.msra.mxu0 0
        %2132 = vmatprep.subr.bf16.mxu0 0
        %2133 = vmatpush2.bf16.xpose.msra.mxu0 0
        %2134 = vmatprep.subr.bf16.mxu0 0
        %2135 = vmatpush2.bf16.xpose.msra.mxu0 0
        %2136 = vmatprep.subr.bf16.mxu0 0
        %2137 = vmatpush2.bf16.xpose.msra.mxu0 0
        %2138 = vmatprep.subr.bf16.mxu0 0
        %2139 = vmatpush2.bf16.xpose.msra.mxu0 0
        %2140 = vmatprep.subr.bf16.mxu0 0
        %2141 = vmatpush2.bf16.xpose.msra.mxu0 0
        %2142 = vmatprep.subr.bf16.mxu0 0
        %2143 = vmatpush2.bf16.xpose.msra.mxu0 0
        %2144 = vmatprep.subr.bf16.mxu0 0
        %2145 = vmatpush2.bf16.xpose.msra.mxu0 0
        %2146 = vmatprep.mubr.bf16.mxu0 0
        %2147 = vmatmul.mubr.bf16.gmra.mxu0 %v2109
        %v2148 = vpop.f32.mrf.mxu0
        %v2149 = vadd.f32 0.0, %v2148
        %v2150 = vpop.f32.mrf.mxu0
        %v2151 = vpop.f32.mrf.mxu0
        %v2152 = vadd.f32 0.0, %v2151
        %v2153 = vpop.f32.mrf.mxu0
        %2154 = vdwg.mxu0
        %v2155 = vsel %vm1137, %v1996, -inf
        %2156 = vmax.xlane.f32.xlu0 %v2155
        %v2157 = vpop.xlane.xlu0 %2156
        %v2158 = vsel %vm1137, %v1999, -inf
        %2159 = vmax.xlane.f32.xlu0 %v2158
        %v2160 = vpop.xlane.xlu0 %2159
        %v2161 = vsel %vm1137, %v2047, -inf
        %2162 = vmax.xlane.f32.xlu0 %v2161
        %v2163 = vpop.xlane.xlu0 %2162
        %v2164 = vsel %vm1137, %v2050, -inf
        %2165 = vmax.xlane.f32.xlu0 %v2164
        %v2166 = vpop.xlane.xlu0 %2165
        %v2167 = vsel %vm1137, %v2098, -inf
        %2168 = vmax.xlane.f32.xlu0 %v2167
        %v2169 = vpop.xlane.xlu0 %2168
        %v2170 = vsel %vm1137, %v2101, -inf
        %2171 = vmax.xlane.f32.xlu0 %v2170
        %v2172 = vpop.xlane.xlu0 %2171
        %v2173 = vsel %vm1137, %v2149, -inf
        %2174 = vmax.xlane.f32.xlu0 %v2173
        %v2175 = vpop.xlane.xlu0 %2174
        %v2176 = vsel %vm1137, %v2152, -inf
        %2177 = vmax.xlane.f32.xlu0 %v2176
        %v2178 = vpop.xlane.xlu0 %2177
        %v2179 = vsub.f32 %v1996, %v2157
        %v2180 = vsub.f32 %v1999, %v2160
        %v2181 = vsub.f32 %v2047, %v2163
        %v2182 = vsub.f32 %v2050, %v2166
        %v2183 = vsub.f32 %v2098, %v2169
        %v2184 = vsub.f32 %v2101, %v2172
        %v2185 = vsub.f32 %v2149, %v2175
        %v2186 = vsub.f32 %v2152, %v2178
        %v2187 = vmul.f32 %v2179, 1.442695
        %v2188 = vpow.pop %v2187
        %v2189 = vmul.f32 %v2180, 1.442695
        %v2190 = vpow.pop %v2189
        %v2191 = vmul.f32 %v2181, 1.442695
        %v2192 = vpow.pop %v2191
        %v2193 = vmul.f32 %v2182, 1.442695
        %v2194 = vpow.pop %v2193
        %v2195 = vmul.f32 %v2183, 1.442695
        %v2196 = vpow.pop %v2195
        %v2197 = vmul.f32 %v2184, 1.442695
        %v2198 = vpow.pop %v2197
        %v2199 = vmul.f32 %v2185, 1.442695
        %v2200 = vpow.pop %v2199
        %v2201 = vmul.f32 %v2186, 1.442695
        %v2202 = vpow.pop %v2201
        %v2203 = vsel %vm1137, %v2188, 0.0
        %2204 = vadd.xlane.f32.xlu0 %v2203
        %v2205 = vpop.xlane.xlu0 %2204
        %v2206 = vsel %vm1137, %v2190, 0.0
        %2207 = vadd.xlane.f32.xlu0 %v2206
        %v2208 = vpop.xlane.xlu0 %2207
        %v2209 = vsel %vm1137, %v2192, 0.0
        %2210 = vadd.xlane.f32.xlu0 %v2209
        %v2211 = vpop.xlane.xlu0 %2210
        %v2212 = vsel %vm1137, %v2194, 0.0
        %2213 = vadd.xlane.f32.xlu0 %v2212
        %v2214 = vpop.xlane.xlu0 %2213
        %v2215 = vsel %vm1137, %v2196, 0.0
        %2216 = vadd.xlane.f32.xlu0 %v2215
        %v2217 = vpop.xlane.xlu0 %2216
        %v2218 = vsel %vm1137, %v2198, 0.0
        %2219 = vadd.xlane.f32.xlu0 %v2218
        %v2220 = vpop.xlane.xlu0 %2219
        %v2221 = vsel %vm1137, %v2200, 0.0
        %2222 = vadd.xlane.f32.xlu0 %v2221
        %v2223 = vpop.xlane.xlu0 %2222
        %v2224 = vsel %vm1137, %v2202, 0.0
        %2225 = vadd.xlane.f32.xlu0 %v2224
        %v2226 = vpop.xlane.xlu0 %2225
        %v2227 = vrcp.pop %v2205
        %v2228 = vrcp.pop %v2208
        %v2229 = vrcp.pop %v2211
        %v2230 = vrcp.pop %v2214
        %v2231 = vrcp.pop %v2217
        %v2232 = vrcp.pop %v2220
        %v2233 = vrcp.pop %v2223
        %v2234 = vrcp.pop %v2226
        %v2235 = vmul.f32 %v2188, %v2227
        %v2236 = vmul.f32 %v2190, %v2228
        %v2237 = vmul.f32 %v2192, %v2229
        %v2238 = vmul.f32 %v2194, %v2230
        %v2239 = vmul.f32 %v2196, %v2231
        %v2240 = vmul.f32 %v2198, %v2232
        %v2241 = vmul.f32 %v2200, %v2233
        %v2242 = vmul.f32 %v2202, %v2234
        %v2243 = vpack.c.bf16 %v2236, %v2235
        %v2244 = vpack.c.bf16 %v2238, %v2237
        %v2245 = vpack.c.bf16 %v2240, %v2239
        %v2246 = vpack.c.bf16 %v2242, %v2241
        %2247 = vrot.lane.b32.xlu0 %v944, 64
        %v2248 = vpop.permute.xlu0 %2247
        %v2251 = vsel %vm1137, %v2243, 0
        %2253 = vmatprep.subr.bf16.mxu0 0
        %2254 = vmatpush1.bf16.msra.mxu0 0
        %2255 = vmatprep.subr.bf16.mxu0 0
        %2256 = vmatpush1.bf16.msra.mxu0 0
        %2257 = vmatprep.subr.bf16.mxu0 0
        %2258 = vmatpush1.bf16.msra.mxu0 0
        %2259 = vmatprep.subr.bf16.mxu0 0
        %2260 = vmatpush1.bf16.msra.mxu0 0
        %2261 = vmatprep.subr.bf16.mxu0 0
        %2262 = vmatpush1.bf16.msra.mxu0 0
        %2263 = vmatprep.subr.bf16.mxu0 0
        %2264 = vmatpush1.bf16.msra.mxu0 0
        %2265 = vmatprep.subr.bf16.mxu0 0
        %2266 = vmatpush1.bf16.msra.mxu0 0
        %2267 = vmatprep.subr.bf16.mxu0 0
        %2268 = vmatpush1.bf16.msra.mxu0 %v2248
        %2269 = vmatprep.subr.bf16.mxu0 0
        %2270 = vmatpush2.bf16.msra.mxu0 0
        %2271 = vmatprep.subr.bf16.mxu0 0
        %2272 = vmatpush2.bf16.msra.mxu0 0
        %2273 = vmatprep.subr.bf16.mxu0 0
        %2274 = vmatpush2.bf16.msra.mxu0 0
        %2275 = vmatprep.subr.bf16.mxu0 0
        %2276 = vmatpush2.bf16.msra.mxu0 0
        %2277 = vmatprep.subr.bf16.mxu0 0
        %2278 = vmatpush2.bf16.msra.mxu0 0
        %2279 = vmatprep.subr.bf16.mxu0 0
        %2280 = vmatpush2.bf16.msra.mxu0 0
        %2281 = vmatprep.subr.bf16.mxu0 0
        %2282 = vmatpush2.bf16.msra.mxu0 0
        %2283 = vmatprep.subr.bf16.mxu0 0
        %2284 = vmatpush2.bf16.msra.mxu0 0
        %2285 = vmatprep.mubr.bf16.mxu0 0
        %2286 = vmatmul.mubr.bf16.gmra.mxu0 %v2251
        %v2287 = vpop.f32.mrf.mxu0
        %v2288 = vadd.f32 0.0, %v2287
        %v2289 = vpop.f32.mrf.mxu0
        %v2290 = vpop.f32.mrf.mxu0
        %v2291 = vadd.f32 0.0, %v2290
        %v2292 = vpop.f32.mrf.mxu0
        %2293 = vdwg.mxu0
        %2294 = vrot.lane.b32.xlu0 %v945, 64
        %v2295 = vpop.permute.xlu0 %2294
        %v2298 = vsel %vm1137, %v2244, 0
        %2300 = vmatprep.subr.bf16.mxu0 0
        %2301 = vmatpush1.bf16.msra.mxu0 0
        %2302 = vmatprep.subr.bf16.mxu0 0
        %2303 = vmatpush1.bf16.msra.mxu0 0
        %2304 = vmatprep.subr.bf16.mxu0 0
        %2305 = vmatpush1.bf16.msra.mxu0 0
        %2306 = vmatprep.subr.bf16.mxu0 0
        %2307 = vmatpush1.bf16.msra.mxu0 0
        %2308 = vmatprep.subr.bf16.mxu0 0
        %2309 = vmatpush1.bf16.msra.mxu0 0
        %2310 = vmatprep.subr.bf16.mxu0 0
        %2311 = vmatpush1.bf16.msra.mxu0 0
        %2312 = vmatprep.subr.bf16.mxu0 0
        %2313 = vmatpush1.bf16.msra.mxu0 0
        %2314 = vmatprep.subr.bf16.mxu0 0
        %2315 = vmatpush1.bf16.msra.mxu0 %v2295
        %2316 = vmatprep.subr.bf16.mxu0 0
        %2317 = vmatpush2.bf16.msra.mxu0 0
        %2318 = vmatprep.subr.bf16.mxu0 0
        %2319 = vmatpush2.bf16.msra.mxu0 0
        %2320 = vmatprep.subr.bf16.mxu0 0
        %2321 = vmatpush2.bf16.msra.mxu0 0
        %2322 = vmatprep.subr.bf16.mxu0 0
        %2323 = vmatpush2.bf16.msra.mxu0 0
        %2324 = vmatprep.subr.bf16.mxu0 0
        %2325 = vmatpush2.bf16.msra.mxu0 0
        %2326 = vmatprep.subr.bf16.mxu0 0
        %2327 = vmatpush2.bf16.msra.mxu0 0
        %2328 = vmatprep.subr.bf16.mxu0 0
        %2329 = vmatpush2.bf16.msra.mxu0 0
        %2330 = vmatprep.subr.bf16.mxu0 0
        %2331 = vmatpush2.bf16.msra.mxu0 0
        %2332 = vmatprep.mubr.bf16.mxu0 0
        %2333 = vmatmul.mubr.bf16.gmra.mxu0 %v2298
        %v2334 = vpop.f32.mrf.mxu0
        %v2335 = vadd.f32 0.0, %v2334
        %v2336 = vpop.f32.mrf.mxu0
        %v2337 = vpop.f32.mrf.mxu0
        %v2338 = vadd.f32 0.0, %v2337
        %v2339 = vpop.f32.mrf.mxu0
        %2340 = vdwg.mxu0
        %2341 = vrot.lane.b32.xlu0 %v946, 64
        %v2342 = vpop.permute.xlu0 %2341
        %v2345 = vsel %vm1137, %v2245, 0
        %2347 = vmatprep.subr.bf16.mxu0 0
        %2348 = vmatpush1.bf16.msra.mxu0 0
        %2349 = vmatprep.subr.bf16.mxu0 0
        %2350 = vmatpush1.bf16.msra.mxu0 0
        %2351 = vmatprep.subr.bf16.mxu0 0
        %2352 = vmatpush1.bf16.msra.mxu0 0
        %2353 = vmatprep.subr.bf16.mxu0 0
        %2354 = vmatpush1.bf16.msra.mxu0 0
        %2355 = vmatprep.subr.bf16.mxu0 0
        %2356 = vmatpush1.bf16.msra.mxu0 0
        %2357 = vmatprep.subr.bf16.mxu0 0
        %2358 = vmatpush1.bf16.msra.mxu0 0
        %2359 = vmatprep.subr.bf16.mxu0 0
        %2360 = vmatpush1.bf16.msra.mxu0 0
        %2361 = vmatprep.subr.bf16.mxu0 0
        %2362 = vmatpush1.bf16.msra.mxu0 %v2342
        %2363 = vmatprep.subr.bf16.mxu0 0
        %2364 = vmatpush2.bf16.msra.mxu0 0
        %2365 = vmatprep.subr.bf16.mxu0 0
        %2366 = vmatpush2.bf16.msra.mxu0 0
        %2367 = vmatprep.subr.bf16.mxu0 0
        %2368 = vmatpush2.bf16.msra.mxu0 0
        %2369 = vmatprep.subr.bf16.mxu0 0
        %2370 = vmatpush2.bf16.msra.mxu0 0
        %2371 = vmatprep.subr.bf16.mxu0 0
        %2372 = vmatpush2.bf16.msra.mxu0 0
        %2373 = vmatprep.subr.bf16.mxu0 0
        %2374 = vmatpush2.bf16.msra.mxu0 0
        %2375 = vmatprep.subr.bf16.mxu0 0
        %2376 = vmatpush2.bf16.msra.mxu0 0
        %2377 = vmatprep.subr.bf16.mxu0 0
        %2378 = vmatpush2.bf16.msra.mxu0 0
        %2379 = vmatprep.mubr.bf16.mxu0 0
        %2380 = vmatmul.mubr.bf16.gmra.mxu0 %v2345
        %v2381 = vpop.f32.mrf.mxu0
        %v2382 = vadd.f32 0.0, %v2381
        %v2383 = vpop.f32.mrf.mxu0
        %v2384 = vpop.f32.mrf.mxu0
        %v2385 = vadd.f32 0.0, %v2384
        %v2386 = vpop.f32.mrf.mxu0
        %2387 = vdwg.mxu0
        %2388 = vrot.lane.b32.xlu0 %v947, 64
        %v2389 = vpop.permute.xlu0 %2388
        %v2392 = vsel %vm1137, %v2246, 0
        %2394 = vmatprep.subr.bf16.mxu0 0
        %2395 = vmatpush1.bf16.msra.mxu0 0
        %2396 = vmatprep.subr.bf16.mxu0 0
        %2397 = vmatpush1.bf16.msra.mxu0 0
        %2398 = vmatprep.subr.bf16.mxu0 0
        %2399 = vmatpush1.bf16.msra.mxu0 0
        %2400 = vmatprep.subr.bf16.mxu0 0
        %2401 = vmatpush1.bf16.msra.mxu0 0
        %2402 = vmatprep.subr.bf16.mxu0 0
        %2403 = vmatpush1.bf16.msra.mxu0 0
        %2404 = vmatprep.subr.bf16.mxu0 0
        %2405 = vmatpush1.bf16.msra.mxu0 0
        %2406 = vmatprep.subr.bf16.mxu0 0
        %2407 = vmatpush1.bf16.msra.mxu0 0
        %2408 = vmatprep.subr.bf16.mxu0 0
        %2409 = vmatpush1.bf16.msra.mxu0 %v2389
        %2410 = vmatprep.subr.bf16.mxu0 0
        %2411 = vmatpush2.bf16.msra.mxu0 0
        %2412 = vmatprep.subr.bf16.mxu0 0
        %2413 = vmatpush2.bf16.msra.mxu0 0
        %2414 = vmatprep.subr.bf16.mxu0 0
        %2415 = vmatpush2.bf16.msra.mxu0 0
        %2416 = vmatprep.subr.bf16.mxu0 0
        %2417 = vmatpush2.bf16.msra.mxu0 0
        %2418 = vmatprep.subr.bf16.mxu0 0
        %2419 = vmatpush2.bf16.msra.mxu0 0
        %2420 = vmatprep.subr.bf16.mxu0 0
        %2421 = vmatpush2.bf16.msra.mxu0 0
        %2422 = vmatprep.subr.bf16.mxu0 0
        %2423 = vmatpush2.bf16.msra.mxu0 0
        %2424 = vmatprep.subr.bf16.mxu0 0
        %2425 = vmatpush2.bf16.msra.mxu0 0
        %2426 = vmatprep.mubr.bf16.mxu0 0
        %2427 = vmatmul.mubr.bf16.gmra.mxu0 %v2392
        %v2428 = vpop.f32.mrf.mxu0
        %v2429 = vadd.f32 0.0, %v2428
        %v2430 = vpop.f32.mrf.mxu0
        %v2431 = vpop.f32.mrf.mxu0
        %v2432 = vadd.f32 0.0, %v2431
        %v2433 = vpop.f32.mrf.mxu0
        %2434 = vdwg.mxu0
        %2443 = vrot.lane.b32.xlu0 %v2288, 64
        %v2444 = vpop.permute.xlu0 %2443
        %2445 = vrot.lane.b32.xlu0 %v2291, 64
        %v2446 = vpop.permute.xlu0 %2445
        %2447 = vrot.lane.b32.xlu0 %v2335, 64
        %v2448 = vpop.permute.xlu0 %2447
        %2449 = vrot.lane.b32.xlu0 %v2338, 64
        %v2450 = vpop.permute.xlu0 %2449
        %2451 = vrot.lane.b32.xlu0 %v2382, 64
        %v2452 = vpop.permute.xlu0 %2451
        %2453 = vrot.lane.b32.xlu0 %v2385, 64
        %v2454 = vpop.permute.xlu0 %2453
        %2455 = vrot.lane.b32.xlu0 %v2429, 64
        %v2456 = vpop.permute.xlu0 %2455
        %2457 = vrot.lane.b32.xlu0 %v2432, 64
        %v2458 = vpop.permute.xlu0 %2457
        %vm2467 = vcmask 785920
        %2468 = vst.msk [vmem:[#allocation2] sm:$0xff] %vm2467, %v2444
        %2469 = vst.msk [vmem:[#allocation2 + $0x8] sm:$0xff] %vm2467, %v2446
        %2470 = vst.msk [vmem:[#allocation2 + $0x10] sm:$0xff] %vm2467, %v2448
        %2471 = vst.msk [vmem:[#allocation2 + $0x18] sm:$0xff] %vm2467, %v2450
        %2472 = vst.msk [vmem:[#allocation2 + $0x20] sm:$0xff] %vm2467, %v2452
        %2473 = vst.msk [vmem:[#allocation2 + $0x28] sm:$0xff] %vm2467, %v2454
        %2474 = vst.msk [vmem:[#allocation2 + $0x30] sm:$0xff] %vm2467, %v2456
        %2475 = vst.msk [vmem:[#allocation2 + $0x38] sm:$0xff] %vm2467, %v2458
        %2476 = vrot.lane.b32.xlu0 %v936, 32
        %v2477 = vpop.permute.xlu0 %2476
        %2478 = vrot.lane.b32.xlu0 %v940, 32
        %v2479 = vpop.permute.xlu0 %2478
        %v2481 = vsel %vm948, %v2477, 0
        %v2484 = vsel %vm948, %v2479, 0
        %2486 = vmatprep.subr.bf16.mxu0 0
        %2487 = vmatpush1.bf16.xpose.msra.mxu0 0
        %2488 = vmatprep.subr.bf16.mxu0 0
        %2489 = vmatpush1.bf16.xpose.msra.mxu0 0
        %2490 = vmatprep.subr.bf16.mxu0 0
        %2491 = vmatpush1.bf16.xpose.msra.mxu0 0
        %2492 = vmatprep.subr.bf16.mxu0 0
        %2493 = vmatpush1.bf16.xpose.msra.mxu0 0
        %2494 = vmatprep.subr.bf16.mxu0 0
        %2495 = vmatpush1.bf16.xpose.msra.mxu0 0
        %2496 = vmatprep.subr.bf16.mxu0 0
        %2497 = vmatpush1.bf16.xpose.msra.mxu0 0
        %2498 = vmatprep.subr.bf16.mxu0 0
        %2499 = vmatpush1.bf16.xpose.msra.mxu0 0
        %2500 = vmatprep.subr.bf16.mxu0 0
        %2501 = vmatpush1.bf16.xpose.msra.mxu0 %v2484
        %2502 = vmatprep.subr.bf16.mxu0 0
        %2503 = vmatpush2.bf16.xpose.msra.mxu0 0
        %2504 = vmatprep.subr.bf16.mxu0 0
        %2505 = vmatpush2.bf16.xpose.msra.mxu0 0
        %2506 = vmatprep.subr.bf16.mxu0 0
        %2507 = vmatpush2.bf16.xpose.msra.mxu0 0
        %2508 = vmatprep.subr.bf16.mxu0 0
        %2509 = vmatpush2.bf16.xpose.msra.mxu0 0
        %2510 = vmatprep.subr.bf16.mxu0 0
        %2511 = vmatpush2.bf16.xpose.msra.mxu0 0
        %2512 = vmatprep.subr.bf16.mxu0 0
        %2513 = vmatpush2.bf16.xpose.msra.mxu0 0
        %2514 = vmatprep.subr.bf16.mxu0 0
        %2515 = vmatpush2.bf16.xpose.msra.mxu0 0
        %2516 = vmatprep.subr.bf16.mxu0 0
        %2517 = vmatpush2.bf16.xpose.msra.mxu0 0
        %2518 = vmatprep.mubr.bf16.mxu0 0
        %2519 = vmatmul.mubr.bf16.gmra.mxu0 %v2481
        %v2520 = vpop.f32.mrf.mxu0
        %v2521 = vadd.f32 0.0, %v2520
        %v2522 = vpop.f32.mrf.mxu0
        %v2523 = vpop.f32.mrf.mxu0
        %v2524 = vadd.f32 0.0, %v2523
        %v2525 = vpop.f32.mrf.mxu0
        %2526 = vdwg.mxu0
        %2527 = vrot.lane.b32.xlu0 %v937, 32
        %v2528 = vpop.permute.xlu0 %2527
        %2529 = vrot.lane.b32.xlu0 %v941, 32
        %v2530 = vpop.permute.xlu0 %2529
        %v2532 = vsel %vm948, %v2528, 0
        %v2535 = vsel %vm948, %v2530, 0
        %2537 = vmatprep.subr.bf16.mxu0 0
        %2538 = vmatpush1.bf16.xpose.msra.mxu0 0
        %2539 = vmatprep.subr.bf16.mxu0 0
        %2540 = vmatpush1.bf16.xpose.msra.mxu0 0
        %2541 = vmatprep.subr.bf16.mxu0 0
        %2542 = vmatpush1.bf16.xpose.msra.mxu0 0
        %2543 = vmatprep.subr.bf16.mxu0 0
        %2544 = vmatpush1.bf16.xpose.msra.mxu0 0
        %2545 = vmatprep.subr.bf16.mxu0 0
        %2546 = vmatpush1.bf16.xpose.msra.mxu0 0
        %2547 = vmatprep.subr.bf16.mxu0 0
        %2548 = vmatpush1.bf16.xpose.msra.mxu0 0
        %2549 = vmatprep.subr.bf16.mxu0 0
        %2550 = vmatpush1.bf16.xpose.msra.mxu0 0
        %2551 = vmatprep.subr.bf16.mxu0 0
        %2552 = vmatpush1.bf16.xpose.msra.mxu0 %v2535
        %2553 = vmatprep.subr.bf16.mxu0 0
        %2554 = vmatpush2.bf16.xpose.msra.mxu0 0
        %2555 = vmatprep.subr.bf16.mxu0 0
        %2556 = vmatpush2.bf16.xpose.msra.mxu0 0
        %2557 = vmatprep.subr.bf16.mxu0 0
        %2558 = vmatpush2.bf16.xpose.msra.mxu0 0
        %2559 = vmatprep.subr.bf16.mxu0 0
        %2560 = vmatpush2.bf16.xpose.msra.mxu0 0
        %2561 = vmatprep.subr.bf16.mxu0 0
        %2562 = vmatpush2.bf16.xpose.msra.mxu0 0
        %2563 = vmatprep.subr.bf16.mxu0 0
        %2564 = vmatpush2.bf16.xpose.msra.mxu0 0
        %2565 = vmatprep.subr.bf16.mxu0 0
        %2566 = vmatpush2.bf16.xpose.msra.mxu0 0
        %2567 = vmatprep.subr.bf16.mxu0 0
        %2568 = vmatpush2.bf16.xpose.msra.mxu0 0
        %2569 = vmatprep.mubr.bf16.mxu0 0
        %2570 = vmatmul.mubr.bf16.gmra.mxu0 %v2532
        %v2571 = vpop.f32.mrf.mxu0
        %v2572 = vadd.f32 0.0, %v2571
        %v2573 = vpop.f32.mrf.mxu0
        %v2574 = vpop.f32.mrf.mxu0
        %v2575 = vadd.f32 0.0, %v2574
        %v2576 = vpop.f32.mrf.mxu0
        %2577 = vdwg.mxu0
        %2578 = vrot.lane.b32.xlu0 %v938, 32
        %v2579 = vpop.permute.xlu0 %2578
        %2580 = vrot.lane.b32.xlu0 %v942, 32
        %v2581 = vpop.permute.xlu0 %2580
        %v2583 = vsel %vm948, %v2579, 0
        %v2586 = vsel %vm948, %v2581, 0
        %2588 = vmatprep.subr.bf16.mxu0 0
        %2589 = vmatpush1.bf16.xpose.msra.mxu0 0
        %2590 = vmatprep.subr.bf16.mxu0 0
        %2591 = vmatpush1.bf16.xpose.msra.mxu0 0
        %2592 = vmatprep.subr.bf16.mxu0 0
        %2593 = vmatpush1.bf16.xpose.msra.mxu0 0
        %2594 = vmatprep.subr.bf16.mxu0 0
        %2595 = vmatpush1.bf16.xpose.msra.mxu0 0
        %2596 = vmatprep.subr.bf16.mxu0 0
        %2597 = vmatpush1.bf16.xpose.msra.mxu0 0
        %2598 = vmatprep.subr.bf16.mxu0 0
        %2599 = vmatpush1.bf16.xpose.msra.mxu0 0
        %2600 = vmatprep.subr.bf16.mxu0 0
        %2601 = vmatpush1.bf16.xpose.msra.mxu0 0
        %2602 = vmatprep.subr.bf16.mxu0 0
        %2603 = vmatpush1.bf16.xpose.msra.mxu0 %v2586
        %2604 = vmatprep.subr.bf16.mxu0 0
        %2605 = vmatpush2.bf16.xpose.msra.mxu0 0
        %2606 = vmatprep.subr.bf16.mxu0 0
        %2607 = vmatpush2.bf16.xpose.msra.mxu0 0
        %2608 = vmatprep.subr.bf16.mxu0 0
        %2609 = vmatpush2.bf16.xpose.msra.mxu0 0
        %2610 = vmatprep.subr.bf16.mxu0 0
        %2611 = vmatpush2.bf16.xpose.msra.mxu0 0
        %2612 = vmatprep.subr.bf16.mxu0 0
        %2613 = vmatpush2.bf16.xpose.msra.mxu0 0
        %2614 = vmatprep.subr.bf16.mxu0 0
        %2615 = vmatpush2.bf16.xpose.msra.mxu0 0
        %2616 = vmatprep.subr.bf16.mxu0 0
        %2617 = vmatpush2.bf16.xpose.msra.mxu0 0
        %2618 = vmatprep.subr.bf16.mxu0 0
        %2619 = vmatpush2.bf16.xpose.msra.mxu0 0
        %2620 = vmatprep.mubr.bf16.mxu0 0
        %2621 = vmatmul.mubr.bf16.gmra.mxu0 %v2583
        %v2622 = vpop.f32.mrf.mxu0
        %v2623 = vadd.f32 0.0, %v2622
        %v2624 = vpop.f32.mrf.mxu0
        %v2625 = vpop.f32.mrf.mxu0
        %v2626 = vadd.f32 0.0, %v2625
        %v2627 = vpop.f32.mrf.mxu0
        %2628 = vdwg.mxu0
        %2629 = vrot.lane.b32.xlu0 %v939, 32
        %v2630 = vpop.permute.xlu0 %2629
        %2631 = vrot.lane.b32.xlu0 %v943, 32
        %v2632 = vpop.permute.xlu0 %2631
        %v2634 = vsel %vm948, %v2630, 0
        %v2637 = vsel %vm948, %v2632, 0
        %2639 = vmatprep.subr.bf16.mxu0 0
        %2640 = vmatpush1.bf16.xpose.msra.mxu0 0
        %2641 = vmatprep.subr.bf16.mxu0 0
        %2642 = vmatpush1.bf16.xpose.msra.mxu0 0
        %2643 = vmatprep.subr.bf16.mxu0 0
        %2644 = vmatpush1.bf16.xpose.msra.mxu0 0
        %2645 = vmatprep.subr.bf16.mxu0 0
        %2646 = vmatpush1.bf16.xpose.msra.mxu0 0
        %2647 = vmatprep.subr.bf16.mxu0 0
        %2648 = vmatpush1.bf16.xpose.msra.mxu0 0
        %2649 = vmatprep.subr.bf16.mxu0 0
        %2650 = vmatpush1.bf16.xpose.msra.mxu0 0
        %2651 = vmatprep.subr.bf16.mxu0 0
        %2652 = vmatpush1.bf16.xpose.msra.mxu0 0
        %2653 = vmatprep.subr.bf16.mxu0 0
        %2654 = vmatpush1.bf16.xpose.msra.mxu0 %v2637
        %2655 = vmatprep.subr.bf16.mxu0 0
        %2656 = vmatpush2.bf16.xpose.msra.mxu0 0
        %2657 = vmatprep.subr.bf16.mxu0 0
        %2658 = vmatpush2.bf16.xpose.msra.mxu0 0
        %2659 = vmatprep.subr.bf16.mxu0 0
        %2660 = vmatpush2.bf16.xpose.msra.mxu0 0
        %2661 = vmatprep.subr.bf16.mxu0 0
        %2662 = vmatpush2.bf16.xpose.msra.mxu0 0
        %2663 = vmatprep.subr.bf16.mxu0 0
        %2664 = vmatpush2.bf16.xpose.msra.mxu0 0
        %2665 = vmatprep.subr.bf16.mxu0 0
        %2666 = vmatpush2.bf16.xpose.msra.mxu0 0
        %2667 = vmatprep.subr.bf16.mxu0 0
        %2668 = vmatpush2.bf16.xpose.msra.mxu0 0
        %2669 = vmatprep.subr.bf16.mxu0 0
        %2670 = vmatpush2.bf16.xpose.msra.mxu0 0
        %2671 = vmatprep.mubr.bf16.mxu0 0
        %2672 = vmatmul.mubr.bf16.gmra.mxu0 %v2634
        %v2673 = vpop.f32.mrf.mxu0
        %v2674 = vadd.f32 0.0, %v2673
        %v2675 = vpop.f32.mrf.mxu0
        %v2676 = vpop.f32.mrf.mxu0
        %v2677 = vadd.f32 0.0, %v2676
        %v2678 = vpop.f32.mrf.mxu0
        %2679 = vdwg.mxu0
        %v2680 = vsel %vm1137, %v2521, -inf
        %2681 = vmax.xlane.f32.xlu0 %v2680
        %v2682 = vpop.xlane.xlu0 %2681
        %v2683 = vsel %vm1137, %v2524, -inf
        %2684 = vmax.xlane.f32.xlu0 %v2683
        %v2685 = vpop.xlane.xlu0 %2684
        %v2686 = vsel %vm1137, %v2572, -inf
        %2687 = vmax.xlane.f32.xlu0 %v2686
        %v2688 = vpop.xlane.xlu0 %2687
        %v2689 = vsel %vm1137, %v2575, -inf
        %2690 = vmax.xlane.f32.xlu0 %v2689
        %v2691 = vpop.xlane.xlu0 %2690
        %v2692 = vsel %vm1137, %v2623, -inf
        %2693 = vmax.xlane.f32.xlu0 %v2692
        %v2694 = vpop.xlane.xlu0 %2693
        %v2695 = vsel %vm1137, %v2626, -inf
        %2696 = vmax.xlane.f32.xlu0 %v2695
        %v2697 = vpop.xlane.xlu0 %2696
        %v2698 = vsel %vm1137, %v2674, -inf
        %2699 = vmax.xlane.f32.xlu0 %v2698
        %v2700 = vpop.xlane.xlu0 %2699
        %v2701 = vsel %vm1137, %v2677, -inf
        %2702 = vmax.xlane.f32.xlu0 %v2701
        %v2703 = vpop.xlane.xlu0 %2702
        %v2704 = vsub.f32 %v2521, %v2682
        %v2705 = vsub.f32 %v2524, %v2685
        %v2706 = vsub.f32 %v2572, %v2688
        %v2707 = vsub.f32 %v2575, %v2691
        %v2708 = vsub.f32 %v2623, %v2694
        %v2709 = vsub.f32 %v2626, %v2697
        %v2710 = vsub.f32 %v2674, %v2700
        %v2711 = vsub.f32 %v2677, %v2703
        %v2712 = vmul.f32 %v2704, 1.442695
        %v2713 = vpow.pop %v2712
        %v2714 = vmul.f32 %v2705, 1.442695
        %v2715 = vpow.pop %v2714
        %v2716 = vmul.f32 %v2706, 1.442695
        %v2717 = vpow.pop %v2716
        %v2718 = vmul.f32 %v2707, 1.442695
        %v2719 = vpow.pop %v2718
        %v2720 = vmul.f32 %v2708, 1.442695
        %v2721 = vpow.pop %v2720
        %v2722 = vmul.f32 %v2709, 1.442695
        %v2723 = vpow.pop %v2722
        %v2724 = vmul.f32 %v2710, 1.442695
        %v2725 = vpow.pop %v2724
        %v2726 = vmul.f32 %v2711, 1.442695
        %v2727 = vpow.pop %v2726
        %v2728 = vsel %vm1137, %v2713, 0.0
        %2729 = vadd.xlane.f32.xlu0 %v2728
        %v2730 = vpop.xlane.xlu0 %2729
        %v2731 = vsel %vm1137, %v2715, 0.0
        %2732 = vadd.xlane.f32.xlu0 %v2731
        %v2733 = vpop.xlane.xlu0 %2732
        %v2734 = vsel %vm1137, %v2717, 0.0
        %2735 = vadd.xlane.f32.xlu0 %v2734
        %v2736 = vpop.xlane.xlu0 %2735
        %v2737 = vsel %vm1137, %v2719, 0.0
        %2738 = vadd.xlane.f32.xlu0 %v2737
        %v2739 = vpop.xlane.xlu0 %2738
        %v2740 = vsel %vm1137, %v2721, 0.0
        %2741 = vadd.xlane.f32.xlu0 %v2740
        %v2742 = vpop.xlane.xlu0 %2741
        %v2743 = vsel %vm1137, %v2723, 0.0
        %2744 = vadd.xlane.f32.xlu0 %v2743
        %v2745 = vpop.xlane.xlu0 %2744
        %v2746 = vsel %vm1137, %v2725, 0.0
        %2747 = vadd.xlane.f32.xlu0 %v2746
        %v2748 = vpop.xlane.xlu0 %2747
        %v2749 = vsel %vm1137, %v2727, 0.0
        %2750 = vadd.xlane.f32.xlu0 %v2749
        %v2751 = vpop.xlane.xlu0 %2750
        %v2752 = vrcp.pop %v2730
        %v2753 = vrcp.pop %v2733
        %v2754 = vrcp.pop %v2736
        %v2755 = vrcp.pop %v2739
        %v2756 = vrcp.pop %v2742
        %v2757 = vrcp.pop %v2745
        %v2758 = vrcp.pop %v2748
        %v2759 = vrcp.pop %v2751
        %v2760 = vmul.f32 %v2713, %v2752
        %v2761 = vmul.f32 %v2715, %v2753
        %v2762 = vmul.f32 %v2717, %v2754
        %v2763 = vmul.f32 %v2719, %v2755
        %v2764 = vmul.f32 %v2721, %v2756
        %v2765 = vmul.f32 %v2723, %v2757
        %v2766 = vmul.f32 %v2725, %v2758
        %v2767 = vmul.f32 %v2727, %v2759
        %v2768 = vpack.c.bf16 %v2761, %v2760
        %v2769 = vpack.c.bf16 %v2763, %v2762
        %v2770 = vpack.c.bf16 %v2765, %v2764
        %v2771 = vpack.c.bf16 %v2767, %v2766
        %2772 = vrot.lane.b32.xlu0 %v944, 32
        %v2773 = vpop.permute.xlu0 %2772
        %v2776 = vsel %vm1137, %v2768, 0
        %2778 = vmatprep.subr.bf16.mxu0 0
        %2779 = vmatpush1.bf16.msra.mxu0 0
        %2780 = vmatprep.subr.bf16.mxu0 0
        %2781 = vmatpush1.bf16.msra.mxu0 0
        %2782 = vmatprep.subr.bf16.mxu0 0
        %2783 = vmatpush1.bf16.msra.mxu0 0
        %2784 = vmatprep.subr.bf16.mxu0 0
        %2785 = vmatpush1.bf16.msra.mxu0 0
        %2786 = vmatprep.subr.bf16.mxu0 0
        %2787 = vmatpush1.bf16.msra.mxu0 0
        %2788 = vmatprep.subr.bf16.mxu0 0
        %2789 = vmatpush1.bf16.msra.mxu0 0
        %2790 = vmatprep.subr.bf16.mxu0 0
        %2791 = vmatpush1.bf16.msra.mxu0 0
        %2792 = vmatprep.subr.bf16.mxu0 0
        %2793 = vmatpush1.bf16.msra.mxu0 %v2773
        %2794 = vmatprep.subr.bf16.mxu0 0
        %2795 = vmatpush2.bf16.msra.mxu0 0
        %2796 = vmatprep.subr.bf16.mxu0 0
        %2797 = vmatpush2.bf16.msra.mxu0 0
        %2798 = vmatprep.subr.bf16.mxu0 0
        %2799 = vmatpush2.bf16.msra.mxu0 0
        %2800 = vmatprep.subr.bf16.mxu0 0
        %2801 = vmatpush2.bf16.msra.mxu0 0
        %2802 = vmatprep.subr.bf16.mxu0 0
        %2803 = vmatpush2.bf16.msra.mxu0 0
        %2804 = vmatprep.subr.bf16.mxu0 0
        %2805 = vmatpush2.bf16.msra.mxu0 0
        %2806 = vmatprep.subr.bf16.mxu0 0
        %2807 = vmatpush2.bf16.msra.mxu0 0
        %2808 = vmatprep.subr.bf16.mxu0 0
        %2809 = vmatpush2.bf16.msra.mxu0 0
        %2810 = vmatprep.mubr.bf16.mxu0 0
        %2811 = vmatmul.mubr.bf16.gmra.mxu0 %v2776
        %v2812 = vpop.f32.mrf.mxu0
        %v2813 = vadd.f32 0.0, %v2812
        %v2814 = vpop.f32.mrf.mxu0
        %v2815 = vpop.f32.mrf.mxu0
        %v2816 = vadd.f32 0.0, %v2815
        %v2817 = vpop.f32.mrf.mxu0
        %2818 = vdwg.mxu0
        %2819 = vrot.lane.b32.xlu0 %v945, 32
        %v2820 = vpop.permute.xlu0 %2819
        %v2823 = vsel %vm1137, %v2769, 0
        %2825 = vmatprep.subr.bf16.mxu0 0
        %2826 = vmatpush1.bf16.msra.mxu0 0
        %2827 = vmatprep.subr.bf16.mxu0 0
        %2828 = vmatpush1.bf16.msra.mxu0 0
        %2829 = vmatprep.subr.bf16.mxu0 0
        %2830 = vmatpush1.bf16.msra.mxu0 0
        %2831 = vmatprep.subr.bf16.mxu0 0
        %2832 = vmatpush1.bf16.msra.mxu0 0
        %2833 = vmatprep.subr.bf16.mxu0 0
        %2834 = vmatpush1.bf16.msra.mxu0 0
        %2835 = vmatprep.subr.bf16.mxu0 0
        %2836 = vmatpush1.bf16.msra.mxu0 0
        %2837 = vmatprep.subr.bf16.mxu0 0
        %2838 = vmatpush1.bf16.msra.mxu0 0
        %2839 = vmatprep.subr.bf16.mxu0 0
        %2840 = vmatpush1.bf16.msra.mxu0 %v2820
        %2841 = vmatprep.subr.bf16.mxu0 0
        %2842 = vmatpush2.bf16.msra.mxu0 0
        %2843 = vmatprep.subr.bf16.mxu0 0
        %2844 = vmatpush2.bf16.msra.mxu0 0
        %2845 = vmatprep.subr.bf16.mxu0 0
        %2846 = vmatpush2.bf16.msra.mxu0 0
        %2847 = vmatprep.subr.bf16.mxu0 0
        %2848 = vmatpush2.bf16.msra.mxu0 0
        %2849 = vmatprep.subr.bf16.mxu0 0
        %2850 = vmatpush2.bf16.msra.mxu0 0
        %2851 = vmatprep.subr.bf16.mxu0 0
        %2852 = vmatpush2.bf16.msra.mxu0 0
        %2853 = vmatprep.subr.bf16.mxu0 0
        %2854 = vmatpush2.bf16.msra.mxu0 0
        %2855 = vmatprep.subr.bf16.mxu0 0
        %2856 = vmatpush2.bf16.msra.mxu0 0
        %2857 = vmatprep.mubr.bf16.mxu0 0
        %2858 = vmatmul.mubr.bf16.gmra.mxu0 %v2823
        %v2859 = vpop.f32.mrf.mxu0
        %v2860 = vadd.f32 0.0, %v2859
        %v2861 = vpop.f32.mrf.mxu0
        %v2862 = vpop.f32.mrf.mxu0
        %v2863 = vadd.f32 0.0, %v2862
        %v2864 = vpop.f32.mrf.mxu0
        %2865 = vdwg.mxu0
        %2866 = vrot.lane.b32.xlu0 %v946, 32
        %v2867 = vpop.permute.xlu0 %2866
        %v2870 = vsel %vm1137, %v2770, 0
        %2872 = vmatprep.subr.bf16.mxu0 0
        %2873 = vmatpush1.bf16.msra.mxu0 0
        %2874 = vmatprep.subr.bf16.mxu0 0
        %2875 = vmatpush1.bf16.msra.mxu0 0
        %2876 = vmatprep.subr.bf16.mxu0 0
        %2877 = vmatpush1.bf16.msra.mxu0 0
        %2878 = vmatprep.subr.bf16.mxu0 0
        %2879 = vmatpush1.bf16.msra.mxu0 0
        %2880 = vmatprep.subr.bf16.mxu0 0
        %2881 = vmatpush1.bf16.msra.mxu0 0
        %2882 = vmatprep.subr.bf16.mxu0 0
        %2883 = vmatpush1.bf16.msra.mxu0 0
        %2884 = vmatprep.subr.bf16.mxu0 0
        %2885 = vmatpush1.bf16.msra.mxu0 0
        %2886 = vmatprep.subr.bf16.mxu0 0
        %2887 = vmatpush1.bf16.msra.mxu0 %v2867
        %2888 = vmatprep.subr.bf16.mxu0 0
        %2889 = vmatpush2.bf16.msra.mxu0 0
        %2890 = vmatprep.subr.bf16.mxu0 0
        %2891 = vmatpush2.bf16.msra.mxu0 0
        %2892 = vmatprep.subr.bf16.mxu0 0
        %2893 = vmatpush2.bf16.msra.mxu0 0
        %2894 = vmatprep.subr.bf16.mxu0 0
        %2895 = vmatpush2.bf16.msra.mxu0 0
        %2896 = vmatprep.subr.bf16.mxu0 0
        %2897 = vmatpush2.bf16.msra.mxu0 0
        %2898 = vmatprep.subr.bf16.mxu0 0
        %2899 = vmatpush2.bf16.msra.mxu0 0
        %2900 = vmatprep.subr.bf16.mxu0 0
        %2901 = vmatpush2.bf16.msra.mxu0 0
        %2902 = vmatprep.subr.bf16.mxu0 0
        %2903 = vmatpush2.bf16.msra.mxu0 0
        %2904 = vmatprep.mubr.bf16.mxu0 0
        %2905 = vmatmul.mubr.bf16.gmra.mxu0 %v2870
        %v2906 = vpop.f32.mrf.mxu0
        %v2907 = vadd.f32 0.0, %v2906
        %v2908 = vpop.f32.mrf.mxu0
        %v2909 = vpop.f32.mrf.mxu0
        %v2910 = vadd.f32 0.0, %v2909
        %v2911 = vpop.f32.mrf.mxu0
        %2912 = vdwg.mxu0
        %2913 = vrot.lane.b32.xlu0 %v947, 32
        %v2914 = vpop.permute.xlu0 %2913
        %v2917 = vsel %vm1137, %v2771, 0
        %2919 = vmatprep.subr.bf16.mxu0 0
        %2920 = vmatpush1.bf16.msra.mxu0 0
        %2921 = vmatprep.subr.bf16.mxu0 0
        %2922 = vmatpush1.bf16.msra.mxu0 0
        %2923 = vmatprep.subr.bf16.mxu0 0
        %2924 = vmatpush1.bf16.msra.mxu0 0
        %2925 = vmatprep.subr.bf16.mxu0 0
        %2926 = vmatpush1.bf16.msra.mxu0 0
        %2927 = vmatprep.subr.bf16.mxu0 0
        %2928 = vmatpush1.bf16.msra.mxu0 0
        %2929 = vmatprep.subr.bf16.mxu0 0
        %2930 = vmatpush1.bf16.msra.mxu0 0
        %2931 = vmatprep.subr.bf16.mxu0 0
        %2932 = vmatpush1.bf16.msra.mxu0 0
        %2933 = vmatprep.subr.bf16.mxu0 0
        %2934 = vmatpush1.bf16.msra.mxu0 %v2914
        %2935 = vmatprep.subr.bf16.mxu0 0
        %2936 = vmatpush2.bf16.msra.mxu0 0
        %2937 = vmatprep.subr.bf16.mxu0 0
        %2938 = vmatpush2.bf16.msra.mxu0 0
        %2939 = vmatprep.subr.bf16.mxu0 0
        %2940 = vmatpush2.bf16.msra.mxu0 0
        %2941 = vmatprep.subr.bf16.mxu0 0
        %2942 = vmatpush2.bf16.msra.mxu0 0
        %2943 = vmatprep.subr.bf16.mxu0 0
        %2944 = vmatpush2.bf16.msra.mxu0 0
        %2945 = vmatprep.subr.bf16.mxu0 0
        %2946 = vmatpush2.bf16.msra.mxu0 0
        %2947 = vmatprep.subr.bf16.mxu0 0
        %2948 = vmatpush2.bf16.msra.mxu0 0
        %2949 = vmatprep.subr.bf16.mxu0 0
        %2950 = vmatpush2.bf16.msra.mxu0 0
        %2951 = vmatprep.mubr.bf16.mxu0 0
        %2952 = vmatmul.mubr.bf16.gmra.mxu0 %v2917
        %v2953 = vpop.f32.mrf.mxu0
        %v2954 = vadd.f32 0.0, %v2953
        %v2955 = vpop.f32.mrf.mxu0
        %v2956 = vpop.f32.mrf.mxu0
        %v2957 = vadd.f32 0.0, %v2956
        %v2958 = vpop.f32.mrf.mxu0
        %2959 = vdwg.mxu0
        %2968 = vrot.lane.b32.xlu0 %v2813, 96
        %v2969 = vpop.permute.xlu0 %2968
        %2970 = vrot.lane.b32.xlu0 %v2816, 96
        %v2971 = vpop.permute.xlu0 %2970
        %2972 = vrot.lane.b32.xlu0 %v2860, 96
        %v2973 = vpop.permute.xlu0 %2972
        %2974 = vrot.lane.b32.xlu0 %v2863, 96
        %v2975 = vpop.permute.xlu0 %2974
        %2976 = vrot.lane.b32.xlu0 %v2907, 96
        %v2977 = vpop.permute.xlu0 %2976
        %2978 = vrot.lane.b32.xlu0 %v2910, 96
        %v2979 = vpop.permute.xlu0 %2978
        %2980 = vrot.lane.b32.xlu0 %v2954, 96
        %v2981 = vpop.permute.xlu0 %2980
        %2982 = vrot.lane.b32.xlu0 %v2957, 96
        %v2983 = vpop.permute.xlu0 %2982
        %vm2992 = vcmask 1048320
        %2993 = vst.msk [vmem:[#allocation2] sm:$0xff] %vm2992, %v2969
        %2994 = vst.msk [vmem:[#allocation2 + $0x8] sm:$0xff] %vm2992, %v2971
        %2995 = vst.msk [vmem:[#allocation2 + $0x10] sm:$0xff] %vm2992, %v2973
        %2996 = vst.msk [vmem:[#allocation2 + $0x18] sm:$0xff] %vm2992, %v2975
        %2997 = vst.msk [vmem:[#allocation2 + $0x20] sm:$0xff] %vm2992, %v2977
        %2998 = vst.msk [vmem:[#allocation2 + $0x28] sm:$0xff] %vm2992, %v2979
        %2999 = vst.msk [vmem:[#allocation2 + $0x30] sm:$0xff] %vm2992, %v2981
        %3000 = vst.msk [vmem:[#allocation2 + $0x38] sm:$0xff] %vm2992, %v2983
        %v3001 = vld [vmem:[#allocation2] sm:$0xff]
        %v3002 = vld [vmem:[#allocation2 + $0x8] sm:$0xff]
        %v3003 = vld [vmem:[#allocation2 + $0x10] sm:$0xff]
        %v3004 = vld [vmem:[#allocation2 + $0x18] sm:$0xff]
        %v3005 = vld [vmem:[#allocation2 + $0x20] sm:$0xff]
        %v3006 = vld [vmem:[#allocation2 + $0x28] sm:$0xff]
        %v3007 = vld [vmem:[#allocation2 + $0x30] sm:$0xff]
        %v3008 = vld [vmem:[#allocation2 + $0x38] sm:$0xff]
        %v3009 = vpack.c.bf16 %v3002, %v3001
        %v3010 = vpack.c.bf16 %v3004, %v3003
        %v3011 = vpack.c.bf16 %v3006, %v3005
        %v3012 = vpack.c.bf16 %v3008, %v3007
        %v3013 = vld [vmem:[#allocation9] sm:$0xf]
        %v3014 = vld [vmem:[#allocation9 + $0x4] sm:$0xf]
        %v3015 = vld [vmem:[#allocation9 + $0x8] sm:$0xf]
        %v3016 = vld [vmem:[#allocation9 + $0xc] sm:$0xf]
        %v3017 = vld [vmem:[#allocation9 + $0x10] sm:$0xf]
        %v3018 = vld [vmem:[#allocation9 + $0x14] sm:$0xf]
        %v3019 = vld [vmem:[#allocation9 + $0x18] sm:$0xf]
        %v3020 = vld [vmem:[#allocation9 + $0x1c] sm:$0xf]
        %v3021 = vld [vmem:[#allocation9 + $0x20] sm:$0xf]
        %v3022 = vld [vmem:[#allocation9 + $0x24] sm:$0xf]
        %v3023 = vld [vmem:[#allocation9 + $0x28] sm:$0xf]
        %v3024 = vld [vmem:[#allocation9 + $0x2c] sm:$0xf]
        %v3025 = vld [vmem:[#allocation9 + $0x30] sm:$0xf]
        %v3026 = vld [vmem:[#allocation9 + $0x34] sm:$0xf]
        %v3027 = vld [vmem:[#allocation9 + $0x38] sm:$0xf]
        %v3028 = vld [vmem:[#allocation9 + $0x3c] sm:$0xf]
        %v3029 = vld [vmem:[%s5] sm:$0x1]
        %v3031 = vlaneseq
        %v3032 = vshrl.u32 %v3031, 7
        %v3033 = vsub.s32 0, %v3032
        %v3034 = vrot.slane %v3029, %v3033
        %v3052 = vunpack.c.l.b16 %v3013
        %v3053 = vunpack.c.l.b16 %v3014
        %v3054 = vunpack.c.l.b16 %v3015
        %v3055 = vunpack.c.l.b16 %v3016
        %v3056 = vunpack.c.l.b16 %v3017
        %v3057 = vunpack.c.l.b16 %v3018
        %v3058 = vunpack.c.l.b16 %v3019
        %v3059 = vunpack.c.l.b16 %v3020
        %v3060 = vunpack.c.l.b16 %v3021
        %v3061 = vunpack.c.l.b16 %v3022
        %v3062 = vunpack.c.l.b16 %v3023
        %v3063 = vunpack.c.l.b16 %v3024
        %v3064 = vunpack.c.l.b16 %v3025
        %v3065 = vunpack.c.l.b16 %v3026
        %v3066 = vunpack.c.l.b16 %v3027
        %v3067 = vunpack.c.l.b16 %v3028
        %v3068 = vpack.c.b16 %v3053, %v3052
        %v3069 = vpack.c.b16 %v3055, %v3054
        %v3070 = vpack.c.b16 %v3057, %v3056
        %v3071 = vpack.c.b16 %v3059, %v3058
        %v3072 = vpack.c.b16 %v3061, %v3060
        %v3073 = vpack.c.b16 %v3063, %v3062
        %v3074 = vpack.c.b16 %v3065, %v3064
        %v3075 = vpack.c.b16 %v3067, %v3066
        %3084 = vmatprep.subr.bf16.mxu0 0
        %3085 = vmatpush1.bf16.msra.mxu0 %v3075
        %3086 = vmatprep.subr.bf16.mxu0 0
        %3087 = vmatpush1.bf16.msra.mxu0 %v3074
        %3088 = vmatprep.subr.bf16.mxu0 0
        %3089 = vmatpush1.bf16.msra.mxu0 %v3073
        %3090 = vmatprep.subr.bf16.mxu0 0
        %3091 = vmatpush1.bf16.msra.mxu0 %v3072
        %3092 = vmatprep.subr.bf16.mxu0 0
        %3093 = vmatpush1.bf16.msra.mxu0 %v3071
        %3094 = vmatprep.subr.bf16.mxu0 0
        %3095 = vmatpush1.bf16.msra.mxu0 %v3070
        %3096 = vmatprep.subr.bf16.mxu0 0
        %3097 = vmatpush1.bf16.msra.mxu0 %v3069
        %3098 = vmatprep.subr.bf16.mxu0 0
        %3099 = vmatpush1.bf16.msra.mxu0 %v3068
        %3100 = vmatprep.subr.bf16.mxu0 0
        %3101 = vmatpush2.bf16.msra.mxu0 0
        %3102 = vmatprep.subr.bf16.mxu0 0
        %3103 = vmatpush2.bf16.msra.mxu0 0
        %3104 = vmatprep.subr.bf16.mxu0 0
        %3105 = vmatpush2.bf16.msra.mxu0 0
        %3106 = vmatprep.subr.bf16.mxu0 0
        %3107 = vmatpush2.bf16.msra.mxu0 0
        %3108 = vmatprep.subr.bf16.mxu0 0
        %3109 = vmatpush2.bf16.msra.mxu0 0
        %3110 = vmatprep.subr.bf16.mxu0 0
        %3111 = vmatpush2.bf16.msra.mxu0 0
        %3112 = vmatprep.subr.bf16.mxu0 0
        %3113 = vmatpush2.bf16.msra.mxu0 0
        %3114 = vmatprep.subr.bf16.mxu0 0
        %3115 = vmatpush2.bf16.msra.mxu0 0
        %3116 = vmatprep.mubr.bf16.mxu0 0
        %3117 = vmatmul.mubr.bf16.gmra.mxu0 %v3009
        %v3118 = vpop.f32.mrf.mxu0
        %v3119 = vadd.f32 %v3034, %v3118
        %v3120 = vpop.f32.mrf.mxu0
        %v3121 = vpop.f32.mrf.mxu0
        %v3122 = vadd.f32 %v3034, %v3121
        %v3123 = vpop.f32.mrf.mxu0
        %3124 = vmatprep.mubr.bf16.mxu0 0
        %3125 = vmatmul.mubr.bf16.gmra.mxu0 %v3010
        %v3126 = vpop.f32.mrf.mxu0
        %v3127 = vadd.f32 %v3034, %v3126
        %v3128 = vpop.f32.mrf.mxu0
        %v3129 = vpop.f32.mrf.mxu0
        %v3130 = vadd.f32 %v3034, %v3129
        %v3131 = vpop.f32.mrf.mxu0
        %3132 = vmatprep.mubr.bf16.mxu0 0
        %3133 = vmatmul.mubr.bf16.gmra.mxu0 %v3011
        %v3134 = vpop.f32.mrf.mxu0
        %v3135 = vadd.f32 %v3034, %v3134
        %v3136 = vpop.f32.mrf.mxu0
        %v3137 = vpop.f32.mrf.mxu0
        %v3138 = vadd.f32 %v3034, %v3137
        %v3139 = vpop.f32.mrf.mxu0
        %3140 = vmatprep.mubr.bf16.mxu0 0
        %3141 = vmatmul.mubr.bf16.gmra.mxu0 %v3012
        %v3142 = vpop.f32.mrf.mxu0
        %v3143 = vadd.f32 %v3034, %v3142
        %v3144 = vpop.f32.mrf.mxu0
        %v3145 = vpop.f32.mrf.mxu0
        %v3146 = vadd.f32 %v3034, %v3145
        %v3147 = vpop.f32.mrf.mxu0
        %3148 = vdwg.mxu0
        %v3149 = vadd.f32 %v507, %v3119
        %v3150 = vadd.f32 %v508, %v3122
        %v3151 = vadd.f32 %v509, %v3127
        %v3152 = vadd.f32 %v510, %v3130
        %v3153 = vadd.f32 %v511, %v3135
        %v3154 = vadd.f32 %v512, %v3138
        %v3155 = vadd.f32 %v513, %v3143
        %v3156 = vadd.f32 %v514, %v3146
        %3157 = vadd.xlane.f32.xlu0 %v3149
        %v3158 = vpop.xlane.xlu0 %3157
        %3159 = vadd.xlane.f32.xlu0 %v3150
        %v3160 = vpop.xlane.xlu0 %3159
        %3161 = vadd.xlane.f32.xlu0 %v3151
        %v3162 = vpop.xlane.xlu0 %3161
        %3163 = vadd.xlane.f32.xlu0 %v3152
        %v3164 = vpop.xlane.xlu0 %3163
        %3165 = vadd.xlane.f32.xlu0 %v3153
        %v3166 = vpop.xlane.xlu0 %3165
        %3167 = vadd.xlane.f32.xlu0 %v3154
        %v3168 = vpop.xlane.xlu0 %3167
        %3169 = vadd.xlane.f32.xlu0 %v3155
        %v3170 = vpop.xlane.xlu0 %3169
        %3171 = vadd.xlane.f32.xlu0 %v3156
        %v3172 = vpop.xlane.xlu0 %3171
        %v3173 = vmul.f32 %v3158, %v531
        %v3174 = vmul.f32 %v3160, %v531
        %v3175 = vmul.f32 %v3162, %v531
        %v3176 = vmul.f32 %v3164, %v531
        %v3177 = vmul.f32 %v3166, %v531
        %v3178 = vmul.f32 %v3168, %v531
        %v3179 = vmul.f32 %v3170, %v531
        %v3180 = vmul.f32 %v3172, %v531
        %v3181 = vsub.f32 %v3149, %v3173
        %v3182 = vsub.f32 %v3150, %v3174
        %v3183 = vsub.f32 %v3151, %v3175
        %v3184 = vsub.f32 %v3152, %v3176
        %v3185 = vsub.f32 %v3153, %v3177
        %v3186 = vsub.f32 %v3154, %v3178
        %v3187 = vsub.f32 %v3155, %v3179
        %v3188 = vsub.f32 %v3156, %v3180
        %v3189 = vmul.f32 %v3181, %v3181
        %v3190 = vmul.f32 %v3182, %v3182
        %v3191 = vmul.f32 %v3183, %v3183
        %v3192 = vmul.f32 %v3184, %v3184
        %v3193 = vmul.f32 %v3185, %v3185
        %v3194 = vmul.f32 %v3186, %v3186
        %v3195 = vmul.f32 %v3187, %v3187
        %v3196 = vmul.f32 %v3188, %v3188
        %3197 = vadd.xlane.f32.xlu0 %v3189
        %v3198 = vpop.xlane.xlu0 %3197
        %3199 = vadd.xlane.f32.xlu0 %v3190
        %v3200 = vpop.xlane.xlu0 %3199
        %3201 = vadd.xlane.f32.xlu0 %v3191
        %v3202 = vpop.xlane.xlu0 %3201
        %3203 = vadd.xlane.f32.xlu0 %v3192
        %v3204 = vpop.xlane.xlu0 %3203
        %3205 = vadd.xlane.f32.xlu0 %v3193
        %v3206 = vpop.xlane.xlu0 %3205
        %3207 = vadd.xlane.f32.xlu0 %v3194
        %v3208 = vpop.xlane.xlu0 %3207
        %3209 = vadd.xlane.f32.xlu0 %v3195
        %v3210 = vpop.xlane.xlu0 %3209
        %3211 = vadd.xlane.f32.xlu0 %v3196
        %v3212 = vpop.xlane.xlu0 %3211
        %v3213 = vmul.f32 %v3198, %v531
        %v3214 = vmul.f32 %v3200, %v531
        %v3215 = vmul.f32 %v3202, %v531
        %v3216 = vmul.f32 %v3204, %v531
        %v3217 = vmul.f32 %v3206, %v531
        %v3218 = vmul.f32 %v3208, %v531
        %v3219 = vmul.f32 %v3210, %v531
        %v3220 = vmul.f32 %v3212, %v531
        %v3221 = vadd.f32 %v3213, 1e-05
        %v3222 = vadd.f32 %v3214, 1e-05
        %v3223 = vadd.f32 %v3215, 1e-05
        %v3224 = vadd.f32 %v3216, 1e-05
        %v3225 = vadd.f32 %v3217, 1e-05
        %v3226 = vadd.f32 %v3218, 1e-05
        %v3227 = vadd.f32 %v3219, 1e-05
        %v3228 = vadd.f32 %v3220, 1e-05
        %v3229 = vrsqrt.pop %v3221
        %v3230 = vrsqrt.pop %v3222
        %v3231 = vrsqrt.pop %v3223
        %v3232 = vrsqrt.pop %v3224
        %v3233 = vrsqrt.pop %v3225
        %v3234 = vrsqrt.pop %v3226
        %v3235 = vrsqrt.pop %v3227
        %v3236 = vrsqrt.pop %v3228
        %v3237 = vmul.f32 %v3181, %v3229
        %v3238 = vmul.f32 %v3182, %v3230
        %v3239 = vmul.f32 %v3183, %v3231
        %v3240 = vmul.f32 %v3184, %v3232
        %v3241 = vmul.f32 %v3185, %v3233
        %v3242 = vmul.f32 %v3186, %v3234
        %v3243 = vmul.f32 %v3187, %v3235
        %v3244 = vmul.f32 %v3188, %v3236
        %v3245 = vld [vmem:[%s6] sm:$0x1]
        %v3247 = vlaneseq
        %v3248 = vshrl.u32 %v3247, 7
        %v3249 = vsub.s32 0, %v3248
        %v3250 = vrot.slane %v3245, %v3249
        %v3252 = vmul.f32 %v3237, %v3250
        %v3253 = vmul.f32 %v3238, %v3250
        %v3254 = vmul.f32 %v3239, %v3250
        %v3255 = vmul.f32 %v3240, %v3250
        %v3256 = vmul.f32 %v3241, %v3250
        %v3257 = vmul.f32 %v3242, %v3250
        %v3258 = vmul.f32 %v3243, %v3250
        %v3259 = vmul.f32 %v3244, %v3250
        %v3260 = vld [vmem:[%s7] sm:$0x1]
        %v3262 = vlaneseq
        %v3263 = vshrl.u32 %v3262, 7
        %v3264 = vsub.s32 0, %v3263
        %v3265 = vrot.slane %v3260, %v3264
        %v3267 = vadd.f32 %v3252, %v3265
        %v3268 = vadd.f32 %v3253, %v3265
        %v3269 = vadd.f32 %v3254, %v3265
        %v3270 = vadd.f32 %v3255, %v3265
        %v3271 = vadd.f32 %v3256, %v3265
        %v3272 = vadd.f32 %v3257, %v3265
        %v3273 = vadd.f32 %v3258, %v3265
        %v3274 = vadd.f32 %v3259, %v3265
        %v3275 = vpack.c.bf16 %v3268, %v3267
        %v3276 = vpack.c.bf16 %v3270, %v3269
        %v3277 = vpack.c.bf16 %v3272, %v3271
        %v3278 = vpack.c.bf16 %v3274, %v3273
        %v3279 = vld [vmem:[#allocation11] sm:$0xff]
        %v3280 = vld [vmem:[#allocation11 + $0x8] sm:$0xff]
        %v3281 = vld [vmem:[#allocation11 + $0x10] sm:$0xff]
        %v3282 = vld [vmem:[#allocation11 + $0x18] sm:$0xff]
        %v3283 = vld [vmem:[#allocation11 + $0x20] sm:$0xff]
        %v3284 = vld [vmem:[#allocation11 + $0x28] sm:$0xff]
        %v3285 = vld [vmem:[#allocation11 + $0x30] sm:$0xff]
        %v3286 = vld [vmem:[#allocation11 + $0x38] sm:$0xff]
        %v3287 = vld [vmem:[#allocation11 + $0x40] sm:$0xff]
        %v3288 = vld [vmem:[#allocation11 + $0x48] sm:$0xff]
        %v3289 = vld [vmem:[#allocation11 + $0x50] sm:$0xff]
        %v3290 = vld [vmem:[#allocation11 + $0x58] sm:$0xff]
        %v3291 = vld [vmem:[#allocation11 + $0x60] sm:$0xff]
        %v3292 = vld [vmem:[#allocation11 + $0x68] sm:$0xff]
        %v3293 = vld [vmem:[#allocation11 + $0x70] sm:$0xff]
        %v3294 = vld [vmem:[#allocation11 + $0x78] sm:$0xff]
        %v3295 = vld [vmem:[%s9] sm:$0x3]
        %v3297 = vlaneseq
        %v3298 = vshrl.u32 %v3297, 7
        %v3299 = vsub.s32 0, %v3298
        %v3300 = vrot.slane %v3295, %v3299
        %v3301 = vlaneseq
        %v3302 = vshrl.u32 %v3301, 7
        %v3303 = vsub.s32 1, %v3302
        %v3304 = vrot.slane %v3295, %v3303
        %v3323 = vunpack.c.l.b16 %v3279
        %v3324 = vunpack.c.h.b16 %v3279
        %v3325 = vunpack.c.l.b16 %v3280
        %v3326 = vunpack.c.h.b16 %v3280
        %v3327 = vunpack.c.l.b16 %v3281
        %v3328 = vunpack.c.h.b16 %v3281
        %v3329 = vunpack.c.l.b16 %v3282
        %v3330 = vunpack.c.h.b16 %v3282
        %v3331 = vunpack.c.l.b16 %v3283
        %v3332 = vunpack.c.h.b16 %v3283
        %v3333 = vunpack.c.l.b16 %v3284
        %v3334 = vunpack.c.h.b16 %v3284
        %v3335 = vunpack.c.l.b16 %v3285
        %v3336 = vunpack.c.h.b16 %v3285
        %v3337 = vunpack.c.l.b16 %v3286
        %v3338 = vunpack.c.h.b16 %v3286
        %v3339 = vunpack.c.l.b16 %v3287
        %v3340 = vunpack.c.h.b16 %v3287
        %v3341 = vunpack.c.l.b16 %v3288
        %v3342 = vunpack.c.h.b16 %v3288
        %v3343 = vunpack.c.l.b16 %v3289
        %v3344 = vunpack.c.h.b16 %v3289
        %v3345 = vunpack.c.l.b16 %v3290
        %v3346 = vunpack.c.h.b16 %v3290
        %v3347 = vunpack.c.l.b16 %v3291
        %v3348 = vunpack.c.h.b16 %v3291
        %v3349 = vunpack.c.l.b16 %v3292
        %v3350 = vunpack.c.h.b16 %v3292
        %v3351 = vunpack.c.l.b16 %v3293
        %v3352 = vunpack.c.h.b16 %v3293
        %v3353 = vunpack.c.l.b16 %v3294
        %v3354 = vunpack.c.h.b16 %v3294
        %v3355 = vpack.c.b16 %v3325, %v3323
        %v3356 = vpack.c.b16 %v3326, %v3324
        %v3357 = vpack.c.b16 %v3329, %v3327
        %v3358 = vpack.c.b16 %v3330, %v3328
        %v3359 = vpack.c.b16 %v3333, %v3331
        %v3360 = vpack.c.b16 %v3334, %v3332
        %v3361 = vpack.c.b16 %v3337, %v3335
        %v3362 = vpack.c.b16 %v3338, %v3336
        %v3363 = vpack.c.b16 %v3341, %v3339
        %v3364 = vpack.c.b16 %v3342, %v3340
        %v3365 = vpack.c.b16 %v3345, %v3343
        %v3366 = vpack.c.b16 %v3346, %v3344
        %v3367 = vpack.c.b16 %v3349, %v3347
        %v3368 = vpack.c.b16 %v3350, %v3348
        %v3369 = vpack.c.b16 %v3353, %v3351
        %v3370 = vpack.c.b16 %v3354, %v3352
        %3387 = vmatprep.subr.bf16.mxu0 %v3370
        %3388 = vmatpush1.bf16.msra.mxu0 %v3369
        %3389 = vmatprep.subr.bf16.mxu0 %v3368
        %3390 = vmatpush1.bf16.msra.mxu0 %v3367
        %3391 = vmatprep.subr.bf16.mxu0 %v3366
        %3392 = vmatpush1.bf16.msra.mxu0 %v3365
        %3393 = vmatprep.subr.bf16.mxu0 %v3364
        %3394 = vmatpush1.bf16.msra.mxu0 %v3363
        %3395 = vmatprep.subr.bf16.mxu0 %v3362
        %3396 = vmatpush1.bf16.msra.mxu0 %v3361
        %3397 = vmatprep.subr.bf16.mxu0 %v3360
        %3398 = vmatpush1.bf16.msra.mxu0 %v3359
        %3399 = vmatprep.subr.bf16.mxu0 %v3358
        %3400 = vmatpush1.bf16.msra.mxu0 %v3357
        %3401 = vmatprep.subr.bf16.mxu0 %v3356
        %3402 = vmatpush1.bf16.msra.mxu0 %v3355
        %3403 = vmatprep.subr.bf16.mxu0 0
        %3404 = vmatpush2.bf16.msra.mxu0 0
        %3405 = vmatprep.subr.bf16.mxu0 0
        %3406 = vmatpush2.bf16.msra.mxu0 0
        %3407 = vmatprep.subr.bf16.mxu0 0
        %3408 = vmatpush2.bf16.msra.mxu0 0
        %3409 = vmatprep.subr.bf16.mxu0 0
        %3410 = vmatpush2.bf16.msra.mxu0 0
        %3411 = vmatprep.subr.bf16.mxu0 0
        %3412 = vmatpush2.bf16.msra.mxu0 0
        %3413 = vmatprep.subr.bf16.mxu0 0
        %3414 = vmatpush2.bf16.msra.mxu0 0
        %3415 = vmatprep.subr.bf16.mxu0 0
        %3416 = vmatpush2.bf16.msra.mxu0 0
        %3417 = vmatprep.subr.bf16.mxu0 0
        %3418 = vmatpush2.bf16.msra.mxu0 0
        %3419 = vmatprep.mubr.bf16.mxu0 0
        %3420 = vmatmul.mubr.bf16.gmra.mxu0 %v3275
        %v3421 = vpop.f32.mrf.mxu0
        %v3422 = vadd.f32 %v3300, %v3421
        %v3423 = vpop.f32.mrf.mxu0
        %v3424 = vadd.f32 %v3304, %v3423
        %v3425 = vpop.f32.mrf.mxu0
        %v3426 = vadd.f32 %v3300, %v3425
        %v3427 = vpop.f32.mrf.mxu0
        %v3428 = vadd.f32 %v3304, %v3427
        %3429 = vmatprep.mubr.bf16.mxu0 0
        %3430 = vmatmul.mubr.bf16.gmra.mxu0 %v3276
        %v3431 = vpop.f32.mrf.mxu0
        %v3432 = vadd.f32 %v3300, %v3431
        %v3433 = vpop.f32.mrf.mxu0
        %v3434 = vadd.f32 %v3304, %v3433
        %v3435 = vpop.f32.mrf.mxu0
        %v3436 = vadd.f32 %v3300, %v3435
        %v3437 = vpop.f32.mrf.mxu0
        %v3438 = vadd.f32 %v3304, %v3437
        %3439 = vmatprep.mubr.bf16.mxu0 0
        %3440 = vmatmul.mubr.bf16.gmra.mxu0 %v3277
        %v3441 = vpop.f32.mrf.mxu0
        %v3442 = vadd.f32 %v3300, %v3441
        %v3443 = vpop.f32.mrf.mxu0
        %v3444 = vadd.f32 %v3304, %v3443
        %v3445 = vpop.f32.mrf.mxu0
        %v3446 = vadd.f32 %v3300, %v3445
        %v3447 = vpop.f32.mrf.mxu0
        %v3448 = vadd.f32 %v3304, %v3447
        %3449 = vmatprep.mubr.bf16.mxu0 0
        %3450 = vmatmul.mubr.bf16.gmra.mxu0 %v3278
        %v3451 = vpop.f32.mrf.mxu0
        %v3452 = vadd.f32 %v3300, %v3451
        %v3453 = vpop.f32.mrf.mxu0
        %v3454 = vadd.f32 %v3304, %v3453
        %v3455 = vpop.f32.mrf.mxu0
        %v3456 = vadd.f32 %v3300, %v3455
        %v3457 = vpop.f32.mrf.mxu0
        %v3458 = vadd.f32 %v3304, %v3457
        %3459 = vdwg.mxu0
        %v3460 = vmul.f32 %v3422, 0.5
        %v3461 = vmul.f32 %v3424, 0.5
        %v3462 = vmul.f32 %v3426, 0.5
        %v3463 = vmul.f32 %v3428, 0.5
        %v3464 = vmul.f32 %v3432, 0.5
        %v3465 = vmul.f32 %v3434, 0.5
        %v3466 = vmul.f32 %v3436, 0.5
        %v3467 = vmul.f32 %v3438, 0.5
        %v3468 = vmul.f32 %v3442, 0.5
        %v3469 = vmul.f32 %v3444, 0.5
        %v3470 = vmul.f32 %v3446, 0.5
        %v3471 = vmul.f32 %v3448, 0.5
        %v3472 = vmul.f32 %v3452, 0.5
        %v3473 = vmul.f32 %v3454, 0.5
        %v3474 = vmul.f32 %v3456, 0.5
        %v3475 = vmul.f32 %v3458, 0.5
        %v3476 = vmul.f32 %v3422, 0.70710677
        %v3477 = vmul.f32 %v3424, 0.70710677
        %v3478 = vmul.f32 %v3426, 0.70710677
        %v3479 = vmul.f32 %v3428, 0.70710677
        %v3480 = vmul.f32 %v3432, 0.70710677
        %v3481 = vmul.f32 %v3434, 0.70710677
        %v3482 = vmul.f32 %v3436, 0.70710677
        %v3483 = vmul.f32 %v3438, 0.70710677
        %v3484 = vmul.f32 %v3442, 0.70710677
        %v3485 = vmul.f32 %v3444, 0.70710677
        %v3486 = vmul.f32 %v3446, 0.70710677
        %v3487 = vmul.f32 %v3448, 0.70710677
        %v3488 = vmul.f32 %v3452, 0.70710677
        %v3489 = vmul.f32 %v3454, 0.70710677
        %v3490 = vmul.f32 %v3456, 0.70710677
        %v3491 = vmul.f32 %v3458, 0.70710677
        %v3492 = verf.f32.pop %v3476
        %v3493 = verf.f32.pop %v3477
        %v3494 = verf.f32.pop %v3478
        %v3495 = verf.f32.pop %v3479
        %v3496 = verf.f32.pop %v3480
        %v3497 = verf.f32.pop %v3481
        %v3498 = verf.f32.pop %v3482
        %v3499 = verf.f32.pop %v3483
        %v3500 = verf.f32.pop %v3484
        %v3501 = verf.f32.pop %v3485
        %v3502 = verf.f32.pop %v3486
        %v3503 = verf.f32.pop %v3487
        %v3504 = verf.f32.pop %v3488
        %v3505 = verf.f32.pop %v3489
        %v3506 = verf.f32.pop %v3490
        %v3507 = verf.f32.pop %v3491
        %v3508 = vadd.f32 %v3492, 1.0
        %v3509 = vadd.f32 %v3493, 1.0
        %v3510 = vadd.f32 %v3494, 1.0
        %v3511 = vadd.f32 %v3495, 1.0
        %v3512 = vadd.f32 %v3496, 1.0
        %v3513 = vadd.f32 %v3497, 1.0
        %v3514 = vadd.f32 %v3498, 1.0
        %v3515 = vadd.f32 %v3499, 1.0
        %v3516 = vadd.f32 %v3500, 1.0
        %v3517 = vadd.f32 %v3501, 1.0
        %v3518 = vadd.f32 %v3502, 1.0
        %v3519 = vadd.f32 %v3503, 1.0
        %v3520 = vadd.f32 %v3504, 1.0
        %v3521 = vadd.f32 %v3505, 1.0
        %v3522 = vadd.f32 %v3506, 1.0
        %v3523 = vadd.f32 %v3507, 1.0
        %v3524 = vmul.f32 %v3460, %v3508
        %v3525 = vmul.f32 %v3461, %v3509
        %v3526 = vmul.f32 %v3462, %v3510
        %v3527 = vmul.f32 %v3463, %v3511
        %v3528 = vmul.f32 %v3464, %v3512
        %v3529 = vmul.f32 %v3465, %v3513
        %v3530 = vmul.f32 %v3466, %v3514
        %v3531 = vmul.f32 %v3467, %v3515
        %v3532 = vmul.f32 %v3468, %v3516
        %v3533 = vmul.f32 %v3469, %v3517
        %v3534 = vmul.f32 %v3470, %v3518
        %v3535 = vmul.f32 %v3471, %v3519
        %v3536 = vmul.f32 %v3472, %v3520
        %v3537 = vmul.f32 %v3473, %v3521
        %v3538 = vmul.f32 %v3474, %v3522
        %v3539 = vmul.f32 %v3475, %v3523
        %v3540 = vpack.c.bf16 %v3526, %v3524
        %v3541 = vpack.c.bf16 %v3527, %v3525
        %v3542 = vpack.c.bf16 %v3530, %v3528
        %v3543 = vpack.c.bf16 %v3531, %v3529
        %v3544 = vpack.c.bf16 %v3534, %v3532
        %v3545 = vpack.c.bf16 %v3535, %v3533
        %v3546 = vpack.c.bf16 %v3538, %v3536
        %v3547 = vpack.c.bf16 %v3539, %v3537
        %v3548 = vld [vmem:[#allocation12] sm:$0xf]
        %v3549 = vld [vmem:[#allocation12 + $0x4] sm:$0xf]
        %v3550 = vld [vmem:[#allocation12 + $0x8] sm:$0xf]
        %v3551 = vld [vmem:[#allocation12 + $0xc] sm:$0xf]
        %v3552 = vld [vmem:[#allocation12 + $0x10] sm:$0xf]
        %v3553 = vld [vmem:[#allocation12 + $0x14] sm:$0xf]
        %v3554 = vld [vmem:[#allocation12 + $0x18] sm:$0xf]
        %v3555 = vld [vmem:[#allocation12 + $0x1c] sm:$0xf]
        %v3556 = vld [vmem:[#allocation12 + $0x20] sm:$0xf]
        %v3557 = vld [vmem:[#allocation12 + $0x24] sm:$0xf]
        %v3558 = vld [vmem:[#allocation12 + $0x28] sm:$0xf]
        %v3559 = vld [vmem:[#allocation12 + $0x2c] sm:$0xf]
        %v3560 = vld [vmem:[#allocation12 + $0x30] sm:$0xf]
        %v3561 = vld [vmem:[#allocation12 + $0x34] sm:$0xf]
        %v3562 = vld [vmem:[#allocation12 + $0x38] sm:$0xf]
        %v3563 = vld [vmem:[#allocation12 + $0x3c] sm:$0xf]
        %v3564 = vld [vmem:[#allocation12 + $0x40] sm:$0xf]
        %v3565 = vld [vmem:[#allocation12 + $0x44] sm:$0xf]
        %v3566 = vld [vmem:[#allocation12 + $0x48] sm:$0xf]
        %v3567 = vld [vmem:[#allocation12 + $0x4c] sm:$0xf]
        %v3568 = vld [vmem:[#allocation12 + $0x50] sm:$0xf]
        %v3569 = vld [vmem:[#allocation12 + $0x54] sm:$0xf]
        %v3570 = vld [vmem:[#allocation12 + $0x58] sm:$0xf]
        %v3571 = vld [vmem:[#allocation12 + $0x5c] sm:$0xf]
        %v3572 = vld [vmem:[#allocation12 + $0x60] sm:$0xf]
        %v3573 = vld [vmem:[#allocation12 + $0x64] sm:$0xf]
        %v3574 = vld [vmem:[#allocation12 + $0x68] sm:$0xf]
        %v3575 = vld [vmem:[#allocation12 + $0x6c] sm:$0xf]
        %v3576 = vld [vmem:[#allocation12 + $0x70] sm:$0xf]
        %v3577 = vld [vmem:[#allocation12 + $0x74] sm:$0xf]
        %v3578 = vld [vmem:[#allocation12 + $0x78] sm:$0xf]
        %v3579 = vld [vmem:[#allocation12 + $0x7c] sm:$0xf]
        %v3580 = vld [vmem:[%s11] sm:$0x1]
        %v3582 = vlaneseq
        %v3583 = vshrl.u32 %v3582, 7
        %v3584 = vsub.s32 0, %v3583
        %v3585 = vrot.slane %v3580, %v3584
        %v3619 = vunpack.c.l.b16 %v3548
        %v3620 = vunpack.c.l.b16 %v3549
        %v3621 = vunpack.c.l.b16 %v3550
        %v3622 = vunpack.c.l.b16 %v3551
        %v3623 = vunpack.c.l.b16 %v3552
        %v3624 = vunpack.c.l.b16 %v3553
        %v3625 = vunpack.c.l.b16 %v3554
        %v3626 = vunpack.c.l.b16 %v3555
        %v3627 = vunpack.c.l.b16 %v3556
        %v3628 = vunpack.c.l.b16 %v3557
        %v3629 = vunpack.c.l.b16 %v3558
        %v3630 = vunpack.c.l.b16 %v3559
        %v3631 = vunpack.c.l.b16 %v3560
        %v3632 = vunpack.c.l.b16 %v3561
        %v3633 = vunpack.c.l.b16 %v3562
        %v3634 = vunpack.c.l.b16 %v3563
        %v3635 = vunpack.c.l.b16 %v3564
        %v3636 = vunpack.c.l.b16 %v3565
        %v3637 = vunpack.c.l.b16 %v3566
        %v3638 = vunpack.c.l.b16 %v3567
        %v3639 = vunpack.c.l.b16 %v3568
        %v3640 = vunpack.c.l.b16 %v3569
        %v3641 = vunpack.c.l.b16 %v3570
        %v3642 = vunpack.c.l.b16 %v3571
        %v3643 = vunpack.c.l.b16 %v3572
        %v3644 = vunpack.c.l.b16 %v3573
        %v3645 = vunpack.c.l.b16 %v3574
        %v3646 = vunpack.c.l.b16 %v3575
        %v3647 = vunpack.c.l.b16 %v3576
        %v3648 = vunpack.c.l.b16 %v3577
        %v3649 = vunpack.c.l.b16 %v3578
        %v3650 = vunpack.c.l.b16 %v3579
        %v3651 = vpack.c.b16 %v3620, %v3619
        %v3652 = vpack.c.b16 %v3622, %v3621
        %v3653 = vpack.c.b16 %v3624, %v3623
        %v3654 = vpack.c.b16 %v3626, %v3625
        %v3655 = vpack.c.b16 %v3628, %v3627
        %v3656 = vpack.c.b16 %v3630, %v3629
        %v3657 = vpack.c.b16 %v3632, %v3631
        %v3658 = vpack.c.b16 %v3634, %v3633
        %v3659 = vpack.c.b16 %v3636, %v3635
        %v3660 = vpack.c.b16 %v3638, %v3637
        %v3661 = vpack.c.b16 %v3640, %v3639
        %v3662 = vpack.c.b16 %v3642, %v3641
        %v3663 = vpack.c.b16 %v3644, %v3643
        %v3664 = vpack.c.b16 %v3646, %v3645
        %v3665 = vpack.c.b16 %v3648, %v3647
        %v3666 = vpack.c.b16 %v3650, %v3649
        %3683 = vmatprep.subr.bf16.mxu0 0
        %3684 = vmatpush1.bf16.msra.mxu0 %v3658
        %3685 = vmatprep.subr.bf16.mxu0 0
        %3686 = vmatpush1.bf16.msra.mxu0 %v3657
        %3687 = vmatprep.subr.bf16.mxu0 0
        %3688 = vmatpush1.bf16.msra.mxu0 %v3656
        %3689 = vmatprep.subr.bf16.mxu0 0
        %3690 = vmatpush1.bf16.msra.mxu0 %v3655
        %3691 = vmatprep.subr.bf16.mxu0 0
        %3692 = vmatpush1.bf16.msra.mxu0 %v3654
        %3693 = vmatprep.subr.bf16.mxu0 0
        %3694 = vmatpush1.bf16.msra.mxu0 %v3653
        %3695 = vmatprep.subr.bf16.mxu0 0
        %3696 = vmatpush1.bf16.msra.mxu0 %v3652
        %3697 = vmatprep.subr.bf16.mxu0 0
        %3698 = vmatpush1.bf16.msra.mxu0 %v3651
        %3699 = vmatprep.subr.bf16.mxu0 0
        %3700 = vmatpush2.bf16.msra.mxu0 %v3666
        %3701 = vmatprep.subr.bf16.mxu0 0
        %3702 = vmatpush2.bf16.msra.mxu0 %v3665
        %3703 = vmatprep.subr.bf16.mxu0 0
        %3704 = vmatpush2.bf16.msra.mxu0 %v3664
        %3705 = vmatprep.subr.bf16.mxu0 0
        %3706 = vmatpush2.bf16.msra.mxu0 %v3663
        %3707 = vmatprep.subr.bf16.mxu0 0
        %3708 = vmatpush2.bf16.msra.mxu0 %v3662
        %3709 = vmatprep.subr.bf16.mxu0 0
        %3710 = vmatpush2.bf16.msra.mxu0 %v3661
        %3711 = vmatprep.subr.bf16.mxu0 0
        %3712 = vmatpush2.bf16.msra.mxu0 %v3660
        %3713 = vmatprep.subr.bf16.mxu0 0
        %3714 = vmatpush2.bf16.msra.mxu0 %v3659
        %3715 = vmatprep.mubr.bf16.mxu0 %v3541
        %3716 = vmatmul.mubr.bf16.gmra.mxu0 %v3540
        %v3717 = vpop.f32.mrf.mxu0
        %v3718 = vadd.f32 %v3585, %v3717
        %v3719 = vpop.f32.mrf.mxu0
        %v3720 = vpop.f32.mrf.mxu0
        %v3721 = vadd.f32 %v3585, %v3720
        %v3722 = vpop.f32.mrf.mxu0
        %3723 = vmatprep.mubr.bf16.mxu0 %v3543
        %3724 = vmatmul.mubr.bf16.gmra.mxu0 %v3542
        %v3725 = vpop.f32.mrf.mxu0
        %v3726 = vadd.f32 %v3585, %v3725
        %v3727 = vpop.f32.mrf.mxu0
        %v3728 = vpop.f32.mrf.mxu0
        %v3729 = vadd.f32 %v3585, %v3728
        %v3730 = vpop.f32.mrf.mxu0
        %3731 = vmatprep.mubr.bf16.mxu0 %v3545
        %3732 = vmatmul.mubr.bf16.gmra.mxu0 %v3544
        %v3733 = vpop.f32.mrf.mxu0
        %v3734 = vadd.f32 %v3585, %v3733
        %v3735 = vpop.f32.mrf.mxu0
        %v3736 = vpop.f32.mrf.mxu0
        %v3737 = vadd.f32 %v3585, %v3736
        %v3738 = vpop.f32.mrf.mxu0
        %3739 = vmatprep.mubr.bf16.mxu0 %v3547
        %3740 = vmatmul.mubr.bf16.gmra.mxu0 %v3546
        %v3741 = vpop.f32.mrf.mxu0
        %v3742 = vadd.f32 %v3585, %v3741
        %v3743 = vpop.f32.mrf.mxu0
        %v3744 = vpop.f32.mrf.mxu0
        %v3745 = vadd.f32 %v3585, %v3744
        %v3746 = vpop.f32.mrf.mxu0
        %3747 = vdwg.mxu0
        %v3748 = vadd.f32 %v3149, %v3718
        %v3749 = vadd.f32 %v3150, %v3721
        %v3750 = vadd.f32 %v3151, %v3726
        %v3751 = vadd.f32 %v3152, %v3729
        %v3752 = vadd.f32 %v3153, %v3734
        %v3753 = vadd.f32 %v3154, %v3737
        %v3754 = vadd.f32 %v3155, %v3742
        %v3755 = vadd.f32 %v3156, %v3745
        %3756 = vst [vmem:[%s503] sm:$0xff] %v3748
        %3757 = vst [vmem:[%s503 + $0x8] sm:$0xff] %v3749
        %3758 = vst [vmem:[%s503 + $0x10] sm:$0xff] %v3750
        %3759 = vst [vmem:[%s503 + $0x18] sm:$0xff] %v3751
        %3760 = vst [vmem:[%s503 + $0x20] sm:$0xff] %v3752
        %3761 = vst [vmem:[%s503 + $0x28] sm:$0xff] %v3753
        %3762 = vst [vmem:[%s503 + $0x30] sm:$0xff] %v3754
        %3763 = vst [vmem:[%s503 + $0x38] sm:$0xff] %v3755
        %s3764 = sand.u32 %s297, 1
        %s3765 = scalar_lea.sflag [#allocation5], %s3764
        %s3766 = sand.u32 %s297, 1
        %s3767 = smul.addr %s3766, 64
        %s3768 = scalar_lea.vmem [#allocation14], %s3767
        // Predicated region
        $region93: #{tpu_custom_call.1} parent=67 // pred_check
          %p3769 = pneg %p307
        $region94: #{tpu_custom_call.1} parent=67 // pred_check_branch
          %3771 = sbr.rel (%p3769) target = $region96
        $region95: #{tpu_custom_call.1} parent=67 // pred_region
          %s3772 = smul.u32 4, %s32
          %s3774 = ssub.s32 1024, 1024
          %3775 = vsyncadd %s3765, %s3774
          %s3776 = smul.addr %s3772, 2
          %s3777 = smul.addr %s3776, 128
          %s3778 = scalar_lea.hbm %s12, %s3777
          %s3779 = sshll.u32 %s3768, 4
          %s3780 = int_to_ptr.vmem [resolvable:$true] %s3779
          %3785 = dma.vmem_to_hbm [thread:$0]  %s3780, 1024, %s3778, %s3765, 128, 128, 8
        $region96: #{tpu_custom_call.1} parent=67 // pred_fallthru
          _
      $region68: #{tpu_custom_call.1} parent=5 // pred_fallthru
        _
      %p3786 = scmp.le.s32.totalorder 2, %s27
      // Predicated region
      $region97: #{tpu_custom_call.1} parent=5 // pred_check
        %p3787 = pneg %p3786
      $region98: #{tpu_custom_call.1} parent=5 // pred_check_branch
        %3789 = sbr.rel (%p3787) target = $region100
      $region99: #{tpu_custom_call.1} parent=5 // pred_region
        %s3790 = ssub.s32 %s27, 2
        // Predicated region
        $region101: #{tpu_custom_call.1} parent=99 // pred_check
          %p3791 = pneg %p313
        $region102: #{tpu_custom_call.1} parent=99 // pred_check_branch
          %3793 = sbr.rel (%p3791) target = $region104
        $region103: #{tpu_custom_call.1} parent=99 // pred_region
          %s3794 = sand.u32 %s298, 1
          %s3795 = scalar_lea.sflag [#allocation5], %s3794
          %s3796 = sand.u32 %s298, 1
          %s3797 = smul.addr %s3796, 64
          %s3798 = scalar_lea.vmem [#allocation14], %s3797
          %3799 = dma.done %s3795, 1024
        $region104: #{tpu_custom_call.1} parent=99 // pred_fallthru
          _
      $region100: #{tpu_custom_call.1} parent=5 // pred_fallthru
        _
    $region6: #{tpu_custom_call.1} parent=1 // loop_footer
      %s31 = sadd.s32 1, %s27
    $region7: #{tpu_custom_call.1} parent=1 // loop_footer_branch
      %26 = sbr.rel target = $region3
    $region8: #{tpu_custom_call.1} parent=1 // loop_exit
      _
    %3800 = vsyncpa [#allocation4], 1
    %s3801 = scalar_lea.sflag [#allocation4], 1
    %3802 = vsyncpa %s3801, 1
    %3803 = vsyncpa [#allocation7], 1
    %3804 = vsyncpa [#allocation10], 1
    %3805 = vsyncpa [#allocation13], 1
    %3806 = vsyncpa [#allocation5], 1
    %s3807 = scalar_lea.sflag [#allocation5], 1
    %3808 = vsyncpa %s3807, 1

</llo_original>
